<compile_context>
chip_gen: v7x
topology: tpu7x:2x2x1
jax: 0.10.0
libtpu: 0.0.40
codegen_flags: <defaults>
</compile_context>

<pallas_src>
import math

import jax
import jax.numpy as jnp
from jax.experimental import pallas as pl
from jax.experimental.pallas import tpu as pltpu

EMBED_DIM = 768    # module default embed_dim
OUTPUT_DIM = 128   # module default output_dim


# ----------------------------------------------------------------------------
# Kernel
# ----------------------------------------------------------------------------
def additive_attention_kernel(x_ref,     # (Bt, S, E) bf16 input block
                              wt_ref,    # (E, D)     bf16 linear.weight.T (resident)
                              b_ref,     # (1, D)     f32  linear.bias     (resident)
                              q_ref,     # (1, D)     f32  query vector    (resident)
                              out_ref):  # (Bt, S)    f32  attention probabilities
    Bt, S, E = x_ref.shape
    D = wt_ref.shape[1]

    # Fold the batch block into the matmul M dimension: (Bt*S, E).
    x2 = x_ref[...].reshape(Bt * S, E)                               # bf16

    # Linear projection on the MXU: bf16 operands, f32 accumulation.
    z = jnp.dot(x2, wt_ref[...], preferred_element_type=jnp.float32)  # (Bt*S, D)
    xp = jnp.tanh(z + b_ref[...])                                    # tanh in f32

    # Score against the learned query: lane-axis (last-dim) reduction.
    scores = jnp.sum(xp.reshape(Bt, S, D) * q_ref[...], axis=-1)     # (Bt, S) f32

    # Softmax over the sequence, kept on the lane axis; exact normalization.
    scores = scores - jnp.max(scores, axis=-1, keepdims=True)
    e = jnp.exp(scores)
    denom = jnp.sum(e, axis=-1, keepdims=True)                       # (Bt, 1)
    out_ref[...] = e * pl.reciprocal(denom)                          # exact recip


# ----------------------------------------------------------------------------
# Block / VMEM heuristics
# ----------------------------------------------------------------------------
def _choose_block_b(B, S, E):
    """Largest divisor of B whose bf16 x block fits the per-block VMEM budget.

    Prefers sublane-aligned (multiple of 8) blocks and >=2 grid steps so the
    parallel axis can be split across v7x's two TensorCores.
    """
    x_block_budget = 12 << 20                          # bf16 x block; x2 when buffered
    cap = max(1, x_block_budget // (S * E * 2))
    divs = [d for d in range(1, min(B, cap) + 1) if B % d == 0]
    preds = (
        lambda d: d % 8 == 0 and B // d >= 2,
        lambda d: d % 8 == 0,
        lambda d: B // d >= 2,
        lambda d: True,
    )
    for pred in preds:
        cand = [d for d in divs if pred(d)]
        if cand:
            return max(cand)
    return 1


def _vmem_limit_bytes(block_b, S, E, D):
    x_block = block_b * S * E * 2                      # bf16 x block
    acts = block_b * S * D * 4 * 3                     # z / xp / scratch in f32
    resident = E * D * 2 + 4 * D * 4                   # bf16 W^T + bias/query
    est = 2 * x_block + acts + resident + (8 << 20)    # double buffer + headroom
    return int(min(max(est, 32 << 20), 96 << 20))


# ----------------------------------------------------------------------------
# Wrapper
# ----------------------------------------------------------------------------
def additive_attention(x, weight, bias, query, *, block_b=None):
    """x: (B, S, E); weight: (D, E); bias: (D,); query: (D,). Returns (B, S) f32.

    x is streamed in bf16 (the dominant HBM traffic); ideally the caller
    supplies bf16 directly so the cast fuses into the upstream producer.
    """
    B, S, E = x.shape
    D = weight.shape[0]
    assert weight.shape == (D, E) and bias.shape == (D,) and query.shape == (D,)

    if block_b is None:
        block_b = _choose_block_b(B, S, E)
    assert B % block_b == 0

    x_bf = x if x.dtype == jnp.bfloat16 else x.astype(jnp.bfloat16)
    wt = weight.T.astype(jnp.bfloat16)                 # (E, D) resident, bf16
    b2 = bias.reshape(1, D).astype(jnp.float32)
    q2 = query.reshape(1, D).astype(jnp.float32)

    return pl.pallas_call(
        additive_attention_kernel,
        out_shape=jax.ShapeDtypeStruct((B, S), jnp.float32),
        grid_spec=pltpu.PrefetchScalarGridSpec(
            num_scalar_prefetch=0,
            grid=(B // block_b,),
            in_specs=[
                pl.BlockSpec((block_b, S, E), lambda i: (i, 0, 0)),  # x block (bf16)
                pl.BlockSpec((E, D), lambda i: (0, 0)),              # resident W^T
                pl.BlockSpec((1, D), lambda i: (0, 0)),              # resident bias
                pl.BlockSpec((1, D), lambda i: (0, 0)),              # resident query
            ],
            out_specs=pl.BlockSpec((block_b, S), lambda i: (i, 0)),
        ),
        compiler_params=pltpu.CompilerParams(
            dimension_semantics=("parallel",),
            vmem_limit_bytes=_vmem_limit_bytes(block_b, S, E, D),
        ),
    )(x_bf, wt, b2, q2)


# ----------------------------------------------------------------------------
# Parameters (PyTorch-style layout/init) and pure-JAX reference
# ----------------------------------------------------------------------------
def make_params(key):
    k1, k2, k3 = jax.random.split(key, 3)
    std = math.sqrt(2.0 / (EMBED_DIM + OUTPUT_DIM))      # xavier_normal_
    weight = (std * jax.random.normal(k1, (OUTPUT_DIM, EMBED_DIM))).astype(jnp.float32)
    bound = 1.0 / math.sqrt(EMBED_DIM)                   # nn.Linear default bias init
    bias = jax.random.uniform(k2, (OUTPUT_DIM,), minval=-bound,
                              maxval=bound).astype(jnp.float32)
    query = jax.random.normal(k3, (OUTPUT_DIM,)).astype(jnp.float32)
    return weight, bias, query


def ref_forward(x, weight, bias, query):
    xp = jnp.tanh(jnp.einsum("bse,de->bsd", x, weight) + bias)
    scores = jnp.einsum("bsd,d->bs", xp, query)
    return jax.nn.softmax(scores, axis=1)                # softmax over the sequence


# ----------------------------------------------------------------------------
if __name__ == "__main__":
    key = jax.random.PRNGKey(0)
    kx, kp = jax.random.split(key)

    B, S = 16, 128
    x = jax.random.normal(kx, (B, S, EMBED_DIM), dtype=jnp.float32)
    weight, bias, query = make_params(kp)

    out = jax.block_until_ready(additive_attention(x, weight, bias, query))
    assert out.shape == (B, S), out.shape

    ref = jax.block_until_ready(ref_forward(x, weight, bias, query))
    max_err = float(jnp.max(jnp.abs(out - ref)))
    # bf16 x / W on the MXU -> slightly looser than pure-f32 (signed-off trade).
    assert jnp.allclose(out, ref, atol=2e-2, rtol=2e-2), max_err

    print("KERNEL_OK")
</pallas_src>

<mosaic_0001>
module attributes {stable_mosaic.version = 11 : i64} {
  func.func @additive_attention_kernel(%arg0: i32, %arg1: memref<8x128x768xbf16, #tpu.memory_space<vmem>>, %arg2: memref<768x128xbf16, #tpu.memory_space<vmem>>, %arg3: memref<1x128xf32, #tpu.memory_space<vmem>>, %arg4: memref<1x128xf32, #tpu.memory_space<vmem>>, %arg5: memref<8x128xf32, #tpu.memory_space<vmem>>) attributes {dimension_semantics = [#tpu.dimension_semantics<parallel>], iteration_bounds = array<i64: 2>, scalar_prefetch = 0 : i64, scratch_operands = 0 : i64, tpu.core_type = #tpu.core_type<tc>, window_params = [{transform_indices = @transform_0, window_bounds = array<i64: 8, 128, 768>}, {pipeline_mode = #tpu.pipeline_mode<synchronous>, transform_indices = @transform_1, window_bounds = array<i64: 768, 128>}, {pipeline_mode = #tpu.pipeline_mode<synchronous>, transform_indices = @transform_2, window_bounds = array<i64: 1, 128>}, {pipeline_mode = #tpu.pipeline_mode<synchronous>, transform_indices = @transform_3, window_bounds = array<i64: 1, 128>}, {transform_indices = @transform_4, window_bounds = array<i64: 8, 128>}]} {
    %c0 = arith.constant 0 : index
    %c0_0 = arith.constant 0 : index
    %c0_1 = arith.constant 0 : index
    %0 = vector.load %arg1[%c0, %c0_0, %c0_1] : memref<8x128x768xbf16, #tpu.memory_space<vmem>>, vector<8x128x768xbf16>
    %1 = vector.shape_cast %0 : vector<8x128x768xbf16> to vector<1024x768xbf16>
    %c0_2 = arith.constant 0 : index
    %c0_3 = arith.constant 0 : index
    %2 = vector.load %arg2[%c0_2, %c0_3] : memref<768x128xbf16, #tpu.memory_space<vmem>>, vector<768x128xbf16>
    %cst = arith.constant dense<0.000000e+00> : vector<1024x128xf32>
    %3 = tpu.matmul %1, %2, %cst {dimension_numbers = #tpu.dot_dimension_numbers<[1], [0], [0], [1], [0, 0, 1, 1], [], []>} : vector<1024x768xbf16>, vector<768x128xbf16>, vector<1024x128xf32> -> vector<1024x128xf32>
    %c0_4 = arith.constant 0 : index
    %c0_5 = arith.constant 0 : index
    %4 = vector.load %arg3[%c0_4, %c0_5] : memref<1x128xf32, #tpu.memory_space<vmem>>, vector<1x128xf32>
    %5 = vector.broadcast %4 : vector<1x128xf32> to vector<1024x128xf32>
    %6 = arith.addf %3, %5 : vector<1024x128xf32>
    %7 = math.tanh %6 : vector<1024x128xf32>
    %8 = vector.shape_cast %7 : vector<1024x128xf32> to vector<8x128x128xf32>
    %c0_6 = arith.constant 0 : index
    %c0_7 = arith.constant 0 : index
    %9 = vector.load %arg4[%c0_6, %c0_7] : memref<1x128xf32, #tpu.memory_space<vmem>>, vector<1x128xf32>
    %10 = vector.shape_cast %9 : vector<1x128xf32> to vector<1x1x128xf32>
    %11 = vector.broadcast %10 : vector<1x1x128xf32> to vector<8x128x128xf32>
    %12 = arith.mulf %8, %11 : vector<8x128x128xf32>
    %cst_8 = arith.constant dense<0.000000e+00> : vector<8x128xf32>
    %13 = vector.multi_reduction <add>, %12, %cst_8 [2] : vector<8x128x128xf32> to vector<8x128xf32>
    %cst_9 = arith.constant dense<0xFF800000> : vector<8xf32>
    %14 = vector.multi_reduction <maximumf>, %13, %cst_9 [1] : vector<8x128xf32> to vector<8xf32>
    %15 = vector.shape_cast %14 : vector<8xf32> to vector<8x1xf32>
    %16 = vector.broadcast %15 : vector<8x1xf32> to vector<8x128xf32>
    %17 = arith.subf %13, %16 : vector<8x128xf32>
    %18 = math.exp %17 : vector<8x128xf32>
    %cst_10 = arith.constant dense<0.000000e+00> : vector<8xf32>
    %19 = vector.multi_reduction <add>, %18, %cst_10 [1] : vector<8x128xf32> to vector<8xf32>
    %20 = vector.shape_cast %19 : vector<8xf32> to vector<8x1xf32>
    %21 = tpu.reciprocal %20 : vector<8x1xf32> -> vector<8x1xf32>
    %22 = vector.broadcast %21 : vector<8x1xf32> to vector<8x128xf32>
    %23 = arith.mulf %18, %22 : vector<8x128xf32>
    %c0_11 = arith.constant 0 : index
    %c0_12 = arith.constant 0 : index
    %24 = vector.load %arg5[%c0_11, %c0_12] : memref<8x128xf32, #tpu.memory_space<vmem>>, vector<8x128xf32>
    tpu.vector_store %arg5[%c0_11, %c0_12], %23 {strides = array<i32>} : memref<8x128xf32, #tpu.memory_space<vmem>>, vector<8x128xf32>,
    return
  }
  func.func @transform_0(%arg0: i32) -> (i32, i32, i32) {
    %c0_i32 = arith.constant 0 : i32
    %c0_i32_0 = arith.constant 0 : i32
    %c0_i32_1 = arith.constant 0 : i32
    return %arg0, %c0_i32, %c0_i32_0 : i32, i32, i32
  }
  func.func @transform_1(%arg0: i32) -> (i32, i32) {
    %c0_i32 = arith.constant 0 : i32
    %c0_i32_0 = arith.constant 0 : i32
    %c0_i32_1 = arith.constant 0 : i32
    return %c0_i32, %c0_i32_0 : i32, i32
  }
  func.func @transform_2(%arg0: i32) -> (i32, i32) {
    %c0_i32 = arith.constant 0 : i32
    %c0_i32_0 = arith.constant 0 : i32
    %c0_i32_1 = arith.constant 0 : i32
    return %c0_i32, %c0_i32_0 : i32, i32
  }
  func.func @transform_3(%arg0: i32) -> (i32, i32) {
    %c0_i32 = arith.constant 0 : i32
    %c0_i32_0 = arith.constant 0 : i32
    %c0_i32_1 = arith.constant 0 : i32
    return %c0_i32, %c0_i32_0 : i32, i32
  }
  func.func @transform_4(%arg0: i32) -> (i32, i32) {
    %c0_i32 = arith.constant 0 : i32
    %c0_i32_0 = arith.constant 0 : i32
    return %arg0, %c0_i32 : i32, i32
  }
}

</mosaic_0001>

<llo_original>
// kernel: tpu_custom_call.1
$region0: #{tpu_custom_call.1}
  #allocation0 [shape = 'u32[]', space=smem, size = 0x4, offset = 0x4, fixed_abs, tag = 'smem constant byte address 0x4 - core index']
  #allocation1 [shape = 'u32[144,128]{1,0:T(1,128)}', space=vmem, size = 0x12000, scoped, tag = 'internal scratch']
  %s0 = inlined_call_operand.hbm [shape: bf16[16,128,768], index: 0, kind: input, shape index: {}]
  %s1 = inlined_call_operand.hbm [shape: bf16[768,128], index: 1, kind: input, shape index: {}]
  %s2 = inlined_call_operand.hbm [shape: f32[1,128], index: 2, kind: input, shape index: {}]
  %s3 = inlined_call_operand.hbm [shape: f32[1,128], index: 3, kind: input, shape index: {}]
  %s4 = inlined_call_operand.hbm [shape: f32[16,128], index: 4, kind: output, shape index: {}]
  %s5 = sld [smem:[#allocation0]]
  $region65: #{tpu_custom_call.1} parent=0
    _
  %s7 = ssub.s32 1, %s5
  %s8 = scalar_select 0, %s7, %s5
  $region1: #{tpu_custom_call.1} parent=0
    #allocation2 [shape = 'u8[3145728]{0}', space=vmem, size = 0x300000, scoped, tag = 'input window, operand 0']
    #allocation3 [shape = 's32[2]{0}', space=sflag, size = 0x8, scoped, tag = 'scoped memory for tpu_custom_call.1']
    #allocation4 [shape = 's32[2]{0}', space=sflag, size = 0x8, scoped, tag = 'scoped memory for tpu_custom_call.1']
    #allocation5 [shape = 'u8[196608]{0}', space=vmem, size = 0x30000, scoped, tag = 'input window, operand 1, single buffered']
    #allocation6 [shape = 's32[1]{0}', space=sflag, size = 0x4, scoped, tag = 'scoped memory for tpu_custom_call.1']
    #allocation7 [shape = 'u8[512]{0}', space=vmem, size = 0x400, scoped, tag = 'input window, operand 2, single buffered']
    #allocation8 [shape = 'u8[512]{0}', space=vmem, size = 0x400, scoped, tag = 'input window, operand 3, single buffered']
    #allocation9 [shape = 's32[1]{0}', space=sflag, size = 0x4, scoped, tag = 'scoped memory for tpu_custom_call.1']
    #allocation10 [shape = 'u8[8192]{0}', space=vmem, size = 0x2000, scoped, tag = 'output window, operand 0']
    %9 = vsyncpa [#allocation3], 0
    %s10 = scalar_lea.sflag [#allocation3], 1
    %11 = vsyncpa %s10, 0
    %12 = vsyncpa [#allocation6], 0
    %13 = vsyncpa [#allocation9], 0
    %14 = vsyncpa [#allocation4], 0
    %s15 = scalar_lea.sflag [#allocation4], 1
    %16 = vsyncpa %s15, 0
    loop: start=0, step=1, limit=4
    $region2: #{tpu_custom_call.1} parent=1 // loop_pre_header
      _
    $region3: #{tpu_custom_call.1} parent=1 // loop_header
      %s18 = sphi 0, %s22
      %p19 = scmp.ge.s32.totalorder %s18, 4
      %s28 = sphi 0, %s30
      %s31 = sphi 0, %s28
      %s32 = sphi 0, %s31
      %s48 = sphi 0, %s32
      %s52 = sphi 0, %s52
      %s54 = sphi 0, %s52
      %s55 = sphi 0, %s54
      %s69 = sphi 0, %s55
      %s73 = sphi 0, %s73
      %s75 = sphi 0, %s73
      %s76 = sphi 0, %s75
      %s90 = sphi 0, %s76
      %s94 = sphi 0, %s94
      %s96 = sphi 0, %s94
      %s97 = sphi 0, %s96
      %s111 = sphi 0, %s97
      %s117 = sphi 0, %s119
      %s120 = sphi 0, %s117
      %s121 = sphi 0, %s120
      %s137 = sphi 0, %s121
    $region4: #{tpu_custom_call.1} parent=1 // loop_header_branch
      %21 = sbr.rel (%p19) target = $region8
    $region5: #{tpu_custom_call.1} parent=1 // loop_body
      %s23 = ssub.s32 %s18, 1
      %s24 = ssub.s32 %s18, 2
      %s25 = sadd.s32 %s18, 1
      %s26 = ssub.s32 %s18, %s25
      %p27 = scmp.eq.s32.totalorder %s26, 0
      %s29 = sadd.s32 %s28, 1
      %s30 = scalar_select %p27, %s28, %s29
      %p33 = pneg %p27
      %p34 = scmp.eq.s32.totalorder %s18, 1
      %p35 = por %p33, %p34
      %p36 = scmp.ne.s32.totalorder %s28, %s31
      %p37 = scmp.eq.s32.totalorder %s18, 0
      %p38 = por %p36, %p37
      %p39 = scmp.ne.s32.totalorder %s28, %s31
      %p40 = scmp.eq.s32.totalorder %s23, 1
      %p41 = por %p39, %p40
      %p42 = scmp.ne.s32.totalorder %s31, %s32
      %p43 = scmp.eq.s32.totalorder %s23, 0
      %p44 = por %p42, %p43
      %p45 = scmp.ne.s32.totalorder %s31, %s32
      %p46 = scmp.eq.s32.totalorder %s24, 1
      %p47 = por %p45, %p46
      %p49 = scmp.ne.s32.totalorder %s32, %s48
      %p50 = scmp.eq.s32.totalorder %s24, 0
      %p51 = por %p49, %p50
      %s53 = sadd.s32 %s52, 1
      %p56 = scmp.eq.s32.totalorder %s18, 1
      %p57 = scmp.ne.s32.totalorder %s52, %s54
      %p58 = scmp.eq.s32.totalorder %s18, 0
      %p59 = por %p57, %p58
      %p60 = scmp.ne.s32.totalorder %s52, %s54
      %p61 = scmp.eq.s32.totalorder %s23, 1
      %p62 = por %p60, %p61
      %p63 = scmp.ne.s32.totalorder %s54, %s55
      %p64 = scmp.eq.s32.totalorder %s23, 0
      %p65 = por %p63, %p64
      %p66 = scmp.ne.s32.totalorder %s54, %s55
      %p67 = scmp.eq.s32.totalorder %s24, 1
      %p68 = por %p66, %p67
      %p70 = scmp.ne.s32.totalorder %s55, %s69
      %p71 = scmp.eq.s32.totalorder %s24, 0
      %p72 = por %p70, %p71
      %s74 = sadd.s32 %s73, 1
      %p77 = scmp.eq.s32.totalorder %s18, 1
      %p78 = scmp.ne.s32.totalorder %s73, %s75
      %p79 = scmp.eq.s32.totalorder %s18, 0
      %p80 = por %p78, %p79
      %p81 = scmp.ne.s32.totalorder %s73, %s75
      %p82 = scmp.eq.s32.totalorder %s23, 1
      %p83 = por %p81, %p82
      %p84 = scmp.ne.s32.totalorder %s75, %s76
      %p85 = scmp.eq.s32.totalorder %s23, 0
      %p86 = por %p84, %p85
      %p87 = scmp.ne.s32.totalorder %s75, %s76
      %p88 = scmp.eq.s32.totalorder %s24, 1
      %p89 = por %p87, %p88
      %p91 = scmp.ne.s32.totalorder %s76, %s90
      %p92 = scmp.eq.s32.totalorder %s24, 0
      %p93 = por %p91, %p92
      %s95 = sadd.s32 %s94, 1
      %p98 = scmp.eq.s32.totalorder %s18, 1
      %p99 = scmp.ne.s32.totalorder %s94, %s96
      %p100 = scmp.eq.s32.totalorder %s18, 0
      %p101 = por %p99, %p100
      %p102 = scmp.ne.s32.totalorder %s94, %s96
      %p103 = scmp.eq.s32.totalorder %s23, 1
      %p104 = por %p102, %p103
      %p105 = scmp.ne.s32.totalorder %s96, %s97
      %p106 = scmp.eq.s32.totalorder %s23, 0
      %p107 = por %p105, %p106
      %p108 = scmp.ne.s32.totalorder %s96, %s97
      %p109 = scmp.eq.s32.totalorder %s24, 1
      %p110 = por %p108, %p109
      %p112 = scmp.ne.s32.totalorder %s97, %s111
      %p113 = scmp.eq.s32.totalorder %s24, 0
      %p114 = por %p112, %p113
      %s115 = ssub.s32 %s18, %s25
      %p116 = scmp.eq.s32.totalorder %s115, 0
      %s118 = sadd.s32 %s117, 1
      %s119 = scalar_select %p116, %s117, %s118
      %p122 = pneg %p116
      %p123 = scmp.eq.s32.totalorder %s18, 1
      %p124 = por %p122, %p123
      %p125 = scmp.ne.s32.totalorder %s117, %s120
      %p126 = scmp.eq.s32.totalorder %s18, 0
      %p127 = por %p125, %p126
      %p128 = scmp.ne.s32.totalorder %s117, %s120
      %p129 = scmp.eq.s32.totalorder %s23, 1
      %p130 = por %p128, %p129
      %p131 = scmp.ne.s32.totalorder %s120, %s121
      %p132 = scmp.eq.s32.totalorder %s23, 0
      %p133 = por %p131, %p132
      %p134 = scmp.ne.s32.totalorder %s120, %s121
      %p135 = scmp.eq.s32.totalorder %s24, 1
      %p136 = por %p134, %p135
      %p138 = scmp.ne.s32.totalorder %s121, %s137
      %p139 = scmp.eq.s32.totalorder %s24, 0
      %p140 = por %p138, %p139
      %p141 = scmp.le.s32.totalorder 1, %s18
      %p142 = scmp.lt.s32.totalorder %s18, 3
      %p143 = pnand %p141, %p142
      %p144 = pneg %p143
      // Predicated region
      $region9: #{tpu_custom_call.1} parent=5 // pred_check
        _
      $region10: #{tpu_custom_call.1} parent=5 // pred_check_branch
        %146 = sbr.rel (%p143) target = $region12
      $region11: #{tpu_custom_call.1} parent=5 // pred_region
        %s147 = ssub.s32 %s18, 1
        // Predicated region
        $region13: #{tpu_custom_call.1} parent=11 // pred_check
          %p148 = pneg %p65
        $region14: #{tpu_custom_call.1} parent=11 // pred_check_branch
          %150 = sbr.rel (%p148) target = $region16
        $region15: #{tpu_custom_call.1} parent=11 // pred_region
          %s152 = ssub.s32 6144, 6144
          %153 = vsyncadd [#allocation6], %s152
          %s154 = sshll.u32 [#allocation5], 4
          %s155 = int_to_ptr.vmem [resolvable:$true] %s154
          %160 = dma.hbm_to_vmem [thread:$0]  %s1, 6144, %s155, [#allocation6], 64, 64, 4
        $region16: #{tpu_custom_call.1} parent=11 // pred_fallthru
          _
        // Predicated region
        $region17: #{tpu_custom_call.1} parent=11 // pred_check
          %p161 = pneg %p86
        $region18: #{tpu_custom_call.1} parent=11 // pred_check_branch
          %163 = sbr.rel (%p161) target = $region20
        $region19: #{tpu_custom_call.1} parent=11 // pred_region
          %s165 = ssub.s32 16, 16
          %166 = vsyncadd [#allocation6], %s165
          %s168 = sshll.u32 [#allocation7], 4
          %s169 = int_to_ptr.vmem [resolvable:$true] %s168
          %171 = dma.hbm_to_vmem [thread:$0]  %s2, 16, %s169, [#allocation6]
        $region20: #{tpu_custom_call.1} parent=11 // pred_fallthru
          _
        // Predicated region
        $region21: #{tpu_custom_call.1} parent=11 // pred_check
          %p172 = pneg %p107
        $region22: #{tpu_custom_call.1} parent=11 // pred_check_branch
          %174 = sbr.rel (%p172) target = $region24
        $region23: #{tpu_custom_call.1} parent=11 // pred_region
          %s176 = ssub.s32 16, 16
          %177 = vsyncadd [#allocation9], %s176
          %s179 = sshll.u32 [#allocation8], 4
          %s180 = int_to_ptr.vmem [resolvable:$true] %s179
          %182 = dma.hbm_to_vmem [thread:$0]  %s3, 16, %s180, [#allocation9]
        $region24: #{tpu_custom_call.1} parent=11 // pred_fallthru
          _
      $region12: #{tpu_custom_call.1} parent=5 // pred_fallthru
        _
      %p183 = scmp.lt.s32.totalorder %s18, 2
      // Predicated region
      $region25: #{tpu_custom_call.1} parent=5 // pred_check
        %p184 = pneg %p183
      $region26: #{tpu_custom_call.1} parent=5 // pred_check_branch
        %186 = sbr.rel (%p184) target = $region28
      $region27: #{tpu_custom_call.1} parent=5 // pred_region
        // Predicated region
        $region29: #{tpu_custom_call.1} parent=27 // pred_check
          %p187 = pneg %p38
        $region30: #{tpu_custom_call.1} parent=27 // pred_check_branch
          %189 = sbr.rel (%p187) target = $region32
        $region31: #{tpu_custom_call.1} parent=27 // pred_region
          %s190 = sand.u32 %s28, 1
          %s191 = scalar_lea.sflag [#allocation3], %s190
          %s192 = sand.u32 %s28, 1
          %s193 = smul.addr %s192, 3072
          %s194 = scalar_lea.vmem [#allocation2], %s193
          %s195 = smul.u32 8, %s18
          %s197 = ssub.s32 49152, 49152
          %198 = vsyncadd %s191, %s197
          %s199 = smul.addr %s195, 96
          %s200 = smul.addr %s199, 64
          %s201 = scalar_lea.hbm %s0, %s200
          %s202 = sshll.u32 %s194, 4
          %s203 = int_to_ptr.vmem [resolvable:$true] %s202
          %208 = dma.hbm_to_vmem [thread:$0]  %s201, 49152, %s203, %s191, 384, 384, 24
        $region32: #{tpu_custom_call.1} parent=27 // pred_fallthru
          _
      $region28: #{tpu_custom_call.1} parent=5 // pred_fallthru
        _
      %p209 = scmp.le.s32.totalorder 1, %s18
      %p210 = scmp.lt.s32.totalorder %s18, 3
      %p211 = pnand %p209, %p210
      %p212 = pneg %p211
      // Predicated region
      $region33: #{tpu_custom_call.1} parent=5 // pred_check
        _
      $region34: #{tpu_custom_call.1} parent=5 // pred_check_branch
        %214 = sbr.rel (%p211) target = $region36
      $region35: #{tpu_custom_call.1} parent=5 // pred_region
        %s215 = ssub.s32 %s18, 1
        %s216 = sand.u32 %s31, 1
        %s217 = scalar_lea.sflag [#allocation3], %s216
        %s218 = sand.u32 %s31, 1
        %s219 = smul.addr %s218, 3072
        %s220 = scalar_lea.vmem [#allocation2], %s219
        // Predicated region
        $region37: #{tpu_custom_call.1} parent=35 // pred_check
          %p221 = pneg %p44
        $region38: #{tpu_custom_call.1} parent=35 // pred_check_branch
          %223 = sbr.rel (%p221) target = $region40
        $region39: #{tpu_custom_call.1} parent=35 // pred_region
          %224 = dma.done %s217, 49152
        $region40: #{tpu_custom_call.1} parent=35 // pred_fallthru
          _
        // Predicated region
        $region41: #{tpu_custom_call.1} parent=35 // pred_check
          %p225 = pneg %p65
        $region42: #{tpu_custom_call.1} parent=35 // pred_check_branch
          %227 = sbr.rel (%p225) target = $region44
        $region43: #{tpu_custom_call.1} parent=35 // pred_region
          %228 = dma.done [#allocation6], 6144
        $region44: #{tpu_custom_call.1} parent=35 // pred_fallthru
          _
        // Predicated region
        $region45: #{tpu_custom_call.1} parent=35 // pred_check
          %p229 = pneg %p86
        $region46: #{tpu_custom_call.1} parent=35 // pred_check_branch
          %231 = sbr.rel (%p229) target = $region48
        $region47: #{tpu_custom_call.1} parent=35 // pred_region
          %232 = dma.done [#allocation6], 16
        $region48: #{tpu_custom_call.1} parent=35 // pred_fallthru
          _
        // Predicated region
        $region49: #{tpu_custom_call.1} parent=35 // pred_check
          %p233 = pneg %p107
        $region50: #{tpu_custom_call.1} parent=35 // pred_check_branch
          %235 = sbr.rel (%p233) target = $region52
        $region51: #{tpu_custom_call.1} parent=35 // pred_region
          %236 = dma.done [#allocation9], 16
        $region52: #{tpu_custom_call.1} parent=35 // pred_fallthru
          _
        %s237 = sand.u32 %s31, 1
        %s238 = scalar_lea.sflag [#allocation3], %s237
        %s239 = sand.u32 %s31, 1
        %s240 = smul.addr %s239, 3072
        %s241 = scalar_lea.vmem [#allocation2], %s240
        %p242 = pneg %p44
        %p243 = pneg %p41
        %p244 = pneg %p65
        %p245 = pneg %p62
        %p246 = pneg %p86
        %p247 = pneg %p83
        %p248 = pneg %p107
        %p249 = pneg %p104
        %p250 = pneg %p133
        %p251 = pneg %p130
        %s252 = sand.u32 %s120, 1
        %s253 = scalar_lea.sflag [#allocation4], %s252
        %s254 = sand.u32 %s120, 1
        %s255 = smul.addr %s254, 8
        %s256 = scalar_lea.vmem [#allocation10], %s255
        %s257 = smul.u32 8, %s23
        %v259 = vld [vmem:[%s220] sm:$0xff]
        %v260 = vld [vmem:[%s220 + $0x8] sm:$0xff]
        %v261 = vld [vmem:[%s220 + $0x10] sm:$0xff]
        %v262 = vld [vmem:[%s220 + $0x18] sm:$0xff]
        %v263 = vld [vmem:[%s220 + $0x20] sm:$0xff]
        %v264 = vld [vmem:[%s220 + $0x28] sm:$0xff]
        %v265 = vld [vmem:[%s220 + $0x30] sm:$0xff]
        %v266 = vld [vmem:[%s220 + $0x38] sm:$0xff]
        %v267 = vld [vmem:[%s220 + $0x40] sm:$0xff]
        %v268 = vld [vmem:[%s220 + $0x48] sm:$0xff]
        %v269 = vld [vmem:[%s220 + $0x50] sm:$0xff]
        %v270 = vld [vmem:[%s220 + $0x58] sm:$0xff]
        %v271 = vld [vmem:[%s220 + $0x60] sm:$0xff]
        %v272 = vld [vmem:[%s220 + $0x68] sm:$0xff]
        %v273 = vld [vmem:[%s220 + $0x70] sm:$0xff]
        %v274 = vld [vmem:[%s220 + $0x78] sm:$0xff]
        %v275 = vld [vmem:[%s220 + $0x80] sm:$0xff]
        %v276 = vld [vmem:[%s220 + $0x88] sm:$0xff]
        %v277 = vld [vmem:[%s220 + $0x90] sm:$0xff]
        %v278 = vld [vmem:[%s220 + $0x98] sm:$0xff]
        %v279 = vld [vmem:[%s220 + $0xa0] sm:$0xff]
        %v280 = vld [vmem:[%s220 + $0xa8] sm:$0xff]
        %v281 = vld [vmem:[%s220 + $0xb0] sm:$0xff]
        %v282 = vld [vmem:[%s220 + $0xb8] sm:$0xff]
        %v283 = vld [vmem:[%s220 + $0xc0] sm:$0xff]
        %v284 = vld [vmem:[%s220 + $0xc8] sm:$0xff]
        %v285 = vld [vmem:[%s220 + $0xd0] sm:$0xff]
        %v286 = vld [vmem:[%s220 + $0xd8] sm:$0xff]
        %v287 = vld [vmem:[%s220 + $0xe0] sm:$0xff]
        %v288 = vld [vmem:[%s220 + $0xe8] sm:$0xff]
        %v289 = vld [vmem:[%s220 + $0xf0] sm:$0xff]
        %v290 = vld [vmem:[%s220 + $0xf8] sm:$0xff]
        %v291 = vld [vmem:[%s220 + $0x100] sm:$0xff]
        %v292 = vld [vmem:[%s220 + $0x108] sm:$0xff]
        %v293 = vld [vmem:[%s220 + $0x110] sm:$0xff]
        %v294 = vld [vmem:[%s220 + $0x118] sm:$0xff]
        %v295 = vld [vmem:[%s220 + $0x120] sm:$0xff]
        %v296 = vld [vmem:[%s220 + $0x128] sm:$0xff]
        %v297 = vld [vmem:[%s220 + $0x130] sm:$0xff]
        %v298 = vld [vmem:[%s220 + $0x138] sm:$0xff]
        %v299 = vld [vmem:[%s220 + $0x140] sm:$0xff]
        %v300 = vld [vmem:[%s220 + $0x148] sm:$0xff]
        %v301 = vld [vmem:[%s220 + $0x150] sm:$0xff]
        %v302 = vld [vmem:[%s220 + $0x158] sm:$0xff]
        %v303 = vld [vmem:[%s220 + $0x160] sm:$0xff]
        %v304 = vld [vmem:[%s220 + $0x168] sm:$0xff]
        %v305 = vld [vmem:[%s220 + $0x170] sm:$0xff]
        %v306 = vld [vmem:[%s220 + $0x178] sm:$0xff]
        %v307 = vld [vmem:[%s220 + $0x180] sm:$0xff]
        %v308 = vld [vmem:[%s220 + $0x188] sm:$0xff]
        %v309 = vld [vmem:[%s220 + $0x190] sm:$0xff]
        %v310 = vld [vmem:[%s220 + $0x198] sm:$0xff]
        %v311 = vld [vmem:[%s220 + $0x1a0] sm:$0xff]
        %v312 = vld [vmem:[%s220 + $0x1a8] sm:$0xff]
        %v313 = vld [vmem:[%s220 + $0x1b0] sm:$0xff]
        %v314 = vld [vmem:[%s220 + $0x1b8] sm:$0xff]
        %v315 = vld [vmem:[%s220 + $0x1c0] sm:$0xff]
        %v316 = vld [vmem:[%s220 + $0x1c8] sm:$0xff]
        %v317 = vld [vmem:[%s220 + $0x1d0] sm:$0xff]
        %v318 = vld [vmem:[%s220 + $0x1d8] sm:$0xff]
        %v319 = vld [vmem:[%s220 + $0x1e0] sm:$0xff]
        %v320 = vld [vmem:[%s220 + $0x1e8] sm:$0xff]
        %v321 = vld [vmem:[%s220 + $0x1f0] sm:$0xff]
        %v322 = vld [vmem:[%s220 + $0x1f8] sm:$0xff]
        %v323 = vld [vmem:[%s220 + $0x200] sm:$0xff]
        %v324 = vld [vmem:[%s220 + $0x208] sm:$0xff]
        %v325 = vld [vmem:[%s220 + $0x210] sm:$0xff]
        %v326 = vld [vmem:[%s220 + $0x218] sm:$0xff]
        %v327 = vld [vmem:[%s220 + $0x220] sm:$0xff]
        %v328 = vld [vmem:[%s220 + $0x228] sm:$0xff]
        %v329 = vld [vmem:[%s220 + $0x230] sm:$0xff]
        %v330 = vld [vmem:[%s220 + $0x238] sm:$0xff]
        %v331 = vld [vmem:[%s220 + $0x240] sm:$0xff]
        %v332 = vld [vmem:[%s220 + $0x248] sm:$0xff]
        %v333 = vld [vmem:[%s220 + $0x250] sm:$0xff]
        %v334 = vld [vmem:[%s220 + $0x258] sm:$0xff]
        %v335 = vld [vmem:[%s220 + $0x260] sm:$0xff]
        %v336 = vld [vmem:[%s220 + $0x268] sm:$0xff]
        %v337 = vld [vmem:[%s220 + $0x270] sm:$0xff]
        %v338 = vld [vmem:[%s220 + $0x278] sm:$0xff]
        %v339 = vld [vmem:[%s220 + $0x280] sm:$0xff]
        %v340 = vld [vmem:[%s220 + $0x288] sm:$0xff]
        %v341 = vld [vmem:[%s220 + $0x290] sm:$0xff]
        %v342 = vld [vmem:[%s220 + $0x298] sm:$0xff]
        %v343 = vld [vmem:[%s220 + $0x2a0] sm:$0xff]
        %v344 = vld [vmem:[%s220 + $0x2a8] sm:$0xff]
        %v345 = vld [vmem:[%s220 + $0x2b0] sm:$0xff]
        %v346 = vld [vmem:[%s220 + $0x2b8] sm:$0xff]
        %v347 = vld [vmem:[%s220 + $0x2c0] sm:$0xff]
        %v348 = vld [vmem:[%s220 + $0x2c8] sm:$0xff]
        %v349 = vld [vmem:[%s220 + $0x2d0] sm:$0xff]
        %v350 = vld [vmem:[%s220 + $0x2d8] sm:$0xff]
        %v351 = vld [vmem:[%s220 + $0x2e0] sm:$0xff]
        %v352 = vld [vmem:[%s220 + $0x2e8] sm:$0xff]
        %v353 = vld [vmem:[%s220 + $0x2f0] sm:$0xff]
        %v354 = vld [vmem:[%s220 + $0x2f8] sm:$0xff]
        %v355 = vld [vmem:[%s220 + $0x300] sm:$0xff]
        %v356 = vld [vmem:[%s220 + $0x308] sm:$0xff]
        %v357 = vld [vmem:[%s220 + $0x310] sm:$0xff]
        %v358 = vld [vmem:[%s220 + $0x318] sm:$0xff]
        %v359 = vld [vmem:[%s220 + $0x320] sm:$0xff]
        %v360 = vld [vmem:[%s220 + $0x328] sm:$0xff]
        %v361 = vld [vmem:[%s220 + $0x330] sm:$0xff]
        %v362 = vld [vmem:[%s220 + $0x338] sm:$0xff]
        %v363 = vld [vmem:[%s220 + $0x340] sm:$0xff]
        %v364 = vld [vmem:[%s220 + $0x348] sm:$0xff]
        %v365 = vld [vmem:[%s220 + $0x350] sm:$0xff]
        %v366 = vld [vmem:[%s220 + $0x358] sm:$0xff]
        %v367 = vld [vmem:[%s220 + $0x360] sm:$0xff]
        %v368 = vld [vmem:[%s220 + $0x368] sm:$0xff]
        %v369 = vld [vmem:[%s220 + $0x370] sm:$0xff]
        %v370 = vld [vmem:[%s220 + $0x378] sm:$0xff]
        %v371 = vld [vmem:[%s220 + $0x380] sm:$0xff]
        %v372 = vld [vmem:[%s220 + $0x388] sm:$0xff]
        %v373 = vld [vmem:[%s220 + $0x390] sm:$0xff]
        %v374 = vld [vmem:[%s220 + $0x398] sm:$0xff]
        %v375 = vld [vmem:[%s220 + $0x3a0] sm:$0xff]
        %v376 = vld [vmem:[%s220 + $0x3a8] sm:$0xff]
        %v377 = vld [vmem:[%s220 + $0x3b0] sm:$0xff]
        %v378 = vld [vmem:[%s220 + $0x3b8] sm:$0xff]
        %v379 = vld [vmem:[%s220 + $0x3c0] sm:$0xff]
        %v380 = vld [vmem:[%s220 + $0x3c8] sm:$0xff]
        %v381 = vld [vmem:[%s220 + $0x3d0] sm:$0xff]
        %v382 = vld [vmem:[%s220 + $0x3d8] sm:$0xff]
        %v383 = vld [vmem:[%s220 + $0x3e0] sm:$0xff]
        %v384 = vld [vmem:[%s220 + $0x3e8] sm:$0xff]
        %v385 = vld [vmem:[%s220 + $0x3f0] sm:$0xff]
        %v386 = vld [vmem:[%s220 + $0x3f8] sm:$0xff]
        %v387 = vld [vmem:[%s220 + $0x400] sm:$0xff]
        %v388 = vld [vmem:[%s220 + $0x408] sm:$0xff]
        %v389 = vld [vmem:[%s220 + $0x410] sm:$0xff]
        %v390 = vld [vmem:[%s220 + $0x418] sm:$0xff]
        %v391 = vld [vmem:[%s220 + $0x420] sm:$0xff]
        %v392 = vld [vmem:[%s220 + $0x428] sm:$0xff]
        %v393 = vld [vmem:[%s220 + $0x430] sm:$0xff]
        %v394 = vld [vmem:[%s220 + $0x438] sm:$0xff]
        %v395 = vld [vmem:[%s220 + $0x440] sm:$0xff]
        %v396 = vld [vmem:[%s220 + $0x448] sm:$0xff]
        %v397 = vld [vmem:[%s220 + $0x450] sm:$0xff]
        %v398 = vld [vmem:[%s220 + $0x458] sm:$0xff]
        %v399 = vld [vmem:[%s220 + $0x460] sm:$0xff]
        %v400 = vld [vmem:[%s220 + $0x468] sm:$0xff]
        %v401 = vld [vmem:[%s220 + $0x470] sm:$0xff]
        %v402 = vld [vmem:[%s220 + $0x478] sm:$0xff]
        %v403 = vld [vmem:[%s220 + $0x480] sm:$0xff]
        %v404 = vld [vmem:[%s220 + $0x488] sm:$0xff]
        %v405 = vld [vmem:[%s220 + $0x490] sm:$0xff]
        %v406 = vld [vmem:[%s220 + $0x498] sm:$0xff]
        %v407 = vld [vmem:[%s220 + $0x4a0] sm:$0xff]
        %v408 = vld [vmem:[%s220 + $0x4a8] sm:$0xff]
        %v409 = vld [vmem:[%s220 + $0x4b0] sm:$0xff]
        %v410 = vld [vmem:[%s220 + $0x4b8] sm:$0xff]
        %v411 = vld [vmem:[%s220 + $0x4c0] sm:$0xff]
        %v412 = vld [vmem:[%s220 + $0x4c8] sm:$0xff]
        %v413 = vld [vmem:[%s220 + $0x4d0] sm:$0xff]
        %v414 = vld [vmem:[%s220 + $0x4d8] sm:$0xff]
        %v415 = vld [vmem:[%s220 + $0x4e0] sm:$0xff]
        %v416 = vld [vmem:[%s220 + $0x4e8] sm:$0xff]
        %v417 = vld [vmem:[%s220 + $0x4f0] sm:$0xff]
        %v418 = vld [vmem:[%s220 + $0x4f8] sm:$0xff]
        %v419 = vld [vmem:[%s220 + $0x500] sm:$0xff]
        %v420 = vld [vmem:[%s220 + $0x508] sm:$0xff]
        %v421 = vld [vmem:[%s220 + $0x510] sm:$0xff]
        %v422 = vld [vmem:[%s220 + $0x518] sm:$0xff]
        %v423 = vld [vmem:[%s220 + $0x520] sm:$0xff]
        %v424 = vld [vmem:[%s220 + $0x528] sm:$0xff]
        %v425 = vld [vmem:[%s220 + $0x530] sm:$0xff]
        %v426 = vld [vmem:[%s220 + $0x538] sm:$0xff]
        %v427 = vld [vmem:[%s220 + $0x540] sm:$0xff]
        %v428 = vld [vmem:[%s220 + $0x548] sm:$0xff]
        %v429 = vld [vmem:[%s220 + $0x550] sm:$0xff]
        %v430 = vld [vmem:[%s220 + $0x558] sm:$0xff]
        %v431 = vld [vmem:[%s220 + $0x560] sm:$0xff]
        %v432 = vld [vmem:[%s220 + $0x568] sm:$0xff]
        %v433 = vld [vmem:[%s220 + $0x570] sm:$0xff]
        %v434 = vld [vmem:[%s220 + $0x578] sm:$0xff]
        %v435 = vld [vmem:[%s220 + $0x580] sm:$0xff]
        %v436 = vld [vmem:[%s220 + $0x588] sm:$0xff]
        %v437 = vld [vmem:[%s220 + $0x590] sm:$0xff]
        %v438 = vld [vmem:[%s220 + $0x598] sm:$0xff]
        %v439 = vld [vmem:[%s220 + $0x5a0] sm:$0xff]
        %v440 = vld [vmem:[%s220 + $0x5a8] sm:$0xff]
        %v441 = vld [vmem:[%s220 + $0x5b0] sm:$0xff]
        %v442 = vld [vmem:[%s220 + $0x5b8] sm:$0xff]
        %v443 = vld [vmem:[%s220 + $0x5c0] sm:$0xff]
        %v444 = vld [vmem:[%s220 + $0x5c8] sm:$0xff]
        %v445 = vld [vmem:[%s220 + $0x5d0] sm:$0xff]
        %v446 = vld [vmem:[%s220 + $0x5d8] sm:$0xff]
        %v447 = vld [vmem:[%s220 + $0x5e0] sm:$0xff]
        %v448 = vld [vmem:[%s220 + $0x5e8] sm:$0xff]
        %v449 = vld [vmem:[%s220 + $0x5f0] sm:$0xff]
        %v450 = vld [vmem:[%s220 + $0x5f8] sm:$0xff]
        %v451 = vld [vmem:[%s220 + $0x600] sm:$0xff]
        %v452 = vld [vmem:[%s220 + $0x608] sm:$0xff]
        %v453 = vld [vmem:[%s220 + $0x610] sm:$0xff]
        %v454 = vld [vmem:[%s220 + $0x618] sm:$0xff]
        %v455 = vld [vmem:[%s220 + $0x620] sm:$0xff]
        %v456 = vld [vmem:[%s220 + $0x628] sm:$0xff]
        %v457 = vld [vmem:[%s220 + $0x630] sm:$0xff]
        %v458 = vld [vmem:[%s220 + $0x638] sm:$0xff]
        %v459 = vld [vmem:[%s220 + $0x640] sm:$0xff]
        %v460 = vld [vmem:[%s220 + $0x648] sm:$0xff]
        %v461 = vld [vmem:[%s220 + $0x650] sm:$0xff]
        %v462 = vld [vmem:[%s220 + $0x658] sm:$0xff]
        %v463 = vld [vmem:[%s220 + $0x660] sm:$0xff]
        %v464 = vld [vmem:[%s220 + $0x668] sm:$0xff]
        %v465 = vld [vmem:[%s220 + $0x670] sm:$0xff]
        %v466 = vld [vmem:[%s220 + $0x678] sm:$0xff]
        %v467 = vld [vmem:[%s220 + $0x680] sm:$0xff]
        %v468 = vld [vmem:[%s220 + $0x688] sm:$0xff]
        %v469 = vld [vmem:[%s220 + $0x690] sm:$0xff]
        %v470 = vld [vmem:[%s220 + $0x698] sm:$0xff]
        %v471 = vld [vmem:[%s220 + $0x6a0] sm:$0xff]
        %v472 = vld [vmem:[%s220 + $0x6a8] sm:$0xff]
        %v473 = vld [vmem:[%s220 + $0x6b0] sm:$0xff]
        %v474 = vld [vmem:[%s220 + $0x6b8] sm:$0xff]
        %v475 = vld [vmem:[%s220 + $0x6c0] sm:$0xff]
        %v476 = vld [vmem:[%s220 + $0x6c8] sm:$0xff]
        %v477 = vld [vmem:[%s220 + $0x6d0] sm:$0xff]
        %v478 = vld [vmem:[%s220 + $0x6d8] sm:$0xff]
        %v479 = vld [vmem:[%s220 + $0x6e0] sm:$0xff]
        %v480 = vld [vmem:[%s220 + $0x6e8] sm:$0xff]
        %v481 = vld [vmem:[%s220 + $0x6f0] sm:$0xff]
        %v482 = vld [vmem:[%s220 + $0x6f8] sm:$0xff]
        %v483 = vld [vmem:[%s220 + $0x700] sm:$0xff]
        %v484 = vld [vmem:[%s220 + $0x708] sm:$0xff]
        %v485 = vld [vmem:[%s220 + $0x710] sm:$0xff]
        %v486 = vld [vmem:[%s220 + $0x718] sm:$0xff]
        %v487 = vld [vmem:[%s220 + $0x720] sm:$0xff]
        %v488 = vld [vmem:[%s220 + $0x728] sm:$0xff]
        %v489 = vld [vmem:[%s220 + $0x730] sm:$0xff]
        %v490 = vld [vmem:[%s220 + $0x738] sm:$0xff]
        %v491 = vld [vmem:[%s220 + $0x740] sm:$0xff]
        %v492 = vld [vmem:[%s220 + $0x748] sm:$0xff]
        %v493 = vld [vmem:[%s220 + $0x750] sm:$0xff]
        %v494 = vld [vmem:[%s220 + $0x758] sm:$0xff]
        %v495 = vld [vmem:[%s220 + $0x760] sm:$0xff]
        %v496 = vld [vmem:[%s220 + $0x768] sm:$0xff]
        %v497 = vld [vmem:[%s220 + $0x770] sm:$0xff]
        %v498 = vld [vmem:[%s220 + $0x778] sm:$0xff]
        %v499 = vld [vmem:[%s220 + $0x780] sm:$0xff]
        %v500 = vld [vmem:[%s220 + $0x788] sm:$0xff]
        %v501 = vld [vmem:[%s220 + $0x790] sm:$0xff]
        %v502 = vld [vmem:[%s220 + $0x798] sm:$0xff]
        %v503 = vld [vmem:[%s220 + $0x7a0] sm:$0xff]
        %v504 = vld [vmem:[%s220 + $0x7a8] sm:$0xff]
        %v505 = vld [vmem:[%s220 + $0x7b0] sm:$0xff]
        %v506 = vld [vmem:[%s220 + $0x7b8] sm:$0xff]
        %v507 = vld [vmem:[%s220 + $0x7c0] sm:$0xff]
        %v508 = vld [vmem:[%s220 + $0x7c8] sm:$0xff]
        %v509 = vld [vmem:[%s220 + $0x7d0] sm:$0xff]
        %v510 = vld [vmem:[%s220 + $0x7d8] sm:$0xff]
        %v511 = vld [vmem:[%s220 + $0x7e0] sm:$0xff]
        %v512 = vld [vmem:[%s220 + $0x7e8] sm:$0xff]
        %v513 = vld [vmem:[%s220 + $0x7f0] sm:$0xff]
        %v514 = vld [vmem:[%s220 + $0x7f8] sm:$0xff]
        %v515 = vld [vmem:[%s220 + $0x800] sm:$0xff]
        %v516 = vld [vmem:[%s220 + $0x808] sm:$0xff]
        %v517 = vld [vmem:[%s220 + $0x810] sm:$0xff]
        %v518 = vld [vmem:[%s220 + $0x818] sm:$0xff]
        %v519 = vld [vmem:[%s220 + $0x820] sm:$0xff]
        %v520 = vld [vmem:[%s220 + $0x828] sm:$0xff]
        %v521 = vld [vmem:[%s220 + $0x830] sm:$0xff]
        %v522 = vld [vmem:[%s220 + $0x838] sm:$0xff]
        %v523 = vld [vmem:[%s220 + $0x840] sm:$0xff]
        %v524 = vld [vmem:[%s220 + $0x848] sm:$0xff]
        %v525 = vld [vmem:[%s220 + $0x850] sm:$0xff]
        %v526 = vld [vmem:[%s220 + $0x858] sm:$0xff]
        %v527 = vld [vmem:[%s220 + $0x860] sm:$0xff]
        %v528 = vld [vmem:[%s220 + $0x868] sm:$0xff]
        %v529 = vld [vmem:[%s220 + $0x870] sm:$0xff]
        %v530 = vld [vmem:[%s220 + $0x878] sm:$0xff]
        %v531 = vld [vmem:[%s220 + $0x880] sm:$0xff]
        %v532 = vld [vmem:[%s220 + $0x888] sm:$0xff]
        %v533 = vld [vmem:[%s220 + $0x890] sm:$0xff]
        %v534 = vld [vmem:[%s220 + $0x898] sm:$0xff]
        %v535 = vld [vmem:[%s220 + $0x8a0] sm:$0xff]
        %v536 = vld [vmem:[%s220 + $0x8a8] sm:$0xff]
        %v537 = vld [vmem:[%s220 + $0x8b0] sm:$0xff]
        %v538 = vld [vmem:[%s220 + $0x8b8] sm:$0xff]
        %v539 = vld [vmem:[%s220 + $0x8c0] sm:$0xff]
        %v540 = vld [vmem:[%s220 + $0x8c8] sm:$0xff]
        %v541 = vld [vmem:[%s220 + $0x8d0] sm:$0xff]
        %v542 = vld [vmem:[%s220 + $0x8d8] sm:$0xff]
        %v543 = vld [vmem:[%s220 + $0x8e0] sm:$0xff]
        %v544 = vld [vmem:[%s220 + $0x8e8] sm:$0xff]
        %v545 = vld [vmem:[%s220 + $0x8f0] sm:$0xff]
        %v546 = vld [vmem:[%s220 + $0x8f8] sm:$0xff]
        %v547 = vld [vmem:[%s220 + $0x900] sm:$0xff]
        %v548 = vld [vmem:[%s220 + $0x908] sm:$0xff]
        %v549 = vld [vmem:[%s220 + $0x910] sm:$0xff]
        %v550 = vld [vmem:[%s220 + $0x918] sm:$0xff]
        %v551 = vld [vmem:[%s220 + $0x920] sm:$0xff]
        %v552 = vld [vmem:[%s220 + $0x928] sm:$0xff]
        %v553 = vld [vmem:[%s220 + $0x930] sm:$0xff]
        %v554 = vld [vmem:[%s220 + $0x938] sm:$0xff]
        %v555 = vld [vmem:[%s220 + $0x940] sm:$0xff]
        %v556 = vld [vmem:[%s220 + $0x948] sm:$0xff]
        %v557 = vld [vmem:[%s220 + $0x950] sm:$0xff]
        %v558 = vld [vmem:[%s220 + $0x958] sm:$0xff]
        %v559 = vld [vmem:[%s220 + $0x960] sm:$0xff]
        %v560 = vld [vmem:[%s220 + $0x968] sm:$0xff]
        %v561 = vld [vmem:[%s220 + $0x970] sm:$0xff]
        %v562 = vld [vmem:[%s220 + $0x978] sm:$0xff]
        %v563 = vld [vmem:[%s220 + $0x980] sm:$0xff]
        %v564 = vld [vmem:[%s220 + $0x988] sm:$0xff]
        %v565 = vld [vmem:[%s220 + $0x990] sm:$0xff]
        %v566 = vld [vmem:[%s220 + $0x998] sm:$0xff]
        %v567 = vld [vmem:[%s220 + $0x9a0] sm:$0xff]
        %v568 = vld [vmem:[%s220 + $0x9a8] sm:$0xff]
        %v569 = vld [vmem:[%s220 + $0x9b0] sm:$0xff]
        %v570 = vld [vmem:[%s220 + $0x9b8] sm:$0xff]
        %v571 = vld [vmem:[%s220 + $0x9c0] sm:$0xff]
        %v572 = vld [vmem:[%s220 + $0x9c8] sm:$0xff]
        %v573 = vld [vmem:[%s220 + $0x9d0] sm:$0xff]
        %v574 = vld [vmem:[%s220 + $0x9d8] sm:$0xff]
        %v575 = vld [vmem:[%s220 + $0x9e0] sm:$0xff]
        %v576 = vld [vmem:[%s220 + $0x9e8] sm:$0xff]
        %v577 = vld [vmem:[%s220 + $0x9f0] sm:$0xff]
        %v578 = vld [vmem:[%s220 + $0x9f8] sm:$0xff]
        %v579 = vld [vmem:[%s220 + $0xa00] sm:$0xff]
        %v580 = vld [vmem:[%s220 + $0xa08] sm:$0xff]
        %v581 = vld [vmem:[%s220 + $0xa10] sm:$0xff]
        %v582 = vld [vmem:[%s220 + $0xa18] sm:$0xff]
        %v583 = vld [vmem:[%s220 + $0xa20] sm:$0xff]
        %v584 = vld [vmem:[%s220 + $0xa28] sm:$0xff]
        %v585 = vld [vmem:[%s220 + $0xa30] sm:$0xff]
        %v586 = vld [vmem:[%s220 + $0xa38] sm:$0xff]
        %v587 = vld [vmem:[%s220 + $0xa40] sm:$0xff]
        %v588 = vld [vmem:[%s220 + $0xa48] sm:$0xff]
        %v589 = vld [vmem:[%s220 + $0xa50] sm:$0xff]
        %v590 = vld [vmem:[%s220 + $0xa58] sm:$0xff]
        %v591 = vld [vmem:[%s220 + $0xa60] sm:$0xff]
        %v592 = vld [vmem:[%s220 + $0xa68] sm:$0xff]
        %v593 = vld [vmem:[%s220 + $0xa70] sm:$0xff]
        %v594 = vld [vmem:[%s220 + $0xa78] sm:$0xff]
        %v595 = vld [vmem:[%s220 + $0xa80] sm:$0xff]
        %v596 = vld [vmem:[%s220 + $0xa88] sm:$0xff]
        %v597 = vld [vmem:[%s220 + $0xa90] sm:$0xff]
        %v598 = vld [vmem:[%s220 + $0xa98] sm:$0xff]
        %v599 = vld [vmem:[%s220 + $0xaa0] sm:$0xff]
        %v600 = vld [vmem:[%s220 + $0xaa8] sm:$0xff]
        %v601 = vld [vmem:[%s220 + $0xab0] sm:$0xff]
        %v602 = vld [vmem:[%s220 + $0xab8] sm:$0xff]
        %v603 = vld [vmem:[%s220 + $0xac0] sm:$0xff]
        %v604 = vld [vmem:[%s220 + $0xac8] sm:$0xff]
        %v605 = vld [vmem:[%s220 + $0xad0] sm:$0xff]
        %v606 = vld [vmem:[%s220 + $0xad8] sm:$0xff]
        %v607 = vld [vmem:[%s220 + $0xae0] sm:$0xff]
        %v608 = vld [vmem:[%s220 + $0xae8] sm:$0xff]
        %v609 = vld [vmem:[%s220 + $0xaf0] sm:$0xff]
        %v610 = vld [vmem:[%s220 + $0xaf8] sm:$0xff]
        %v611 = vld [vmem:[%s220 + $0xb00] sm:$0xff]
        %v612 = vld [vmem:[%s220 + $0xb08] sm:$0xff]
        %v613 = vld [vmem:[%s220 + $0xb10] sm:$0xff]
        %v614 = vld [vmem:[%s220 + $0xb18] sm:$0xff]
        %v615 = vld [vmem:[%s220 + $0xb20] sm:$0xff]
        %v616 = vld [vmem:[%s220 + $0xb28] sm:$0xff]
        %v617 = vld [vmem:[%s220 + $0xb30] sm:$0xff]
        %v618 = vld [vmem:[%s220 + $0xb38] sm:$0xff]
        %v619 = vld [vmem:[%s220 + $0xb40] sm:$0xff]
        %v620 = vld [vmem:[%s220 + $0xb48] sm:$0xff]
        %v621 = vld [vmem:[%s220 + $0xb50] sm:$0xff]
        %v622 = vld [vmem:[%s220 + $0xb58] sm:$0xff]
        %v623 = vld [vmem:[%s220 + $0xb60] sm:$0xff]
        %v624 = vld [vmem:[%s220 + $0xb68] sm:$0xff]
        %v625 = vld [vmem:[%s220 + $0xb70] sm:$0xff]
        %v626 = vld [vmem:[%s220 + $0xb78] sm:$0xff]
        %v627 = vld [vmem:[%s220 + $0xb80] sm:$0xff]
        %v628 = vld [vmem:[%s220 + $0xb88] sm:$0xff]
        %v629 = vld [vmem:[%s220 + $0xb90] sm:$0xff]
        %v630 = vld [vmem:[%s220 + $0xb98] sm:$0xff]
        %v631 = vld [vmem:[%s220 + $0xba0] sm:$0xff]
        %v632 = vld [vmem:[%s220 + $0xba8] sm:$0xff]
        %v633 = vld [vmem:[%s220 + $0xbb0] sm:$0xff]
        %v634 = vld [vmem:[%s220 + $0xbb8] sm:$0xff]
        %v635 = vld [vmem:[%s220 + $0xbc0] sm:$0xff]
        %v636 = vld [vmem:[%s220 + $0xbc8] sm:$0xff]
        %v637 = vld [vmem:[%s220 + $0xbd0] sm:$0xff]
        %v638 = vld [vmem:[%s220 + $0xbd8] sm:$0xff]
        %v639 = vld [vmem:[%s220 + $0xbe0] sm:$0xff]
        %v640 = vld [vmem:[%s220 + $0xbe8] sm:$0xff]
        %v641 = vld [vmem:[%s220 + $0xbf0] sm:$0xff]
        %v642 = vld [vmem:[%s220 + $0xbf8] sm:$0xff]
        %v643 = vld [vmem:[#allocation5] sm:$0xf]
        %v644 = vld [vmem:[#allocation5 + $0x4] sm:$0xf]
        %v645 = vld [vmem:[#allocation5 + $0x8] sm:$0xf]
        %v646 = vld [vmem:[#allocation5 + $0xc] sm:$0xf]
        %v647 = vld [vmem:[#allocation5 + $0x10] sm:$0xf]
        %v648 = vld [vmem:[#allocation5 + $0x14] sm:$0xf]
        %v649 = vld [vmem:[#allocation5 + $0x18] sm:$0xf]
        %v650 = vld [vmem:[#allocation5 + $0x1c] sm:$0xf]
        %v651 = vld [vmem:[#allocation5 + $0x20] sm:$0xf]
        %v652 = vld [vmem:[#allocation5 + $0x24] sm:$0xf]
        %v653 = vld [vmem:[#allocation5 + $0x28] sm:$0xf]
        %v654 = vld [vmem:[#allocation5 + $0x2c] sm:$0xf]
        %v655 = vld [vmem:[#allocation5 + $0x30] sm:$0xf]
        %v656 = vld [vmem:[#allocation5 + $0x34] sm:$0xf]
        %v657 = vld [vmem:[#allocation5 + $0x38] sm:$0xf]
        %v658 = vld [vmem:[#allocation5 + $0x3c] sm:$0xf]
        %v659 = vld [vmem:[#allocation5 + $0x40] sm:$0xf]
        %v660 = vld [vmem:[#allocation5 + $0x44] sm:$0xf]
        %v661 = vld [vmem:[#allocation5 + $0x48] sm:$0xf]
        %v662 = vld [vmem:[#allocation5 + $0x4c] sm:$0xf]
        %v663 = vld [vmem:[#allocation5 + $0x50] sm:$0xf]
        %v664 = vld [vmem:[#allocation5 + $0x54] sm:$0xf]
        %v665 = vld [vmem:[#allocation5 + $0x58] sm:$0xf]
        %v666 = vld [vmem:[#allocation5 + $0x5c] sm:$0xf]
        %v667 = vld [vmem:[#allocation5 + $0x60] sm:$0xf]
        %v668 = vld [vmem:[#allocation5 + $0x64] sm:$0xf]
        %v669 = vld [vmem:[#allocation5 + $0x68] sm:$0xf]
        %v670 = vld [vmem:[#allocation5 + $0x6c] sm:$0xf]
        %v671 = vld [vmem:[#allocation5 + $0x70] sm:$0xf]
        %v672 = vld [vmem:[#allocation5 + $0x74] sm:$0xf]
        %v673 = vld [vmem:[#allocation5 + $0x78] sm:$0xf]
        %v674 = vld [vmem:[#allocation5 + $0x7c] sm:$0xf]
        %v675 = vld [vmem:[#allocation5 + $0x80] sm:$0xf]
        %v676 = vld [vmem:[#allocation5 + $0x84] sm:$0xf]
        %v677 = vld [vmem:[#allocation5 + $0x88] sm:$0xf]
        %v678 = vld [vmem:[#allocation5 + $0x8c] sm:$0xf]
        %v679 = vld [vmem:[#allocation5 + $0x90] sm:$0xf]
        %v680 = vld [vmem:[#allocation5 + $0x94] sm:$0xf]
        %v681 = vld [vmem:[#allocation5 + $0x98] sm:$0xf]
        %v682 = vld [vmem:[#allocation5 + $0x9c] sm:$0xf]
        %v683 = vld [vmem:[#allocation5 + $0xa0] sm:$0xf]
        %v684 = vld [vmem:[#allocation5 + $0xa4] sm:$0xf]
        %v685 = vld [vmem:[#allocation5 + $0xa8] sm:$0xf]
        %v686 = vld [vmem:[#allocation5 + $0xac] sm:$0xf]
        %v687 = vld [vmem:[#allocation5 + $0xb0] sm:$0xf]
        %v688 = vld [vmem:[#allocation5 + $0xb4] sm:$0xf]
        %v689 = vld [vmem:[#allocation5 + $0xb8] sm:$0xf]
        %v690 = vld [vmem:[#allocation5 + $0xbc] sm:$0xf]
        %v691 = vld [vmem:[#allocation5 + $0xc0] sm:$0xf]
        %v692 = vld [vmem:[#allocation5 + $0xc4] sm:$0xf]
        %v693 = vld [vmem:[#allocation5 + $0xc8] sm:$0xf]
        %v694 = vld [vmem:[#allocation5 + $0xcc] sm:$0xf]
        %v695 = vld [vmem:[#allocation5 + $0xd0] sm:$0xf]
        %v696 = vld [vmem:[#allocation5 + $0xd4] sm:$0xf]
        %v697 = vld [vmem:[#allocation5 + $0xd8] sm:$0xf]
        %v698 = vld [vmem:[#allocation5 + $0xdc] sm:$0xf]
        %v699 = vld [vmem:[#allocation5 + $0xe0] sm:$0xf]
        %v700 = vld [vmem:[#allocation5 + $0xe4] sm:$0xf]
        %v701 = vld [vmem:[#allocation5 + $0xe8] sm:$0xf]
        %v702 = vld [vmem:[#allocation5 + $0xec] sm:$0xf]
        %v703 = vld [vmem:[#allocation5 + $0xf0] sm:$0xf]
        %v704 = vld [vmem:[#allocation5 + $0xf4] sm:$0xf]
        %v705 = vld [vmem:[#allocation5 + $0xf8] sm:$0xf]
        %v706 = vld [vmem:[#allocation5 + $0xfc] sm:$0xf]
        %v707 = vld [vmem:[#allocation5 + $0x100] sm:$0xf]
        %v708 = vld [vmem:[#allocation5 + $0x104] sm:$0xf]
        %v709 = vld [vmem:[#allocation5 + $0x108] sm:$0xf]
        %v710 = vld [vmem:[#allocation5 + $0x10c] sm:$0xf]
        %v711 = vld [vmem:[#allocation5 + $0x110] sm:$0xf]
        %v712 = vld [vmem:[#allocation5 + $0x114] sm:$0xf]
        %v713 = vld [vmem:[#allocation5 + $0x118] sm:$0xf]
        %v714 = vld [vmem:[#allocation5 + $0x11c] sm:$0xf]
        %v715 = vld [vmem:[#allocation5 + $0x120] sm:$0xf]
        %v716 = vld [vmem:[#allocation5 + $0x124] sm:$0xf]
        %v717 = vld [vmem:[#allocation5 + $0x128] sm:$0xf]
        %v718 = vld [vmem:[#allocation5 + $0x12c] sm:$0xf]
        %v719 = vld [vmem:[#allocation5 + $0x130] sm:$0xf]
        %v720 = vld [vmem:[#allocation5 + $0x134] sm:$0xf]
        %v721 = vld [vmem:[#allocation5 + $0x138] sm:$0xf]
        %v722 = vld [vmem:[#allocation5 + $0x13c] sm:$0xf]
        %v723 = vld [vmem:[#allocation5 + $0x140] sm:$0xf]
        %v724 = vld [vmem:[#allocation5 + $0x144] sm:$0xf]
        %v725 = vld [vmem:[#allocation5 + $0x148] sm:$0xf]
        %v726 = vld [vmem:[#allocation5 + $0x14c] sm:$0xf]
        %v727 = vld [vmem:[#allocation5 + $0x150] sm:$0xf]
        %v728 = vld [vmem:[#allocation5 + $0x154] sm:$0xf]
        %v729 = vld [vmem:[#allocation5 + $0x158] sm:$0xf]
        %v730 = vld [vmem:[#allocation5 + $0x15c] sm:$0xf]
        %v731 = vld [vmem:[#allocation5 + $0x160] sm:$0xf]
        %v732 = vld [vmem:[#allocation5 + $0x164] sm:$0xf]
        %v733 = vld [vmem:[#allocation5 + $0x168] sm:$0xf]
        %v734 = vld [vmem:[#allocation5 + $0x16c] sm:$0xf]
        %v735 = vld [vmem:[#allocation5 + $0x170] sm:$0xf]
        %v736 = vld [vmem:[#allocation5 + $0x174] sm:$0xf]
        %v737 = vld [vmem:[#allocation5 + $0x178] sm:$0xf]
        %v738 = vld [vmem:[#allocation5 + $0x17c] sm:$0xf]
        %v739 = vld [vmem:[#allocation7] sm:$0x1]
        %v741 = vlaneseq
        %v742 = vshrl.u32 %v741, 7
        %v743 = vsub.s32 0, %v742
        %v744 = vrot.slane %v739, %v743
        %v1130 = vunpack.c.l.b16 %v259
        %v1131 = vunpack.c.h.b16 %v259
        %v1132 = vunpack.c.l.b16 %v260
        %v1133 = vunpack.c.h.b16 %v260
        %v1134 = vunpack.c.l.b16 %v261
        %v1135 = vunpack.c.h.b16 %v261
        %v1136 = vunpack.c.l.b16 %v262
        %v1137 = vunpack.c.h.b16 %v262
        %v1138 = vunpack.c.l.b16 %v263
        %v1139 = vunpack.c.h.b16 %v263
        %v1140 = vunpack.c.l.b16 %v264
        %v1141 = vunpack.c.h.b16 %v264
        %v1142 = vunpack.c.l.b16 %v265
        %v1143 = vunpack.c.h.b16 %v265
        %v1144 = vunpack.c.l.b16 %v266
        %v1145 = vunpack.c.h.b16 %v266
        %v1146 = vunpack.c.l.b16 %v267
        %v1147 = vunpack.c.h.b16 %v267
        %v1148 = vunpack.c.l.b16 %v268
        %v1149 = vunpack.c.h.b16 %v268
        %v1150 = vunpack.c.l.b16 %v269
        %v1151 = vunpack.c.h.b16 %v269
        %v1152 = vunpack.c.l.b16 %v270
        %v1153 = vunpack.c.h.b16 %v270
        %v1154 = vunpack.c.l.b16 %v271
        %v1155 = vunpack.c.h.b16 %v271
        %v1156 = vunpack.c.l.b16 %v272
        %v1157 = vunpack.c.h.b16 %v272
        %v1158 = vunpack.c.l.b16 %v273
        %v1159 = vunpack.c.h.b16 %v273
        %v1160 = vunpack.c.l.b16 %v274
        %v1161 = vunpack.c.h.b16 %v274
        %v1162 = vunpack.c.l.b16 %v275
        %v1163 = vunpack.c.h.b16 %v275
        %v1164 = vunpack.c.l.b16 %v276
        %v1165 = vunpack.c.h.b16 %v276
        %v1166 = vunpack.c.l.b16 %v277
        %v1167 = vunpack.c.h.b16 %v277
        %v1168 = vunpack.c.l.b16 %v278
        %v1169 = vunpack.c.h.b16 %v278
        %v1170 = vunpack.c.l.b16 %v279
        %v1171 = vunpack.c.h.b16 %v279
        %v1172 = vunpack.c.l.b16 %v280
        %v1173 = vunpack.c.h.b16 %v280
        %v1174 = vunpack.c.l.b16 %v281
        %v1175 = vunpack.c.h.b16 %v281
        %v1176 = vunpack.c.l.b16 %v282
        %v1177 = vunpack.c.h.b16 %v282
        %v1178 = vunpack.c.l.b16 %v283
        %v1179 = vunpack.c.h.b16 %v283
        %v1180 = vunpack.c.l.b16 %v284
        %v1181 = vunpack.c.h.b16 %v284
        %v1182 = vunpack.c.l.b16 %v285
        %v1183 = vunpack.c.h.b16 %v285
        %v1184 = vunpack.c.l.b16 %v286
        %v1185 = vunpack.c.h.b16 %v286
        %v1186 = vunpack.c.l.b16 %v287
        %v1187 = vunpack.c.h.b16 %v287
        %v1188 = vunpack.c.l.b16 %v288
        %v1189 = vunpack.c.h.b16 %v288
        %v1190 = vunpack.c.l.b16 %v289
        %v1191 = vunpack.c.h.b16 %v289
        %v1192 = vunpack.c.l.b16 %v290
        %v1193 = vunpack.c.h.b16 %v290
        %v1194 = vunpack.c.l.b16 %v291
        %v1195 = vunpack.c.h.b16 %v291
        %v1196 = vunpack.c.l.b16 %v292
        %v1197 = vunpack.c.h.b16 %v292
        %v1198 = vunpack.c.l.b16 %v293
        %v1199 = vunpack.c.h.b16 %v293
        %v1200 = vunpack.c.l.b16 %v294
        %v1201 = vunpack.c.h.b16 %v294
        %v1202 = vunpack.c.l.b16 %v295
        %v1203 = vunpack.c.h.b16 %v295
        %v1204 = vunpack.c.l.b16 %v296
        %v1205 = vunpack.c.h.b16 %v296
        %v1206 = vunpack.c.l.b16 %v297
        %v1207 = vunpack.c.h.b16 %v297
        %v1208 = vunpack.c.l.b16 %v298
        %v1209 = vunpack.c.h.b16 %v298
        %v1210 = vunpack.c.l.b16 %v299
        %v1211 = vunpack.c.h.b16 %v299
        %v1212 = vunpack.c.l.b16 %v300
        %v1213 = vunpack.c.h.b16 %v300
        %v1214 = vunpack.c.l.b16 %v301
        %v1215 = vunpack.c.h.b16 %v301
        %v1216 = vunpack.c.l.b16 %v302
        %v1217 = vunpack.c.h.b16 %v302
        %v1218 = vunpack.c.l.b16 %v303
        %v1219 = vunpack.c.h.b16 %v303
        %v1220 = vunpack.c.l.b16 %v304
        %v1221 = vunpack.c.h.b16 %v304
        %v1222 = vunpack.c.l.b16 %v305
        %v1223 = vunpack.c.h.b16 %v305
        %v1224 = vunpack.c.l.b16 %v306
        %v1225 = vunpack.c.h.b16 %v306
        %v1226 = vunpack.c.l.b16 %v307
        %v1227 = vunpack.c.h.b16 %v307
        %v1228 = vunpack.c.l.b16 %v308
        %v1229 = vunpack.c.h.b16 %v308
        %v1230 = vunpack.c.l.b16 %v309
        %v1231 = vunpack.c.h.b16 %v309
        %v1232 = vunpack.c.l.b16 %v310
        %v1233 = vunpack.c.h.b16 %v310
        %v1234 = vunpack.c.l.b16 %v311
        %v1235 = vunpack.c.h.b16 %v311
        %v1236 = vunpack.c.l.b16 %v312
        %v1237 = vunpack.c.h.b16 %v312
        %v1238 = vunpack.c.l.b16 %v313
        %v1239 = vunpack.c.h.b16 %v313
        %v1240 = vunpack.c.l.b16 %v314
        %v1241 = vunpack.c.h.b16 %v314
        %v1242 = vunpack.c.l.b16 %v315
        %v1243 = vunpack.c.h.b16 %v315
        %v1244 = vunpack.c.l.b16 %v316
        %v1245 = vunpack.c.h.b16 %v316
        %v1246 = vunpack.c.l.b16 %v317
        %v1247 = vunpack.c.h.b16 %v317
        %v1248 = vunpack.c.l.b16 %v318
        %v1249 = vunpack.c.h.b16 %v318
        %v1250 = vunpack.c.l.b16 %v319
        %v1251 = vunpack.c.h.b16 %v319
        %v1252 = vunpack.c.l.b16 %v320
        %v1253 = vunpack.c.h.b16 %v320
        %v1254 = vunpack.c.l.b16 %v321
        %v1255 = vunpack.c.h.b16 %v321
        %v1256 = vunpack.c.l.b16 %v322
        %v1257 = vunpack.c.h.b16 %v322
        %v1258 = vunpack.c.l.b16 %v323
        %v1259 = vunpack.c.h.b16 %v323
        %v1260 = vunpack.c.l.b16 %v324
        %v1261 = vunpack.c.h.b16 %v324
        %v1262 = vunpack.c.l.b16 %v325
        %v1263 = vunpack.c.h.b16 %v325
        %v1264 = vunpack.c.l.b16 %v326
        %v1265 = vunpack.c.h.b16 %v326
        %v1266 = vunpack.c.l.b16 %v327
        %v1267 = vunpack.c.h.b16 %v327
        %v1268 = vunpack.c.l.b16 %v328
        %v1269 = vunpack.c.h.b16 %v328
        %v1270 = vunpack.c.l.b16 %v329
        %v1271 = vunpack.c.h.b16 %v329
        %v1272 = vunpack.c.l.b16 %v330
        %v1273 = vunpack.c.h.b16 %v330
        %v1274 = vunpack.c.l.b16 %v331
        %v1275 = vunpack.c.h.b16 %v331
        %v1276 = vunpack.c.l.b16 %v332
        %v1277 = vunpack.c.h.b16 %v332
        %v1278 = vunpack.c.l.b16 %v333
        %v1279 = vunpack.c.h.b16 %v333
        %v1280 = vunpack.c.l.b16 %v334
        %v1281 = vunpack.c.h.b16 %v334
        %v1282 = vunpack.c.l.b16 %v335
        %v1283 = vunpack.c.h.b16 %v335
        %v1284 = vunpack.c.l.b16 %v336
        %v1285 = vunpack.c.h.b16 %v336
        %v1286 = vunpack.c.l.b16 %v337
        %v1287 = vunpack.c.h.b16 %v337
        %v1288 = vunpack.c.l.b16 %v338
        %v1289 = vunpack.c.h.b16 %v338
        %v1290 = vunpack.c.l.b16 %v339
        %v1291 = vunpack.c.h.b16 %v339
        %v1292 = vunpack.c.l.b16 %v340
        %v1293 = vunpack.c.h.b16 %v340
        %v1294 = vunpack.c.l.b16 %v341
        %v1295 = vunpack.c.h.b16 %v341
        %v1296 = vunpack.c.l.b16 %v342
        %v1297 = vunpack.c.h.b16 %v342
        %v1298 = vunpack.c.l.b16 %v343
        %v1299 = vunpack.c.h.b16 %v343
        %v1300 = vunpack.c.l.b16 %v344
        %v1301 = vunpack.c.h.b16 %v344
        %v1302 = vunpack.c.l.b16 %v345
        %v1303 = vunpack.c.h.b16 %v345
        %v1304 = vunpack.c.l.b16 %v346
        %v1305 = vunpack.c.h.b16 %v346
        %v1306 = vunpack.c.l.b16 %v347
        %v1307 = vunpack.c.h.b16 %v347
        %v1308 = vunpack.c.l.b16 %v348
        %v1309 = vunpack.c.h.b16 %v348
        %v1310 = vunpack.c.l.b16 %v349
        %v1311 = vunpack.c.h.b16 %v349
        %v1312 = vunpack.c.l.b16 %v350
        %v1313 = vunpack.c.h.b16 %v350
        %v1314 = vunpack.c.l.b16 %v351
        %v1315 = vunpack.c.h.b16 %v351
        %v1316 = vunpack.c.l.b16 %v352
        %v1317 = vunpack.c.h.b16 %v352
        %v1318 = vunpack.c.l.b16 %v353
        %v1319 = vunpack.c.h.b16 %v353
        %v1320 = vunpack.c.l.b16 %v354
        %v1321 = vunpack.c.h.b16 %v354
        %v1322 = vunpack.c.l.b16 %v355
        %v1323 = vunpack.c.h.b16 %v355
        %v1324 = vunpack.c.l.b16 %v356
        %v1325 = vunpack.c.h.b16 %v356
        %v1326 = vunpack.c.l.b16 %v357
        %v1327 = vunpack.c.h.b16 %v357
        %v1328 = vunpack.c.l.b16 %v358
        %v1329 = vunpack.c.h.b16 %v358
        %v1330 = vunpack.c.l.b16 %v359
        %v1331 = vunpack.c.h.b16 %v359
        %v1332 = vunpack.c.l.b16 %v360
        %v1333 = vunpack.c.h.b16 %v360
        %v1334 = vunpack.c.l.b16 %v361
        %v1335 = vunpack.c.h.b16 %v361
        %v1336 = vunpack.c.l.b16 %v362
        %v1337 = vunpack.c.h.b16 %v362
        %v1338 = vunpack.c.l.b16 %v363
        %v1339 = vunpack.c.h.b16 %v363
        %v1340 = vunpack.c.l.b16 %v364
        %v1341 = vunpack.c.h.b16 %v364
        %v1342 = vunpack.c.l.b16 %v365
        %v1343 = vunpack.c.h.b16 %v365
        %v1344 = vunpack.c.l.b16 %v366
        %v1345 = vunpack.c.h.b16 %v366
        %v1346 = vunpack.c.l.b16 %v367
        %v1347 = vunpack.c.h.b16 %v367
        %v1348 = vunpack.c.l.b16 %v368
        %v1349 = vunpack.c.h.b16 %v368
        %v1350 = vunpack.c.l.b16 %v369
        %v1351 = vunpack.c.h.b16 %v369
        %v1352 = vunpack.c.l.b16 %v370
        %v1353 = vunpack.c.h.b16 %v370
        %v1354 = vunpack.c.l.b16 %v371
        %v1355 = vunpack.c.h.b16 %v371
        %v1356 = vunpack.c.l.b16 %v372
        %v1357 = vunpack.c.h.b16 %v372
        %v1358 = vunpack.c.l.b16 %v373
        %v1359 = vunpack.c.h.b16 %v373
        %v1360 = vunpack.c.l.b16 %v374
        %v1361 = vunpack.c.h.b16 %v374
        %v1362 = vunpack.c.l.b16 %v375
        %v1363 = vunpack.c.h.b16 %v375
        %v1364 = vunpack.c.l.b16 %v376
        %v1365 = vunpack.c.h.b16 %v376
        %v1366 = vunpack.c.l.b16 %v377
        %v1367 = vunpack.c.h.b16 %v377
        %v1368 = vunpack.c.l.b16 %v378
        %v1369 = vunpack.c.h.b16 %v378
        %v1370 = vunpack.c.l.b16 %v379
        %v1371 = vunpack.c.h.b16 %v379
        %v1372 = vunpack.c.l.b16 %v380
        %v1373 = vunpack.c.h.b16 %v380
        %v1374 = vunpack.c.l.b16 %v381
        %v1375 = vunpack.c.h.b16 %v381
        %v1376 = vunpack.c.l.b16 %v382
        %v1377 = vunpack.c.h.b16 %v382
        %v1378 = vunpack.c.l.b16 %v383
        %v1379 = vunpack.c.h.b16 %v383
        %v1380 = vunpack.c.l.b16 %v384
        %v1381 = vunpack.c.h.b16 %v384
        %v1382 = vunpack.c.l.b16 %v385
        %v1383 = vunpack.c.h.b16 %v385
        %v1384 = vunpack.c.l.b16 %v386
        %v1385 = vunpack.c.h.b16 %v386
        %v1386 = vunpack.c.l.b16 %v387
        %v1387 = vunpack.c.h.b16 %v387
        %v1388 = vunpack.c.l.b16 %v388
        %v1389 = vunpack.c.h.b16 %v388
        %v1390 = vunpack.c.l.b16 %v389
        %v1391 = vunpack.c.h.b16 %v389
        %v1392 = vunpack.c.l.b16 %v390
        %v1393 = vunpack.c.h.b16 %v390
        %v1394 = vunpack.c.l.b16 %v391
        %v1395 = vunpack.c.h.b16 %v391
        %v1396 = vunpack.c.l.b16 %v392
        %v1397 = vunpack.c.h.b16 %v392
        %v1398 = vunpack.c.l.b16 %v393
        %v1399 = vunpack.c.h.b16 %v393
        %v1400 = vunpack.c.l.b16 %v394
        %v1401 = vunpack.c.h.b16 %v394
        %v1402 = vunpack.c.l.b16 %v395
        %v1403 = vunpack.c.h.b16 %v395
        %v1404 = vunpack.c.l.b16 %v396
        %v1405 = vunpack.c.h.b16 %v396
        %v1406 = vunpack.c.l.b16 %v397
        %v1407 = vunpack.c.h.b16 %v397
        %v1408 = vunpack.c.l.b16 %v398
        %v1409 = vunpack.c.h.b16 %v398
        %v1410 = vunpack.c.l.b16 %v399
        %v1411 = vunpack.c.h.b16 %v399
        %v1412 = vunpack.c.l.b16 %v400
        %v1413 = vunpack.c.h.b16 %v400
        %v1414 = vunpack.c.l.b16 %v401
        %v1415 = vunpack.c.h.b16 %v401
        %v1416 = vunpack.c.l.b16 %v402
        %v1417 = vunpack.c.h.b16 %v402
        %v1418 = vunpack.c.l.b16 %v403
        %v1419 = vunpack.c.h.b16 %v403
        %v1420 = vunpack.c.l.b16 %v404
        %v1421 = vunpack.c.h.b16 %v404
        %v1422 = vunpack.c.l.b16 %v405
        %v1423 = vunpack.c.h.b16 %v405
        %v1424 = vunpack.c.l.b16 %v406
        %v1425 = vunpack.c.h.b16 %v406
        %v1426 = vunpack.c.l.b16 %v407
        %v1427 = vunpack.c.h.b16 %v407
        %v1428 = vunpack.c.l.b16 %v408
        %v1429 = vunpack.c.h.b16 %v408
        %v1430 = vunpack.c.l.b16 %v409
        %v1431 = vunpack.c.h.b16 %v409
        %v1432 = vunpack.c.l.b16 %v410
        %v1433 = vunpack.c.h.b16 %v410
        %v1434 = vunpack.c.l.b16 %v411
        %v1435 = vunpack.c.h.b16 %v411
        %v1436 = vunpack.c.l.b16 %v412
        %v1437 = vunpack.c.h.b16 %v412
        %v1438 = vunpack.c.l.b16 %v413
        %v1439 = vunpack.c.h.b16 %v413
        %v1440 = vunpack.c.l.b16 %v414
        %v1441 = vunpack.c.h.b16 %v414
        %v1442 = vunpack.c.l.b16 %v415
        %v1443 = vunpack.c.h.b16 %v415
        %v1444 = vunpack.c.l.b16 %v416
        %v1445 = vunpack.c.h.b16 %v416
        %v1446 = vunpack.c.l.b16 %v417
        %v1447 = vunpack.c.h.b16 %v417
        %v1448 = vunpack.c.l.b16 %v418
        %v1449 = vunpack.c.h.b16 %v418
        %v1450 = vunpack.c.l.b16 %v419
        %v1451 = vunpack.c.h.b16 %v419
        %v1452 = vunpack.c.l.b16 %v420
        %v1453 = vunpack.c.h.b16 %v420
        %v1454 = vunpack.c.l.b16 %v421
        %v1455 = vunpack.c.h.b16 %v421
        %v1456 = vunpack.c.l.b16 %v422
        %v1457 = vunpack.c.h.b16 %v422
        %v1458 = vunpack.c.l.b16 %v423
        %v1459 = vunpack.c.h.b16 %v423
        %v1460 = vunpack.c.l.b16 %v424
        %v1461 = vunpack.c.h.b16 %v424
        %v1462 = vunpack.c.l.b16 %v425
        %v1463 = vunpack.c.h.b16 %v425
        %v1464 = vunpack.c.l.b16 %v426
        %v1465 = vunpack.c.h.b16 %v426
        %v1466 = vunpack.c.l.b16 %v427
        %v1467 = vunpack.c.h.b16 %v427
        %v1468 = vunpack.c.l.b16 %v428
        %v1469 = vunpack.c.h.b16 %v428
        %v1470 = vunpack.c.l.b16 %v429
        %v1471 = vunpack.c.h.b16 %v429
        %v1472 = vunpack.c.l.b16 %v430
        %v1473 = vunpack.c.h.b16 %v430
        %v1474 = vunpack.c.l.b16 %v431
        %v1475 = vunpack.c.h.b16 %v431
        %v1476 = vunpack.c.l.b16 %v432
        %v1477 = vunpack.c.h.b16 %v432
        %v1478 = vunpack.c.l.b16 %v433
        %v1479 = vunpack.c.h.b16 %v433
        %v1480 = vunpack.c.l.b16 %v434
        %v1481 = vunpack.c.h.b16 %v434
        %v1482 = vunpack.c.l.b16 %v435
        %v1483 = vunpack.c.h.b16 %v435
        %v1484 = vunpack.c.l.b16 %v436
        %v1485 = vunpack.c.h.b16 %v436
        %v1486 = vunpack.c.l.b16 %v437
        %v1487 = vunpack.c.h.b16 %v437
        %v1488 = vunpack.c.l.b16 %v438
        %v1489 = vunpack.c.h.b16 %v438
        %v1490 = vunpack.c.l.b16 %v439
        %v1491 = vunpack.c.h.b16 %v439
        %v1492 = vunpack.c.l.b16 %v440
        %v1493 = vunpack.c.h.b16 %v440
        %v1494 = vunpack.c.l.b16 %v441
        %v1495 = vunpack.c.h.b16 %v441
        %v1496 = vunpack.c.l.b16 %v442
        %v1497 = vunpack.c.h.b16 %v442
        %v1498 = vunpack.c.l.b16 %v443
        %v1499 = vunpack.c.h.b16 %v443
        %v1500 = vunpack.c.l.b16 %v444
        %v1501 = vunpack.c.h.b16 %v444
        %v1502 = vunpack.c.l.b16 %v445
        %v1503 = vunpack.c.h.b16 %v445
        %v1504 = vunpack.c.l.b16 %v446
        %v1505 = vunpack.c.h.b16 %v446
        %v1506 = vunpack.c.l.b16 %v447
        %v1507 = vunpack.c.h.b16 %v447
        %v1508 = vunpack.c.l.b16 %v448
        %v1509 = vunpack.c.h.b16 %v448
        %v1510 = vunpack.c.l.b16 %v449
        %v1511 = vunpack.c.h.b16 %v449
        %v1512 = vunpack.c.l.b16 %v450
        %v1513 = vunpack.c.h.b16 %v450
        %v1514 = vunpack.c.l.b16 %v451
        %v1515 = vunpack.c.h.b16 %v451
        %v1516 = vunpack.c.l.b16 %v452
        %v1517 = vunpack.c.h.b16 %v452
        %v1518 = vunpack.c.l.b16 %v453
        %v1519 = vunpack.c.h.b16 %v453
        %v1520 = vunpack.c.l.b16 %v454
        %v1521 = vunpack.c.h.b16 %v454
        %v1522 = vunpack.c.l.b16 %v455
        %v1523 = vunpack.c.h.b16 %v455
        %v1524 = vunpack.c.l.b16 %v456
        %v1525 = vunpack.c.h.b16 %v456
        %v1526 = vunpack.c.l.b16 %v457
        %v1527 = vunpack.c.h.b16 %v457
        %v1528 = vunpack.c.l.b16 %v458
        %v1529 = vunpack.c.h.b16 %v458
        %v1530 = vunpack.c.l.b16 %v459
        %v1531 = vunpack.c.h.b16 %v459
        %v1532 = vunpack.c.l.b16 %v460
        %v1533 = vunpack.c.h.b16 %v460
        %v1534 = vunpack.c.l.b16 %v461
        %v1535 = vunpack.c.h.b16 %v461
        %v1536 = vunpack.c.l.b16 %v462
        %v1537 = vunpack.c.h.b16 %v462
        %v1538 = vunpack.c.l.b16 %v463
        %v1539 = vunpack.c.h.b16 %v463
        %v1540 = vunpack.c.l.b16 %v464
        %v1541 = vunpack.c.h.b16 %v464
        %v1542 = vunpack.c.l.b16 %v465
        %v1543 = vunpack.c.h.b16 %v465
        %v1544 = vunpack.c.l.b16 %v466
        %v1545 = vunpack.c.h.b16 %v466
        %v1546 = vunpack.c.l.b16 %v467
        %v1547 = vunpack.c.h.b16 %v467
        %v1548 = vunpack.c.l.b16 %v468
        %v1549 = vunpack.c.h.b16 %v468
        %v1550 = vunpack.c.l.b16 %v469
        %v1551 = vunpack.c.h.b16 %v469
        %v1552 = vunpack.c.l.b16 %v470
        %v1553 = vunpack.c.h.b16 %v470
        %v1554 = vunpack.c.l.b16 %v471
        %v1555 = vunpack.c.h.b16 %v471
        %v1556 = vunpack.c.l.b16 %v472
        %v1557 = vunpack.c.h.b16 %v472
        %v1558 = vunpack.c.l.b16 %v473
        %v1559 = vunpack.c.h.b16 %v473
        %v1560 = vunpack.c.l.b16 %v474
        %v1561 = vunpack.c.h.b16 %v474
        %v1562 = vunpack.c.l.b16 %v475
        %v1563 = vunpack.c.h.b16 %v475
        %v1564 = vunpack.c.l.b16 %v476
        %v1565 = vunpack.c.h.b16 %v476
        %v1566 = vunpack.c.l.b16 %v477
        %v1567 = vunpack.c.h.b16 %v477
        %v1568 = vunpack.c.l.b16 %v478
        %v1569 = vunpack.c.h.b16 %v478
        %v1570 = vunpack.c.l.b16 %v479
        %v1571 = vunpack.c.h.b16 %v479
        %v1572 = vunpack.c.l.b16 %v480
        %v1573 = vunpack.c.h.b16 %v480
        %v1574 = vunpack.c.l.b16 %v481
        %v1575 = vunpack.c.h.b16 %v481
        %v1576 = vunpack.c.l.b16 %v482
        %v1577 = vunpack.c.h.b16 %v482
        %v1578 = vunpack.c.l.b16 %v483
        %v1579 = vunpack.c.h.b16 %v483
        %v1580 = vunpack.c.l.b16 %v484
        %v1581 = vunpack.c.h.b16 %v484
        %v1582 = vunpack.c.l.b16 %v485
        %v1583 = vunpack.c.h.b16 %v485
        %v1584 = vunpack.c.l.b16 %v486
        %v1585 = vunpack.c.h.b16 %v486
        %v1586 = vunpack.c.l.b16 %v487
        %v1587 = vunpack.c.h.b16 %v487
        %v1588 = vunpack.c.l.b16 %v488
        %v1589 = vunpack.c.h.b16 %v488
        %v1590 = vunpack.c.l.b16 %v489
        %v1591 = vunpack.c.h.b16 %v489
        %v1592 = vunpack.c.l.b16 %v490
        %v1593 = vunpack.c.h.b16 %v490
        %v1594 = vunpack.c.l.b16 %v491
        %v1595 = vunpack.c.h.b16 %v491
        %v1596 = vunpack.c.l.b16 %v492
        %v1597 = vunpack.c.h.b16 %v492
        %v1598 = vunpack.c.l.b16 %v493
        %v1599 = vunpack.c.h.b16 %v493
        %v1600 = vunpack.c.l.b16 %v494
        %v1601 = vunpack.c.h.b16 %v494
        %v1602 = vunpack.c.l.b16 %v495
        %v1603 = vunpack.c.h.b16 %v495
        %v1604 = vunpack.c.l.b16 %v496
        %v1605 = vunpack.c.h.b16 %v496
        %v1606 = vunpack.c.l.b16 %v497
        %v1607 = vunpack.c.h.b16 %v497
        %v1608 = vunpack.c.l.b16 %v498
        %v1609 = vunpack.c.h.b16 %v498
        %v1610 = vunpack.c.l.b16 %v499
        %v1611 = vunpack.c.h.b16 %v499
        %v1612 = vunpack.c.l.b16 %v500
        %v1613 = vunpack.c.h.b16 %v500
        %v1614 = vunpack.c.l.b16 %v501
        %v1615 = vunpack.c.h.b16 %v501
        %v1616 = vunpack.c.l.b16 %v502
        %v1617 = vunpack.c.h.b16 %v502
        %v1618 = vunpack.c.l.b16 %v503
        %v1619 = vunpack.c.h.b16 %v503
        %v1620 = vunpack.c.l.b16 %v504
        %v1621 = vunpack.c.h.b16 %v504
        %v1622 = vunpack.c.l.b16 %v505
        %v1623 = vunpack.c.h.b16 %v505
        %v1624 = vunpack.c.l.b16 %v506
        %v1625 = vunpack.c.h.b16 %v506
        %v1626 = vunpack.c.l.b16 %v507
        %v1627 = vunpack.c.h.b16 %v507
        %v1628 = vunpack.c.l.b16 %v508
        %v1629 = vunpack.c.h.b16 %v508
        %v1630 = vunpack.c.l.b16 %v509
        %v1631 = vunpack.c.h.b16 %v509
        %v1632 = vunpack.c.l.b16 %v510
        %v1633 = vunpack.c.h.b16 %v510
        %v1634 = vunpack.c.l.b16 %v511
        %v1635 = vunpack.c.h.b16 %v511
        %v1636 = vunpack.c.l.b16 %v512
        %v1637 = vunpack.c.h.b16 %v512
        %v1638 = vunpack.c.l.b16 %v513
        %v1639 = vunpack.c.h.b16 %v513
        %v1640 = vunpack.c.l.b16 %v514
        %v1641 = vunpack.c.h.b16 %v514
        %v1642 = vunpack.c.l.b16 %v515
        %v1643 = vunpack.c.h.b16 %v515
        %v1644 = vunpack.c.l.b16 %v516
        %v1645 = vunpack.c.h.b16 %v516
        %v1646 = vunpack.c.l.b16 %v517
        %v1647 = vunpack.c.h.b16 %v517
        %v1648 = vunpack.c.l.b16 %v518
        %v1649 = vunpack.c.h.b16 %v518
        %v1650 = vunpack.c.l.b16 %v519
        %v1651 = vunpack.c.h.b16 %v519
        %v1652 = vunpack.c.l.b16 %v520
        %v1653 = vunpack.c.h.b16 %v520
        %v1654 = vunpack.c.l.b16 %v521
        %v1655 = vunpack.c.h.b16 %v521
        %v1656 = vunpack.c.l.b16 %v522
        %v1657 = vunpack.c.h.b16 %v522
        %v1658 = vunpack.c.l.b16 %v523
        %v1659 = vunpack.c.h.b16 %v523
        %v1660 = vunpack.c.l.b16 %v524
        %v1661 = vunpack.c.h.b16 %v524
        %v1662 = vunpack.c.l.b16 %v525
        %v1663 = vunpack.c.h.b16 %v525
        %v1664 = vunpack.c.l.b16 %v526
        %v1665 = vunpack.c.h.b16 %v526
        %v1666 = vunpack.c.l.b16 %v527
        %v1667 = vunpack.c.h.b16 %v527
        %v1668 = vunpack.c.l.b16 %v528
        %v1669 = vunpack.c.h.b16 %v528
        %v1670 = vunpack.c.l.b16 %v529
        %v1671 = vunpack.c.h.b16 %v529
        %v1672 = vunpack.c.l.b16 %v530
        %v1673 = vunpack.c.h.b16 %v530
        %v1674 = vunpack.c.l.b16 %v531
        %v1675 = vunpack.c.h.b16 %v531
        %v1676 = vunpack.c.l.b16 %v532
        %v1677 = vunpack.c.h.b16 %v532
        %v1678 = vunpack.c.l.b16 %v533
        %v1679 = vunpack.c.h.b16 %v533
        %v1680 = vunpack.c.l.b16 %v534
        %v1681 = vunpack.c.h.b16 %v534
        %v1682 = vunpack.c.l.b16 %v535
        %v1683 = vunpack.c.h.b16 %v535
        %v1684 = vunpack.c.l.b16 %v536
        %v1685 = vunpack.c.h.b16 %v536
        %v1686 = vunpack.c.l.b16 %v537
        %v1687 = vunpack.c.h.b16 %v537
        %v1688 = vunpack.c.l.b16 %v538
        %v1689 = vunpack.c.h.b16 %v538
        %v1690 = vunpack.c.l.b16 %v539
        %v1691 = vunpack.c.h.b16 %v539
        %v1692 = vunpack.c.l.b16 %v540
        %v1693 = vunpack.c.h.b16 %v540
        %v1694 = vunpack.c.l.b16 %v541
        %v1695 = vunpack.c.h.b16 %v541
        %v1696 = vunpack.c.l.b16 %v542
        %v1697 = vunpack.c.h.b16 %v542
        %v1698 = vunpack.c.l.b16 %v543
        %v1699 = vunpack.c.h.b16 %v543
        %v1700 = vunpack.c.l.b16 %v544
        %v1701 = vunpack.c.h.b16 %v544
        %v1702 = vunpack.c.l.b16 %v545
        %v1703 = vunpack.c.h.b16 %v545
        %v1704 = vunpack.c.l.b16 %v546
        %v1705 = vunpack.c.h.b16 %v546
        %v1706 = vunpack.c.l.b16 %v547
        %v1707 = vunpack.c.h.b16 %v547
        %v1708 = vunpack.c.l.b16 %v548
        %v1709 = vunpack.c.h.b16 %v548
        %v1710 = vunpack.c.l.b16 %v549
        %v1711 = vunpack.c.h.b16 %v549
        %v1712 = vunpack.c.l.b16 %v550
        %v1713 = vunpack.c.h.b16 %v550
        %v1714 = vunpack.c.l.b16 %v551
        %v1715 = vunpack.c.h.b16 %v551
        %v1716 = vunpack.c.l.b16 %v552
        %v1717 = vunpack.c.h.b16 %v552
        %v1718 = vunpack.c.l.b16 %v553
        %v1719 = vunpack.c.h.b16 %v553
        %v1720 = vunpack.c.l.b16 %v554
        %v1721 = vunpack.c.h.b16 %v554
        %v1722 = vunpack.c.l.b16 %v555
        %v1723 = vunpack.c.h.b16 %v555
        %v1724 = vunpack.c.l.b16 %v556
        %v1725 = vunpack.c.h.b16 %v556
        %v1726 = vunpack.c.l.b16 %v557
        %v1727 = vunpack.c.h.b16 %v557
        %v1728 = vunpack.c.l.b16 %v558
        %v1729 = vunpack.c.h.b16 %v558
        %v1730 = vunpack.c.l.b16 %v559
        %v1731 = vunpack.c.h.b16 %v559
        %v1732 = vunpack.c.l.b16 %v560
        %v1733 = vunpack.c.h.b16 %v560
        %v1734 = vunpack.c.l.b16 %v561
        %v1735 = vunpack.c.h.b16 %v561
        %v1736 = vunpack.c.l.b16 %v562
        %v1737 = vunpack.c.h.b16 %v562
        %v1738 = vunpack.c.l.b16 %v563
        %v1739 = vunpack.c.h.b16 %v563
        %v1740 = vunpack.c.l.b16 %v564
        %v1741 = vunpack.c.h.b16 %v564
        %v1742 = vunpack.c.l.b16 %v565
        %v1743 = vunpack.c.h.b16 %v565
        %v1744 = vunpack.c.l.b16 %v566
        %v1745 = vunpack.c.h.b16 %v566
        %v1746 = vunpack.c.l.b16 %v567
        %v1747 = vunpack.c.h.b16 %v567
        %v1748 = vunpack.c.l.b16 %v568
        %v1749 = vunpack.c.h.b16 %v568
        %v1750 = vunpack.c.l.b16 %v569
        %v1751 = vunpack.c.h.b16 %v569
        %v1752 = vunpack.c.l.b16 %v570
        %v1753 = vunpack.c.h.b16 %v570
        %v1754 = vunpack.c.l.b16 %v571
        %v1755 = vunpack.c.h.b16 %v571
        %v1756 = vunpack.c.l.b16 %v572
        %v1757 = vunpack.c.h.b16 %v572
        %v1758 = vunpack.c.l.b16 %v573
        %v1759 = vunpack.c.h.b16 %v573
        %v1760 = vunpack.c.l.b16 %v574
        %v1761 = vunpack.c.h.b16 %v574
        %v1762 = vunpack.c.l.b16 %v575
        %v1763 = vunpack.c.h.b16 %v575
        %v1764 = vunpack.c.l.b16 %v576
        %v1765 = vunpack.c.h.b16 %v576
        %v1766 = vunpack.c.l.b16 %v577
        %v1767 = vunpack.c.h.b16 %v577
        %v1768 = vunpack.c.l.b16 %v578
        %v1769 = vunpack.c.h.b16 %v578
        %v1770 = vunpack.c.l.b16 %v579
        %v1771 = vunpack.c.h.b16 %v579
        %v1772 = vunpack.c.l.b16 %v580
        %v1773 = vunpack.c.h.b16 %v580
        %v1774 = vunpack.c.l.b16 %v581
        %v1775 = vunpack.c.h.b16 %v581
        %v1776 = vunpack.c.l.b16 %v582
        %v1777 = vunpack.c.h.b16 %v582
        %v1778 = vunpack.c.l.b16 %v583
        %v1779 = vunpack.c.h.b16 %v583
        %v1780 = vunpack.c.l.b16 %v584
        %v1781 = vunpack.c.h.b16 %v584
        %v1782 = vunpack.c.l.b16 %v585
        %v1783 = vunpack.c.h.b16 %v585
        %v1784 = vunpack.c.l.b16 %v586
        %v1785 = vunpack.c.h.b16 %v586
        %v1786 = vunpack.c.l.b16 %v587
        %v1787 = vunpack.c.h.b16 %v587
        %v1788 = vunpack.c.l.b16 %v588
        %v1789 = vunpack.c.h.b16 %v588
        %v1790 = vunpack.c.l.b16 %v589
        %v1791 = vunpack.c.h.b16 %v589
        %v1792 = vunpack.c.l.b16 %v590
        %v1793 = vunpack.c.h.b16 %v590
        %v1794 = vunpack.c.l.b16 %v591
        %v1795 = vunpack.c.h.b16 %v591
        %v1796 = vunpack.c.l.b16 %v592
        %v1797 = vunpack.c.h.b16 %v592
        %v1798 = vunpack.c.l.b16 %v593
        %v1799 = vunpack.c.h.b16 %v593
        %v1800 = vunpack.c.l.b16 %v594
        %v1801 = vunpack.c.h.b16 %v594
        %v1802 = vunpack.c.l.b16 %v595
        %v1803 = vunpack.c.h.b16 %v595
        %v1804 = vunpack.c.l.b16 %v596
        %v1805 = vunpack.c.h.b16 %v596
        %v1806 = vunpack.c.l.b16 %v597
        %v1807 = vunpack.c.h.b16 %v597
        %v1808 = vunpack.c.l.b16 %v598
        %v1809 = vunpack.c.h.b16 %v598
        %v1810 = vunpack.c.l.b16 %v599
        %v1811 = vunpack.c.h.b16 %v599
        %v1812 = vunpack.c.l.b16 %v600
        %v1813 = vunpack.c.h.b16 %v600
        %v1814 = vunpack.c.l.b16 %v601
        %v1815 = vunpack.c.h.b16 %v601
        %v1816 = vunpack.c.l.b16 %v602
        %v1817 = vunpack.c.h.b16 %v602
        %v1818 = vunpack.c.l.b16 %v603
        %v1819 = vunpack.c.h.b16 %v603
        %v1820 = vunpack.c.l.b16 %v604
        %v1821 = vunpack.c.h.b16 %v604
        %v1822 = vunpack.c.l.b16 %v605
        %v1823 = vunpack.c.h.b16 %v605
        %v1824 = vunpack.c.l.b16 %v606
        %v1825 = vunpack.c.h.b16 %v606
        %v1826 = vunpack.c.l.b16 %v607
        %v1827 = vunpack.c.h.b16 %v607
        %v1828 = vunpack.c.l.b16 %v608
        %v1829 = vunpack.c.h.b16 %v608
        %v1830 = vunpack.c.l.b16 %v609
        %v1831 = vunpack.c.h.b16 %v609
        %v1832 = vunpack.c.l.b16 %v610
        %v1833 = vunpack.c.h.b16 %v610
        %v1834 = vunpack.c.l.b16 %v611
        %v1835 = vunpack.c.h.b16 %v611
        %v1836 = vunpack.c.l.b16 %v612
        %v1837 = vunpack.c.h.b16 %v612
        %v1838 = vunpack.c.l.b16 %v613
        %v1839 = vunpack.c.h.b16 %v613
        %v1840 = vunpack.c.l.b16 %v614
        %v1841 = vunpack.c.h.b16 %v614
        %v1842 = vunpack.c.l.b16 %v615
        %v1843 = vunpack.c.h.b16 %v615
        %v1844 = vunpack.c.l.b16 %v616
        %v1845 = vunpack.c.h.b16 %v616
        %v1846 = vunpack.c.l.b16 %v617
        %v1847 = vunpack.c.h.b16 %v617
        %v1848 = vunpack.c.l.b16 %v618
        %v1849 = vunpack.c.h.b16 %v618
        %v1850 = vunpack.c.l.b16 %v619
        %v1851 = vunpack.c.h.b16 %v619
        %v1852 = vunpack.c.l.b16 %v620
        %v1853 = vunpack.c.h.b16 %v620
        %v1854 = vunpack.c.l.b16 %v621
        %v1855 = vunpack.c.h.b16 %v621
        %v1856 = vunpack.c.l.b16 %v622
        %v1857 = vunpack.c.h.b16 %v622
        %v1858 = vunpack.c.l.b16 %v623
        %v1859 = vunpack.c.h.b16 %v623
        %v1860 = vunpack.c.l.b16 %v624
        %v1861 = vunpack.c.h.b16 %v624
        %v1862 = vunpack.c.l.b16 %v625
        %v1863 = vunpack.c.h.b16 %v625
        %v1864 = vunpack.c.l.b16 %v626
        %v1865 = vunpack.c.h.b16 %v626
        %v1866 = vunpack.c.l.b16 %v627
        %v1867 = vunpack.c.h.b16 %v627
        %v1868 = vunpack.c.l.b16 %v628
        %v1869 = vunpack.c.h.b16 %v628
        %v1870 = vunpack.c.l.b16 %v629
        %v1871 = vunpack.c.h.b16 %v629
        %v1872 = vunpack.c.l.b16 %v630
        %v1873 = vunpack.c.h.b16 %v630
        %v1874 = vunpack.c.l.b16 %v631
        %v1875 = vunpack.c.h.b16 %v631
        %v1876 = vunpack.c.l.b16 %v632
        %v1877 = vunpack.c.h.b16 %v632
        %v1878 = vunpack.c.l.b16 %v633
        %v1879 = vunpack.c.h.b16 %v633
        %v1880 = vunpack.c.l.b16 %v634
        %v1881 = vunpack.c.h.b16 %v634
        %v1882 = vunpack.c.l.b16 %v635
        %v1883 = vunpack.c.h.b16 %v635
        %v1884 = vunpack.c.l.b16 %v636
        %v1885 = vunpack.c.h.b16 %v636
        %v1886 = vunpack.c.l.b16 %v637
        %v1887 = vunpack.c.h.b16 %v637
        %v1888 = vunpack.c.l.b16 %v638
        %v1889 = vunpack.c.h.b16 %v638
        %v1890 = vunpack.c.l.b16 %v639
        %v1891 = vunpack.c.h.b16 %v639
        %v1892 = vunpack.c.l.b16 %v640
        %v1893 = vunpack.c.h.b16 %v640
        %v1894 = vunpack.c.l.b16 %v641
        %v1895 = vunpack.c.h.b16 %v641
        %v1896 = vunpack.c.l.b16 %v642
        %v1897 = vunpack.c.h.b16 %v642
        %v1898 = vpack.c.b16 %v1136, %v1130
        %v1899 = vpack.c.b16 %v1137, %v1131
        %v1900 = vpack.c.b16 %v1138, %v1132
        %v1901 = vpack.c.b16 %v1139, %v1133
        %v1902 = vpack.c.b16 %v1140, %v1134
        %v1903 = vpack.c.b16 %v1141, %v1135
        %v1904 = vpack.c.b16 %v1148, %v1142
        %v1905 = vpack.c.b16 %v1149, %v1143
        %v1906 = vpack.c.b16 %v1150, %v1144
        %v1907 = vpack.c.b16 %v1151, %v1145
        %v1908 = vpack.c.b16 %v1152, %v1146
        %v1909 = vpack.c.b16 %v1153, %v1147
        %v1910 = vpack.c.b16 %v1160, %v1154
        %v1911 = vpack.c.b16 %v1161, %v1155
        %v1912 = vpack.c.b16 %v1162, %v1156
        %v1913 = vpack.c.b16 %v1163, %v1157
        %v1914 = vpack.c.b16 %v1164, %v1158
        %v1915 = vpack.c.b16 %v1165, %v1159
        %v1916 = vpack.c.b16 %v1172, %v1166
        %v1917 = vpack.c.b16 %v1173, %v1167
        %v1918 = vpack.c.b16 %v1174, %v1168
        %v1919 = vpack.c.b16 %v1175, %v1169
        %v1920 = vpack.c.b16 %v1176, %v1170
        %v1921 = vpack.c.b16 %v1177, %v1171
        %v1922 = vpack.c.b16 %v1184, %v1178
        %v1923 = vpack.c.b16 %v1185, %v1179
        %v1924 = vpack.c.b16 %v1186, %v1180
        %v1925 = vpack.c.b16 %v1187, %v1181
        %v1926 = vpack.c.b16 %v1188, %v1182
        %v1927 = vpack.c.b16 %v1189, %v1183
        %v1928 = vpack.c.b16 %v1196, %v1190
        %v1929 = vpack.c.b16 %v1197, %v1191
        %v1930 = vpack.c.b16 %v1198, %v1192
        %v1931 = vpack.c.b16 %v1199, %v1193
        %v1932 = vpack.c.b16 %v1200, %v1194
        %v1933 = vpack.c.b16 %v1201, %v1195
        %v1934 = vpack.c.b16 %v1208, %v1202
        %v1935 = vpack.c.b16 %v1209, %v1203
        %v1936 = vpack.c.b16 %v1210, %v1204
        %v1937 = vpack.c.b16 %v1211, %v1205
        %v1938 = vpack.c.b16 %v1212, %v1206
        %v1939 = vpack.c.b16 %v1213, %v1207
        %v1940 = vpack.c.b16 %v1220, %v1214
        %v1941 = vpack.c.b16 %v1221, %v1215
        %v1942 = vpack.c.b16 %v1222, %v1216
        %v1943 = vpack.c.b16 %v1223, %v1217
        %v1944 = vpack.c.b16 %v1224, %v1218
        %v1945 = vpack.c.b16 %v1225, %v1219
        %v1946 = vpack.c.b16 %v1232, %v1226
        %v1947 = vpack.c.b16 %v1233, %v1227
        %v1948 = vpack.c.b16 %v1234, %v1228
        %v1949 = vpack.c.b16 %v1235, %v1229
        %v1950 = vpack.c.b16 %v1236, %v1230
        %v1951 = vpack.c.b16 %v1237, %v1231
        %v1952 = vpack.c.b16 %v1244, %v1238
        %v1953 = vpack.c.b16 %v1245, %v1239
        %v1954 = vpack.c.b16 %v1246, %v1240
        %v1955 = vpack.c.b16 %v1247, %v1241
        %v1956 = vpack.c.b16 %v1248, %v1242
        %v1957 = vpack.c.b16 %v1249, %v1243
        %v1958 = vpack.c.b16 %v1256, %v1250
        %v1959 = vpack.c.b16 %v1257, %v1251
        %v1960 = vpack.c.b16 %v1258, %v1252
        %v1961 = vpack.c.b16 %v1259, %v1253
        %v1962 = vpack.c.b16 %v1260, %v1254
        %v1963 = vpack.c.b16 %v1261, %v1255
        %v1964 = vpack.c.b16 %v1268, %v1262
        %v1965 = vpack.c.b16 %v1269, %v1263
        %v1966 = vpack.c.b16 %v1270, %v1264
        %v1967 = vpack.c.b16 %v1271, %v1265
        %v1968 = vpack.c.b16 %v1272, %v1266
        %v1969 = vpack.c.b16 %v1273, %v1267
        %v1970 = vpack.c.b16 %v1280, %v1274
        %v1971 = vpack.c.b16 %v1281, %v1275
        %v1972 = vpack.c.b16 %v1282, %v1276
        %v1973 = vpack.c.b16 %v1283, %v1277
        %v1974 = vpack.c.b16 %v1284, %v1278
        %v1975 = vpack.c.b16 %v1285, %v1279
        %v1976 = vpack.c.b16 %v1292, %v1286
        %v1977 = vpack.c.b16 %v1293, %v1287
        %v1978 = vpack.c.b16 %v1294, %v1288
        %v1979 = vpack.c.b16 %v1295, %v1289
        %v1980 = vpack.c.b16 %v1296, %v1290
        %v1981 = vpack.c.b16 %v1297, %v1291
        %v1982 = vpack.c.b16 %v1304, %v1298
        %v1983 = vpack.c.b16 %v1305, %v1299
        %v1984 = vpack.c.b16 %v1306, %v1300
        %v1985 = vpack.c.b16 %v1307, %v1301
        %v1986 = vpack.c.b16 %v1308, %v1302
        %v1987 = vpack.c.b16 %v1309, %v1303
        %v1988 = vpack.c.b16 %v1316, %v1310
        %v1989 = vpack.c.b16 %v1317, %v1311
        %v1990 = vpack.c.b16 %v1318, %v1312
        %v1991 = vpack.c.b16 %v1319, %v1313
        %v1992 = vpack.c.b16 %v1320, %v1314
        %v1993 = vpack.c.b16 %v1321, %v1315
        %v1994 = vpack.c.b16 %v1328, %v1322
        %v1995 = vpack.c.b16 %v1329, %v1323
        %v1996 = vpack.c.b16 %v1330, %v1324
        %v1997 = vpack.c.b16 %v1331, %v1325
        %v1998 = vpack.c.b16 %v1332, %v1326
        %v1999 = vpack.c.b16 %v1333, %v1327
        %v2000 = vpack.c.b16 %v1340, %v1334
        %v2001 = vpack.c.b16 %v1341, %v1335
        %v2002 = vpack.c.b16 %v1342, %v1336
        %v2003 = vpack.c.b16 %v1343, %v1337
        %v2004 = vpack.c.b16 %v1344, %v1338
        %v2005 = vpack.c.b16 %v1345, %v1339
        %v2006 = vpack.c.b16 %v1352, %v1346
        %v2007 = vpack.c.b16 %v1353, %v1347
        %v2008 = vpack.c.b16 %v1354, %v1348
        %v2009 = vpack.c.b16 %v1355, %v1349
        %v2010 = vpack.c.b16 %v1356, %v1350
        %v2011 = vpack.c.b16 %v1357, %v1351
        %v2012 = vpack.c.b16 %v1364, %v1358
        %v2013 = vpack.c.b16 %v1365, %v1359
        %v2014 = vpack.c.b16 %v1366, %v1360
        %v2015 = vpack.c.b16 %v1367, %v1361
        %v2016 = vpack.c.b16 %v1368, %v1362
        %v2017 = vpack.c.b16 %v1369, %v1363
        %v2018 = vpack.c.b16 %v1376, %v1370
        %v2019 = vpack.c.b16 %v1377, %v1371
        %v2020 = vpack.c.b16 %v1378, %v1372
        %v2021 = vpack.c.b16 %v1379, %v1373
        %v2022 = vpack.c.b16 %v1380, %v1374
        %v2023 = vpack.c.b16 %v1381, %v1375
        %v2024 = vpack.c.b16 %v1388, %v1382
        %v2025 = vpack.c.b16 %v1389, %v1383
        %v2026 = vpack.c.b16 %v1390, %v1384
        %v2027 = vpack.c.b16 %v1391, %v1385
        %v2028 = vpack.c.b16 %v1392, %v1386
        %v2029 = vpack.c.b16 %v1393, %v1387
        %v2030 = vpack.c.b16 %v1400, %v1394
        %v2031 = vpack.c.b16 %v1401, %v1395
        %v2032 = vpack.c.b16 %v1402, %v1396
        %v2033 = vpack.c.b16 %v1403, %v1397
        %v2034 = vpack.c.b16 %v1404, %v1398
        %v2035 = vpack.c.b16 %v1405, %v1399
        %v2036 = vpack.c.b16 %v1412, %v1406
        %v2037 = vpack.c.b16 %v1413, %v1407
        %v2038 = vpack.c.b16 %v1414, %v1408
        %v2039 = vpack.c.b16 %v1415, %v1409
        %v2040 = vpack.c.b16 %v1416, %v1410
        %v2041 = vpack.c.b16 %v1417, %v1411
        %v2042 = vpack.c.b16 %v1424, %v1418
        %v2043 = vpack.c.b16 %v1425, %v1419
        %v2044 = vpack.c.b16 %v1426, %v1420
        %v2045 = vpack.c.b16 %v1427, %v1421
        %v2046 = vpack.c.b16 %v1428, %v1422
        %v2047 = vpack.c.b16 %v1429, %v1423
        %v2048 = vpack.c.b16 %v1436, %v1430
        %v2049 = vpack.c.b16 %v1437, %v1431
        %v2050 = vpack.c.b16 %v1438, %v1432
        %v2051 = vpack.c.b16 %v1439, %v1433
        %v2052 = vpack.c.b16 %v1440, %v1434
        %v2053 = vpack.c.b16 %v1441, %v1435
        %v2054 = vpack.c.b16 %v1448, %v1442
        %v2055 = vpack.c.b16 %v1449, %v1443
        %v2056 = vpack.c.b16 %v1450, %v1444
        %v2057 = vpack.c.b16 %v1451, %v1445
        %v2058 = vpack.c.b16 %v1452, %v1446
        %v2059 = vpack.c.b16 %v1453, %v1447
        %v2060 = vpack.c.b16 %v1460, %v1454
        %v2061 = vpack.c.b16 %v1461, %v1455
        %v2062 = vpack.c.b16 %v1462, %v1456
        %v2063 = vpack.c.b16 %v1463, %v1457
        %v2064 = vpack.c.b16 %v1464, %v1458
        %v2065 = vpack.c.b16 %v1465, %v1459
        %v2066 = vpack.c.b16 %v1472, %v1466
        %v2067 = vpack.c.b16 %v1473, %v1467
        %v2068 = vpack.c.b16 %v1474, %v1468
        %v2069 = vpack.c.b16 %v1475, %v1469
        %v2070 = vpack.c.b16 %v1476, %v1470
        %v2071 = vpack.c.b16 %v1477, %v1471
        %v2072 = vpack.c.b16 %v1484, %v1478
        %v2073 = vpack.c.b16 %v1485, %v1479
        %v2074 = vpack.c.b16 %v1486, %v1480
        %v2075 = vpack.c.b16 %v1487, %v1481
        %v2076 = vpack.c.b16 %v1488, %v1482
        %v2077 = vpack.c.b16 %v1489, %v1483
        %v2078 = vpack.c.b16 %v1496, %v1490
        %v2079 = vpack.c.b16 %v1497, %v1491
        %v2080 = vpack.c.b16 %v1498, %v1492
        %v2081 = vpack.c.b16 %v1499, %v1493
        %v2082 = vpack.c.b16 %v1500, %v1494
        %v2083 = vpack.c.b16 %v1501, %v1495
        %v2084 = vpack.c.b16 %v1508, %v1502
        %v2085 = vpack.c.b16 %v1509, %v1503
        %v2086 = vpack.c.b16 %v1510, %v1504
        %v2087 = vpack.c.b16 %v1511, %v1505
        %v2088 = vpack.c.b16 %v1512, %v1506
        %v2089 = vpack.c.b16 %v1513, %v1507
        %v2090 = vpack.c.b16 %v1520, %v1514
        %v2091 = vpack.c.b16 %v1521, %v1515
        %v2092 = vpack.c.b16 %v1522, %v1516
        %v2093 = vpack.c.b16 %v1523, %v1517
        %v2094 = vpack.c.b16 %v1524, %v1518
        %v2095 = vpack.c.b16 %v1525, %v1519
        %v2096 = vpack.c.b16 %v1532, %v1526
        %v2097 = vpack.c.b16 %v1533, %v1527
        %v2098 = vpack.c.b16 %v1534, %v1528
        %v2099 = vpack.c.b16 %v1535, %v1529
        %v2100 = vpack.c.b16 %v1536, %v1530
        %v2101 = vpack.c.b16 %v1537, %v1531
        %v2102 = vpack.c.b16 %v1544, %v1538
        %v2103 = vpack.c.b16 %v1545, %v1539
        %v2104 = vpack.c.b16 %v1546, %v1540
        %v2105 = vpack.c.b16 %v1547, %v1541
        %v2106 = vpack.c.b16 %v1548, %v1542
        %v2107 = vpack.c.b16 %v1549, %v1543
        %v2108 = vpack.c.b16 %v1556, %v1550
        %v2109 = vpack.c.b16 %v1557, %v1551
        %v2110 = vpack.c.b16 %v1558, %v1552
        %v2111 = vpack.c.b16 %v1559, %v1553
        %v2112 = vpack.c.b16 %v1560, %v1554
        %v2113 = vpack.c.b16 %v1561, %v1555
        %v2114 = vpack.c.b16 %v1568, %v1562
        %v2115 = vpack.c.b16 %v1569, %v1563
        %v2116 = vpack.c.b16 %v1570, %v1564
        %v2117 = vpack.c.b16 %v1571, %v1565
        %v2118 = vpack.c.b16 %v1572, %v1566
        %v2119 = vpack.c.b16 %v1573, %v1567
        %v2120 = vpack.c.b16 %v1580, %v1574
        %v2121 = vpack.c.b16 %v1581, %v1575
        %v2122 = vpack.c.b16 %v1582, %v1576
        %v2123 = vpack.c.b16 %v1583, %v1577
        %v2124 = vpack.c.b16 %v1584, %v1578
        %v2125 = vpack.c.b16 %v1585, %v1579
        %v2126 = vpack.c.b16 %v1592, %v1586
        %v2127 = vpack.c.b16 %v1593, %v1587
        %v2128 = vpack.c.b16 %v1594, %v1588
        %v2129 = vpack.c.b16 %v1595, %v1589
        %v2130 = vpack.c.b16 %v1596, %v1590
        %v2131 = vpack.c.b16 %v1597, %v1591
        %v2132 = vpack.c.b16 %v1604, %v1598
        %v2133 = vpack.c.b16 %v1605, %v1599
        %v2134 = vpack.c.b16 %v1606, %v1600
        %v2135 = vpack.c.b16 %v1607, %v1601
        %v2136 = vpack.c.b16 %v1608, %v1602
        %v2137 = vpack.c.b16 %v1609, %v1603
        %v2138 = vpack.c.b16 %v1616, %v1610
        %v2139 = vpack.c.b16 %v1617, %v1611
        %v2140 = vpack.c.b16 %v1618, %v1612
        %v2141 = vpack.c.b16 %v1619, %v1613
        %v2142 = vpack.c.b16 %v1620, %v1614
        %v2143 = vpack.c.b16 %v1621, %v1615
        %v2144 = vpack.c.b16 %v1628, %v1622
        %v2145 = vpack.c.b16 %v1629, %v1623
        %v2146 = vpack.c.b16 %v1630, %v1624
        %v2147 = vpack.c.b16 %v1631, %v1625
        %v2148 = vpack.c.b16 %v1632, %v1626
        %v2149 = vpack.c.b16 %v1633, %v1627
        %v2150 = vpack.c.b16 %v1640, %v1634
        %v2151 = vpack.c.b16 %v1641, %v1635
        %v2152 = vpack.c.b16 %v1642, %v1636
        %v2153 = vpack.c.b16 %v1643, %v1637
        %v2154 = vpack.c.b16 %v1644, %v1638
        %v2155 = vpack.c.b16 %v1645, %v1639
        %v2156 = vpack.c.b16 %v1652, %v1646
        %v2157 = vpack.c.b16 %v1653, %v1647
        %v2158 = vpack.c.b16 %v1654, %v1648
        %v2159 = vpack.c.b16 %v1655, %v1649
        %v2160 = vpack.c.b16 %v1656, %v1650
        %v2161 = vpack.c.b16 %v1657, %v1651
        %v2162 = vpack.c.b16 %v1664, %v1658
        %v2163 = vpack.c.b16 %v1665, %v1659
        %v2164 = vpack.c.b16 %v1666, %v1660
        %v2165 = vpack.c.b16 %v1667, %v1661
        %v2166 = vpack.c.b16 %v1668, %v1662
        %v2167 = vpack.c.b16 %v1669, %v1663
        %v2168 = vpack.c.b16 %v1676, %v1670
        %v2169 = vpack.c.b16 %v1677, %v1671
        %v2170 = vpack.c.b16 %v1678, %v1672
        %v2171 = vpack.c.b16 %v1679, %v1673
        %v2172 = vpack.c.b16 %v1680, %v1674
        %v2173 = vpack.c.b16 %v1681, %v1675
        %v2174 = vpack.c.b16 %v1688, %v1682
        %v2175 = vpack.c.b16 %v1689, %v1683
        %v2176 = vpack.c.b16 %v1690, %v1684
        %v2177 = vpack.c.b16 %v1691, %v1685
        %v2178 = vpack.c.b16 %v1692, %v1686
        %v2179 = vpack.c.b16 %v1693, %v1687
        %v2180 = vpack.c.b16 %v1700, %v1694
        %v2181 = vpack.c.b16 %v1701, %v1695
        %v2182 = vpack.c.b16 %v1702, %v1696
        %v2183 = vpack.c.b16 %v1703, %v1697
        %v2184 = vpack.c.b16 %v1704, %v1698
        %v2185 = vpack.c.b16 %v1705, %v1699
        %v2186 = vpack.c.b16 %v1712, %v1706
        %v2187 = vpack.c.b16 %v1713, %v1707
        %v2188 = vpack.c.b16 %v1714, %v1708
        %v2189 = vpack.c.b16 %v1715, %v1709
        %v2190 = vpack.c.b16 %v1716, %v1710
        %v2191 = vpack.c.b16 %v1717, %v1711
        %v2192 = vpack.c.b16 %v1724, %v1718
        %v2193 = vpack.c.b16 %v1725, %v1719
        %v2194 = vpack.c.b16 %v1726, %v1720
        %v2195 = vpack.c.b16 %v1727, %v1721
        %v2196 = vpack.c.b16 %v1728, %v1722
        %v2197 = vpack.c.b16 %v1729, %v1723
        %v2198 = vpack.c.b16 %v1736, %v1730
        %v2199 = vpack.c.b16 %v1737, %v1731
        %v2200 = vpack.c.b16 %v1738, %v1732
        %v2201 = vpack.c.b16 %v1739, %v1733
        %v2202 = vpack.c.b16 %v1740, %v1734
        %v2203 = vpack.c.b16 %v1741, %v1735
        %v2204 = vpack.c.b16 %v1748, %v1742
        %v2205 = vpack.c.b16 %v1749, %v1743
        %v2206 = vpack.c.b16 %v1750, %v1744
        %v2207 = vpack.c.b16 %v1751, %v1745
        %v2208 = vpack.c.b16 %v1752, %v1746
        %v2209 = vpack.c.b16 %v1753, %v1747
        %v2210 = vpack.c.b16 %v1760, %v1754
        %v2211 = vpack.c.b16 %v1761, %v1755
        %v2212 = vpack.c.b16 %v1762, %v1756
        %v2213 = vpack.c.b16 %v1763, %v1757
        %v2214 = vpack.c.b16 %v1764, %v1758
        %v2215 = vpack.c.b16 %v1765, %v1759
        %v2216 = vpack.c.b16 %v1772, %v1766
        %v2217 = vpack.c.b16 %v1773, %v1767
        %v2218 = vpack.c.b16 %v1774, %v1768
        %v2219 = vpack.c.b16 %v1775, %v1769
        %v2220 = vpack.c.b16 %v1776, %v1770
        %v2221 = vpack.c.b16 %v1777, %v1771
        %v2222 = vpack.c.b16 %v1784, %v1778
        %v2223 = vpack.c.b16 %v1785, %v1779
        %v2224 = vpack.c.b16 %v1786, %v1780
        %v2225 = vpack.c.b16 %v1787, %v1781
        %v2226 = vpack.c.b16 %v1788, %v1782
        %v2227 = vpack.c.b16 %v1789, %v1783
        %v2228 = vpack.c.b16 %v1796, %v1790
        %v2229 = vpack.c.b16 %v1797, %v1791
        %v2230 = vpack.c.b16 %v1798, %v1792
        %v2231 = vpack.c.b16 %v1799, %v1793
        %v2232 = vpack.c.b16 %v1800, %v1794
        %v2233 = vpack.c.b16 %v1801, %v1795
        %v2234 = vpack.c.b16 %v1808, %v1802
        %v2235 = vpack.c.b16 %v1809, %v1803
        %v2236 = vpack.c.b16 %v1810, %v1804
        %v2237 = vpack.c.b16 %v1811, %v1805
        %v2238 = vpack.c.b16 %v1812, %v1806
        %v2239 = vpack.c.b16 %v1813, %v1807
        %v2240 = vpack.c.b16 %v1820, %v1814
        %v2241 = vpack.c.b16 %v1821, %v1815
        %v2242 = vpack.c.b16 %v1822, %v1816
        %v2243 = vpack.c.b16 %v1823, %v1817
        %v2244 = vpack.c.b16 %v1824, %v1818
        %v2245 = vpack.c.b16 %v1825, %v1819
        %v2246 = vpack.c.b16 %v1832, %v1826
        %v2247 = vpack.c.b16 %v1833, %v1827
        %v2248 = vpack.c.b16 %v1834, %v1828
        %v2249 = vpack.c.b16 %v1835, %v1829
        %v2250 = vpack.c.b16 %v1836, %v1830
        %v2251 = vpack.c.b16 %v1837, %v1831
        %v2252 = vpack.c.b16 %v1844, %v1838
        %v2253 = vpack.c.b16 %v1845, %v1839
        %v2254 = vpack.c.b16 %v1846, %v1840
        %v2255 = vpack.c.b16 %v1847, %v1841
        %v2256 = vpack.c.b16 %v1848, %v1842
        %v2257 = vpack.c.b16 %v1849, %v1843
        %v2258 = vpack.c.b16 %v1856, %v1850
        %v2259 = vpack.c.b16 %v1857, %v1851
        %v2260 = vpack.c.b16 %v1858, %v1852
        %v2261 = vpack.c.b16 %v1859, %v1853
        %v2262 = vpack.c.b16 %v1860, %v1854
        %v2263 = vpack.c.b16 %v1861, %v1855
        %v2264 = vpack.c.b16 %v1868, %v1862
        %v2265 = vpack.c.b16 %v1869, %v1863
        %v2266 = vpack.c.b16 %v1870, %v1864
        %v2267 = vpack.c.b16 %v1871, %v1865
        %v2268 = vpack.c.b16 %v1872, %v1866
        %v2269 = vpack.c.b16 %v1873, %v1867
        %v2270 = vpack.c.b16 %v1880, %v1874
        %v2271 = vpack.c.b16 %v1881, %v1875
        %v2272 = vpack.c.b16 %v1882, %v1876
        %v2273 = vpack.c.b16 %v1883, %v1877
        %v2274 = vpack.c.b16 %v1884, %v1878
        %v2275 = vpack.c.b16 %v1885, %v1879
        %v2276 = vpack.c.b16 %v1892, %v1886
        %v2277 = vpack.c.b16 %v1893, %v1887
        %v2278 = vpack.c.b16 %v1894, %v1888
        %v2279 = vpack.c.b16 %v1895, %v1889
        %v2280 = vpack.c.b16 %v1896, %v1890
        %v2281 = vpack.c.b16 %v1897, %v1891
        %v2762 = vunpack.c.l.b16 %v643
        %v2763 = vunpack.c.l.b16 %v644
        %v2764 = vunpack.c.l.b16 %v645
        %v2765 = vunpack.c.l.b16 %v646
        %v2766 = vunpack.c.l.b16 %v647
        %v2767 = vunpack.c.l.b16 %v648
        %v2768 = vunpack.c.l.b16 %v649
        %v2769 = vunpack.c.l.b16 %v650
        %v2770 = vunpack.c.l.b16 %v651
        %v2771 = vunpack.c.l.b16 %v652
        %v2772 = vunpack.c.l.b16 %v653
        %v2773 = vunpack.c.l.b16 %v654
        %v2774 = vunpack.c.l.b16 %v655
        %v2775 = vunpack.c.l.b16 %v656
        %v2776 = vunpack.c.l.b16 %v657
        %v2777 = vunpack.c.l.b16 %v658
        %v2778 = vunpack.c.l.b16 %v659
        %v2779 = vunpack.c.l.b16 %v660
        %v2780 = vunpack.c.l.b16 %v661
        %v2781 = vunpack.c.l.b16 %v662
        %v2782 = vunpack.c.l.b16 %v663
        %v2783 = vunpack.c.l.b16 %v664
        %v2784 = vunpack.c.l.b16 %v665
        %v2785 = vunpack.c.l.b16 %v666
        %v2786 = vunpack.c.l.b16 %v667
        %v2787 = vunpack.c.l.b16 %v668
        %v2788 = vunpack.c.l.b16 %v669
        %v2789 = vunpack.c.l.b16 %v670
        %v2790 = vunpack.c.l.b16 %v671
        %v2791 = vunpack.c.l.b16 %v672
        %v2792 = vunpack.c.l.b16 %v673
        %v2793 = vunpack.c.l.b16 %v674
        %v2794 = vunpack.c.l.b16 %v675
        %v2795 = vunpack.c.l.b16 %v676
        %v2796 = vunpack.c.l.b16 %v677
        %v2797 = vunpack.c.l.b16 %v678
        %v2798 = vunpack.c.l.b16 %v679
        %v2799 = vunpack.c.l.b16 %v680
        %v2800 = vunpack.c.l.b16 %v681
        %v2801 = vunpack.c.l.b16 %v682
        %v2802 = vunpack.c.l.b16 %v683
        %v2803 = vunpack.c.l.b16 %v684
        %v2804 = vunpack.c.l.b16 %v685
        %v2805 = vunpack.c.l.b16 %v686
        %v2806 = vunpack.c.l.b16 %v687
        %v2807 = vunpack.c.l.b16 %v688
        %v2808 = vunpack.c.l.b16 %v689
        %v2809 = vunpack.c.l.b16 %v690
        %v2810 = vunpack.c.l.b16 %v691
        %v2811 = vunpack.c.l.b16 %v692
        %v2812 = vunpack.c.l.b16 %v693
        %v2813 = vunpack.c.l.b16 %v694
        %v2814 = vunpack.c.l.b16 %v695
        %v2815 = vunpack.c.l.b16 %v696
        %v2816 = vunpack.c.l.b16 %v697
        %v2817 = vunpack.c.l.b16 %v698
        %v2818 = vunpack.c.l.b16 %v699
        %v2819 = vunpack.c.l.b16 %v700
        %v2820 = vunpack.c.l.b16 %v701
        %v2821 = vunpack.c.l.b16 %v702
        %v2822 = vunpack.c.l.b16 %v703
        %v2823 = vunpack.c.l.b16 %v704
        %v2824 = vunpack.c.l.b16 %v705
        %v2825 = vunpack.c.l.b16 %v706
        %v2826 = vunpack.c.l.b16 %v707
        %v2827 = vunpack.c.l.b16 %v708
        %v2828 = vunpack.c.l.b16 %v709
        %v2829 = vunpack.c.l.b16 %v710
        %v2830 = vunpack.c.l.b16 %v711
        %v2831 = vunpack.c.l.b16 %v712
        %v2832 = vunpack.c.l.b16 %v713
        %v2833 = vunpack.c.l.b16 %v714
        %v2834 = vunpack.c.l.b16 %v715
        %v2835 = vunpack.c.l.b16 %v716
        %v2836 = vunpack.c.l.b16 %v717
        %v2837 = vunpack.c.l.b16 %v718
        %v2838 = vunpack.c.l.b16 %v719
        %v2839 = vunpack.c.l.b16 %v720
        %v2840 = vunpack.c.l.b16 %v721
        %v2841 = vunpack.c.l.b16 %v722
        %v2842 = vunpack.c.l.b16 %v723
        %v2843 = vunpack.c.l.b16 %v724
        %v2844 = vunpack.c.l.b16 %v725
        %v2845 = vunpack.c.l.b16 %v726
        %v2846 = vunpack.c.l.b16 %v727
        %v2847 = vunpack.c.l.b16 %v728
        %v2848 = vunpack.c.l.b16 %v729
        %v2849 = vunpack.c.l.b16 %v730
        %v2850 = vunpack.c.l.b16 %v731
        %v2851 = vunpack.c.l.b16 %v732
        %v2852 = vunpack.c.l.b16 %v733
        %v2853 = vunpack.c.l.b16 %v734
        %v2854 = vunpack.c.l.b16 %v735
        %v2855 = vunpack.c.l.b16 %v736
        %v2856 = vunpack.c.l.b16 %v737
        %v2857 = vunpack.c.l.b16 %v738
        %v2858 = vpack.c.b16 %v2763, %v2762
        %v2859 = vpack.c.b16 %v2765, %v2764
        %v2860 = vpack.c.b16 %v2767, %v2766
        %v2861 = vpack.c.b16 %v2769, %v2768
        %v2862 = vpack.c.b16 %v2771, %v2770
        %v2863 = vpack.c.b16 %v2773, %v2772
        %v2864 = vpack.c.b16 %v2775, %v2774
        %v2865 = vpack.c.b16 %v2777, %v2776
        %v2866 = vpack.c.b16 %v2779, %v2778
        %v2867 = vpack.c.b16 %v2781, %v2780
        %v2868 = vpack.c.b16 %v2783, %v2782
        %v2869 = vpack.c.b16 %v2785, %v2784
        %v2870 = vpack.c.b16 %v2787, %v2786
        %v2871 = vpack.c.b16 %v2789, %v2788
        %v2872 = vpack.c.b16 %v2791, %v2790
        %v2873 = vpack.c.b16 %v2793, %v2792
        %v2874 = vpack.c.b16 %v2795, %v2794
        %v2875 = vpack.c.b16 %v2797, %v2796
        %v2876 = vpack.c.b16 %v2799, %v2798
        %v2877 = vpack.c.b16 %v2801, %v2800
        %v2878 = vpack.c.b16 %v2803, %v2802
        %v2879 = vpack.c.b16 %v2805, %v2804
        %v2880 = vpack.c.b16 %v2807, %v2806
        %v2881 = vpack.c.b16 %v2809, %v2808
        %v2882 = vpack.c.b16 %v2811, %v2810
        %v2883 = vpack.c.b16 %v2813, %v2812
        %v2884 = vpack.c.b16 %v2815, %v2814
        %v2885 = vpack.c.b16 %v2817, %v2816
        %v2886 = vpack.c.b16 %v2819, %v2818
        %v2887 = vpack.c.b16 %v2821, %v2820
        %v2888 = vpack.c.b16 %v2823, %v2822
        %v2889 = vpack.c.b16 %v2825, %v2824
        %v2890 = vpack.c.b16 %v2827, %v2826
        %v2891 = vpack.c.b16 %v2829, %v2828
        %v2892 = vpack.c.b16 %v2831, %v2830
        %v2893 = vpack.c.b16 %v2833, %v2832
        %v2894 = vpack.c.b16 %v2835, %v2834
        %v2895 = vpack.c.b16 %v2837, %v2836
        %v2896 = vpack.c.b16 %v2839, %v2838
        %v2897 = vpack.c.b16 %v2841, %v2840
        %v2898 = vpack.c.b16 %v2843, %v2842
        %v2899 = vpack.c.b16 %v2845, %v2844
        %v2900 = vpack.c.b16 %v2847, %v2846
        %v2901 = vpack.c.b16 %v2849, %v2848
        %v2902 = vpack.c.b16 %v2851, %v2850
        %v2903 = vpack.c.b16 %v2853, %v2852
        %v2904 = vpack.c.b16 %v2855, %v2854
        %v2905 = vpack.c.b16 %v2857, %v2856
        %2954 = vmatprep.subr.bf16.mxu0 0
        %2955 = vmatpush1.bf16.msra.mxu0 %v2858
        %2956 = vmatprep.subr.bf16.mxu0 0
        %2957 = vmatpush1.bf16.msra.mxu0 %v2859
        %2958 = vmatprep.subr.bf16.mxu0 0
        %2959 = vmatpush1.bf16.msra.mxu0 %v2860
        %2960 = vmatprep.subr.bf16.mxu0 0
        %2961 = vmatpush1.bf16.msra.mxu0 %v2861
        %2962 = vmatprep.subr.bf16.mxu0 0
        %2963 = vmatpush1.bf16.msra.mxu0 %v2862
        %2964 = vmatprep.subr.bf16.mxu0 0
        %2965 = vmatpush1.bf16.msra.mxu0 %v2863
        %2966 = vmatprep.subr.bf16.mxu0 0
        %2967 = vmatpush1.bf16.msra.mxu0 %v2864
        %2968 = vmatprep.subr.bf16.mxu0 0
        %2969 = vmatpush1.bf16.msra.mxu0 %v2865
        %2970 = vmatprep.subr.bf16.mxu0 0
        %2971 = vmatpush1.bf16.msra.mxu0 %v2866
        %2972 = vmatprep.subr.bf16.mxu0 0
        %2973 = vmatpush1.bf16.msra.mxu0 %v2867
        %2974 = vmatprep.subr.bf16.mxu0 0
        %2975 = vmatpush1.bf16.msra.mxu0 %v2868
        %2976 = vmatprep.subr.bf16.mxu0 0
        %2977 = vmatpush1.bf16.msra.mxu0 %v2869
        %2978 = vmatprep.subr.bf16.mxu0 0
        %2979 = vmatpush1.bf16.msra.mxu0 %v2870
        %2980 = vmatprep.subr.bf16.mxu0 0
        %2981 = vmatpush1.bf16.msra.mxu0 %v2871
        %2982 = vmatprep.subr.bf16.mxu0 0
        %2983 = vmatpush1.bf16.msra.mxu0 %v2872
        %2984 = vmatprep.subr.bf16.mxu0 0
        %2985 = vmatpush1.bf16.msra.mxu0 %v2873
        %2986 = vmatprep.mubr.bf16.mxu0 %v1899
        %2987 = vmatmul.mubr.bf16.gmra.mrb[0].mxu0 %v1898
        %v2988 = vpop.f32.mrb[0].mxu0
        %v2989 = vadd.f32 %v744, %v2988
        %v2990 = vpop.f32.mrb[0].mxu0
        %v2991 = vpop.f32.mrb[0].mxu0
        %v2992 = vadd.f32 %v744, %v2991
        %v2993 = vpop.f32.mrb[0].mxu0
        %2994 = vmatprep.mubr.bf16.mxu0 %v1905
        %2995 = vmatmul.mubr.bf16.gmra.mrb[0].mxu0 %v1904
        %v2996 = vpop.f32.mrb[0].mxu0
        %v2997 = vadd.f32 %v744, %v2996
        %v2998 = vpop.f32.mrb[0].mxu0
        %v2999 = vpop.f32.mrb[0].mxu0
        %v3000 = vadd.f32 %v744, %v2999
        %v3001 = vpop.f32.mrb[0].mxu0
        %3002 = vmatprep.mubr.bf16.mxu0 %v1911
        %3003 = vmatmul.mubr.bf16.gmra.mrb[0].mxu0 %v1910
        %v3004 = vpop.f32.mrb[0].mxu0
        %v3005 = vadd.f32 %v744, %v3004
        %v3006 = vpop.f32.mrb[0].mxu0
        %v3007 = vpop.f32.mrb[0].mxu0
        %v3008 = vadd.f32 %v744, %v3007
        %v3009 = vpop.f32.mrb[0].mxu0
        %3010 = vmatprep.mubr.bf16.mxu0 %v1917
        %3011 = vmatmul.mubr.bf16.gmra.mrb[0].mxu0 %v1916
        %v3012 = vpop.f32.mrb[0].mxu0
        %v3013 = vadd.f32 %v744, %v3012
        %v3014 = vpop.f32.mrb[0].mxu0
        %v3015 = vpop.f32.mrb[0].mxu0
        %v3016 = vadd.f32 %v744, %v3015
        %v3017 = vpop.f32.mrb[0].mxu0
        %3018 = vmatprep.mubr.bf16.mxu0 %v1923
        %3019 = vmatmul.mubr.bf16.gmra.mrb[0].mxu0 %v1922
        %v3020 = vpop.f32.mrb[0].mxu0
        %v3021 = vadd.f32 %v744, %v3020
        %v3022 = vpop.f32.mrb[0].mxu0
        %v3023 = vpop.f32.mrb[0].mxu0
        %v3024 = vadd.f32 %v744, %v3023
        %v3025 = vpop.f32.mrb[0].mxu0
        %3026 = vmatprep.mubr.bf16.mxu0 %v1929
        %3027 = vmatmul.mubr.bf16.gmra.mrb[0].mxu0 %v1928
        %v3028 = vpop.f32.mrb[0].mxu0
        %v3029 = vadd.f32 %v744, %v3028
        %v3030 = vpop.f32.mrb[0].mxu0
        %v3031 = vpop.f32.mrb[0].mxu0
        %v3032 = vadd.f32 %v744, %v3031
        %v3033 = vpop.f32.mrb[0].mxu0
        %3034 = vmatprep.mubr.bf16.mxu0 %v1935
        %3035 = vmatmul.mubr.bf16.gmra.mrb[0].mxu0 %v1934
        %v3036 = vpop.f32.mrb[0].mxu0
        %v3037 = vadd.f32 %v744, %v3036
        %v3038 = vpop.f32.mrb[0].mxu0
        %v3039 = vpop.f32.mrb[0].mxu0
        %v3040 = vadd.f32 %v744, %v3039
        %v3041 = vpop.f32.mrb[0].mxu0
        %3042 = vmatprep.mubr.bf16.mxu0 %v1941
        %3043 = vmatmul.mubr.bf16.gmra.mrb[0].mxu0 %v1940
        %v3044 = vpop.f32.mrb[0].mxu0
        %v3045 = vadd.f32 %v744, %v3044
        %v3046 = vpop.f32.mrb[0].mxu0
        %v3047 = vpop.f32.mrb[0].mxu0
        %v3048 = vadd.f32 %v744, %v3047
        %v3049 = vpop.f32.mrb[0].mxu0
        %3050 = vmatprep.mubr.bf16.mxu0 %v1947
        %3051 = vmatmul.mubr.bf16.gmra.mrb[0].mxu0 %v1946
        %v3052 = vpop.f32.mrb[0].mxu0
        %v3053 = vadd.f32 %v744, %v3052
        %v3054 = vpop.f32.mrb[0].mxu0
        %v3055 = vpop.f32.mrb[0].mxu0
        %v3056 = vadd.f32 %v744, %v3055
        %v3057 = vpop.f32.mrb[0].mxu0
        %3058 = vmatprep.mubr.bf16.mxu0 %v1953
        %3059 = vmatmul.mubr.bf16.gmra.mrb[0].mxu0 %v1952
        %v3060 = vpop.f32.mrb[0].mxu0
        %v3061 = vadd.f32 %v744, %v3060
        %v3062 = vpop.f32.mrb[0].mxu0
        %v3063 = vpop.f32.mrb[0].mxu0
        %v3064 = vadd.f32 %v744, %v3063
        %v3065 = vpop.f32.mrb[0].mxu0
        %3066 = vmatprep.mubr.bf16.mxu0 %v1959
        %3067 = vmatmul.mubr.bf16.gmra.mrb[0].mxu0 %v1958
        %v3068 = vpop.f32.mrb[0].mxu0
        %v3069 = vadd.f32 %v744, %v3068
        %v3070 = vpop.f32.mrb[0].mxu0
        %v3071 = vpop.f32.mrb[0].mxu0
        %v3072 = vadd.f32 %v744, %v3071
        %v3073 = vpop.f32.mrb[0].mxu0
        %3074 = vmatprep.mubr.bf16.mxu0 %v1965
        %3075 = vmatmul.mubr.bf16.gmra.mrb[0].mxu0 %v1964
        %v3076 = vpop.f32.mrb[0].mxu0
        %v3077 = vadd.f32 %v744, %v3076
        %v3078 = vpop.f32.mrb[0].mxu0
        %v3079 = vpop.f32.mrb[0].mxu0
        %v3080 = vadd.f32 %v744, %v3079
        %v3081 = vpop.f32.mrb[0].mxu0
        %3082 = vmatprep.mubr.bf16.mxu0 %v1971
        %3083 = vmatmul.mubr.bf16.gmra.mrb[0].mxu0 %v1970
        %v3084 = vpop.f32.mrb[0].mxu0
        %v3085 = vadd.f32 %v744, %v3084
        %v3086 = vpop.f32.mrb[0].mxu0
        %v3087 = vpop.f32.mrb[0].mxu0
        %v3088 = vadd.f32 %v744, %v3087
        %v3089 = vpop.f32.mrb[0].mxu0
        %3090 = vmatprep.mubr.bf16.mxu0 %v1977
        %3091 = vmatmul.mubr.bf16.gmra.mrb[0].mxu0 %v1976
        %v3092 = vpop.f32.mrb[0].mxu0
        %v3093 = vadd.f32 %v744, %v3092
        %v3094 = vpop.f32.mrb[0].mxu0
        %v3095 = vpop.f32.mrb[0].mxu0
        %v3096 = vadd.f32 %v744, %v3095
        %v3097 = vpop.f32.mrb[0].mxu0
        %3098 = vmatprep.mubr.bf16.mxu0 %v1983
        %3099 = vmatmul.mubr.bf16.gmra.mrb[0].mxu0 %v1982
        %v3100 = vpop.f32.mrb[0].mxu0
        %v3101 = vadd.f32 %v744, %v3100
        %v3102 = vpop.f32.mrb[0].mxu0
        %v3103 = vpop.f32.mrb[0].mxu0
        %v3104 = vadd.f32 %v744, %v3103
        %v3105 = vpop.f32.mrb[0].mxu0
        %3106 = vmatprep.mubr.bf16.mxu0 %v1989
        %3107 = vmatmul.mubr.bf16.gmra.mrb[0].mxu0 %v1988
        %v3108 = vpop.f32.mrb[0].mxu0
        %v3109 = vadd.f32 %v744, %v3108
        %v3110 = vpop.f32.mrb[0].mxu0
        %v3111 = vpop.f32.mrb[0].mxu0
        %v3112 = vadd.f32 %v744, %v3111
        %v3113 = vpop.f32.mrb[0].mxu0
        %3114 = vmatprep.mubr.bf16.mxu0 %v1995
        %3115 = vmatmul.mubr.bf16.gmra.mrb[0].mxu0 %v1994
        %v3116 = vpop.f32.mrb[0].mxu0
        %v3117 = vadd.f32 %v744, %v3116
        %v3118 = vpop.f32.mrb[0].mxu0
        %v3119 = vpop.f32.mrb[0].mxu0
        %v3120 = vadd.f32 %v744, %v3119
        %v3121 = vpop.f32.mrb[0].mxu0
        %3122 = vmatprep.mubr.bf16.mxu0 %v2001
        %3123 = vmatmul.mubr.bf16.gmra.mrb[0].mxu0 %v2000
        %v3124 = vpop.f32.mrb[0].mxu0
        %v3125 = vadd.f32 %v744, %v3124
        %v3126 = vpop.f32.mrb[0].mxu0
        %v3127 = vpop.f32.mrb[0].mxu0
        %v3128 = vadd.f32 %v744, %v3127
        %v3129 = vpop.f32.mrb[0].mxu0
        %3130 = vmatprep.mubr.bf16.mxu0 %v2007
        %3131 = vmatmul.mubr.bf16.gmra.mrb[0].mxu0 %v2006
        %v3132 = vpop.f32.mrb[0].mxu0
        %v3133 = vadd.f32 %v744, %v3132
        %v3134 = vpop.f32.mrb[0].mxu0
        %v3135 = vpop.f32.mrb[0].mxu0
        %v3136 = vadd.f32 %v744, %v3135
        %v3137 = vpop.f32.mrb[0].mxu0
        %3138 = vmatprep.mubr.bf16.mxu0 %v2013
        %3139 = vmatmul.mubr.bf16.gmra.mrb[0].mxu0 %v2012
        %v3140 = vpop.f32.mrb[0].mxu0
        %v3141 = vadd.f32 %v744, %v3140
        %v3142 = vpop.f32.mrb[0].mxu0
        %v3143 = vpop.f32.mrb[0].mxu0
        %v3144 = vadd.f32 %v744, %v3143
        %v3145 = vpop.f32.mrb[0].mxu0
        %3146 = vmatprep.mubr.bf16.mxu0 %v2019
        %3147 = vmatmul.mubr.bf16.gmra.mrb[0].mxu0 %v2018
        %v3148 = vpop.f32.mrb[0].mxu0
        %v3149 = vadd.f32 %v744, %v3148
        %v3150 = vpop.f32.mrb[0].mxu0
        %v3151 = vpop.f32.mrb[0].mxu0
        %v3152 = vadd.f32 %v744, %v3151
        %v3153 = vpop.f32.mrb[0].mxu0
        %3154 = vmatprep.mubr.bf16.mxu0 %v2025
        %3155 = vmatmul.mubr.bf16.gmra.mrb[0].mxu0 %v2024
        %v3156 = vpop.f32.mrb[0].mxu0
        %v3157 = vadd.f32 %v744, %v3156
        %v3158 = vpop.f32.mrb[0].mxu0
        %v3159 = vpop.f32.mrb[0].mxu0
        %v3160 = vadd.f32 %v744, %v3159
        %v3161 = vpop.f32.mrb[0].mxu0
        %3162 = vmatprep.mubr.bf16.mxu0 %v2031
        %3163 = vmatmul.mubr.bf16.gmra.mrb[0].mxu0 %v2030
        %v3164 = vpop.f32.mrb[0].mxu0
        %v3165 = vadd.f32 %v744, %v3164
        %v3166 = vpop.f32.mrb[0].mxu0
        %v3167 = vpop.f32.mrb[0].mxu0
        %v3168 = vadd.f32 %v744, %v3167
        %v3169 = vpop.f32.mrb[0].mxu0
        %3170 = vmatprep.mubr.bf16.mxu0 %v2037
        %3171 = vmatmul.mubr.bf16.gmra.mrb[0].mxu0 %v2036
        %v3172 = vpop.f32.mrb[0].mxu0
        %v3173 = vadd.f32 %v744, %v3172
        %v3174 = vpop.f32.mrb[0].mxu0
        %v3175 = vpop.f32.mrb[0].mxu0
        %v3176 = vadd.f32 %v744, %v3175
        %v3177 = vpop.f32.mrb[0].mxu0
        %3178 = vmatprep.mubr.bf16.mxu0 %v2043
        %3179 = vmatmul.mubr.bf16.gmra.mrb[0].mxu0 %v2042
        %v3180 = vpop.f32.mrb[0].mxu0
        %v3181 = vadd.f32 %v744, %v3180
        %v3182 = vpop.f32.mrb[0].mxu0
        %v3183 = vpop.f32.mrb[0].mxu0
        %v3184 = vadd.f32 %v744, %v3183
        %v3185 = vpop.f32.mrb[0].mxu0
        %3186 = vmatprep.mubr.bf16.mxu0 %v2049
        %3187 = vmatmul.mubr.bf16.gmra.mrb[0].mxu0 %v2048
        %v3188 = vpop.f32.mrb[0].mxu0
        %v3189 = vadd.f32 %v744, %v3188
        %v3190 = vpop.f32.mrb[0].mxu0
        %v3191 = vpop.f32.mrb[0].mxu0
        %v3192 = vadd.f32 %v744, %v3191
        %v3193 = vpop.f32.mrb[0].mxu0
        %3194 = vmatprep.mubr.bf16.mxu0 %v2055
        %3195 = vmatmul.mubr.bf16.gmra.mrb[0].mxu0 %v2054
        %v3196 = vpop.f32.mrb[0].mxu0
        %v3197 = vadd.f32 %v744, %v3196
        %v3198 = vpop.f32.mrb[0].mxu0
        %v3199 = vpop.f32.mrb[0].mxu0
        %v3200 = vadd.f32 %v744, %v3199
        %v3201 = vpop.f32.mrb[0].mxu0
        %3202 = vmatprep.mubr.bf16.mxu0 %v2061
        %3203 = vmatmul.mubr.bf16.gmra.mrb[0].mxu0 %v2060
        %v3204 = vpop.f32.mrb[0].mxu0
        %v3205 = vadd.f32 %v744, %v3204
        %v3206 = vpop.f32.mrb[0].mxu0
        %v3207 = vpop.f32.mrb[0].mxu0
        %v3208 = vadd.f32 %v744, %v3207
        %v3209 = vpop.f32.mrb[0].mxu0
        %3210 = vmatprep.mubr.bf16.mxu0 %v2067
        %3211 = vmatmul.mubr.bf16.gmra.mrb[0].mxu0 %v2066
        %v3212 = vpop.f32.mrb[0].mxu0
        %v3213 = vadd.f32 %v744, %v3212
        %v3214 = vpop.f32.mrb[0].mxu0
        %v3215 = vpop.f32.mrb[0].mxu0
        %v3216 = vadd.f32 %v744, %v3215
        %v3217 = vpop.f32.mrb[0].mxu0
        %3218 = vmatprep.mubr.bf16.mxu0 %v2073
        %3219 = vmatmul.mubr.bf16.gmra.mrb[0].mxu0 %v2072
        %v3220 = vpop.f32.mrb[0].mxu0
        %v3221 = vadd.f32 %v744, %v3220
        %v3222 = vpop.f32.mrb[0].mxu0
        %v3223 = vpop.f32.mrb[0].mxu0
        %v3224 = vadd.f32 %v744, %v3223
        %v3225 = vpop.f32.mrb[0].mxu0
        %3226 = vmatprep.mubr.bf16.mxu0 %v2079
        %3227 = vmatmul.mubr.bf16.gmra.mrb[0].mxu0 %v2078
        %v3228 = vpop.f32.mrb[0].mxu0
        %v3229 = vadd.f32 %v744, %v3228
        %v3230 = vpop.f32.mrb[0].mxu0
        %v3231 = vpop.f32.mrb[0].mxu0
        %v3232 = vadd.f32 %v744, %v3231
        %v3233 = vpop.f32.mrb[0].mxu0
        %3234 = vmatprep.mubr.bf16.mxu0 %v2085
        %3235 = vmatmul.mubr.bf16.gmra.mrb[0].mxu0 %v2084
        %v3236 = vpop.f32.mrb[0].mxu0
        %v3237 = vadd.f32 %v744, %v3236
        %v3238 = vpop.f32.mrb[0].mxu0
        %v3239 = vpop.f32.mrb[0].mxu0
        %v3240 = vadd.f32 %v744, %v3239
        %v3241 = vpop.f32.mrb[0].mxu0
        %3242 = vmatprep.mubr.bf16.mxu0 %v2091
        %3243 = vmatmul.mubr.bf16.gmra.mrb[0].mxu0 %v2090
        %v3244 = vpop.f32.mrb[0].mxu0
        %v3245 = vadd.f32 %v744, %v3244
        %v3246 = vpop.f32.mrb[0].mxu0
        %v3247 = vpop.f32.mrb[0].mxu0
        %v3248 = vadd.f32 %v744, %v3247
        %v3249 = vpop.f32.mrb[0].mxu0
        %3250 = vmatprep.mubr.bf16.mxu0 %v2097
        %3251 = vmatmul.mubr.bf16.gmra.mrb[0].mxu0 %v2096
        %v3252 = vpop.f32.mrb[0].mxu0
        %v3253 = vadd.f32 %v744, %v3252
        %v3254 = vpop.f32.mrb[0].mxu0
        %v3255 = vpop.f32.mrb[0].mxu0
        %v3256 = vadd.f32 %v744, %v3255
        %v3257 = vpop.f32.mrb[0].mxu0
        %3258 = vmatprep.mubr.bf16.mxu0 %v2103
        %3259 = vmatmul.mubr.bf16.gmra.mrb[0].mxu0 %v2102
        %v3260 = vpop.f32.mrb[0].mxu0
        %v3261 = vadd.f32 %v744, %v3260
        %v3262 = vpop.f32.mrb[0].mxu0
        %v3263 = vpop.f32.mrb[0].mxu0
        %v3264 = vadd.f32 %v744, %v3263
        %v3265 = vpop.f32.mrb[0].mxu0
        %3266 = vmatprep.mubr.bf16.mxu0 %v2109
        %3267 = vmatmul.mubr.bf16.gmra.mrb[0].mxu0 %v2108
        %v3268 = vpop.f32.mrb[0].mxu0
        %v3269 = vadd.f32 %v744, %v3268
        %v3270 = vpop.f32.mrb[0].mxu0
        %v3271 = vpop.f32.mrb[0].mxu0
        %v3272 = vadd.f32 %v744, %v3271
        %v3273 = vpop.f32.mrb[0].mxu0
        %3274 = vmatprep.mubr.bf16.mxu0 %v2115
        %3275 = vmatmul.mubr.bf16.gmra.mrb[0].mxu0 %v2114
        %v3276 = vpop.f32.mrb[0].mxu0
        %v3277 = vadd.f32 %v744, %v3276
        %v3278 = vpop.f32.mrb[0].mxu0
        %v3279 = vpop.f32.mrb[0].mxu0
        %v3280 = vadd.f32 %v744, %v3279
        %v3281 = vpop.f32.mrb[0].mxu0
        %3282 = vmatprep.mubr.bf16.mxu0 %v2121
        %3283 = vmatmul.mubr.bf16.gmra.mrb[0].mxu0 %v2120
        %v3284 = vpop.f32.mrb[0].mxu0
        %v3285 = vadd.f32 %v744, %v3284
        %v3286 = vpop.f32.mrb[0].mxu0
        %v3287 = vpop.f32.mrb[0].mxu0
        %v3288 = vadd.f32 %v744, %v3287
        %v3289 = vpop.f32.mrb[0].mxu0
        %3290 = vmatprep.mubr.bf16.mxu0 %v2127
        %3291 = vmatmul.mubr.bf16.gmra.mrb[0].mxu0 %v2126
        %v3292 = vpop.f32.mrb[0].mxu0
        %v3293 = vadd.f32 %v744, %v3292
        %v3294 = vpop.f32.mrb[0].mxu0
        %v3295 = vpop.f32.mrb[0].mxu0
        %v3296 = vadd.f32 %v744, %v3295
        %v3297 = vpop.f32.mrb[0].mxu0
        %3298 = vmatprep.mubr.bf16.mxu0 %v2133
        %3299 = vmatmul.mubr.bf16.gmra.mrb[0].mxu0 %v2132
        %v3300 = vpop.f32.mrb[0].mxu0
        %v3301 = vadd.f32 %v744, %v3300
        %v3302 = vpop.f32.mrb[0].mxu0
        %v3303 = vpop.f32.mrb[0].mxu0
        %v3304 = vadd.f32 %v744, %v3303
        %v3305 = vpop.f32.mrb[0].mxu0
        %3306 = vmatprep.mubr.bf16.mxu0 %v2139
        %3307 = vmatmul.mubr.bf16.gmra.mrb[0].mxu0 %v2138
        %v3308 = vpop.f32.mrb[0].mxu0
        %v3309 = vadd.f32 %v744, %v3308
        %v3310 = vpop.f32.mrb[0].mxu0
        %v3311 = vpop.f32.mrb[0].mxu0
        %v3312 = vadd.f32 %v744, %v3311
        %v3313 = vpop.f32.mrb[0].mxu0
        %3314 = vmatprep.mubr.bf16.mxu0 %v2145
        %3315 = vmatmul.mubr.bf16.gmra.mrb[0].mxu0 %v2144
        %v3316 = vpop.f32.mrb[0].mxu0
        %v3317 = vadd.f32 %v744, %v3316
        %v3318 = vpop.f32.mrb[0].mxu0
        %v3319 = vpop.f32.mrb[0].mxu0
        %v3320 = vadd.f32 %v744, %v3319
        %v3321 = vpop.f32.mrb[0].mxu0
        %3322 = vmatprep.mubr.bf16.mxu0 %v2151
        %3323 = vmatmul.mubr.bf16.gmra.mrb[0].mxu0 %v2150
        %v3324 = vpop.f32.mrb[0].mxu0
        %v3325 = vadd.f32 %v744, %v3324
        %v3326 = vpop.f32.mrb[0].mxu0
        %v3327 = vpop.f32.mrb[0].mxu0
        %v3328 = vadd.f32 %v744, %v3327
        %v3329 = vpop.f32.mrb[0].mxu0
        %3330 = vmatprep.mubr.bf16.mxu0 %v2157
        %3331 = vmatmul.mubr.bf16.gmra.mrb[0].mxu0 %v2156
        %v3332 = vpop.f32.mrb[0].mxu0
        %v3333 = vadd.f32 %v744, %v3332
        %v3334 = vpop.f32.mrb[0].mxu0
        %v3335 = vpop.f32.mrb[0].mxu0
        %v3336 = vadd.f32 %v744, %v3335
        %v3337 = vpop.f32.mrb[0].mxu0
        %3338 = vmatprep.mubr.bf16.mxu0 %v2163
        %3339 = vmatmul.mubr.bf16.gmra.mrb[0].mxu0 %v2162
        %v3340 = vpop.f32.mrb[0].mxu0
        %v3341 = vadd.f32 %v744, %v3340
        %v3342 = vpop.f32.mrb[0].mxu0
        %v3343 = vpop.f32.mrb[0].mxu0
        %v3344 = vadd.f32 %v744, %v3343
        %v3345 = vpop.f32.mrb[0].mxu0
        %3346 = vmatprep.mubr.bf16.mxu0 %v2169
        %3347 = vmatmul.mubr.bf16.gmra.mrb[0].mxu0 %v2168
        %v3348 = vpop.f32.mrb[0].mxu0
        %v3349 = vadd.f32 %v744, %v3348
        %v3350 = vpop.f32.mrb[0].mxu0
        %v3351 = vpop.f32.mrb[0].mxu0
        %v3352 = vadd.f32 %v744, %v3351
        %v3353 = vpop.f32.mrb[0].mxu0
        %3354 = vmatprep.mubr.bf16.mxu0 %v2175
        %3355 = vmatmul.mubr.bf16.gmra.mrb[0].mxu0 %v2174
        %v3356 = vpop.f32.mrb[0].mxu0
        %v3357 = vadd.f32 %v744, %v3356
        %v3358 = vpop.f32.mrb[0].mxu0
        %v3359 = vpop.f32.mrb[0].mxu0
        %v3360 = vadd.f32 %v744, %v3359
        %v3361 = vpop.f32.mrb[0].mxu0
        %3362 = vmatprep.mubr.bf16.mxu0 %v2181
        %3363 = vmatmul.mubr.bf16.gmra.mrb[0].mxu0 %v2180
        %v3364 = vpop.f32.mrb[0].mxu0
        %v3365 = vadd.f32 %v744, %v3364
        %v3366 = vpop.f32.mrb[0].mxu0
        %v3367 = vpop.f32.mrb[0].mxu0
        %v3368 = vadd.f32 %v744, %v3367
        %v3369 = vpop.f32.mrb[0].mxu0
        %3370 = vmatprep.mubr.bf16.mxu0 %v2187
        %3371 = vmatmul.mubr.bf16.gmra.mrb[0].mxu0 %v2186
        %v3372 = vpop.f32.mrb[0].mxu0
        %v3373 = vadd.f32 %v744, %v3372
        %v3374 = vpop.f32.mrb[0].mxu0
        %v3375 = vpop.f32.mrb[0].mxu0
        %v3376 = vadd.f32 %v744, %v3375
        %v3377 = vpop.f32.mrb[0].mxu0
        %3378 = vmatprep.mubr.bf16.mxu0 %v2193
        %3379 = vmatmul.mubr.bf16.gmra.mrb[0].mxu0 %v2192
        %v3380 = vpop.f32.mrb[0].mxu0
        %v3381 = vadd.f32 %v744, %v3380
        %v3382 = vpop.f32.mrb[0].mxu0
        %v3383 = vpop.f32.mrb[0].mxu0
        %v3384 = vadd.f32 %v744, %v3383
        %v3385 = vpop.f32.mrb[0].mxu0
        %3386 = vmatprep.mubr.bf16.mxu0 %v2199
        %3387 = vmatmul.mubr.bf16.gmra.mrb[0].mxu0 %v2198
        %v3388 = vpop.f32.mrb[0].mxu0
        %v3389 = vadd.f32 %v744, %v3388
        %v3390 = vpop.f32.mrb[0].mxu0
        %v3391 = vpop.f32.mrb[0].mxu0
        %v3392 = vadd.f32 %v744, %v3391
        %v3393 = vpop.f32.mrb[0].mxu0
        %3394 = vmatprep.mubr.bf16.mxu0 %v2205
        %3395 = vmatmul.mubr.bf16.gmra.mrb[0].mxu0 %v2204
        %v3396 = vpop.f32.mrb[0].mxu0
        %v3397 = vadd.f32 %v744, %v3396
        %v3398 = vpop.f32.mrb[0].mxu0
        %v3399 = vpop.f32.mrb[0].mxu0
        %v3400 = vadd.f32 %v744, %v3399
        %v3401 = vpop.f32.mrb[0].mxu0
        %3402 = vmatprep.mubr.bf16.mxu0 %v2211
        %3403 = vmatmul.mubr.bf16.gmra.mrb[0].mxu0 %v2210
        %v3404 = vpop.f32.mrb[0].mxu0
        %v3405 = vadd.f32 %v744, %v3404
        %v3406 = vpop.f32.mrb[0].mxu0
        %v3407 = vpop.f32.mrb[0].mxu0
        %v3408 = vadd.f32 %v744, %v3407
        %v3409 = vpop.f32.mrb[0].mxu0
        %3410 = vmatprep.mubr.bf16.mxu0 %v2217
        %3411 = vmatmul.mubr.bf16.gmra.mrb[0].mxu0 %v2216
        %v3412 = vpop.f32.mrb[0].mxu0
        %v3413 = vadd.f32 %v744, %v3412
        %v3414 = vpop.f32.mrb[0].mxu0
        %v3415 = vpop.f32.mrb[0].mxu0
        %v3416 = vadd.f32 %v744, %v3415
        %v3417 = vpop.f32.mrb[0].mxu0
        %3418 = vmatprep.mubr.bf16.mxu0 %v2223
        %3419 = vmatmul.mubr.bf16.gmra.mrb[0].mxu0 %v2222
        %v3420 = vpop.f32.mrb[0].mxu0
        %v3421 = vadd.f32 %v744, %v3420
        %v3422 = vpop.f32.mrb[0].mxu0
        %v3423 = vpop.f32.mrb[0].mxu0
        %v3424 = vadd.f32 %v744, %v3423
        %v3425 = vpop.f32.mrb[0].mxu0
        %3426 = vmatprep.mubr.bf16.mxu0 %v2229
        %3427 = vmatmul.mubr.bf16.gmra.mrb[0].mxu0 %v2228
        %v3428 = vpop.f32.mrb[0].mxu0
        %v3429 = vadd.f32 %v744, %v3428
        %v3430 = vpop.f32.mrb[0].mxu0
        %v3431 = vpop.f32.mrb[0].mxu0
        %v3432 = vadd.f32 %v744, %v3431
        %v3433 = vpop.f32.mrb[0].mxu0
        %3434 = vmatprep.mubr.bf16.mxu0 %v2235
        %3435 = vmatmul.mubr.bf16.gmra.mrb[0].mxu0 %v2234
        %v3436 = vpop.f32.mrb[0].mxu0
        %v3437 = vadd.f32 %v744, %v3436
        %v3438 = vpop.f32.mrb[0].mxu0
        %v3439 = vpop.f32.mrb[0].mxu0
        %v3440 = vadd.f32 %v744, %v3439
        %v3441 = vpop.f32.mrb[0].mxu0
        %3442 = vmatprep.mubr.bf16.mxu0 %v2241
        %3443 = vmatmul.mubr.bf16.gmra.mrb[0].mxu0 %v2240
        %v3444 = vpop.f32.mrb[0].mxu0
        %v3445 = vadd.f32 %v744, %v3444
        %v3446 = vpop.f32.mrb[0].mxu0
        %v3447 = vpop.f32.mrb[0].mxu0
        %v3448 = vadd.f32 %v744, %v3447
        %v3449 = vpop.f32.mrb[0].mxu0
        %3450 = vmatprep.mubr.bf16.mxu0 %v2247
        %3451 = vmatmul.mubr.bf16.gmra.mrb[0].mxu0 %v2246
        %v3452 = vpop.f32.mrb[0].mxu0
        %v3453 = vadd.f32 %v744, %v3452
        %v3454 = vpop.f32.mrb[0].mxu0
        %v3455 = vpop.f32.mrb[0].mxu0
        %v3456 = vadd.f32 %v744, %v3455
        %v3457 = vpop.f32.mrb[0].mxu0
        %3458 = vmatprep.mubr.bf16.mxu0 %v2253
        %3459 = vmatmul.mubr.bf16.gmra.mrb[0].mxu0 %v2252
        %v3460 = vpop.f32.mrb[0].mxu0
        %v3461 = vadd.f32 %v744, %v3460
        %v3462 = vpop.f32.mrb[0].mxu0
        %v3463 = vpop.f32.mrb[0].mxu0
        %v3464 = vadd.f32 %v744, %v3463
        %v3465 = vpop.f32.mrb[0].mxu0
        %3466 = vmatprep.mubr.bf16.mxu0 %v2259
        %3467 = vmatmul.mubr.bf16.gmra.mrb[0].mxu0 %v2258
        %v3468 = vpop.f32.mrb[0].mxu0
        %v3469 = vadd.f32 %v744, %v3468
        %v3470 = vpop.f32.mrb[0].mxu0
        %v3471 = vpop.f32.mrb[0].mxu0
        %v3472 = vadd.f32 %v744, %v3471
        %v3473 = vpop.f32.mrb[0].mxu0
        %3474 = vmatprep.mubr.bf16.mxu0 %v2265
        %3475 = vmatmul.mubr.bf16.gmra.mrb[0].mxu0 %v2264
        %v3476 = vpop.f32.mrb[0].mxu0
        %v3477 = vadd.f32 %v744, %v3476
        %v3478 = vpop.f32.mrb[0].mxu0
        %v3479 = vpop.f32.mrb[0].mxu0
        %v3480 = vadd.f32 %v744, %v3479
        %v3481 = vpop.f32.mrb[0].mxu0
        %3482 = vmatprep.mubr.bf16.mxu0 %v2271
        %3483 = vmatmul.mubr.bf16.gmra.mrb[0].mxu0 %v2270
        %v3484 = vpop.f32.mrb[0].mxu0
        %v3485 = vadd.f32 %v744, %v3484
        %v3486 = vpop.f32.mrb[0].mxu0
        %v3487 = vpop.f32.mrb[0].mxu0
        %v3488 = vadd.f32 %v744, %v3487
        %v3489 = vpop.f32.mrb[0].mxu0
        %3490 = vmatprep.mubr.bf16.mxu0 %v2277
        %3491 = vmatmul.mubr.bf16.gmra.mrb[0].mxu0 %v2276
        %v3492 = vpop.f32.mrb[0].mxu0
        %v3493 = vadd.f32 %v744, %v3492
        %v3494 = vpop.f32.mrb[0].mxu0
        %v3495 = vpop.f32.mrb[0].mxu0
        %v3496 = vadd.f32 %v744, %v3495
        %v3497 = vpop.f32.mrb[0].mxu0
        %3498 = vdwg.mxu0
        %3499 = vmatprep.subr.bf16.mxu0 0
        %3500 = vmatpush1.bf16.msra.mxu0 %v2874
        %3501 = vmatprep.subr.bf16.mxu0 0
        %3502 = vmatpush1.bf16.msra.mxu0 %v2875
        %3503 = vmatprep.subr.bf16.mxu0 0
        %3504 = vmatpush1.bf16.msra.mxu0 %v2876
        %3505 = vmatprep.subr.bf16.mxu0 0
        %3506 = vmatpush1.bf16.msra.mxu0 %v2877
        %3507 = vmatprep.subr.bf16.mxu0 0
        %3508 = vmatpush1.bf16.msra.mxu0 %v2878
        %3509 = vmatprep.subr.bf16.mxu0 0
        %3510 = vmatpush1.bf16.msra.mxu0 %v2879
        %3511 = vmatprep.subr.bf16.mxu0 0
        %3512 = vmatpush1.bf16.msra.mxu0 %v2880
        %3513 = vmatprep.subr.bf16.mxu0 0
        %3514 = vmatpush1.bf16.msra.mxu0 %v2881
        %3515 = vmatprep.subr.bf16.mxu0 0
        %3516 = vmatpush1.bf16.msra.mxu0 %v2882
        %3517 = vmatprep.subr.bf16.mxu0 0
        %3518 = vmatpush1.bf16.msra.mxu0 %v2883
        %3519 = vmatprep.subr.bf16.mxu0 0
        %3520 = vmatpush1.bf16.msra.mxu0 %v2884
        %3521 = vmatprep.subr.bf16.mxu0 0
        %3522 = vmatpush1.bf16.msra.mxu0 %v2885
        %3523 = vmatprep.subr.bf16.mxu0 0
        %3524 = vmatpush1.bf16.msra.mxu0 %v2886
        %3525 = vmatprep.subr.bf16.mxu0 0
        %3526 = vmatpush1.bf16.msra.mxu0 %v2887
        %3527 = vmatprep.subr.bf16.mxu0 0
        %3528 = vmatpush1.bf16.msra.mxu0 %v2888
        %3529 = vmatprep.subr.bf16.mxu0 0
        %3530 = vmatpush1.bf16.msra.mxu0 %v2889
        %3531 = vmatprep.mubr.bf16.mxu0 %v1901
        %3532 = vmatmul.mubr.bf16.gmra.mrb[0].mxu0 %v1900
        %v3533 = vpop.f32.mrb[0].mxu0
        %v3534 = vadd.f32 %v2989, %v3533
        %v3535 = vpop.f32.mrb[0].mxu0
        %v3536 = vpop.f32.mrb[0].mxu0
        %v3537 = vadd.f32 %v2992, %v3536
        %v3538 = vpop.f32.mrb[0].mxu0
        %3539 = vmatprep.mubr.bf16.mxu0 %v1907
        %3540 = vmatmul.mubr.bf16.gmra.mrb[0].mxu0 %v1906
        %v3541 = vpop.f32.mrb[0].mxu0
        %v3542 = vadd.f32 %v2997, %v3541
        %v3543 = vpop.f32.mrb[0].mxu0
        %v3544 = vpop.f32.mrb[0].mxu0
        %v3545 = vadd.f32 %v3000, %v3544
        %v3546 = vpop.f32.mrb[0].mxu0
        %3547 = vmatprep.mubr.bf16.mxu0 %v1913
        %3548 = vmatmul.mubr.bf16.gmra.mrb[0].mxu0 %v1912
        %v3549 = vpop.f32.mrb[0].mxu0
        %v3550 = vadd.f32 %v3005, %v3549
        %v3551 = vpop.f32.mrb[0].mxu0
        %v3552 = vpop.f32.mrb[0].mxu0
        %v3553 = vadd.f32 %v3008, %v3552
        %v3554 = vpop.f32.mrb[0].mxu0
        %3555 = vmatprep.mubr.bf16.mxu0 %v1919
        %3556 = vmatmul.mubr.bf16.gmra.mrb[0].mxu0 %v1918
        %v3557 = vpop.f32.mrb[0].mxu0
        %v3558 = vadd.f32 %v3013, %v3557
        %v3559 = vpop.f32.mrb[0].mxu0
        %v3560 = vpop.f32.mrb[0].mxu0
        %v3561 = vadd.f32 %v3016, %v3560
        %v3562 = vpop.f32.mrb[0].mxu0
        %3563 = vmatprep.mubr.bf16.mxu0 %v1925
        %3564 = vmatmul.mubr.bf16.gmra.mrb[0].mxu0 %v1924
        %v3565 = vpop.f32.mrb[0].mxu0
        %v3566 = vadd.f32 %v3021, %v3565
        %v3567 = vpop.f32.mrb[0].mxu0
        %v3568 = vpop.f32.mrb[0].mxu0
        %v3569 = vadd.f32 %v3024, %v3568
        %v3570 = vpop.f32.mrb[0].mxu0
        %3571 = vmatprep.mubr.bf16.mxu0 %v1931
        %3572 = vmatmul.mubr.bf16.gmra.mrb[0].mxu0 %v1930
        %v3573 = vpop.f32.mrb[0].mxu0
        %v3574 = vadd.f32 %v3029, %v3573
        %v3575 = vpop.f32.mrb[0].mxu0
        %v3576 = vpop.f32.mrb[0].mxu0
        %v3577 = vadd.f32 %v3032, %v3576
        %v3578 = vpop.f32.mrb[0].mxu0
        %3579 = vmatprep.mubr.bf16.mxu0 %v1937
        %3580 = vmatmul.mubr.bf16.gmra.mrb[0].mxu0 %v1936
        %v3581 = vpop.f32.mrb[0].mxu0
        %v3582 = vadd.f32 %v3037, %v3581
        %v3583 = vpop.f32.mrb[0].mxu0
        %v3584 = vpop.f32.mrb[0].mxu0
        %v3585 = vadd.f32 %v3040, %v3584
        %v3586 = vpop.f32.mrb[0].mxu0
        %3587 = vmatprep.mubr.bf16.mxu0 %v1943
        %3588 = vmatmul.mubr.bf16.gmra.mrb[0].mxu0 %v1942
        %v3589 = vpop.f32.mrb[0].mxu0
        %v3590 = vadd.f32 %v3045, %v3589
        %v3591 = vpop.f32.mrb[0].mxu0
        %v3592 = vpop.f32.mrb[0].mxu0
        %v3593 = vadd.f32 %v3048, %v3592
        %v3594 = vpop.f32.mrb[0].mxu0
        %3595 = vmatprep.mubr.bf16.mxu0 %v1949
        %3596 = vmatmul.mubr.bf16.gmra.mrb[0].mxu0 %v1948
        %v3597 = vpop.f32.mrb[0].mxu0
        %v3598 = vadd.f32 %v3053, %v3597
        %v3599 = vpop.f32.mrb[0].mxu0
        %v3600 = vpop.f32.mrb[0].mxu0
        %v3601 = vadd.f32 %v3056, %v3600
        %v3602 = vpop.f32.mrb[0].mxu0
        %3603 = vmatprep.mubr.bf16.mxu0 %v1955
        %3604 = vmatmul.mubr.bf16.gmra.mrb[0].mxu0 %v1954
        %v3605 = vpop.f32.mrb[0].mxu0
        %v3606 = vadd.f32 %v3061, %v3605
        %v3607 = vpop.f32.mrb[0].mxu0
        %v3608 = vpop.f32.mrb[0].mxu0
        %v3609 = vadd.f32 %v3064, %v3608
        %v3610 = vpop.f32.mrb[0].mxu0
        %3611 = vmatprep.mubr.bf16.mxu0 %v1961
        %3612 = vmatmul.mubr.bf16.gmra.mrb[0].mxu0 %v1960
        %v3613 = vpop.f32.mrb[0].mxu0
        %v3614 = vadd.f32 %v3069, %v3613
        %v3615 = vpop.f32.mrb[0].mxu0
        %v3616 = vpop.f32.mrb[0].mxu0
        %v3617 = vadd.f32 %v3072, %v3616
        %v3618 = vpop.f32.mrb[0].mxu0
        %3619 = vmatprep.mubr.bf16.mxu0 %v1967
        %3620 = vmatmul.mubr.bf16.gmra.mrb[0].mxu0 %v1966
        %v3621 = vpop.f32.mrb[0].mxu0
        %v3622 = vadd.f32 %v3077, %v3621
        %v3623 = vpop.f32.mrb[0].mxu0
        %v3624 = vpop.f32.mrb[0].mxu0
        %v3625 = vadd.f32 %v3080, %v3624
        %v3626 = vpop.f32.mrb[0].mxu0
        %3627 = vmatprep.mubr.bf16.mxu0 %v1973
        %3628 = vmatmul.mubr.bf16.gmra.mrb[0].mxu0 %v1972
        %v3629 = vpop.f32.mrb[0].mxu0
        %v3630 = vadd.f32 %v3085, %v3629
        %v3631 = vpop.f32.mrb[0].mxu0
        %v3632 = vpop.f32.mrb[0].mxu0
        %v3633 = vadd.f32 %v3088, %v3632
        %v3634 = vpop.f32.mrb[0].mxu0
        %3635 = vmatprep.mubr.bf16.mxu0 %v1979
        %3636 = vmatmul.mubr.bf16.gmra.mrb[0].mxu0 %v1978
        %v3637 = vpop.f32.mrb[0].mxu0
        %v3638 = vadd.f32 %v3093, %v3637
        %v3639 = vpop.f32.mrb[0].mxu0
        %v3640 = vpop.f32.mrb[0].mxu0
        %v3641 = vadd.f32 %v3096, %v3640
        %v3642 = vpop.f32.mrb[0].mxu0
        %3643 = vmatprep.mubr.bf16.mxu0 %v1985
        %3644 = vmatmul.mubr.bf16.gmra.mrb[0].mxu0 %v1984
        %v3645 = vpop.f32.mrb[0].mxu0
        %v3646 = vadd.f32 %v3101, %v3645
        %v3647 = vpop.f32.mrb[0].mxu0
        %v3648 = vpop.f32.mrb[0].mxu0
        %v3649 = vadd.f32 %v3104, %v3648
        %v3650 = vpop.f32.mrb[0].mxu0
        %3651 = vmatprep.mubr.bf16.mxu0 %v1991
        %3652 = vmatmul.mubr.bf16.gmra.mrb[0].mxu0 %v1990
        %v3653 = vpop.f32.mrb[0].mxu0
        %v3654 = vadd.f32 %v3109, %v3653
        %v3655 = vpop.f32.mrb[0].mxu0
        %v3656 = vpop.f32.mrb[0].mxu0
        %v3657 = vadd.f32 %v3112, %v3656
        %v3658 = vpop.f32.mrb[0].mxu0
        %3659 = vmatprep.mubr.bf16.mxu0 %v1997
        %3660 = vmatmul.mubr.bf16.gmra.mrb[0].mxu0 %v1996
        %v3661 = vpop.f32.mrb[0].mxu0
        %v3662 = vadd.f32 %v3117, %v3661
        %v3663 = vpop.f32.mrb[0].mxu0
        %v3664 = vpop.f32.mrb[0].mxu0
        %v3665 = vadd.f32 %v3120, %v3664
        %v3666 = vpop.f32.mrb[0].mxu0
        %3667 = vmatprep.mubr.bf16.mxu0 %v2003
        %3668 = vmatmul.mubr.bf16.gmra.mrb[0].mxu0 %v2002
        %v3669 = vpop.f32.mrb[0].mxu0
        %v3670 = vadd.f32 %v3125, %v3669
        %v3671 = vpop.f32.mrb[0].mxu0
        %v3672 = vpop.f32.mrb[0].mxu0
        %v3673 = vadd.f32 %v3128, %v3672
        %v3674 = vpop.f32.mrb[0].mxu0
        %3675 = vmatprep.mubr.bf16.mxu0 %v2009
        %3676 = vmatmul.mubr.bf16.gmra.mrb[0].mxu0 %v2008
        %v3677 = vpop.f32.mrb[0].mxu0
        %v3678 = vadd.f32 %v3133, %v3677
        %v3679 = vpop.f32.mrb[0].mxu0
        %v3680 = vpop.f32.mrb[0].mxu0
        %v3681 = vadd.f32 %v3136, %v3680
        %v3682 = vpop.f32.mrb[0].mxu0
        %3683 = vmatprep.mubr.bf16.mxu0 %v2015
        %3684 = vmatmul.mubr.bf16.gmra.mrb[0].mxu0 %v2014
        %v3685 = vpop.f32.mrb[0].mxu0
        %v3686 = vadd.f32 %v3141, %v3685
        %v3687 = vpop.f32.mrb[0].mxu0
        %v3688 = vpop.f32.mrb[0].mxu0
        %v3689 = vadd.f32 %v3144, %v3688
        %v3690 = vpop.f32.mrb[0].mxu0
        %3691 = vmatprep.mubr.bf16.mxu0 %v2021
        %3692 = vmatmul.mubr.bf16.gmra.mrb[0].mxu0 %v2020
        %v3693 = vpop.f32.mrb[0].mxu0
        %v3694 = vadd.f32 %v3149, %v3693
        %v3695 = vpop.f32.mrb[0].mxu0
        %v3696 = vpop.f32.mrb[0].mxu0
        %v3697 = vadd.f32 %v3152, %v3696
        %v3698 = vpop.f32.mrb[0].mxu0
        %3699 = vmatprep.mubr.bf16.mxu0 %v2027
        %3700 = vmatmul.mubr.bf16.gmra.mrb[0].mxu0 %v2026
        %v3701 = vpop.f32.mrb[0].mxu0
        %v3702 = vadd.f32 %v3157, %v3701
        %v3703 = vpop.f32.mrb[0].mxu0
        %v3704 = vpop.f32.mrb[0].mxu0
        %v3705 = vadd.f32 %v3160, %v3704
        %v3706 = vpop.f32.mrb[0].mxu0
        %3707 = vmatprep.mubr.bf16.mxu0 %v2033
        %3708 = vmatmul.mubr.bf16.gmra.mrb[0].mxu0 %v2032
        %v3709 = vpop.f32.mrb[0].mxu0
        %v3710 = vadd.f32 %v3165, %v3709
        %v3711 = vpop.f32.mrb[0].mxu0
        %v3712 = vpop.f32.mrb[0].mxu0
        %v3713 = vadd.f32 %v3168, %v3712
        %v3714 = vpop.f32.mrb[0].mxu0
        %3715 = vmatprep.mubr.bf16.mxu0 %v2039
        %3716 = vmatmul.mubr.bf16.gmra.mrb[0].mxu0 %v2038
        %v3717 = vpop.f32.mrb[0].mxu0
        %v3718 = vadd.f32 %v3173, %v3717
        %v3719 = vpop.f32.mrb[0].mxu0
        %v3720 = vpop.f32.mrb[0].mxu0
        %v3721 = vadd.f32 %v3176, %v3720
        %v3722 = vpop.f32.mrb[0].mxu0
        %3723 = vmatprep.mubr.bf16.mxu0 %v2045
        %3724 = vmatmul.mubr.bf16.gmra.mrb[0].mxu0 %v2044
        %v3725 = vpop.f32.mrb[0].mxu0
        %v3726 = vadd.f32 %v3181, %v3725
        %v3727 = vpop.f32.mrb[0].mxu0
        %v3728 = vpop.f32.mrb[0].mxu0
        %v3729 = vadd.f32 %v3184, %v3728
        %v3730 = vpop.f32.mrb[0].mxu0
        %3731 = vmatprep.mubr.bf16.mxu0 %v2051
        %3732 = vmatmul.mubr.bf16.gmra.mrb[0].mxu0 %v2050
        %v3733 = vpop.f32.mrb[0].mxu0
        %v3734 = vadd.f32 %v3189, %v3733
        %v3735 = vpop.f32.mrb[0].mxu0
        %v3736 = vpop.f32.mrb[0].mxu0
        %v3737 = vadd.f32 %v3192, %v3736
        %v3738 = vpop.f32.mrb[0].mxu0
        %3739 = vmatprep.mubr.bf16.mxu0 %v2057
        %3740 = vmatmul.mubr.bf16.gmra.mrb[0].mxu0 %v2056
        %v3741 = vpop.f32.mrb[0].mxu0
        %v3742 = vadd.f32 %v3197, %v3741
        %v3743 = vpop.f32.mrb[0].mxu0
        %v3744 = vpop.f32.mrb[0].mxu0
        %v3745 = vadd.f32 %v3200, %v3744
        %v3746 = vpop.f32.mrb[0].mxu0
        %3747 = vmatprep.mubr.bf16.mxu0 %v2063
        %3748 = vmatmul.mubr.bf16.gmra.mrb[0].mxu0 %v2062
        %v3749 = vpop.f32.mrb[0].mxu0
        %v3750 = vadd.f32 %v3205, %v3749
        %v3751 = vpop.f32.mrb[0].mxu0
        %v3752 = vpop.f32.mrb[0].mxu0
        %v3753 = vadd.f32 %v3208, %v3752
        %v3754 = vpop.f32.mrb[0].mxu0
        %3755 = vmatprep.mubr.bf16.mxu0 %v2069
        %3756 = vmatmul.mubr.bf16.gmra.mrb[0].mxu0 %v2068
        %v3757 = vpop.f32.mrb[0].mxu0
        %v3758 = vadd.f32 %v3213, %v3757
        %v3759 = vpop.f32.mrb[0].mxu0
        %v3760 = vpop.f32.mrb[0].mxu0
        %v3761 = vadd.f32 %v3216, %v3760
        %v3762 = vpop.f32.mrb[0].mxu0
        %3763 = vmatprep.mubr.bf16.mxu0 %v2075
        %3764 = vmatmul.mubr.bf16.gmra.mrb[0].mxu0 %v2074
        %v3765 = vpop.f32.mrb[0].mxu0
        %v3766 = vadd.f32 %v3221, %v3765
        %v3767 = vpop.f32.mrb[0].mxu0
        %v3768 = vpop.f32.mrb[0].mxu0
        %v3769 = vadd.f32 %v3224, %v3768
        %v3770 = vpop.f32.mrb[0].mxu0
        %3771 = vmatprep.mubr.bf16.mxu0 %v2081
        %3772 = vmatmul.mubr.bf16.gmra.mrb[0].mxu0 %v2080
        %v3773 = vpop.f32.mrb[0].mxu0
        %v3774 = vadd.f32 %v3229, %v3773
        %v3775 = vpop.f32.mrb[0].mxu0
        %v3776 = vpop.f32.mrb[0].mxu0
        %v3777 = vadd.f32 %v3232, %v3776
        %v3778 = vpop.f32.mrb[0].mxu0
        %3779 = vmatprep.mubr.bf16.mxu0 %v2087
        %3780 = vmatmul.mubr.bf16.gmra.mrb[0].mxu0 %v2086
        %v3781 = vpop.f32.mrb[0].mxu0
        %v3782 = vadd.f32 %v3237, %v3781
        %v3783 = vpop.f32.mrb[0].mxu0
        %v3784 = vpop.f32.mrb[0].mxu0
        %v3785 = vadd.f32 %v3240, %v3784
        %v3786 = vpop.f32.mrb[0].mxu0
        %3787 = vmatprep.mubr.bf16.mxu0 %v2093
        %3788 = vmatmul.mubr.bf16.gmra.mrb[0].mxu0 %v2092
        %v3789 = vpop.f32.mrb[0].mxu0
        %v3790 = vadd.f32 %v3245, %v3789
        %v3791 = vpop.f32.mrb[0].mxu0
        %v3792 = vpop.f32.mrb[0].mxu0
        %v3793 = vadd.f32 %v3248, %v3792
        %v3794 = vpop.f32.mrb[0].mxu0
        %3795 = vmatprep.mubr.bf16.mxu0 %v2099
        %3796 = vmatmul.mubr.bf16.gmra.mrb[0].mxu0 %v2098
        %v3797 = vpop.f32.mrb[0].mxu0
        %v3798 = vadd.f32 %v3253, %v3797
        %v3799 = vpop.f32.mrb[0].mxu0
        %v3800 = vpop.f32.mrb[0].mxu0
        %v3801 = vadd.f32 %v3256, %v3800
        %v3802 = vpop.f32.mrb[0].mxu0
        %3803 = vmatprep.mubr.bf16.mxu0 %v2105
        %3804 = vmatmul.mubr.bf16.gmra.mrb[0].mxu0 %v2104
        %v3805 = vpop.f32.mrb[0].mxu0
        %v3806 = vadd.f32 %v3261, %v3805
        %v3807 = vpop.f32.mrb[0].mxu0
        %v3808 = vpop.f32.mrb[0].mxu0
        %v3809 = vadd.f32 %v3264, %v3808
        %v3810 = vpop.f32.mrb[0].mxu0
        %3811 = vmatprep.mubr.bf16.mxu0 %v2111
        %3812 = vmatmul.mubr.bf16.gmra.mrb[0].mxu0 %v2110
        %v3813 = vpop.f32.mrb[0].mxu0
        %v3814 = vadd.f32 %v3269, %v3813
        %v3815 = vpop.f32.mrb[0].mxu0
        %v3816 = vpop.f32.mrb[0].mxu0
        %v3817 = vadd.f32 %v3272, %v3816
        %v3818 = vpop.f32.mrb[0].mxu0
        %3819 = vmatprep.mubr.bf16.mxu0 %v2117
        %3820 = vmatmul.mubr.bf16.gmra.mrb[0].mxu0 %v2116
        %v3821 = vpop.f32.mrb[0].mxu0
        %v3822 = vadd.f32 %v3277, %v3821
        %v3823 = vpop.f32.mrb[0].mxu0
        %v3824 = vpop.f32.mrb[0].mxu0
        %v3825 = vadd.f32 %v3280, %v3824
        %v3826 = vpop.f32.mrb[0].mxu0
        %3827 = vmatprep.mubr.bf16.mxu0 %v2123
        %3828 = vmatmul.mubr.bf16.gmra.mrb[0].mxu0 %v2122
        %v3829 = vpop.f32.mrb[0].mxu0
        %v3830 = vadd.f32 %v3285, %v3829
        %v3831 = vpop.f32.mrb[0].mxu0
        %v3832 = vpop.f32.mrb[0].mxu0
        %v3833 = vadd.f32 %v3288, %v3832
        %v3834 = vpop.f32.mrb[0].mxu0
        %3835 = vmatprep.mubr.bf16.mxu0 %v2129
        %3836 = vmatmul.mubr.bf16.gmra.mrb[0].mxu0 %v2128
        %v3837 = vpop.f32.mrb[0].mxu0
        %v3838 = vadd.f32 %v3293, %v3837
        %v3839 = vpop.f32.mrb[0].mxu0
        %v3840 = vpop.f32.mrb[0].mxu0
        %v3841 = vadd.f32 %v3296, %v3840
        %v3842 = vpop.f32.mrb[0].mxu0
        %3843 = vmatprep.mubr.bf16.mxu0 %v2135
        %3844 = vmatmul.mubr.bf16.gmra.mrb[0].mxu0 %v2134
        %v3845 = vpop.f32.mrb[0].mxu0
        %v3846 = vadd.f32 %v3301, %v3845
        %v3847 = vpop.f32.mrb[0].mxu0
        %v3848 = vpop.f32.mrb[0].mxu0
        %v3849 = vadd.f32 %v3304, %v3848
        %v3850 = vpop.f32.mrb[0].mxu0
        %3851 = vmatprep.mubr.bf16.mxu0 %v2141
        %3852 = vmatmul.mubr.bf16.gmra.mrb[0].mxu0 %v2140
        %v3853 = vpop.f32.mrb[0].mxu0
        %v3854 = vadd.f32 %v3309, %v3853
        %v3855 = vpop.f32.mrb[0].mxu0
        %v3856 = vpop.f32.mrb[0].mxu0
        %v3857 = vadd.f32 %v3312, %v3856
        %v3858 = vpop.f32.mrb[0].mxu0
        %3859 = vmatprep.mubr.bf16.mxu0 %v2147
        %3860 = vmatmul.mubr.bf16.gmra.mrb[0].mxu0 %v2146
        %v3861 = vpop.f32.mrb[0].mxu0
        %v3862 = vadd.f32 %v3317, %v3861
        %v3863 = vpop.f32.mrb[0].mxu0
        %v3864 = vpop.f32.mrb[0].mxu0
        %v3865 = vadd.f32 %v3320, %v3864
        %v3866 = vpop.f32.mrb[0].mxu0
        %3867 = vmatprep.mubr.bf16.mxu0 %v2153
        %3868 = vmatmul.mubr.bf16.gmra.mrb[0].mxu0 %v2152
        %v3869 = vpop.f32.mrb[0].mxu0
        %v3870 = vadd.f32 %v3325, %v3869
        %v3871 = vpop.f32.mrb[0].mxu0
        %v3872 = vpop.f32.mrb[0].mxu0
        %v3873 = vadd.f32 %v3328, %v3872
        %v3874 = vpop.f32.mrb[0].mxu0
        %3875 = vmatprep.mubr.bf16.mxu0 %v2159
        %3876 = vmatmul.mubr.bf16.gmra.mrb[0].mxu0 %v2158
        %v3877 = vpop.f32.mrb[0].mxu0
        %v3878 = vadd.f32 %v3333, %v3877
        %v3879 = vpop.f32.mrb[0].mxu0
        %v3880 = vpop.f32.mrb[0].mxu0
        %v3881 = vadd.f32 %v3336, %v3880
        %v3882 = vpop.f32.mrb[0].mxu0
        %3883 = vmatprep.mubr.bf16.mxu0 %v2165
        %3884 = vmatmul.mubr.bf16.gmra.mrb[0].mxu0 %v2164
        %v3885 = vpop.f32.mrb[0].mxu0
        %v3886 = vadd.f32 %v3341, %v3885
        %v3887 = vpop.f32.mrb[0].mxu0
        %v3888 = vpop.f32.mrb[0].mxu0
        %v3889 = vadd.f32 %v3344, %v3888
        %v3890 = vpop.f32.mrb[0].mxu0
        %3891 = vmatprep.mubr.bf16.mxu0 %v2171
        %3892 = vmatmul.mubr.bf16.gmra.mrb[0].mxu0 %v2170
        %v3893 = vpop.f32.mrb[0].mxu0
        %v3894 = vadd.f32 %v3349, %v3893
        %v3895 = vpop.f32.mrb[0].mxu0
        %v3896 = vpop.f32.mrb[0].mxu0
        %v3897 = vadd.f32 %v3352, %v3896
        %v3898 = vpop.f32.mrb[0].mxu0
        %3899 = vmatprep.mubr.bf16.mxu0 %v2177
        %3900 = vmatmul.mubr.bf16.gmra.mrb[0].mxu0 %v2176
        %v3901 = vpop.f32.mrb[0].mxu0
        %v3902 = vadd.f32 %v3357, %v3901
        %v3903 = vpop.f32.mrb[0].mxu0
        %v3904 = vpop.f32.mrb[0].mxu0
        %v3905 = vadd.f32 %v3360, %v3904
        %v3906 = vpop.f32.mrb[0].mxu0
        %3907 = vmatprep.mubr.bf16.mxu0 %v2183
        %3908 = vmatmul.mubr.bf16.gmra.mrb[0].mxu0 %v2182
        %v3909 = vpop.f32.mrb[0].mxu0
        %v3910 = vadd.f32 %v3365, %v3909
        %v3911 = vpop.f32.mrb[0].mxu0
        %v3912 = vpop.f32.mrb[0].mxu0
        %v3913 = vadd.f32 %v3368, %v3912
        %v3914 = vpop.f32.mrb[0].mxu0
        %3915 = vmatprep.mubr.bf16.mxu0 %v2189
        %3916 = vmatmul.mubr.bf16.gmra.mrb[0].mxu0 %v2188
        %v3917 = vpop.f32.mrb[0].mxu0
        %v3918 = vadd.f32 %v3373, %v3917
        %v3919 = vpop.f32.mrb[0].mxu0
        %v3920 = vpop.f32.mrb[0].mxu0
        %v3921 = vadd.f32 %v3376, %v3920
        %v3922 = vpop.f32.mrb[0].mxu0
        %3923 = vmatprep.mubr.bf16.mxu0 %v2195
        %3924 = vmatmul.mubr.bf16.gmra.mrb[0].mxu0 %v2194
        %v3925 = vpop.f32.mrb[0].mxu0
        %v3926 = vadd.f32 %v3381, %v3925
        %v3927 = vpop.f32.mrb[0].mxu0
        %v3928 = vpop.f32.mrb[0].mxu0
        %v3929 = vadd.f32 %v3384, %v3928
        %v3930 = vpop.f32.mrb[0].mxu0
        %3931 = vmatprep.mubr.bf16.mxu0 %v2201
        %3932 = vmatmul.mubr.bf16.gmra.mrb[0].mxu0 %v2200
        %v3933 = vpop.f32.mrb[0].mxu0
        %v3934 = vadd.f32 %v3389, %v3933
        %v3935 = vpop.f32.mrb[0].mxu0
        %v3936 = vpop.f32.mrb[0].mxu0
        %v3937 = vadd.f32 %v3392, %v3936
        %v3938 = vpop.f32.mrb[0].mxu0
        %3939 = vmatprep.mubr.bf16.mxu0 %v2207
        %3940 = vmatmul.mubr.bf16.gmra.mrb[0].mxu0 %v2206
        %v3941 = vpop.f32.mrb[0].mxu0
        %v3942 = vadd.f32 %v3397, %v3941
        %v3943 = vpop.f32.mrb[0].mxu0
        %v3944 = vpop.f32.mrb[0].mxu0
        %v3945 = vadd.f32 %v3400, %v3944
        %v3946 = vpop.f32.mrb[0].mxu0
        %3947 = vmatprep.mubr.bf16.mxu0 %v2213
        %3948 = vmatmul.mubr.bf16.gmra.mrb[0].mxu0 %v2212
        %v3949 = vpop.f32.mrb[0].mxu0
        %v3950 = vadd.f32 %v3405, %v3949
        %v3951 = vpop.f32.mrb[0].mxu0
        %v3952 = vpop.f32.mrb[0].mxu0
        %v3953 = vadd.f32 %v3408, %v3952
        %v3954 = vpop.f32.mrb[0].mxu0
        %3955 = vmatprep.mubr.bf16.mxu0 %v2219
        %3956 = vmatmul.mubr.bf16.gmra.mrb[0].mxu0 %v2218
        %v3957 = vpop.f32.mrb[0].mxu0
        %v3958 = vadd.f32 %v3413, %v3957
        %v3959 = vpop.f32.mrb[0].mxu0
        %v3960 = vpop.f32.mrb[0].mxu0
        %v3961 = vadd.f32 %v3416, %v3960
        %v3962 = vpop.f32.mrb[0].mxu0
        %3963 = vmatprep.mubr.bf16.mxu0 %v2225
        %3964 = vmatmul.mubr.bf16.gmra.mrb[0].mxu0 %v2224
        %v3965 = vpop.f32.mrb[0].mxu0
        %v3966 = vadd.f32 %v3421, %v3965
        %v3967 = vpop.f32.mrb[0].mxu0
        %v3968 = vpop.f32.mrb[0].mxu0
        %v3969 = vadd.f32 %v3424, %v3968
        %v3970 = vpop.f32.mrb[0].mxu0
        %3971 = vmatprep.mubr.bf16.mxu0 %v2231
        %3972 = vmatmul.mubr.bf16.gmra.mrb[0].mxu0 %v2230
        %v3973 = vpop.f32.mrb[0].mxu0
        %v3974 = vadd.f32 %v3429, %v3973
        %v3975 = vpop.f32.mrb[0].mxu0
        %v3976 = vpop.f32.mrb[0].mxu0
        %v3977 = vadd.f32 %v3432, %v3976
        %v3978 = vpop.f32.mrb[0].mxu0
        %3979 = vmatprep.mubr.bf16.mxu0 %v2237
        %3980 = vmatmul.mubr.bf16.gmra.mrb[0].mxu0 %v2236
        %v3981 = vpop.f32.mrb[0].mxu0
        %v3982 = vadd.f32 %v3437, %v3981
        %v3983 = vpop.f32.mrb[0].mxu0
        %v3984 = vpop.f32.mrb[0].mxu0
        %v3985 = vadd.f32 %v3440, %v3984
        %v3986 = vpop.f32.mrb[0].mxu0
        %3987 = vmatprep.mubr.bf16.mxu0 %v2243
        %3988 = vmatmul.mubr.bf16.gmra.mrb[0].mxu0 %v2242
        %v3989 = vpop.f32.mrb[0].mxu0
        %v3990 = vadd.f32 %v3445, %v3989
        %v3991 = vpop.f32.mrb[0].mxu0
        %v3992 = vpop.f32.mrb[0].mxu0
        %v3993 = vadd.f32 %v3448, %v3992
        %v3994 = vpop.f32.mrb[0].mxu0
        %3995 = vmatprep.mubr.bf16.mxu0 %v2249
        %3996 = vmatmul.mubr.bf16.gmra.mrb[0].mxu0 %v2248
        %v3997 = vpop.f32.mrb[0].mxu0
        %v3998 = vadd.f32 %v3453, %v3997
        %v3999 = vpop.f32.mrb[0].mxu0
        %v4000 = vpop.f32.mrb[0].mxu0
        %v4001 = vadd.f32 %v3456, %v4000
        %v4002 = vpop.f32.mrb[0].mxu0
        %4003 = vmatprep.mubr.bf16.mxu0 %v2255
        %4004 = vmatmul.mubr.bf16.gmra.mrb[0].mxu0 %v2254
        %v4005 = vpop.f32.mrb[0].mxu0
        %v4006 = vadd.f32 %v3461, %v4005
        %v4007 = vpop.f32.mrb[0].mxu0
        %v4008 = vpop.f32.mrb[0].mxu0
        %v4009 = vadd.f32 %v3464, %v4008
        %v4010 = vpop.f32.mrb[0].mxu0
        %4011 = vmatprep.mubr.bf16.mxu0 %v2261
        %4012 = vmatmul.mubr.bf16.gmra.mrb[0].mxu0 %v2260
        %v4013 = vpop.f32.mrb[0].mxu0
        %v4014 = vadd.f32 %v3469, %v4013
        %v4015 = vpop.f32.mrb[0].mxu0
        %v4016 = vpop.f32.mrb[0].mxu0
        %v4017 = vadd.f32 %v3472, %v4016
        %v4018 = vpop.f32.mrb[0].mxu0
        %4019 = vmatprep.mubr.bf16.mxu0 %v2267
        %4020 = vmatmul.mubr.bf16.gmra.mrb[0].mxu0 %v2266
        %v4021 = vpop.f32.mrb[0].mxu0
        %v4022 = vadd.f32 %v3477, %v4021
        %v4023 = vpop.f32.mrb[0].mxu0
        %v4024 = vpop.f32.mrb[0].mxu0
        %v4025 = vadd.f32 %v3480, %v4024
        %v4026 = vpop.f32.mrb[0].mxu0
        %4027 = vmatprep.mubr.bf16.mxu0 %v2273
        %4028 = vmatmul.mubr.bf16.gmra.mrb[0].mxu0 %v2272
        %v4029 = vpop.f32.mrb[0].mxu0
        %v4030 = vadd.f32 %v3485, %v4029
        %v4031 = vpop.f32.mrb[0].mxu0
        %v4032 = vpop.f32.mrb[0].mxu0
        %v4033 = vadd.f32 %v3488, %v4032
        %v4034 = vpop.f32.mrb[0].mxu0
        %4035 = vmatprep.mubr.bf16.mxu0 %v2279
        %4036 = vmatmul.mubr.bf16.gmra.mrb[0].mxu0 %v2278
        %v4037 = vpop.f32.mrb[0].mxu0
        %v4038 = vadd.f32 %v3493, %v4037
        %v4039 = vpop.f32.mrb[0].mxu0
        %v4040 = vpop.f32.mrb[0].mxu0
        %v4041 = vadd.f32 %v3496, %v4040
        %v4042 = vpop.f32.mrb[0].mxu0
        %4043 = vdwg.mxu0
        %4044 = vmatprep.subr.bf16.mxu0 0
        %4045 = vmatpush1.bf16.msra.mxu0 %v2890
        %4046 = vmatprep.subr.bf16.mxu0 0
        %4047 = vmatpush1.bf16.msra.mxu0 %v2891
        %4048 = vmatprep.subr.bf16.mxu0 0
        %4049 = vmatpush1.bf16.msra.mxu0 %v2892
        %4050 = vmatprep.subr.bf16.mxu0 0
        %4051 = vmatpush1.bf16.msra.mxu0 %v2893
        %4052 = vmatprep.subr.bf16.mxu0 0
        %4053 = vmatpush1.bf16.msra.mxu0 %v2894
        %4054 = vmatprep.subr.bf16.mxu0 0
        %4055 = vmatpush1.bf16.msra.mxu0 %v2895
        %4056 = vmatprep.subr.bf16.mxu0 0
        %4057 = vmatpush1.bf16.msra.mxu0 %v2896
        %4058 = vmatprep.subr.bf16.mxu0 0
        %4059 = vmatpush1.bf16.msra.mxu0 %v2897
        %4060 = vmatprep.subr.bf16.mxu0 0
        %4061 = vmatpush1.bf16.msra.mxu0 %v2898
        %4062 = vmatprep.subr.bf16.mxu0 0
        %4063 = vmatpush1.bf16.msra.mxu0 %v2899
        %4064 = vmatprep.subr.bf16.mxu0 0
        %4065 = vmatpush1.bf16.msra.mxu0 %v2900
        %4066 = vmatprep.subr.bf16.mxu0 0
        %4067 = vmatpush1.bf16.msra.mxu0 %v2901
        %4068 = vmatprep.subr.bf16.mxu0 0
        %4069 = vmatpush1.bf16.msra.mxu0 %v2902
        %4070 = vmatprep.subr.bf16.mxu0 0
        %4071 = vmatpush1.bf16.msra.mxu0 %v2903
        %4072 = vmatprep.subr.bf16.mxu0 0
        %4073 = vmatpush1.bf16.msra.mxu0 %v2904
        %4074 = vmatprep.subr.bf16.mxu0 0
        %4075 = vmatpush1.bf16.msra.mxu0 %v2905
        %4076 = vmatprep.mubr.bf16.mxu0 %v1903
        %4077 = vmatmul.mubr.bf16.gmra.mrb[0].mxu0 %v1902
        %v4078 = vpop.f32.mrb[0].mxu0
        %v4079 = vadd.f32 %v3534, %v4078
        %v4080 = vpop.f32.mrb[0].mxu0
        %v4081 = vpop.f32.mrb[0].mxu0
        %v4082 = vadd.f32 %v3537, %v4081
        %v4083 = vpop.f32.mrb[0].mxu0
        %4084 = vmatprep.mubr.bf16.mxu0 %v1909
        %4085 = vmatmul.mubr.bf16.gmra.mrb[0].mxu0 %v1908
        %v4086 = vpop.f32.mrb[0].mxu0
        %v4087 = vadd.f32 %v3542, %v4086
        %v4088 = vpop.f32.mrb[0].mxu0
        %v4089 = vpop.f32.mrb[0].mxu0
        %v4090 = vadd.f32 %v3545, %v4089
        %v4091 = vpop.f32.mrb[0].mxu0
        %4092 = vmatprep.mubr.bf16.mxu0 %v1915
        %4093 = vmatmul.mubr.bf16.gmra.mrb[0].mxu0 %v1914
        %v4094 = vpop.f32.mrb[0].mxu0
        %v4095 = vadd.f32 %v3550, %v4094
        %v4096 = vpop.f32.mrb[0].mxu0
        %v4097 = vpop.f32.mrb[0].mxu0
        %v4098 = vadd.f32 %v3553, %v4097
        %v4099 = vpop.f32.mrb[0].mxu0
        %4100 = vmatprep.mubr.bf16.mxu0 %v1921
        %4101 = vmatmul.mubr.bf16.gmra.mrb[0].mxu0 %v1920
        %v4102 = vpop.f32.mrb[0].mxu0
        %v4103 = vadd.f32 %v3558, %v4102
        %v4104 = vpop.f32.mrb[0].mxu0
        %v4105 = vpop.f32.mrb[0].mxu0
        %v4106 = vadd.f32 %v3561, %v4105
        %v4107 = vpop.f32.mrb[0].mxu0
        %4108 = vmatprep.mubr.bf16.mxu0 %v1927
        %4109 = vmatmul.mubr.bf16.gmra.mrb[0].mxu0 %v1926
        %v4110 = vpop.f32.mrb[0].mxu0
        %v4111 = vadd.f32 %v3566, %v4110
        %v4112 = vpop.f32.mrb[0].mxu0
        %v4113 = vpop.f32.mrb[0].mxu0
        %v4114 = vadd.f32 %v3569, %v4113
        %v4115 = vpop.f32.mrb[0].mxu0
        %4116 = vmatprep.mubr.bf16.mxu0 %v1933
        %4117 = vmatmul.mubr.bf16.gmra.mrb[0].mxu0 %v1932
        %v4118 = vpop.f32.mrb[0].mxu0
        %v4119 = vadd.f32 %v3574, %v4118
        %v4120 = vpop.f32.mrb[0].mxu0
        %v4121 = vpop.f32.mrb[0].mxu0
        %v4122 = vadd.f32 %v3577, %v4121
        %v4123 = vpop.f32.mrb[0].mxu0
        %4124 = vmatprep.mubr.bf16.mxu0 %v1939
        %4125 = vmatmul.mubr.bf16.gmra.mrb[0].mxu0 %v1938
        %v4126 = vpop.f32.mrb[0].mxu0
        %v4127 = vadd.f32 %v3582, %v4126
        %v4128 = vpop.f32.mrb[0].mxu0
        %v4129 = vpop.f32.mrb[0].mxu0
        %v4130 = vadd.f32 %v3585, %v4129
        %v4131 = vpop.f32.mrb[0].mxu0
        %4132 = vmatprep.mubr.bf16.mxu0 %v1945
        %4133 = vmatmul.mubr.bf16.gmra.mrb[0].mxu0 %v1944
        %v4134 = vpop.f32.mrb[0].mxu0
        %v4135 = vadd.f32 %v3590, %v4134
        %v4136 = vpop.f32.mrb[0].mxu0
        %v4137 = vpop.f32.mrb[0].mxu0
        %v4138 = vadd.f32 %v3593, %v4137
        %v4139 = vpop.f32.mrb[0].mxu0
        %4140 = vmatprep.mubr.bf16.mxu0 %v1951
        %4141 = vmatmul.mubr.bf16.gmra.mrb[0].mxu0 %v1950
        %v4142 = vpop.f32.mrb[0].mxu0
        %v4143 = vadd.f32 %v3598, %v4142
        %v4144 = vpop.f32.mrb[0].mxu0
        %v4145 = vpop.f32.mrb[0].mxu0
        %v4146 = vadd.f32 %v3601, %v4145
        %v4147 = vpop.f32.mrb[0].mxu0
        %4148 = vmatprep.mubr.bf16.mxu0 %v1957
        %4149 = vmatmul.mubr.bf16.gmra.mrb[0].mxu0 %v1956
        %v4150 = vpop.f32.mrb[0].mxu0
        %v4151 = vadd.f32 %v3606, %v4150
        %v4152 = vpop.f32.mrb[0].mxu0
        %v4153 = vpop.f32.mrb[0].mxu0
        %v4154 = vadd.f32 %v3609, %v4153
        %v4155 = vpop.f32.mrb[0].mxu0
        %4156 = vmatprep.mubr.bf16.mxu0 %v1963
        %4157 = vmatmul.mubr.bf16.gmra.mrb[0].mxu0 %v1962
        %v4158 = vpop.f32.mrb[0].mxu0
        %v4159 = vadd.f32 %v3614, %v4158
        %v4160 = vpop.f32.mrb[0].mxu0
        %v4161 = vpop.f32.mrb[0].mxu0
        %v4162 = vadd.f32 %v3617, %v4161
        %v4163 = vpop.f32.mrb[0].mxu0
        %4164 = vmatprep.mubr.bf16.mxu0 %v1969
        %4165 = vmatmul.mubr.bf16.gmra.mrb[0].mxu0 %v1968
        %v4166 = vpop.f32.mrb[0].mxu0
        %v4167 = vadd.f32 %v3622, %v4166
        %v4168 = vpop.f32.mrb[0].mxu0
        %v4169 = vpop.f32.mrb[0].mxu0
        %v4170 = vadd.f32 %v3625, %v4169
        %v4171 = vpop.f32.mrb[0].mxu0
        %4172 = vmatprep.mubr.bf16.mxu0 %v1975
        %4173 = vmatmul.mubr.bf16.gmra.mrb[0].mxu0 %v1974
        %v4174 = vpop.f32.mrb[0].mxu0
        %v4175 = vadd.f32 %v3630, %v4174
        %v4176 = vpop.f32.mrb[0].mxu0
        %v4177 = vpop.f32.mrb[0].mxu0
        %v4178 = vadd.f32 %v3633, %v4177
        %v4179 = vpop.f32.mrb[0].mxu0
        %4180 = vmatprep.mubr.bf16.mxu0 %v1981
        %4181 = vmatmul.mubr.bf16.gmra.mrb[0].mxu0 %v1980
        %v4182 = vpop.f32.mrb[0].mxu0
        %v4183 = vadd.f32 %v3638, %v4182
        %v4184 = vpop.f32.mrb[0].mxu0
        %v4185 = vpop.f32.mrb[0].mxu0
        %v4186 = vadd.f32 %v3641, %v4185
        %v4187 = vpop.f32.mrb[0].mxu0
        %4188 = vmatprep.mubr.bf16.mxu0 %v1987
        %4189 = vmatmul.mubr.bf16.gmra.mrb[0].mxu0 %v1986
        %v4190 = vpop.f32.mrb[0].mxu0
        %v4191 = vadd.f32 %v3646, %v4190
        %v4192 = vpop.f32.mrb[0].mxu0
        %v4193 = vpop.f32.mrb[0].mxu0
        %v4194 = vadd.f32 %v3649, %v4193
        %v4195 = vpop.f32.mrb[0].mxu0
        %4196 = vmatprep.mubr.bf16.mxu0 %v1993
        %4197 = vmatmul.mubr.bf16.gmra.mrb[0].mxu0 %v1992
        %v4198 = vpop.f32.mrb[0].mxu0
        %v4199 = vadd.f32 %v3654, %v4198
        %v4200 = vpop.f32.mrb[0].mxu0
        %v4201 = vpop.f32.mrb[0].mxu0
        %v4202 = vadd.f32 %v3657, %v4201
        %v4203 = vpop.f32.mrb[0].mxu0
        %4204 = vmatprep.mubr.bf16.mxu0 %v1999
        %4205 = vmatmul.mubr.bf16.gmra.mrb[0].mxu0 %v1998
        %v4206 = vpop.f32.mrb[0].mxu0
        %v4207 = vadd.f32 %v3662, %v4206
        %v4208 = vpop.f32.mrb[0].mxu0
        %v4209 = vpop.f32.mrb[0].mxu0
        %v4210 = vadd.f32 %v3665, %v4209
        %v4211 = vpop.f32.mrb[0].mxu0
        %4212 = vmatprep.mubr.bf16.mxu0 %v2005
        %4213 = vmatmul.mubr.bf16.gmra.mrb[0].mxu0 %v2004
        %v4214 = vpop.f32.mrb[0].mxu0
        %v4215 = vadd.f32 %v3670, %v4214
        %v4216 = vpop.f32.mrb[0].mxu0
        %v4217 = vpop.f32.mrb[0].mxu0
        %v4218 = vadd.f32 %v3673, %v4217
        %v4219 = vpop.f32.mrb[0].mxu0
        %4220 = vmatprep.mubr.bf16.mxu0 %v2011
        %4221 = vmatmul.mubr.bf16.gmra.mrb[0].mxu0 %v2010
        %v4222 = vpop.f32.mrb[0].mxu0
        %v4223 = vadd.f32 %v3678, %v4222
        %v4224 = vpop.f32.mrb[0].mxu0
        %v4225 = vpop.f32.mrb[0].mxu0
        %v4226 = vadd.f32 %v3681, %v4225
        %v4227 = vpop.f32.mrb[0].mxu0
        %4228 = vmatprep.mubr.bf16.mxu0 %v2017
        %4229 = vmatmul.mubr.bf16.gmra.mrb[0].mxu0 %v2016
        %v4230 = vpop.f32.mrb[0].mxu0
        %v4231 = vadd.f32 %v3686, %v4230
        %v4232 = vpop.f32.mrb[0].mxu0
        %v4233 = vpop.f32.mrb[0].mxu0
        %v4234 = vadd.f32 %v3689, %v4233
        %v4235 = vpop.f32.mrb[0].mxu0
        %4236 = vmatprep.mubr.bf16.mxu0 %v2023
        %4237 = vmatmul.mubr.bf16.gmra.mrb[0].mxu0 %v2022
        %v4238 = vpop.f32.mrb[0].mxu0
        %v4239 = vadd.f32 %v3694, %v4238
        %v4240 = vpop.f32.mrb[0].mxu0
        %v4241 = vpop.f32.mrb[0].mxu0
        %v4242 = vadd.f32 %v3697, %v4241
        %v4243 = vpop.f32.mrb[0].mxu0
        %4244 = vmatprep.mubr.bf16.mxu0 %v2029
        %4245 = vmatmul.mubr.bf16.gmra.mrb[0].mxu0 %v2028
        %v4246 = vpop.f32.mrb[0].mxu0
        %v4247 = vadd.f32 %v3702, %v4246
        %v4248 = vpop.f32.mrb[0].mxu0
        %v4249 = vpop.f32.mrb[0].mxu0
        %v4250 = vadd.f32 %v3705, %v4249
        %v4251 = vpop.f32.mrb[0].mxu0
        %4252 = vmatprep.mubr.bf16.mxu0 %v2035
        %4253 = vmatmul.mubr.bf16.gmra.mrb[0].mxu0 %v2034
        %v4254 = vpop.f32.mrb[0].mxu0
        %v4255 = vadd.f32 %v3710, %v4254
        %v4256 = vpop.f32.mrb[0].mxu0
        %v4257 = vpop.f32.mrb[0].mxu0
        %v4258 = vadd.f32 %v3713, %v4257
        %v4259 = vpop.f32.mrb[0].mxu0
        %4260 = vmatprep.mubr.bf16.mxu0 %v2041
        %4261 = vmatmul.mubr.bf16.gmra.mrb[0].mxu0 %v2040
        %v4262 = vpop.f32.mrb[0].mxu0
        %v4263 = vadd.f32 %v3718, %v4262
        %v4264 = vpop.f32.mrb[0].mxu0
        %v4265 = vpop.f32.mrb[0].mxu0
        %v4266 = vadd.f32 %v3721, %v4265
        %v4267 = vpop.f32.mrb[0].mxu0
        %4268 = vmatprep.mubr.bf16.mxu0 %v2047
        %4269 = vmatmul.mubr.bf16.gmra.mrb[0].mxu0 %v2046
        %v4270 = vpop.f32.mrb[0].mxu0
        %v4271 = vadd.f32 %v3726, %v4270
        %v4272 = vpop.f32.mrb[0].mxu0
        %v4273 = vpop.f32.mrb[0].mxu0
        %v4274 = vadd.f32 %v3729, %v4273
        %v4275 = vpop.f32.mrb[0].mxu0
        %4276 = vmatprep.mubr.bf16.mxu0 %v2053
        %4277 = vmatmul.mubr.bf16.gmra.mrb[0].mxu0 %v2052
        %v4278 = vpop.f32.mrb[0].mxu0
        %v4279 = vadd.f32 %v3734, %v4278
        %v4280 = vpop.f32.mrb[0].mxu0
        %v4281 = vpop.f32.mrb[0].mxu0
        %v4282 = vadd.f32 %v3737, %v4281
        %v4283 = vpop.f32.mrb[0].mxu0
        %4284 = vmatprep.mubr.bf16.mxu0 %v2059
        %4285 = vmatmul.mubr.bf16.gmra.mrb[0].mxu0 %v2058
        %v4286 = vpop.f32.mrb[0].mxu0
        %v4287 = vadd.f32 %v3742, %v4286
        %v4288 = vpop.f32.mrb[0].mxu0
        %v4289 = vpop.f32.mrb[0].mxu0
        %v4290 = vadd.f32 %v3745, %v4289
        %v4291 = vpop.f32.mrb[0].mxu0
        %4292 = vmatprep.mubr.bf16.mxu0 %v2065
        %4293 = vmatmul.mubr.bf16.gmra.mrb[0].mxu0 %v2064
        %v4294 = vpop.f32.mrb[0].mxu0
        %v4295 = vadd.f32 %v3750, %v4294
        %v4296 = vpop.f32.mrb[0].mxu0
        %v4297 = vpop.f32.mrb[0].mxu0
        %v4298 = vadd.f32 %v3753, %v4297
        %v4299 = vpop.f32.mrb[0].mxu0
        %4300 = vmatprep.mubr.bf16.mxu0 %v2071
        %4301 = vmatmul.mubr.bf16.gmra.mrb[0].mxu0 %v2070
        %v4302 = vpop.f32.mrb[0].mxu0
        %v4303 = vadd.f32 %v3758, %v4302
        %v4304 = vpop.f32.mrb[0].mxu0
        %v4305 = vpop.f32.mrb[0].mxu0
        %v4306 = vadd.f32 %v3761, %v4305
        %v4307 = vpop.f32.mrb[0].mxu0
        %4308 = vmatprep.mubr.bf16.mxu0 %v2077
        %4309 = vmatmul.mubr.bf16.gmra.mrb[0].mxu0 %v2076
        %v4310 = vpop.f32.mrb[0].mxu0
        %v4311 = vadd.f32 %v3766, %v4310
        %v4312 = vpop.f32.mrb[0].mxu0
        %v4313 = vpop.f32.mrb[0].mxu0
        %v4314 = vadd.f32 %v3769, %v4313
        %v4315 = vpop.f32.mrb[0].mxu0
        %4316 = vmatprep.mubr.bf16.mxu0 %v2083
        %4317 = vmatmul.mubr.bf16.gmra.mrb[0].mxu0 %v2082
        %v4318 = vpop.f32.mrb[0].mxu0
        %v4319 = vadd.f32 %v3774, %v4318
        %v4320 = vpop.f32.mrb[0].mxu0
        %v4321 = vpop.f32.mrb[0].mxu0
        %v4322 = vadd.f32 %v3777, %v4321
        %v4323 = vpop.f32.mrb[0].mxu0
        %4324 = vmatprep.mubr.bf16.mxu0 %v2089
        %4325 = vmatmul.mubr.bf16.gmra.mrb[0].mxu0 %v2088
        %v4326 = vpop.f32.mrb[0].mxu0
        %v4327 = vadd.f32 %v3782, %v4326
        %v4328 = vpop.f32.mrb[0].mxu0
        %v4329 = vpop.f32.mrb[0].mxu0
        %v4330 = vadd.f32 %v3785, %v4329
        %v4331 = vpop.f32.mrb[0].mxu0
        %4332 = vmatprep.mubr.bf16.mxu0 %v2095
        %4333 = vmatmul.mubr.bf16.gmra.mrb[0].mxu0 %v2094
        %v4334 = vpop.f32.mrb[0].mxu0
        %v4335 = vadd.f32 %v3790, %v4334
        %v4336 = vpop.f32.mrb[0].mxu0
        %v4337 = vpop.f32.mrb[0].mxu0
        %v4338 = vadd.f32 %v3793, %v4337
        %v4339 = vpop.f32.mrb[0].mxu0
        %4340 = vmatprep.mubr.bf16.mxu0 %v2101
        %4341 = vmatmul.mubr.bf16.gmra.mrb[0].mxu0 %v2100
        %v4342 = vpop.f32.mrb[0].mxu0
        %v4343 = vadd.f32 %v3798, %v4342
        %v4344 = vpop.f32.mrb[0].mxu0
        %v4345 = vpop.f32.mrb[0].mxu0
        %v4346 = vadd.f32 %v3801, %v4345
        %v4347 = vpop.f32.mrb[0].mxu0
        %4348 = vmatprep.mubr.bf16.mxu0 %v2107
        %4349 = vmatmul.mubr.bf16.gmra.mrb[0].mxu0 %v2106
        %v4350 = vpop.f32.mrb[0].mxu0
        %v4351 = vadd.f32 %v3806, %v4350
        %v4352 = vpop.f32.mrb[0].mxu0
        %v4353 = vpop.f32.mrb[0].mxu0
        %v4354 = vadd.f32 %v3809, %v4353
        %v4355 = vpop.f32.mrb[0].mxu0
        %4356 = vmatprep.mubr.bf16.mxu0 %v2113
        %4357 = vmatmul.mubr.bf16.gmra.mrb[0].mxu0 %v2112
        %v4358 = vpop.f32.mrb[0].mxu0
        %v4359 = vadd.f32 %v3814, %v4358
        %v4360 = vpop.f32.mrb[0].mxu0
        %v4361 = vpop.f32.mrb[0].mxu0
        %v4362 = vadd.f32 %v3817, %v4361
        %v4363 = vpop.f32.mrb[0].mxu0
        %4364 = vmatprep.mubr.bf16.mxu0 %v2119
        %4365 = vmatmul.mubr.bf16.gmra.mrb[0].mxu0 %v2118
        %v4366 = vpop.f32.mrb[0].mxu0
        %v4367 = vadd.f32 %v3822, %v4366
        %v4368 = vpop.f32.mrb[0].mxu0
        %v4369 = vpop.f32.mrb[0].mxu0
        %v4370 = vadd.f32 %v3825, %v4369
        %v4371 = vpop.f32.mrb[0].mxu0
        %4372 = vmatprep.mubr.bf16.mxu0 %v2125
        %4373 = vmatmul.mubr.bf16.gmra.mrb[0].mxu0 %v2124
        %v4374 = vpop.f32.mrb[0].mxu0
        %v4375 = vadd.f32 %v3830, %v4374
        %v4376 = vpop.f32.mrb[0].mxu0
        %v4377 = vpop.f32.mrb[0].mxu0
        %v4378 = vadd.f32 %v3833, %v4377
        %v4379 = vpop.f32.mrb[0].mxu0
        %4380 = vmatprep.mubr.bf16.mxu0 %v2131
        %4381 = vmatmul.mubr.bf16.gmra.mrb[0].mxu0 %v2130
        %v4382 = vpop.f32.mrb[0].mxu0
        %v4383 = vadd.f32 %v3838, %v4382
        %v4384 = vpop.f32.mrb[0].mxu0
        %v4385 = vpop.f32.mrb[0].mxu0
        %v4386 = vadd.f32 %v3841, %v4385
        %v4387 = vpop.f32.mrb[0].mxu0
        %4388 = vmatprep.mubr.bf16.mxu0 %v2137
        %4389 = vmatmul.mubr.bf16.gmra.mrb[0].mxu0 %v2136
        %v4390 = vpop.f32.mrb[0].mxu0
        %v4391 = vadd.f32 %v3846, %v4390
        %v4392 = vpop.f32.mrb[0].mxu0
        %v4393 = vpop.f32.mrb[0].mxu0
        %v4394 = vadd.f32 %v3849, %v4393
        %v4395 = vpop.f32.mrb[0].mxu0
        %4396 = vmatprep.mubr.bf16.mxu0 %v2143
        %4397 = vmatmul.mubr.bf16.gmra.mrb[0].mxu0 %v2142
        %v4398 = vpop.f32.mrb[0].mxu0
        %v4399 = vadd.f32 %v3854, %v4398
        %v4400 = vpop.f32.mrb[0].mxu0
        %v4401 = vpop.f32.mrb[0].mxu0
        %v4402 = vadd.f32 %v3857, %v4401
        %v4403 = vpop.f32.mrb[0].mxu0
        %4404 = vmatprep.mubr.bf16.mxu0 %v2149
        %4405 = vmatmul.mubr.bf16.gmra.mrb[0].mxu0 %v2148
        %v4406 = vpop.f32.mrb[0].mxu0
        %v4407 = vadd.f32 %v3862, %v4406
        %v4408 = vpop.f32.mrb[0].mxu0
        %v4409 = vpop.f32.mrb[0].mxu0
        %v4410 = vadd.f32 %v3865, %v4409
        %v4411 = vpop.f32.mrb[0].mxu0
        %4412 = vmatprep.mubr.bf16.mxu0 %v2155
        %4413 = vmatmul.mubr.bf16.gmra.mrb[0].mxu0 %v2154
        %v4414 = vpop.f32.mrb[0].mxu0
        %v4415 = vadd.f32 %v3870, %v4414
        %v4416 = vpop.f32.mrb[0].mxu0
        %v4417 = vpop.f32.mrb[0].mxu0
        %v4418 = vadd.f32 %v3873, %v4417
        %v4419 = vpop.f32.mrb[0].mxu0
        %4420 = vmatprep.mubr.bf16.mxu0 %v2161
        %4421 = vmatmul.mubr.bf16.gmra.mrb[0].mxu0 %v2160
        %v4422 = vpop.f32.mrb[0].mxu0
        %v4423 = vadd.f32 %v3878, %v4422
        %v4424 = vpop.f32.mrb[0].mxu0
        %v4425 = vpop.f32.mrb[0].mxu0
        %v4426 = vadd.f32 %v3881, %v4425
        %v4427 = vpop.f32.mrb[0].mxu0
        %4428 = vmatprep.mubr.bf16.mxu0 %v2167
        %4429 = vmatmul.mubr.bf16.gmra.mrb[0].mxu0 %v2166
        %v4430 = vpop.f32.mrb[0].mxu0
        %v4431 = vadd.f32 %v3886, %v4430
        %v4432 = vpop.f32.mrb[0].mxu0
        %v4433 = vpop.f32.mrb[0].mxu0
        %v4434 = vadd.f32 %v3889, %v4433
        %v4435 = vpop.f32.mrb[0].mxu0
        %4436 = vmatprep.mubr.bf16.mxu0 %v2173
        %4437 = vmatmul.mubr.bf16.gmra.mrb[0].mxu0 %v2172
        %v4438 = vpop.f32.mrb[0].mxu0
        %v4439 = vadd.f32 %v3894, %v4438
        %v4440 = vpop.f32.mrb[0].mxu0
        %v4441 = vpop.f32.mrb[0].mxu0
        %v4442 = vadd.f32 %v3897, %v4441
        %v4443 = vpop.f32.mrb[0].mxu0
        %4444 = vmatprep.mubr.bf16.mxu0 %v2179
        %4445 = vmatmul.mubr.bf16.gmra.mrb[0].mxu0 %v2178
        %v4446 = vpop.f32.mrb[0].mxu0
        %v4447 = vadd.f32 %v3902, %v4446
        %v4448 = vpop.f32.mrb[0].mxu0
        %v4449 = vpop.f32.mrb[0].mxu0
        %v4450 = vadd.f32 %v3905, %v4449
        %v4451 = vpop.f32.mrb[0].mxu0
        %4452 = vmatprep.mubr.bf16.mxu0 %v2185
        %4453 = vmatmul.mubr.bf16.gmra.mrb[0].mxu0 %v2184
        %v4454 = vpop.f32.mrb[0].mxu0
        %v4455 = vadd.f32 %v3910, %v4454
        %v4456 = vpop.f32.mrb[0].mxu0
        %v4457 = vpop.f32.mrb[0].mxu0
        %v4458 = vadd.f32 %v3913, %v4457
        %v4459 = vpop.f32.mrb[0].mxu0
        %4460 = vmatprep.mubr.bf16.mxu0 %v2191
        %4461 = vmatmul.mubr.bf16.gmra.mrb[0].mxu0 %v2190
        %v4462 = vpop.f32.mrb[0].mxu0
        %v4463 = vadd.f32 %v3918, %v4462
        %v4464 = vpop.f32.mrb[0].mxu0
        %v4465 = vpop.f32.mrb[0].mxu0
        %v4466 = vadd.f32 %v3921, %v4465
        %v4467 = vpop.f32.mrb[0].mxu0
        %4468 = vmatprep.mubr.bf16.mxu0 %v2197
        %4469 = vmatmul.mubr.bf16.gmra.mrb[0].mxu0 %v2196
        %v4470 = vpop.f32.mrb[0].mxu0
        %v4471 = vadd.f32 %v3926, %v4470
        %v4472 = vpop.f32.mrb[0].mxu0
        %v4473 = vpop.f32.mrb[0].mxu0
        %v4474 = vadd.f32 %v3929, %v4473
        %v4475 = vpop.f32.mrb[0].mxu0
        %4476 = vmatprep.mubr.bf16.mxu0 %v2203
        %4477 = vmatmul.mubr.bf16.gmra.mrb[0].mxu0 %v2202
        %v4478 = vpop.f32.mrb[0].mxu0
        %v4479 = vadd.f32 %v3934, %v4478
        %v4480 = vpop.f32.mrb[0].mxu0
        %v4481 = vpop.f32.mrb[0].mxu0
        %v4482 = vadd.f32 %v3937, %v4481
        %v4483 = vpop.f32.mrb[0].mxu0
        %4484 = vmatprep.mubr.bf16.mxu0 %v2209
        %4485 = vmatmul.mubr.bf16.gmra.mrb[0].mxu0 %v2208
        %v4486 = vpop.f32.mrb[0].mxu0
        %v4487 = vadd.f32 %v3942, %v4486
        %v4488 = vpop.f32.mrb[0].mxu0
        %v4489 = vpop.f32.mrb[0].mxu0
        %v4490 = vadd.f32 %v3945, %v4489
        %v4491 = vpop.f32.mrb[0].mxu0
        %4492 = vmatprep.mubr.bf16.mxu0 %v2215
        %4493 = vmatmul.mubr.bf16.gmra.mrb[0].mxu0 %v2214
        %v4494 = vpop.f32.mrb[0].mxu0
        %v4495 = vadd.f32 %v3950, %v4494
        %v4496 = vpop.f32.mrb[0].mxu0
        %v4497 = vpop.f32.mrb[0].mxu0
        %v4498 = vadd.f32 %v3953, %v4497
        %v4499 = vpop.f32.mrb[0].mxu0
        %4500 = vmatprep.mubr.bf16.mxu0 %v2221
        %4501 = vmatmul.mubr.bf16.gmra.mrb[0].mxu0 %v2220
        %v4502 = vpop.f32.mrb[0].mxu0
        %v4503 = vadd.f32 %v3958, %v4502
        %v4504 = vpop.f32.mrb[0].mxu0
        %v4505 = vpop.f32.mrb[0].mxu0
        %v4506 = vadd.f32 %v3961, %v4505
        %v4507 = vpop.f32.mrb[0].mxu0
        %4508 = vmatprep.mubr.bf16.mxu0 %v2227
        %4509 = vmatmul.mubr.bf16.gmra.mrb[0].mxu0 %v2226
        %v4510 = vpop.f32.mrb[0].mxu0
        %v4511 = vadd.f32 %v3966, %v4510
        %v4512 = vpop.f32.mrb[0].mxu0
        %v4513 = vpop.f32.mrb[0].mxu0
        %v4514 = vadd.f32 %v3969, %v4513
        %v4515 = vpop.f32.mrb[0].mxu0
        %4516 = vmatprep.mubr.bf16.mxu0 %v2233
        %4517 = vmatmul.mubr.bf16.gmra.mrb[0].mxu0 %v2232
        %v4518 = vpop.f32.mrb[0].mxu0
        %v4519 = vadd.f32 %v3974, %v4518
        %v4520 = vpop.f32.mrb[0].mxu0
        %v4521 = vpop.f32.mrb[0].mxu0
        %v4522 = vadd.f32 %v3977, %v4521
        %v4523 = vpop.f32.mrb[0].mxu0
        %4524 = vmatprep.mubr.bf16.mxu0 %v2239
        %4525 = vmatmul.mubr.bf16.gmra.mrb[0].mxu0 %v2238
        %v4526 = vpop.f32.mrb[0].mxu0
        %v4527 = vadd.f32 %v3982, %v4526
        %v4528 = vpop.f32.mrb[0].mxu0
        %v4529 = vpop.f32.mrb[0].mxu0
        %v4530 = vadd.f32 %v3985, %v4529
        %v4531 = vpop.f32.mrb[0].mxu0
        %4532 = vmatprep.mubr.bf16.mxu0 %v2245
        %4533 = vmatmul.mubr.bf16.gmra.mrb[0].mxu0 %v2244
        %v4534 = vpop.f32.mrb[0].mxu0
        %v4535 = vadd.f32 %v3990, %v4534
        %v4536 = vpop.f32.mrb[0].mxu0
        %v4537 = vpop.f32.mrb[0].mxu0
        %v4538 = vadd.f32 %v3993, %v4537
        %v4539 = vpop.f32.mrb[0].mxu0
        %4540 = vmatprep.mubr.bf16.mxu0 %v2251
        %4541 = vmatmul.mubr.bf16.gmra.mrb[0].mxu0 %v2250
        %v4542 = vpop.f32.mrb[0].mxu0
        %v4543 = vadd.f32 %v3998, %v4542
        %v4544 = vpop.f32.mrb[0].mxu0
        %v4545 = vpop.f32.mrb[0].mxu0
        %v4546 = vadd.f32 %v4001, %v4545
        %v4547 = vpop.f32.mrb[0].mxu0
        %4548 = vmatprep.mubr.bf16.mxu0 %v2257
        %4549 = vmatmul.mubr.bf16.gmra.mrb[0].mxu0 %v2256
        %v4550 = vpop.f32.mrb[0].mxu0
        %v4551 = vadd.f32 %v4006, %v4550
        %v4552 = vpop.f32.mrb[0].mxu0
        %v4553 = vpop.f32.mrb[0].mxu0
        %v4554 = vadd.f32 %v4009, %v4553
        %v4555 = vpop.f32.mrb[0].mxu0
        %4556 = vmatprep.mubr.bf16.mxu0 %v2263
        %4557 = vmatmul.mubr.bf16.gmra.mrb[0].mxu0 %v2262
        %v4558 = vpop.f32.mrb[0].mxu0
        %v4559 = vadd.f32 %v4014, %v4558
        %v4560 = vpop.f32.mrb[0].mxu0
        %v4561 = vpop.f32.mrb[0].mxu0
        %v4562 = vadd.f32 %v4017, %v4561
        %v4563 = vpop.f32.mrb[0].mxu0
        %4564 = vmatprep.mubr.bf16.mxu0 %v2269
        %4565 = vmatmul.mubr.bf16.gmra.mrb[0].mxu0 %v2268
        %v4566 = vpop.f32.mrb[0].mxu0
        %v4567 = vadd.f32 %v4022, %v4566
        %v4568 = vpop.f32.mrb[0].mxu0
        %v4569 = vpop.f32.mrb[0].mxu0
        %v4570 = vadd.f32 %v4025, %v4569
        %v4571 = vpop.f32.mrb[0].mxu0
        %4572 = vmatprep.mubr.bf16.mxu0 %v2275
        %4573 = vmatmul.mubr.bf16.gmra.mrb[0].mxu0 %v2274
        %v4574 = vpop.f32.mrb[0].mxu0
        %v4575 = vadd.f32 %v4030, %v4574
        %v4576 = vpop.f32.mrb[0].mxu0
        %v4577 = vpop.f32.mrb[0].mxu0
        %v4578 = vadd.f32 %v4033, %v4577
        %v4579 = vpop.f32.mrb[0].mxu0
        %4580 = vmatprep.mubr.bf16.mxu0 %v2281
        %4581 = vmatmul.mubr.bf16.gmra.mrb[0].mxu0 %v2280
        %v4582 = vpop.f32.mrb[0].mxu0
        %v4583 = vadd.f32 %v4038, %v4582
        %v4584 = vpop.f32.mrb[0].mxu0
        %v4585 = vpop.f32.mrb[0].mxu0
        %v4586 = vadd.f32 %v4041, %v4585
        %v4587 = vpop.f32.mrb[0].mxu0
        %4588 = vdwg.mxu0
        %v4589 = vtanh.pop %v4079
        %v4590 = vtanh.pop %v4082
        %v4591 = vtanh.pop %v4087
        %v4592 = vtanh.pop %v4090
        %v4593 = vtanh.pop %v4095
        %v4594 = vtanh.pop %v4098
        %v4595 = vtanh.pop %v4103
        %v4596 = vtanh.pop %v4106
        %v4597 = vtanh.pop %v4111
        %v4598 = vtanh.pop %v4114
        %v4599 = vtanh.pop %v4119
        %v4600 = vtanh.pop %v4122
        %v4601 = vtanh.pop %v4127
        %v4602 = vtanh.pop %v4130
        %v4603 = vtanh.pop %v4135
        %v4604 = vtanh.pop %v4138
        %v4605 = vtanh.pop %v4143
        %v4606 = vtanh.pop %v4146
        %v4607 = vtanh.pop %v4151
        %v4608 = vtanh.pop %v4154
        %v4609 = vtanh.pop %v4159
        %v4610 = vtanh.pop %v4162
        %v4611 = vtanh.pop %v4167
        %v4612 = vtanh.pop %v4170
        %v4613 = vtanh.pop %v4175
        %v4614 = vtanh.pop %v4178
        %v4615 = vtanh.pop %v4183
        %v4616 = vtanh.pop %v4186
        %v4617 = vtanh.pop %v4191
        %v4618 = vtanh.pop %v4194
        %v4619 = vtanh.pop %v4199
        %v4620 = vtanh.pop %v4202
        %v4621 = vtanh.pop %v4207
        %v4622 = vtanh.pop %v4210
        %v4623 = vtanh.pop %v4215
        %v4624 = vtanh.pop %v4218
        %v4625 = vtanh.pop %v4223
        %v4626 = vtanh.pop %v4226
        %v4627 = vtanh.pop %v4231
        %v4628 = vtanh.pop %v4234
        %v4629 = vtanh.pop %v4239
        %v4630 = vtanh.pop %v4242
        %v4631 = vtanh.pop %v4247
        %v4632 = vtanh.pop %v4250
        %v4633 = vtanh.pop %v4255
        %v4634 = vtanh.pop %v4258
        %v4635 = vtanh.pop %v4263
        %v4636 = vtanh.pop %v4266
        %v4637 = vtanh.pop %v4271
        %v4638 = vtanh.pop %v4274
        %v4639 = vtanh.pop %v4279
        %v4640 = vtanh.pop %v4282
        %v4641 = vtanh.pop %v4287
        %v4642 = vtanh.pop %v4290
        %v4643 = vtanh.pop %v4295
        %v4644 = vtanh.pop %v4298
        %v4645 = vtanh.pop %v4303
        %v4646 = vtanh.pop %v4306
        %v4647 = vtanh.pop %v4311
        %v4648 = vtanh.pop %v4314
        %v4649 = vtanh.pop %v4319
        %v4650 = vtanh.pop %v4322
        %v4651 = vtanh.pop %v4327
        %v4652 = vtanh.pop %v4330
        %v4653 = vtanh.pop %v4335
        %v4654 = vtanh.pop %v4338
        %v4655 = vtanh.pop %v4343
        %v4656 = vtanh.pop %v4346
        %v4657 = vtanh.pop %v4351
        %v4658 = vtanh.pop %v4354
        %v4659 = vtanh.pop %v4359
        %v4660 = vtanh.pop %v4362
        %v4661 = vtanh.pop %v4367
        %v4662 = vtanh.pop %v4370
        %v4663 = vtanh.pop %v4375
        %v4664 = vtanh.pop %v4378
        %v4665 = vtanh.pop %v4383
        %v4666 = vtanh.pop %v4386
        %v4667 = vtanh.pop %v4391
        %v4668 = vtanh.pop %v4394
        %v4669 = vtanh.pop %v4399
        %v4670 = vtanh.pop %v4402
        %v4671 = vtanh.pop %v4407
        %v4672 = vtanh.pop %v4410
        %v4673 = vtanh.pop %v4415
        %v4674 = vtanh.pop %v4418
        %v4675 = vtanh.pop %v4423
        %v4676 = vtanh.pop %v4426
        %v4677 = vtanh.pop %v4431
        %v4678 = vtanh.pop %v4434
        %v4679 = vtanh.pop %v4439
        %v4680 = vtanh.pop %v4442
        %v4681 = vtanh.pop %v4447
        %v4682 = vtanh.pop %v4450
        %v4683 = vtanh.pop %v4455
        %v4684 = vtanh.pop %v4458
        %v4685 = vtanh.pop %v4463
        %v4686 = vtanh.pop %v4466
        %v4687 = vtanh.pop %v4471
        %v4688 = vtanh.pop %v4474
        %v4689 = vtanh.pop %v4479
        %v4690 = vtanh.pop %v4482
        %v4691 = vtanh.pop %v4487
        %v4692 = vtanh.pop %v4490
        %v4693 = vtanh.pop %v4495
        %v4694 = vtanh.pop %v4498
        %v4695 = vtanh.pop %v4503
        %v4696 = vtanh.pop %v4506
        %v4697 = vtanh.pop %v4511
        %v4698 = vtanh.pop %v4514
        %v4699 = vtanh.pop %v4519
        %v4700 = vtanh.pop %v4522
        %v4701 = vtanh.pop %v4527
        %v4702 = vtanh.pop %v4530
        %v4703 = vtanh.pop %v4535
        %v4704 = vtanh.pop %v4538
        %v4705 = vtanh.pop %v4543
        %v4706 = vtanh.pop %v4546
        %v4707 = vtanh.pop %v4551
        %v4708 = vtanh.pop %v4554
        %v4709 = vtanh.pop %v4559
        %v4710 = vtanh.pop %v4562
        %v4711 = vtanh.pop %v4567
        %v4712 = vtanh.pop %v4570
        %v4713 = vtanh.pop %v4575
        %v4714 = vtanh.pop %v4578
        %v4715 = vtanh.pop %v4583
        %v4716 = vtanh.pop %v4586
        %v4717 = vld [vmem:[#allocation8] sm:$0x1]
        %v4719 = vlaneseq
        %v4720 = vshrl.u32 %v4719, 7
        %v4721 = vsub.s32 0, %v4720
        %v4722 = vrot.slane %v4717, %v4721
        %v4724 = vmul.f32 %v4589, %v4722
        %v4725 = vmul.f32 %v4590, %v4722
        %v4726 = vmul.f32 %v4591, %v4722
        %v4727 = vmul.f32 %v4592, %v4722
        %v4728 = vmul.f32 %v4593, %v4722
        %v4729 = vmul.f32 %v4594, %v4722
        %v4730 = vmul.f32 %v4595, %v4722
        %v4731 = vmul.f32 %v4596, %v4722
        %v4732 = vmul.f32 %v4597, %v4722
        %v4733 = vmul.f32 %v4598, %v4722
        %v4734 = vmul.f32 %v4599, %v4722
        %v4735 = vmul.f32 %v4600, %v4722
        %v4736 = vmul.f32 %v4601, %v4722
        %v4737 = vmul.f32 %v4602, %v4722
        %v4738 = vmul.f32 %v4603, %v4722
        %v4739 = vmul.f32 %v4604, %v4722
        %v4740 = vmul.f32 %v4605, %v4722
        %v4741 = vmul.f32 %v4606, %v4722
        %v4742 = vmul.f32 %v4607, %v4722
        %v4743 = vmul.f32 %v4608, %v4722
        %v4744 = vmul.f32 %v4609, %v4722
        %v4745 = vmul.f32 %v4610, %v4722
        %v4746 = vmul.f32 %v4611, %v4722
        %v4747 = vmul.f32 %v4612, %v4722
        %v4748 = vmul.f32 %v4613, %v4722
        %v4749 = vmul.f32 %v4614, %v4722
        %v4750 = vmul.f32 %v4615, %v4722
        %v4751 = vmul.f32 %v4616, %v4722
        %v4752 = vmul.f32 %v4617, %v4722
        %v4753 = vmul.f32 %v4618, %v4722
        %v4754 = vmul.f32 %v4619, %v4722
        %v4755 = vmul.f32 %v4620, %v4722
        %v4756 = vmul.f32 %v4621, %v4722
        %v4757 = vmul.f32 %v4622, %v4722
        %v4758 = vmul.f32 %v4623, %v4722
        %v4759 = vmul.f32 %v4624, %v4722
        %v4760 = vmul.f32 %v4625, %v4722
        %v4761 = vmul.f32 %v4626, %v4722
        %v4762 = vmul.f32 %v4627, %v4722
        %v4763 = vmul.f32 %v4628, %v4722
        %v4764 = vmul.f32 %v4629, %v4722
        %v4765 = vmul.f32 %v4630, %v4722
        %v4766 = vmul.f32 %v4631, %v4722
        %v4767 = vmul.f32 %v4632, %v4722
        %v4768 = vmul.f32 %v4633, %v4722
        %v4769 = vmul.f32 %v4634, %v4722
        %v4770 = vmul.f32 %v4635, %v4722
        %v4771 = vmul.f32 %v4636, %v4722
        %v4772 = vmul.f32 %v4637, %v4722
        %v4773 = vmul.f32 %v4638, %v4722
        %v4774 = vmul.f32 %v4639, %v4722
        %v4775 = vmul.f32 %v4640, %v4722
        %v4776 = vmul.f32 %v4641, %v4722
        %v4777 = vmul.f32 %v4642, %v4722
        %v4778 = vmul.f32 %v4643, %v4722
        %v4779 = vmul.f32 %v4644, %v4722
        %v4780 = vmul.f32 %v4645, %v4722
        %v4781 = vmul.f32 %v4646, %v4722
        %v4782 = vmul.f32 %v4647, %v4722
        %v4783 = vmul.f32 %v4648, %v4722
        %v4784 = vmul.f32 %v4649, %v4722
        %v4785 = vmul.f32 %v4650, %v4722
        %v4786 = vmul.f32 %v4651, %v4722
        %v4787 = vmul.f32 %v4652, %v4722
        %v4788 = vmul.f32 %v4653, %v4722
        %v4789 = vmul.f32 %v4654, %v4722
        %v4790 = vmul.f32 %v4655, %v4722
        %v4791 = vmul.f32 %v4656, %v4722
        %v4792 = vmul.f32 %v4657, %v4722
        %v4793 = vmul.f32 %v4658, %v4722
        %v4794 = vmul.f32 %v4659, %v4722
        %v4795 = vmul.f32 %v4660, %v4722
        %v4796 = vmul.f32 %v4661, %v4722
        %v4797 = vmul.f32 %v4662, %v4722
        %v4798 = vmul.f32 %v4663, %v4722
        %v4799 = vmul.f32 %v4664, %v4722
        %v4800 = vmul.f32 %v4665, %v4722
        %v4801 = vmul.f32 %v4666, %v4722
        %v4802 = vmul.f32 %v4667, %v4722
        %v4803 = vmul.f32 %v4668, %v4722
        %v4804 = vmul.f32 %v4669, %v4722
        %v4805 = vmul.f32 %v4670, %v4722
        %v4806 = vmul.f32 %v4671, %v4722
        %v4807 = vmul.f32 %v4672, %v4722
        %v4808 = vmul.f32 %v4673, %v4722
        %v4809 = vmul.f32 %v4674, %v4722
        %v4810 = vmul.f32 %v4675, %v4722
        %v4811 = vmul.f32 %v4676, %v4722
        %v4812 = vmul.f32 %v4677, %v4722
        %v4813 = vmul.f32 %v4678, %v4722
        %v4814 = vmul.f32 %v4679, %v4722
        %v4815 = vmul.f32 %v4680, %v4722
        %v4816 = vmul.f32 %v4681, %v4722
        %v4817 = vmul.f32 %v4682, %v4722
        %v4818 = vmul.f32 %v4683, %v4722
        %v4819 = vmul.f32 %v4684, %v4722
        %v4820 = vmul.f32 %v4685, %v4722
        %v4821 = vmul.f32 %v4686, %v4722
        %v4822 = vmul.f32 %v4687, %v4722
        %v4823 = vmul.f32 %v4688, %v4722
        %v4824 = vmul.f32 %v4689, %v4722
        %v4825 = vmul.f32 %v4690, %v4722
        %v4826 = vmul.f32 %v4691, %v4722
        %v4827 = vmul.f32 %v4692, %v4722
        %v4828 = vmul.f32 %v4693, %v4722
        %v4829 = vmul.f32 %v4694, %v4722
        %v4830 = vmul.f32 %v4695, %v4722
        %v4831 = vmul.f32 %v4696, %v4722
        %v4832 = vmul.f32 %v4697, %v4722
        %v4833 = vmul.f32 %v4698, %v4722
        %v4834 = vmul.f32 %v4699, %v4722
        %v4835 = vmul.f32 %v4700, %v4722
        %v4836 = vmul.f32 %v4701, %v4722
        %v4837 = vmul.f32 %v4702, %v4722
        %v4838 = vmul.f32 %v4703, %v4722
        %v4839 = vmul.f32 %v4704, %v4722
        %v4840 = vmul.f32 %v4705, %v4722
        %v4841 = vmul.f32 %v4706, %v4722
        %v4842 = vmul.f32 %v4707, %v4722
        %v4843 = vmul.f32 %v4708, %v4722
        %v4844 = vmul.f32 %v4709, %v4722
        %v4845 = vmul.f32 %v4710, %v4722
        %v4846 = vmul.f32 %v4711, %v4722
        %v4847 = vmul.f32 %v4712, %v4722
        %v4848 = vmul.f32 %v4713, %v4722
        %v4849 = vmul.f32 %v4714, %v4722
        %v4850 = vmul.f32 %v4715, %v4722
        %v4851 = vmul.f32 %v4716, %v4722
        %4852 = vadd.xlane.f32.xlu0 %v4724
        %v4853 = vpop.xlane.xlu0 %4852
        %4854 = vadd.xlane.f32.xlu0 %v4725
        %v4855 = vpop.xlane.xlu0 %4854
        %4856 = vadd.xlane.f32.xlu0 %v4726
        %v4857 = vpop.xlane.xlu0 %4856
        %4858 = vadd.xlane.f32.xlu0 %v4727
        %v4859 = vpop.xlane.xlu0 %4858
        %4860 = vadd.xlane.f32.xlu0 %v4728
        %v4861 = vpop.xlane.xlu0 %4860
        %4862 = vadd.xlane.f32.xlu0 %v4729
        %v4863 = vpop.xlane.xlu0 %4862
        %4864 = vadd.xlane.f32.xlu0 %v4730
        %v4865 = vpop.xlane.xlu0 %4864
        %4866 = vadd.xlane.f32.xlu0 %v4731
        %v4867 = vpop.xlane.xlu0 %4866
        %4868 = vadd.xlane.f32.xlu0 %v4732
        %v4869 = vpop.xlane.xlu0 %4868
        %4870 = vadd.xlane.f32.xlu0 %v4733
        %v4871 = vpop.xlane.xlu0 %4870
        %4872 = vadd.xlane.f32.xlu0 %v4734
        %v4873 = vpop.xlane.xlu0 %4872
        %4874 = vadd.xlane.f32.xlu0 %v4735
        %v4875 = vpop.xlane.xlu0 %4874
        %4876 = vadd.xlane.f32.xlu0 %v4736
        %v4877 = vpop.xlane.xlu0 %4876
        %4878 = vadd.xlane.f32.xlu0 %v4737
        %v4879 = vpop.xlane.xlu0 %4878
        %4880 = vadd.xlane.f32.xlu0 %v4738
        %v4881 = vpop.xlane.xlu0 %4880
        %4882 = vadd.xlane.f32.xlu0 %v4739
        %v4883 = vpop.xlane.xlu0 %4882
        %4884 = vadd.xlane.f32.xlu0 %v4740
        %v4885 = vpop.xlane.xlu0 %4884
        %4886 = vadd.xlane.f32.xlu0 %v4741
        %v4887 = vpop.xlane.xlu0 %4886
        %4888 = vadd.xlane.f32.xlu0 %v4742
        %v4889 = vpop.xlane.xlu0 %4888
        %4890 = vadd.xlane.f32.xlu0 %v4743
        %v4891 = vpop.xlane.xlu0 %4890
        %4892 = vadd.xlane.f32.xlu0 %v4744
        %v4893 = vpop.xlane.xlu0 %4892
        %4894 = vadd.xlane.f32.xlu0 %v4745
        %v4895 = vpop.xlane.xlu0 %4894
        %4896 = vadd.xlane.f32.xlu0 %v4746
        %v4897 = vpop.xlane.xlu0 %4896
        %4898 = vadd.xlane.f32.xlu0 %v4747
        %v4899 = vpop.xlane.xlu0 %4898
        %4900 = vadd.xlane.f32.xlu0 %v4748
        %v4901 = vpop.xlane.xlu0 %4900
        %4902 = vadd.xlane.f32.xlu0 %v4749
        %v4903 = vpop.xlane.xlu0 %4902
        %4904 = vadd.xlane.f32.xlu0 %v4750
        %v4905 = vpop.xlane.xlu0 %4904
        %4906 = vadd.xlane.f32.xlu0 %v4751
        %v4907 = vpop.xlane.xlu0 %4906
        %4908 = vadd.xlane.f32.xlu0 %v4752
        %v4909 = vpop.xlane.xlu0 %4908
        %4910 = vadd.xlane.f32.xlu0 %v4753
        %v4911 = vpop.xlane.xlu0 %4910
        %4912 = vadd.xlane.f32.xlu0 %v4754
        %v4913 = vpop.xlane.xlu0 %4912
        %4914 = vadd.xlane.f32.xlu0 %v4755
        %v4915 = vpop.xlane.xlu0 %4914
        %4916 = vadd.xlane.f32.xlu0 %v4756
        %v4917 = vpop.xlane.xlu0 %4916
        %4918 = vadd.xlane.f32.xlu0 %v4757
        %v4919 = vpop.xlane.xlu0 %4918
        %4920 = vadd.xlane.f32.xlu0 %v4758
        %v4921 = vpop.xlane.xlu0 %4920
        %4922 = vadd.xlane.f32.xlu0 %v4759
        %v4923 = vpop.xlane.xlu0 %4922
        %4924 = vadd.xlane.f32.xlu0 %v4760
        %v4925 = vpop.xlane.xlu0 %4924
        %4926 = vadd.xlane.f32.xlu0 %v4761
        %v4927 = vpop.xlane.xlu0 %4926
        %4928 = vadd.xlane.f32.xlu0 %v4762
        %v4929 = vpop.xlane.xlu0 %4928
        %4930 = vadd.xlane.f32.xlu0 %v4763
        %v4931 = vpop.xlane.xlu0 %4930
        %4932 = vadd.xlane.f32.xlu0 %v4764
        %v4933 = vpop.xlane.xlu0 %4932
        %4934 = vadd.xlane.f32.xlu0 %v4765
        %v4935 = vpop.xlane.xlu0 %4934
        %4936 = vadd.xlane.f32.xlu0 %v4766
        %v4937 = vpop.xlane.xlu0 %4936
        %4938 = vadd.xlane.f32.xlu0 %v4767
        %v4939 = vpop.xlane.xlu0 %4938
        %4940 = vadd.xlane.f32.xlu0 %v4768
        %v4941 = vpop.xlane.xlu0 %4940
        %4942 = vadd.xlane.f32.xlu0 %v4769
        %v4943 = vpop.xlane.xlu0 %4942
        %4944 = vadd.xlane.f32.xlu0 %v4770
        %v4945 = vpop.xlane.xlu0 %4944
        %4946 = vadd.xlane.f32.xlu0 %v4771
        %v4947 = vpop.xlane.xlu0 %4946
        %4948 = vadd.xlane.f32.xlu0 %v4772
        %v4949 = vpop.xlane.xlu0 %4948
        %4950 = vadd.xlane.f32.xlu0 %v4773
        %v4951 = vpop.xlane.xlu0 %4950
        %4952 = vadd.xlane.f32.xlu0 %v4774
        %v4953 = vpop.xlane.xlu0 %4952
        %4954 = vadd.xlane.f32.xlu0 %v4775
        %v4955 = vpop.xlane.xlu0 %4954
        %4956 = vadd.xlane.f32.xlu0 %v4776
        %v4957 = vpop.xlane.xlu0 %4956
        %4958 = vadd.xlane.f32.xlu0 %v4777
        %v4959 = vpop.xlane.xlu0 %4958
        %4960 = vadd.xlane.f32.xlu0 %v4778
        %v4961 = vpop.xlane.xlu0 %4960
        %4962 = vadd.xlane.f32.xlu0 %v4779
        %v4963 = vpop.xlane.xlu0 %4962
        %4964 = vadd.xlane.f32.xlu0 %v4780
        %v4965 = vpop.xlane.xlu0 %4964
        %4966 = vadd.xlane.f32.xlu0 %v4781
        %v4967 = vpop.xlane.xlu0 %4966
        %4968 = vadd.xlane.f32.xlu0 %v4782
        %v4969 = vpop.xlane.xlu0 %4968
        %4970 = vadd.xlane.f32.xlu0 %v4783
        %v4971 = vpop.xlane.xlu0 %4970
        %4972 = vadd.xlane.f32.xlu0 %v4784
        %v4973 = vpop.xlane.xlu0 %4972
        %4974 = vadd.xlane.f32.xlu0 %v4785
        %v4975 = vpop.xlane.xlu0 %4974
        %4976 = vadd.xlane.f32.xlu0 %v4786
        %v4977 = vpop.xlane.xlu0 %4976
        %4978 = vadd.xlane.f32.xlu0 %v4787
        %v4979 = vpop.xlane.xlu0 %4978
        %4980 = vadd.xlane.f32.xlu0 %v4788
        %v4981 = vpop.xlane.xlu0 %4980
        %4982 = vadd.xlane.f32.xlu0 %v4789
        %v4983 = vpop.xlane.xlu0 %4982
        %4984 = vadd.xlane.f32.xlu0 %v4790
        %v4985 = vpop.xlane.xlu0 %4984
        %4986 = vadd.xlane.f32.xlu0 %v4791
        %v4987 = vpop.xlane.xlu0 %4986
        %4988 = vadd.xlane.f32.xlu0 %v4792
        %v4989 = vpop.xlane.xlu0 %4988
        %4990 = vadd.xlane.f32.xlu0 %v4793
        %v4991 = vpop.xlane.xlu0 %4990
        %4992 = vadd.xlane.f32.xlu0 %v4794
        %v4993 = vpop.xlane.xlu0 %4992
        %4994 = vadd.xlane.f32.xlu0 %v4795
        %v4995 = vpop.xlane.xlu0 %4994
        %4996 = vadd.xlane.f32.xlu0 %v4796
        %v4997 = vpop.xlane.xlu0 %4996
        %4998 = vadd.xlane.f32.xlu0 %v4797
        %v4999 = vpop.xlane.xlu0 %4998
        %5000 = vadd.xlane.f32.xlu0 %v4798
        %v5001 = vpop.xlane.xlu0 %5000
        %5002 = vadd.xlane.f32.xlu0 %v4799
        %v5003 = vpop.xlane.xlu0 %5002
        %5004 = vadd.xlane.f32.xlu0 %v4800
        %v5005 = vpop.xlane.xlu0 %5004
        %5006 = vadd.xlane.f32.xlu0 %v4801
        %v5007 = vpop.xlane.xlu0 %5006
        %5008 = vadd.xlane.f32.xlu0 %v4802
        %v5009 = vpop.xlane.xlu0 %5008
        %5010 = vadd.xlane.f32.xlu0 %v4803
        %v5011 = vpop.xlane.xlu0 %5010
        %5012 = vadd.xlane.f32.xlu0 %v4804
        %v5013 = vpop.xlane.xlu0 %5012
        %5014 = vadd.xlane.f32.xlu0 %v4805
        %v5015 = vpop.xlane.xlu0 %5014
        %5016 = vadd.xlane.f32.xlu0 %v4806
        %v5017 = vpop.xlane.xlu0 %5016
        %5018 = vadd.xlane.f32.xlu0 %v4807
        %v5019 = vpop.xlane.xlu0 %5018
        %5020 = vadd.xlane.f32.xlu0 %v4808
        %v5021 = vpop.xlane.xlu0 %5020
        %5022 = vadd.xlane.f32.xlu0 %v4809
        %v5023 = vpop.xlane.xlu0 %5022
        %5024 = vadd.xlane.f32.xlu0 %v4810
        %v5025 = vpop.xlane.xlu0 %5024
        %5026 = vadd.xlane.f32.xlu0 %v4811
        %v5027 = vpop.xlane.xlu0 %5026
        %5028 = vadd.xlane.f32.xlu0 %v4812
        %v5029 = vpop.xlane.xlu0 %5028
        %5030 = vadd.xlane.f32.xlu0 %v4813
        %v5031 = vpop.xlane.xlu0 %5030
        %5032 = vadd.xlane.f32.xlu0 %v4814
        %v5033 = vpop.xlane.xlu0 %5032
        %5034 = vadd.xlane.f32.xlu0 %v4815
        %v5035 = vpop.xlane.xlu0 %5034
        %5036 = vadd.xlane.f32.xlu0 %v4816
        %v5037 = vpop.xlane.xlu0 %5036
        %5038 = vadd.xlane.f32.xlu0 %v4817
        %v5039 = vpop.xlane.xlu0 %5038
        %5040 = vadd.xlane.f32.xlu0 %v4818
        %v5041 = vpop.xlane.xlu0 %5040
        %5042 = vadd.xlane.f32.xlu0 %v4819
        %v5043 = vpop.xlane.xlu0 %5042
        %5044 = vadd.xlane.f32.xlu0 %v4820
        %v5045 = vpop.xlane.xlu0 %5044
        %5046 = vadd.xlane.f32.xlu0 %v4821
        %v5047 = vpop.xlane.xlu0 %5046
        %5048 = vadd.xlane.f32.xlu0 %v4822
        %v5049 = vpop.xlane.xlu0 %5048
        %5050 = vadd.xlane.f32.xlu0 %v4823
        %v5051 = vpop.xlane.xlu0 %5050
        %5052 = vadd.xlane.f32.xlu0 %v4824
        %v5053 = vpop.xlane.xlu0 %5052
        %5054 = vadd.xlane.f32.xlu0 %v4825
        %v5055 = vpop.xlane.xlu0 %5054
        %5056 = vadd.xlane.f32.xlu0 %v4826
        %v5057 = vpop.xlane.xlu0 %5056
        %5058 = vadd.xlane.f32.xlu0 %v4827
        %v5059 = vpop.xlane.xlu0 %5058
        %5060 = vadd.xlane.f32.xlu0 %v4828
        %v5061 = vpop.xlane.xlu0 %5060
        %5062 = vadd.xlane.f32.xlu0 %v4829
        %v5063 = vpop.xlane.xlu0 %5062
        %5064 = vadd.xlane.f32.xlu0 %v4830
        %v5065 = vpop.xlane.xlu0 %5064
        %5066 = vadd.xlane.f32.xlu0 %v4831
        %v5067 = vpop.xlane.xlu0 %5066
        %5068 = vadd.xlane.f32.xlu0 %v4832
        %v5069 = vpop.xlane.xlu0 %5068
        %5070 = vadd.xlane.f32.xlu0 %v4833
        %v5071 = vpop.xlane.xlu0 %5070
        %5072 = vadd.xlane.f32.xlu0 %v4834
        %v5073 = vpop.xlane.xlu0 %5072
        %5074 = vadd.xlane.f32.xlu0 %v4835
        %v5075 = vpop.xlane.xlu0 %5074
        %5076 = vadd.xlane.f32.xlu0 %v4836
        %v5077 = vpop.xlane.xlu0 %5076
        %5078 = vadd.xlane.f32.xlu0 %v4837
        %v5079 = vpop.xlane.xlu0 %5078
        %5080 = vadd.xlane.f32.xlu0 %v4838
        %v5081 = vpop.xlane.xlu0 %5080
        %5082 = vadd.xlane.f32.xlu0 %v4839
        %v5083 = vpop.xlane.xlu0 %5082
        %5084 = vadd.xlane.f32.xlu0 %v4840
        %v5085 = vpop.xlane.xlu0 %5084
        %5086 = vadd.xlane.f32.xlu0 %v4841
        %v5087 = vpop.xlane.xlu0 %5086
        %5088 = vadd.xlane.f32.xlu0 %v4842
        %v5089 = vpop.xlane.xlu0 %5088
        %5090 = vadd.xlane.f32.xlu0 %v4843
        %v5091 = vpop.xlane.xlu0 %5090
        %5092 = vadd.xlane.f32.xlu0 %v4844
        %v5093 = vpop.xlane.xlu0 %5092
        %5094 = vadd.xlane.f32.xlu0 %v4845
        %v5095 = vpop.xlane.xlu0 %5094
        %5096 = vadd.xlane.f32.xlu0 %v4846
        %v5097 = vpop.xlane.xlu0 %5096
        %5098 = vadd.xlane.f32.xlu0 %v4847
        %v5099 = vpop.xlane.xlu0 %5098
        %5100 = vadd.xlane.f32.xlu0 %v4848
        %v5101 = vpop.xlane.xlu0 %5100
        %5102 = vadd.xlane.f32.xlu0 %v4849
        %v5103 = vpop.xlane.xlu0 %5102
        %5104 = vadd.xlane.f32.xlu0 %v4850
        %v5105 = vpop.xlane.xlu0 %5104
        %5106 = vadd.xlane.f32.xlu0 %v4851
        %v5107 = vpop.xlane.xlu0 %5106
        %v5236 = vlaneseq
        %v5237 = vand.u32 %v5236, 127
        %v5238 = vlaneseq
        %v5239 = vshrl.u32 %v5238, 7
        %v5240 = vsub.s32 %v5237, %v5239
        %v5241 = vrot.slane %v4853, %v5240
        %v5242 = vadd.s32 %v5237, 4294967288
        %v5243 = vlaneseq
        %v5244 = vshrl.u32 %v5243, 7
        %v5245 = vsub.s32 %v5242, %v5244
        %v5246 = vrot.slane %v4855, %v5245
        %vm5247 = vcmask 130112
        %v5248 = vsel %vm5247, %v5246, %v5241
        %v5249 = vadd.s32 %v5237, 4294967280
        %v5250 = vlaneseq
        %v5251 = vshrl.u32 %v5250, 7
        %v5252 = vsub.s32 %v5249, %v5251
        %v5253 = vrot.slane %v4857, %v5252
        %vm5254 = vcmask 195712
        %v5255 = vsel %vm5254, %v5253, %v5248
        %v5256 = vadd.s32 %v5237, 4294967272
        %v5257 = vlaneseq
        %v5258 = vshrl.u32 %v5257, 7
        %v5259 = vsub.s32 %v5256, %v5258
        %v5260 = vrot.slane %v4859, %v5259
        %vm5261 = vcmask 261312
        %v5262 = vsel %vm5261, %v5260, %v5255
        %v5263 = vadd.s32 %v5237, 4294967264
        %v5264 = vlaneseq
        %v5265 = vshrl.u32 %v5264, 7
        %v5266 = vsub.s32 %v5263, %v5265
        %v5267 = vrot.slane %v4861, %v5266
        %vm5268 = vcmask 326912
        %v5269 = vsel %vm5268, %v5267, %v5262
        %v5270 = vadd.s32 %v5237, 4294967256
        %v5271 = vlaneseq
        %v5272 = vshrl.u32 %v5271, 7
        %v5273 = vsub.s32 %v5270, %v5272
        %v5274 = vrot.slane %v4863, %v5273
        %vm5275 = vcmask 392512
        %v5276 = vsel %vm5275, %v5274, %v5269
        %v5277 = vadd.s32 %v5237, 4294967248
        %v5278 = vlaneseq
        %v5279 = vshrl.u32 %v5278, 7
        %v5280 = vsub.s32 %v5277, %v5279
        %v5281 = vrot.slane %v4865, %v5280
        %vm5282 = vcmask 458112
        %v5283 = vsel %vm5282, %v5281, %v5276
        %v5284 = vadd.s32 %v5237, 4294967240
        %v5285 = vlaneseq
        %v5286 = vshrl.u32 %v5285, 7
        %v5287 = vsub.s32 %v5284, %v5286
        %v5288 = vrot.slane %v4867, %v5287
        %vm5289 = vcmask 523712
        %v5290 = vsel %vm5289, %v5288, %v5283
        %v5291 = vadd.s32 %v5237, 4294967232
        %v5292 = vlaneseq
        %v5293 = vshrl.u32 %v5292, 7
        %v5294 = vsub.s32 %v5291, %v5293
        %v5295 = vrot.slane %v4869, %v5294
        %vm5296 = vcmask 589312
        %v5297 = vsel %vm5296, %v5295, %v5290
        %v5298 = vadd.s32 %v5237, 4294967224
        %v5299 = vlaneseq
        %v5300 = vshrl.u32 %v5299, 7
        %v5301 = vsub.s32 %v5298, %v5300
        %v5302 = vrot.slane %v4871, %v5301
        %vm5303 = vcmask 654912
        %v5304 = vsel %vm5303, %v5302, %v5297
        %v5305 = vadd.s32 %v5237, 4294967216
        %v5306 = vlaneseq
        %v5307 = vshrl.u32 %v5306, 7
        %v5308 = vsub.s32 %v5305, %v5307
        %v5309 = vrot.slane %v4873, %v5308
        %vm5310 = vcmask 720512
        %v5311 = vsel %vm5310, %v5309, %v5304
        %v5312 = vadd.s32 %v5237, 4294967208
        %v5313 = vlaneseq
        %v5314 = vshrl.u32 %v5313, 7
        %v5315 = vsub.s32 %v5312, %v5314
        %v5316 = vrot.slane %v4875, %v5315
        %vm5317 = vcmask 786112
        %v5318 = vsel %vm5317, %v5316, %v5311
        %v5319 = vadd.s32 %v5237, 4294967200
        %v5320 = vlaneseq
        %v5321 = vshrl.u32 %v5320, 7
        %v5322 = vsub.s32 %v5319, %v5321
        %v5323 = vrot.slane %v4877, %v5322
        %vm5324 = vcmask 851712
        %v5325 = vsel %vm5324, %v5323, %v5318
        %v5326 = vadd.s32 %v5237, 4294967192
        %v5327 = vlaneseq
        %v5328 = vshrl.u32 %v5327, 7
        %v5329 = vsub.s32 %v5326, %v5328
        %v5330 = vrot.slane %v4879, %v5329
        %vm5331 = vcmask 917312
        %v5332 = vsel %vm5331, %v5330, %v5325
        %v5333 = vadd.s32 %v5237, 4294967184
        %v5334 = vlaneseq
        %v5335 = vshrl.u32 %v5334, 7
        %v5336 = vsub.s32 %v5333, %v5335
        %v5337 = vrot.slane %v4881, %v5336
        %vm5338 = vcmask 982912
        %v5339 = vsel %vm5338, %v5337, %v5332
        %v5340 = vadd.s32 %v5237, 4294967176
        %v5341 = vlaneseq
        %v5342 = vshrl.u32 %v5341, 7
        %v5343 = vsub.s32 %v5340, %v5342
        %v5344 = vrot.slane %v4883, %v5343
        %vm5345 = vcmask 1048512
        %v5346 = vsel %vm5345, %v5344, %v5339
        %v5347 = vlaneseq
        %v5348 = vshrl.u32 %v5347, 7
        %v5349 = vsub.s32 %v5237, %v5348
        %v5350 = vrot.slane %v4885, %v5349
        %v5351 = vlaneseq
        %v5352 = vshrl.u32 %v5351, 7
        %v5353 = vsub.s32 %v5242, %v5352
        %v5354 = vrot.slane %v4887, %v5353
        %v5355 = vsel %vm5247, %v5354, %v5350
        %v5356 = vlaneseq
        %v5357 = vshrl.u32 %v5356, 7
        %v5358 = vsub.s32 %v5249, %v5357
        %v5359 = vrot.slane %v4889, %v5358
        %v5360 = vsel %vm5254, %v5359, %v5355
        %v5361 = vlaneseq
        %v5362 = vshrl.u32 %v5361, 7
        %v5363 = vsub.s32 %v5256, %v5362
        %v5364 = vrot.slane %v4891, %v5363
        %v5365 = vsel %vm5261, %v5364, %v5360
        %v5366 = vlaneseq
        %v5367 = vshrl.u32 %v5366, 7
        %v5368 = vsub.s32 %v5263, %v5367
        %v5369 = vrot.slane %v4893, %v5368
        %v5370 = vsel %vm5268, %v5369, %v5365
        %v5371 = vlaneseq
        %v5372 = vshrl.u32 %v5371, 7
        %v5373 = vsub.s32 %v5270, %v5372
        %v5374 = vrot.slane %v4895, %v5373
        %v5375 = vsel %vm5275, %v5374, %v5370
        %v5376 = vlaneseq
        %v5377 = vshrl.u32 %v5376, 7
        %v5378 = vsub.s32 %v5277, %v5377
        %v5379 = vrot.slane %v4897, %v5378
        %v5380 = vsel %vm5282, %v5379, %v5375
        %v5381 = vlaneseq
        %v5382 = vshrl.u32 %v5381, 7
        %v5383 = vsub.s32 %v5284, %v5382
        %v5384 = vrot.slane %v4899, %v5383
        %v5385 = vsel %vm5289, %v5384, %v5380
        %v5386 = vlaneseq
        %v5387 = vshrl.u32 %v5386, 7
        %v5388 = vsub.s32 %v5291, %v5387
        %v5389 = vrot.slane %v4901, %v5388
        %v5390 = vsel %vm5296, %v5389, %v5385
        %v5391 = vlaneseq
        %v5392 = vshrl.u32 %v5391, 7
        %v5393 = vsub.s32 %v5298, %v5392
        %v5394 = vrot.slane %v4903, %v5393
        %v5395 = vsel %vm5303, %v5394, %v5390
        %v5396 = vlaneseq
        %v5397 = vshrl.u32 %v5396, 7
        %v5398 = vsub.s32 %v5305, %v5397
        %v5399 = vrot.slane %v4905, %v5398
        %v5400 = vsel %vm5310, %v5399, %v5395
        %v5401 = vlaneseq
        %v5402 = vshrl.u32 %v5401, 7
        %v5403 = vsub.s32 %v5312, %v5402
        %v5404 = vrot.slane %v4907, %v5403
        %v5405 = vsel %vm5317, %v5404, %v5400
        %v5406 = vlaneseq
        %v5407 = vshrl.u32 %v5406, 7
        %v5408 = vsub.s32 %v5319, %v5407
        %v5409 = vrot.slane %v4909, %v5408
        %v5410 = vsel %vm5324, %v5409, %v5405
        %v5411 = vlaneseq
        %v5412 = vshrl.u32 %v5411, 7
        %v5413 = vsub.s32 %v5326, %v5412
        %v5414 = vrot.slane %v4911, %v5413
        %v5415 = vsel %vm5331, %v5414, %v5410
        %v5416 = vlaneseq
        %v5417 = vshrl.u32 %v5416, 7
        %v5418 = vsub.s32 %v5333, %v5417
        %v5419 = vrot.slane %v4913, %v5418
        %v5420 = vsel %vm5338, %v5419, %v5415
        %v5421 = vlaneseq
        %v5422 = vshrl.u32 %v5421, 7
        %v5423 = vsub.s32 %v5340, %v5422
        %v5424 = vrot.slane %v4915, %v5423
        %v5425 = vsel %vm5345, %v5424, %v5420
        %v5426 = vlaneseq
        %v5427 = vshrl.u32 %v5426, 7
        %v5428 = vsub.s32 %v5237, %v5427
        %v5429 = vrot.slane %v4917, %v5428
        %v5430 = vlaneseq
        %v5431 = vshrl.u32 %v5430, 7
        %v5432 = vsub.s32 %v5242, %v5431
        %v5433 = vrot.slane %v4919, %v5432
        %v5434 = vsel %vm5247, %v5433, %v5429
        %v5435 = vlaneseq
        %v5436 = vshrl.u32 %v5435, 7
        %v5437 = vsub.s32 %v5249, %v5436
        %v5438 = vrot.slane %v4921, %v5437
        %v5439 = vsel %vm5254, %v5438, %v5434
        %v5440 = vlaneseq
        %v5441 = vshrl.u32 %v5440, 7
        %v5442 = vsub.s32 %v5256, %v5441
        %v5443 = vrot.slane %v4923, %v5442
        %v5444 = vsel %vm5261, %v5443, %v5439
        %v5445 = vlaneseq
        %v5446 = vshrl.u32 %v5445, 7
        %v5447 = vsub.s32 %v5263, %v5446
        %v5448 = vrot.slane %v4925, %v5447
        %v5449 = vsel %vm5268, %v5448, %v5444
        %v5450 = vlaneseq
        %v5451 = vshrl.u32 %v5450, 7
        %v5452 = vsub.s32 %v5270, %v5451
        %v5453 = vrot.slane %v4927, %v5452
        %v5454 = vsel %vm5275, %v5453, %v5449
        %v5455 = vlaneseq
        %v5456 = vshrl.u32 %v5455, 7
        %v5457 = vsub.s32 %v5277, %v5456
        %v5458 = vrot.slane %v4929, %v5457
        %v5459 = vsel %vm5282, %v5458, %v5454
        %v5460 = vlaneseq
        %v5461 = vshrl.u32 %v5460, 7
        %v5462 = vsub.s32 %v5284, %v5461
        %v5463 = vrot.slane %v4931, %v5462
        %v5464 = vsel %vm5289, %v5463, %v5459
        %v5465 = vlaneseq
        %v5466 = vshrl.u32 %v5465, 7
        %v5467 = vsub.s32 %v5291, %v5466
        %v5468 = vrot.slane %v4933, %v5467
        %v5469 = vsel %vm5296, %v5468, %v5464
        %v5470 = vlaneseq
        %v5471 = vshrl.u32 %v5470, 7
        %v5472 = vsub.s32 %v5298, %v5471
        %v5473 = vrot.slane %v4935, %v5472
        %v5474 = vsel %vm5303, %v5473, %v5469
        %v5475 = vlaneseq
        %v5476 = vshrl.u32 %v5475, 7
        %v5477 = vsub.s32 %v5305, %v5476
        %v5478 = vrot.slane %v4937, %v5477
        %v5479 = vsel %vm5310, %v5478, %v5474
        %v5480 = vlaneseq
        %v5481 = vshrl.u32 %v5480, 7
        %v5482 = vsub.s32 %v5312, %v5481
        %v5483 = vrot.slane %v4939, %v5482
        %v5484 = vsel %vm5317, %v5483, %v5479
        %v5485 = vlaneseq
        %v5486 = vshrl.u32 %v5485, 7
        %v5487 = vsub.s32 %v5319, %v5486
        %v5488 = vrot.slane %v4941, %v5487
        %v5489 = vsel %vm5324, %v5488, %v5484
        %v5490 = vlaneseq
        %v5491 = vshrl.u32 %v5490, 7
        %v5492 = vsub.s32 %v5326, %v5491
        %v5493 = vrot.slane %v4943, %v5492
        %v5494 = vsel %vm5331, %v5493, %v5489
        %v5495 = vlaneseq
        %v5496 = vshrl.u32 %v5495, 7
        %v5497 = vsub.s32 %v5333, %v5496
        %v5498 = vrot.slane %v4945, %v5497
        %v5499 = vsel %vm5338, %v5498, %v5494
        %v5500 = vlaneseq
        %v5501 = vshrl.u32 %v5500, 7
        %v5502 = vsub.s32 %v5340, %v5501
        %v5503 = vrot.slane %v4947, %v5502
        %v5504 = vsel %vm5345, %v5503, %v5499
        %v5505 = vlaneseq
        %v5506 = vshrl.u32 %v5505, 7
        %v5507 = vsub.s32 %v5237, %v5506
        %v5508 = vrot.slane %v4949, %v5507
        %v5509 = vlaneseq
        %v5510 = vshrl.u32 %v5509, 7
        %v5511 = vsub.s32 %v5242, %v5510
        %v5512 = vrot.slane %v4951, %v5511
        %v5513 = vsel %vm5247, %v5512, %v5508
        %v5514 = vlaneseq
        %v5515 = vshrl.u32 %v5514, 7
        %v5516 = vsub.s32 %v5249, %v5515
        %v5517 = vrot.slane %v4953, %v5516
        %v5518 = vsel %vm5254, %v5517, %v5513
        %v5519 = vlaneseq
        %v5520 = vshrl.u32 %v5519, 7
        %v5521 = vsub.s32 %v5256, %v5520
        %v5522 = vrot.slane %v4955, %v5521
        %v5523 = vsel %vm5261, %v5522, %v5518
        %v5524 = vlaneseq
        %v5525 = vshrl.u32 %v5524, 7
        %v5526 = vsub.s32 %v5263, %v5525
        %v5527 = vrot.slane %v4957, %v5526
        %v5528 = vsel %vm5268, %v5527, %v5523
        %v5529 = vlaneseq
        %v5530 = vshrl.u32 %v5529, 7
        %v5531 = vsub.s32 %v5270, %v5530
        %v5532 = vrot.slane %v4959, %v5531
        %v5533 = vsel %vm5275, %v5532, %v5528
        %v5534 = vlaneseq
        %v5535 = vshrl.u32 %v5534, 7
        %v5536 = vsub.s32 %v5277, %v5535
        %v5537 = vrot.slane %v4961, %v5536
        %v5538 = vsel %vm5282, %v5537, %v5533
        %v5539 = vlaneseq
        %v5540 = vshrl.u32 %v5539, 7
        %v5541 = vsub.s32 %v5284, %v5540
        %v5542 = vrot.slane %v4963, %v5541
        %v5543 = vsel %vm5289, %v5542, %v5538
        %v5544 = vlaneseq
        %v5545 = vshrl.u32 %v5544, 7
        %v5546 = vsub.s32 %v5291, %v5545
        %v5547 = vrot.slane %v4965, %v5546
        %v5548 = vsel %vm5296, %v5547, %v5543
        %v5549 = vlaneseq
        %v5550 = vshrl.u32 %v5549, 7
        %v5551 = vsub.s32 %v5298, %v5550
        %v5552 = vrot.slane %v4967, %v5551
        %v5553 = vsel %vm5303, %v5552, %v5548
        %v5554 = vlaneseq
        %v5555 = vshrl.u32 %v5554, 7
        %v5556 = vsub.s32 %v5305, %v5555
        %v5557 = vrot.slane %v4969, %v5556
        %v5558 = vsel %vm5310, %v5557, %v5553
        %v5559 = vlaneseq
        %v5560 = vshrl.u32 %v5559, 7
        %v5561 = vsub.s32 %v5312, %v5560
        %v5562 = vrot.slane %v4971, %v5561
        %v5563 = vsel %vm5317, %v5562, %v5558
        %v5564 = vlaneseq
        %v5565 = vshrl.u32 %v5564, 7
        %v5566 = vsub.s32 %v5319, %v5565
        %v5567 = vrot.slane %v4973, %v5566
        %v5568 = vsel %vm5324, %v5567, %v5563
        %v5569 = vlaneseq
        %v5570 = vshrl.u32 %v5569, 7
        %v5571 = vsub.s32 %v5326, %v5570
        %v5572 = vrot.slane %v4975, %v5571
        %v5573 = vsel %vm5331, %v5572, %v5568
        %v5574 = vlaneseq
        %v5575 = vshrl.u32 %v5574, 7
        %v5576 = vsub.s32 %v5333, %v5575
        %v5577 = vrot.slane %v4977, %v5576
        %v5578 = vsel %vm5338, %v5577, %v5573
        %v5579 = vlaneseq
        %v5580 = vshrl.u32 %v5579, 7
        %v5581 = vsub.s32 %v5340, %v5580
        %v5582 = vrot.slane %v4979, %v5581
        %v5583 = vsel %vm5345, %v5582, %v5578
        %v5584 = vlaneseq
        %v5585 = vshrl.u32 %v5584, 7
        %v5586 = vsub.s32 %v5237, %v5585
        %v5587 = vrot.slane %v4981, %v5586
        %v5588 = vlaneseq
        %v5589 = vshrl.u32 %v5588, 7
        %v5590 = vsub.s32 %v5242, %v5589
        %v5591 = vrot.slane %v4983, %v5590
        %v5592 = vsel %vm5247, %v5591, %v5587
        %v5593 = vlaneseq
        %v5594 = vshrl.u32 %v5593, 7
        %v5595 = vsub.s32 %v5249, %v5594
        %v5596 = vrot.slane %v4985, %v5595
        %v5597 = vsel %vm5254, %v5596, %v5592
        %v5598 = vlaneseq
        %v5599 = vshrl.u32 %v5598, 7
        %v5600 = vsub.s32 %v5256, %v5599
        %v5601 = vrot.slane %v4987, %v5600
        %v5602 = vsel %vm5261, %v5601, %v5597
        %v5603 = vlaneseq
        %v5604 = vshrl.u32 %v5603, 7
        %v5605 = vsub.s32 %v5263, %v5604
        %v5606 = vrot.slane %v4989, %v5605
        %v5607 = vsel %vm5268, %v5606, %v5602
        %v5608 = vlaneseq
        %v5609 = vshrl.u32 %v5608, 7
        %v5610 = vsub.s32 %v5270, %v5609
        %v5611 = vrot.slane %v4991, %v5610
        %v5612 = vsel %vm5275, %v5611, %v5607
        %v5613 = vlaneseq
        %v5614 = vshrl.u32 %v5613, 7
        %v5615 = vsub.s32 %v5277, %v5614
        %v5616 = vrot.slane %v4993, %v5615
        %v5617 = vsel %vm5282, %v5616, %v5612
        %v5618 = vlaneseq
        %v5619 = vshrl.u32 %v5618, 7
        %v5620 = vsub.s32 %v5284, %v5619
        %v5621 = vrot.slane %v4995, %v5620
        %v5622 = vsel %vm5289, %v5621, %v5617
        %v5623 = vlaneseq
        %v5624 = vshrl.u32 %v5623, 7
        %v5625 = vsub.s32 %v5291, %v5624
        %v5626 = vrot.slane %v4997, %v5625
        %v5627 = vsel %vm5296, %v5626, %v5622
        %v5628 = vlaneseq
        %v5629 = vshrl.u32 %v5628, 7
        %v5630 = vsub.s32 %v5298, %v5629
        %v5631 = vrot.slane %v4999, %v5630
        %v5632 = vsel %vm5303, %v5631, %v5627
        %v5633 = vlaneseq
        %v5634 = vshrl.u32 %v5633, 7
        %v5635 = vsub.s32 %v5305, %v5634
        %v5636 = vrot.slane %v5001, %v5635
        %v5637 = vsel %vm5310, %v5636, %v5632
        %v5638 = vlaneseq
        %v5639 = vshrl.u32 %v5638, 7
        %v5640 = vsub.s32 %v5312, %v5639
        %v5641 = vrot.slane %v5003, %v5640
        %v5642 = vsel %vm5317, %v5641, %v5637
        %v5643 = vlaneseq
        %v5644 = vshrl.u32 %v5643, 7
        %v5645 = vsub.s32 %v5319, %v5644
        %v5646 = vrot.slane %v5005, %v5645
        %v5647 = vsel %vm5324, %v5646, %v5642
        %v5648 = vlaneseq
        %v5649 = vshrl.u32 %v5648, 7
        %v5650 = vsub.s32 %v5326, %v5649
        %v5651 = vrot.slane %v5007, %v5650
        %v5652 = vsel %vm5331, %v5651, %v5647
        %v5653 = vlaneseq
        %v5654 = vshrl.u32 %v5653, 7
        %v5655 = vsub.s32 %v5333, %v5654
        %v5656 = vrot.slane %v5009, %v5655
        %v5657 = vsel %vm5338, %v5656, %v5652
        %v5658 = vlaneseq
        %v5659 = vshrl.u32 %v5658, 7
        %v5660 = vsub.s32 %v5340, %v5659
        %v5661 = vrot.slane %v5011, %v5660
        %v5662 = vsel %vm5345, %v5661, %v5657
        %v5663 = vlaneseq
        %v5664 = vshrl.u32 %v5663, 7
        %v5665 = vsub.s32 %v5237, %v5664
        %v5666 = vrot.slane %v5013, %v5665
        %v5667 = vlaneseq
        %v5668 = vshrl.u32 %v5667, 7
        %v5669 = vsub.s32 %v5242, %v5668
        %v5670 = vrot.slane %v5015, %v5669
        %v5671 = vsel %vm5247, %v5670, %v5666
        %v5672 = vlaneseq
        %v5673 = vshrl.u32 %v5672, 7
        %v5674 = vsub.s32 %v5249, %v5673
        %v5675 = vrot.slane %v5017, %v5674
        %v5676 = vsel %vm5254, %v5675, %v5671
        %v5677 = vlaneseq
        %v5678 = vshrl.u32 %v5677, 7
        %v5679 = vsub.s32 %v5256, %v5678
        %v5680 = vrot.slane %v5019, %v5679
        %v5681 = vsel %vm5261, %v5680, %v5676
        %v5682 = vlaneseq
        %v5683 = vshrl.u32 %v5682, 7
        %v5684 = vsub.s32 %v5263, %v5683
        %v5685 = vrot.slane %v5021, %v5684
        %v5686 = vsel %vm5268, %v5685, %v5681
        %v5687 = vlaneseq
        %v5688 = vshrl.u32 %v5687, 7
        %v5689 = vsub.s32 %v5270, %v5688
        %v5690 = vrot.slane %v5023, %v5689
        %v5691 = vsel %vm5275, %v5690, %v5686
        %v5692 = vlaneseq
        %v5693 = vshrl.u32 %v5692, 7
        %v5694 = vsub.s32 %v5277, %v5693
        %v5695 = vrot.slane %v5025, %v5694
        %v5696 = vsel %vm5282, %v5695, %v5691
        %v5697 = vlaneseq
        %v5698 = vshrl.u32 %v5697, 7
        %v5699 = vsub.s32 %v5284, %v5698
        %v5700 = vrot.slane %v5027, %v5699
        %v5701 = vsel %vm5289, %v5700, %v5696
        %v5702 = vlaneseq
        %v5703 = vshrl.u32 %v5702, 7
        %v5704 = vsub.s32 %v5291, %v5703
        %v5705 = vrot.slane %v5029, %v5704
        %v5706 = vsel %vm5296, %v5705, %v5701
        %v5707 = vlaneseq
        %v5708 = vshrl.u32 %v5707, 7
        %v5709 = vsub.s32 %v5298, %v5708
        %v5710 = vrot.slane %v5031, %v5709
        %v5711 = vsel %vm5303, %v5710, %v5706
        %v5712 = vlaneseq
        %v5713 = vshrl.u32 %v5712, 7
        %v5714 = vsub.s32 %v5305, %v5713
        %v5715 = vrot.slane %v5033, %v5714
        %v5716 = vsel %vm5310, %v5715, %v5711
        %v5717 = vlaneseq
        %v5718 = vshrl.u32 %v5717, 7
        %v5719 = vsub.s32 %v5312, %v5718
        %v5720 = vrot.slane %v5035, %v5719
        %v5721 = vsel %vm5317, %v5720, %v5716
        %v5722 = vlaneseq
        %v5723 = vshrl.u32 %v5722, 7
        %v5724 = vsub.s32 %v5319, %v5723
        %v5725 = vrot.slane %v5037, %v5724
        %v5726 = vsel %vm5324, %v5725, %v5721
        %v5727 = vlaneseq
        %v5728 = vshrl.u32 %v5727, 7
        %v5729 = vsub.s32 %v5326, %v5728
        %v5730 = vrot.slane %v5039, %v5729
        %v5731 = vsel %vm5331, %v5730, %v5726
        %v5732 = vlaneseq
        %v5733 = vshrl.u32 %v5732, 7
        %v5734 = vsub.s32 %v5333, %v5733
        %v5735 = vrot.slane %v5041, %v5734
        %v5736 = vsel %vm5338, %v5735, %v5731
        %v5737 = vlaneseq
        %v5738 = vshrl.u32 %v5737, 7
        %v5739 = vsub.s32 %v5340, %v5738
        %v5740 = vrot.slane %v5043, %v5739
        %v5741 = vsel %vm5345, %v5740, %v5736
        %v5742 = vlaneseq
        %v5743 = vshrl.u32 %v5742, 7
        %v5744 = vsub.s32 %v5237, %v5743
        %v5745 = vrot.slane %v5045, %v5744
        %v5746 = vlaneseq
        %v5747 = vshrl.u32 %v5746, 7
        %v5748 = vsub.s32 %v5242, %v5747
        %v5749 = vrot.slane %v5047, %v5748
        %v5750 = vsel %vm5247, %v5749, %v5745
        %v5751 = vlaneseq
        %v5752 = vshrl.u32 %v5751, 7
        %v5753 = vsub.s32 %v5249, %v5752
        %v5754 = vrot.slane %v5049, %v5753
        %v5755 = vsel %vm5254, %v5754, %v5750
        %v5756 = vlaneseq
        %v5757 = vshrl.u32 %v5756, 7
        %v5758 = vsub.s32 %v5256, %v5757
        %v5759 = vrot.slane %v5051, %v5758
        %v5760 = vsel %vm5261, %v5759, %v5755
        %v5761 = vlaneseq
        %v5762 = vshrl.u32 %v5761, 7
        %v5763 = vsub.s32 %v5263, %v5762
        %v5764 = vrot.slane %v5053, %v5763
        %v5765 = vsel %vm5268, %v5764, %v5760
        %v5766 = vlaneseq
        %v5767 = vshrl.u32 %v5766, 7
        %v5768 = vsub.s32 %v5270, %v5767
        %v5769 = vrot.slane %v5055, %v5768
        %v5770 = vsel %vm5275, %v5769, %v5765
        %v5771 = vlaneseq
        %v5772 = vshrl.u32 %v5771, 7
        %v5773 = vsub.s32 %v5277, %v5772
        %v5774 = vrot.slane %v5057, %v5773
        %v5775 = vsel %vm5282, %v5774, %v5770
        %v5776 = vlaneseq
        %v5777 = vshrl.u32 %v5776, 7
        %v5778 = vsub.s32 %v5284, %v5777
        %v5779 = vrot.slane %v5059, %v5778
        %v5780 = vsel %vm5289, %v5779, %v5775
        %v5781 = vlaneseq
        %v5782 = vshrl.u32 %v5781, 7
        %v5783 = vsub.s32 %v5291, %v5782
        %v5784 = vrot.slane %v5061, %v5783
        %v5785 = vsel %vm5296, %v5784, %v5780
        %v5786 = vlaneseq
        %v5787 = vshrl.u32 %v5786, 7
        %v5788 = vsub.s32 %v5298, %v5787
        %v5789 = vrot.slane %v5063, %v5788
        %v5790 = vsel %vm5303, %v5789, %v5785
        %v5791 = vlaneseq
        %v5792 = vshrl.u32 %v5791, 7
        %v5793 = vsub.s32 %v5305, %v5792
        %v5794 = vrot.slane %v5065, %v5793
        %v5795 = vsel %vm5310, %v5794, %v5790
        %v5796 = vlaneseq
        %v5797 = vshrl.u32 %v5796, 7
        %v5798 = vsub.s32 %v5312, %v5797
        %v5799 = vrot.slane %v5067, %v5798
        %v5800 = vsel %vm5317, %v5799, %v5795
        %v5801 = vlaneseq
        %v5802 = vshrl.u32 %v5801, 7
        %v5803 = vsub.s32 %v5319, %v5802
        %v5804 = vrot.slane %v5069, %v5803
        %v5805 = vsel %vm5324, %v5804, %v5800
        %v5806 = vlaneseq
        %v5807 = vshrl.u32 %v5806, 7
        %v5808 = vsub.s32 %v5326, %v5807
        %v5809 = vrot.slane %v5071, %v5808
        %v5810 = vsel %vm5331, %v5809, %v5805
        %v5811 = vlaneseq
        %v5812 = vshrl.u32 %v5811, 7
        %v5813 = vsub.s32 %v5333, %v5812
        %v5814 = vrot.slane %v5073, %v5813
        %v5815 = vsel %vm5338, %v5814, %v5810
        %v5816 = vlaneseq
        %v5817 = vshrl.u32 %v5816, 7
        %v5818 = vsub.s32 %v5340, %v5817
        %v5819 = vrot.slane %v5075, %v5818
        %v5820 = vsel %vm5345, %v5819, %v5815
        %v5821 = vlaneseq
        %v5822 = vshrl.u32 %v5821, 7
        %v5823 = vsub.s32 %v5237, %v5822
        %v5824 = vrot.slane %v5077, %v5823
        %v5825 = vlaneseq
        %v5826 = vshrl.u32 %v5825, 7
        %v5827 = vsub.s32 %v5242, %v5826
        %v5828 = vrot.slane %v5079, %v5827
        %v5829 = vsel %vm5247, %v5828, %v5824
        %v5830 = vlaneseq
        %v5831 = vshrl.u32 %v5830, 7
        %v5832 = vsub.s32 %v5249, %v5831
        %v5833 = vrot.slane %v5081, %v5832
        %v5834 = vsel %vm5254, %v5833, %v5829
        %v5835 = vlaneseq
        %v5836 = vshrl.u32 %v5835, 7
        %v5837 = vsub.s32 %v5256, %v5836
        %v5838 = vrot.slane %v5083, %v5837
        %v5839 = vsel %vm5261, %v5838, %v5834
        %v5840 = vlaneseq
        %v5841 = vshrl.u32 %v5840, 7
        %v5842 = vsub.s32 %v5263, %v5841
        %v5843 = vrot.slane %v5085, %v5842
        %v5844 = vsel %vm5268, %v5843, %v5839
        %v5845 = vlaneseq
        %v5846 = vshrl.u32 %v5845, 7
        %v5847 = vsub.s32 %v5270, %v5846
        %v5848 = vrot.slane %v5087, %v5847
        %v5849 = vsel %vm5275, %v5848, %v5844
        %v5850 = vlaneseq
        %v5851 = vshrl.u32 %v5850, 7
        %v5852 = vsub.s32 %v5277, %v5851
        %v5853 = vrot.slane %v5089, %v5852
        %v5854 = vsel %vm5282, %v5853, %v5849
        %v5855 = vlaneseq
        %v5856 = vshrl.u32 %v5855, 7
        %v5857 = vsub.s32 %v5284, %v5856
        %v5858 = vrot.slane %v5091, %v5857
        %v5859 = vsel %vm5289, %v5858, %v5854
        %v5860 = vlaneseq
        %v5861 = vshrl.u32 %v5860, 7
        %v5862 = vsub.s32 %v5291, %v5861
        %v5863 = vrot.slane %v5093, %v5862
        %v5864 = vsel %vm5296, %v5863, %v5859
        %v5865 = vlaneseq
        %v5866 = vshrl.u32 %v5865, 7
        %v5867 = vsub.s32 %v5298, %v5866
        %v5868 = vrot.slane %v5095, %v5867
        %v5869 = vsel %vm5303, %v5868, %v5864
        %v5870 = vlaneseq
        %v5871 = vshrl.u32 %v5870, 7
        %v5872 = vsub.s32 %v5305, %v5871
        %v5873 = vrot.slane %v5097, %v5872
        %v5874 = vsel %vm5310, %v5873, %v5869
        %v5875 = vlaneseq
        %v5876 = vshrl.u32 %v5875, 7
        %v5877 = vsub.s32 %v5312, %v5876
        %v5878 = vrot.slane %v5099, %v5877
        %v5879 = vsel %vm5317, %v5878, %v5874
        %v5880 = vlaneseq
        %v5881 = vshrl.u32 %v5880, 7
        %v5882 = vsub.s32 %v5319, %v5881
        %v5883 = vrot.slane %v5101, %v5882
        %v5884 = vsel %vm5324, %v5883, %v5879
        %v5885 = vlaneseq
        %v5886 = vshrl.u32 %v5885, 7
        %v5887 = vsub.s32 %v5326, %v5886
        %v5888 = vrot.slane %v5103, %v5887
        %v5889 = vsel %vm5331, %v5888, %v5884
        %v5890 = vlaneseq
        %v5891 = vshrl.u32 %v5890, 7
        %v5892 = vsub.s32 %v5333, %v5891
        %v5893 = vrot.slane %v5105, %v5892
        %v5894 = vsel %vm5338, %v5893, %v5889
        %v5895 = vlaneseq
        %v5896 = vshrl.u32 %v5895, 7
        %v5897 = vsub.s32 %v5340, %v5896
        %v5898 = vrot.slane %v5107, %v5897
        %v5899 = vsel %vm5345, %v5898, %v5894
        %vm5900 = vcmask 1041409
        %v5901 = vsel %vm5900, %v5425, %v5346
        %vm5902 = vcmask 1042434
        %v5903 = vsel %vm5902, %v5504, %v5901
        %vm5904 = vcmask 1043459
        %v5905 = vsel %vm5904, %v5583, %v5903
        %vm5906 = vcmask 1044484
        %v5907 = vsel %vm5906, %v5662, %v5905
        %vm5908 = vcmask 1045509
        %v5909 = vsel %vm5908, %v5741, %v5907
        %vm5910 = vcmask 1046534
        %v5911 = vsel %vm5910, %v5820, %v5909
        %vm5912 = vcmask 1047559
        %v5913 = vsel %vm5912, %v5899, %v5911
        %5915 = vmax.xlane.f32.xlu0 %v5913
        %v5916 = vpop.xlane.xlu0 %5915
        %v5918 = vlaneseq
        %v5919 = vshrl.u32 %v5918, 7
        %v5920 = vsub.s32 0, %v5919
        %v5921 = vrot.slane %v5916, %v5920
        %v5922 = vlaneseq
        %v5923 = vshrl.u32 %v5922, 7
        %v5924 = vsub.s32 1, %v5923
        %v5925 = vrot.slane %v5916, %v5924
        %v5926 = vlaneseq
        %v5927 = vshrl.u32 %v5926, 7
        %v5928 = vsub.s32 2, %v5927
        %v5929 = vrot.slane %v5916, %v5928
        %v5930 = vlaneseq
        %v5931 = vshrl.u32 %v5930, 7
        %v5932 = vsub.s32 3, %v5931
        %v5933 = vrot.slane %v5916, %v5932
        %v5934 = vlaneseq
        %v5935 = vshrl.u32 %v5934, 7
        %v5936 = vsub.s32 4, %v5935
        %v5937 = vrot.slane %v5916, %v5936
        %v5938 = vlaneseq
        %v5939 = vshrl.u32 %v5938, 7
        %v5940 = vsub.s32 5, %v5939
        %v5941 = vrot.slane %v5916, %v5940
        %v5942 = vlaneseq
        %v5943 = vshrl.u32 %v5942, 7
        %v5944 = vsub.s32 6, %v5943
        %v5945 = vrot.slane %v5916, %v5944
        %v5946 = vlaneseq
        %v5947 = vshrl.u32 %v5946, 7
        %v5948 = vsub.s32 7, %v5947
        %v5949 = vrot.slane %v5916, %v5948
        %v5958 = vsub.f32 %v4853, %v5921
        %v5959 = vsub.f32 %v4855, %v5921
        %v5960 = vsub.f32 %v4857, %v5921
        %v5961 = vsub.f32 %v4859, %v5921
        %v5962 = vsub.f32 %v4861, %v5921
        %v5963 = vsub.f32 %v4863, %v5921
        %v5964 = vsub.f32 %v4865, %v5921
        %v5965 = vsub.f32 %v4867, %v5921
        %v5966 = vsub.f32 %v4869, %v5921
        %v5967 = vsub.f32 %v4871, %v5921
        %v5968 = vsub.f32 %v4873, %v5921
        %v5969 = vsub.f32 %v4875, %v5921
        %v5970 = vsub.f32 %v4877, %v5921
        %v5971 = vsub.f32 %v4879, %v5921
        %v5972 = vsub.f32 %v4881, %v5921
        %v5973 = vsub.f32 %v4883, %v5921
        %v5974 = vsub.f32 %v4885, %v5925
        %v5975 = vsub.f32 %v4887, %v5925
        %v5976 = vsub.f32 %v4889, %v5925
        %v5977 = vsub.f32 %v4891, %v5925
        %v5978 = vsub.f32 %v4893, %v5925
        %v5979 = vsub.f32 %v4895, %v5925
        %v5980 = vsub.f32 %v4897, %v5925
        %v5981 = vsub.f32 %v4899, %v5925
        %v5982 = vsub.f32 %v4901, %v5925
        %v5983 = vsub.f32 %v4903, %v5925
        %v5984 = vsub.f32 %v4905, %v5925
        %v5985 = vsub.f32 %v4907, %v5925
        %v5986 = vsub.f32 %v4909, %v5925
        %v5987 = vsub.f32 %v4911, %v5925
        %v5988 = vsub.f32 %v4913, %v5925
        %v5989 = vsub.f32 %v4915, %v5925
        %v5990 = vsub.f32 %v4917, %v5929
        %v5991 = vsub.f32 %v4919, %v5929
        %v5992 = vsub.f32 %v4921, %v5929
        %v5993 = vsub.f32 %v4923, %v5929
        %v5994 = vsub.f32 %v4925, %v5929
        %v5995 = vsub.f32 %v4927, %v5929
        %v5996 = vsub.f32 %v4929, %v5929
        %v5997 = vsub.f32 %v4931, %v5929
        %v5998 = vsub.f32 %v4933, %v5929
        %v5999 = vsub.f32 %v4935, %v5929
        %v6000 = vsub.f32 %v4937, %v5929
        %v6001 = vsub.f32 %v4939, %v5929
        %v6002 = vsub.f32 %v4941, %v5929
        %v6003 = vsub.f32 %v4943, %v5929
        %v6004 = vsub.f32 %v4945, %v5929
        %v6005 = vsub.f32 %v4947, %v5929
        %v6006 = vsub.f32 %v4949, %v5933
        %v6007 = vsub.f32 %v4951, %v5933
        %v6008 = vsub.f32 %v4953, %v5933
        %v6009 = vsub.f32 %v4955, %v5933
        %v6010 = vsub.f32 %v4957, %v5933
        %v6011 = vsub.f32 %v4959, %v5933
        %v6012 = vsub.f32 %v4961, %v5933
        %v6013 = vsub.f32 %v4963, %v5933
        %v6014 = vsub.f32 %v4965, %v5933
        %v6015 = vsub.f32 %v4967, %v5933
        %v6016 = vsub.f32 %v4969, %v5933
        %v6017 = vsub.f32 %v4971, %v5933
        %v6018 = vsub.f32 %v4973, %v5933
        %v6019 = vsub.f32 %v4975, %v5933
        %v6020 = vsub.f32 %v4977, %v5933
        %v6021 = vsub.f32 %v4979, %v5933
        %v6022 = vsub.f32 %v4981, %v5937
        %v6023 = vsub.f32 %v4983, %v5937
        %v6024 = vsub.f32 %v4985, %v5937
        %v6025 = vsub.f32 %v4987, %v5937
        %v6026 = vsub.f32 %v4989, %v5937
        %v6027 = vsub.f32 %v4991, %v5937
        %v6028 = vsub.f32 %v4993, %v5937
        %v6029 = vsub.f32 %v4995, %v5937
        %v6030 = vsub.f32 %v4997, %v5937
        %v6031 = vsub.f32 %v4999, %v5937
        %v6032 = vsub.f32 %v5001, %v5937
        %v6033 = vsub.f32 %v5003, %v5937
        %v6034 = vsub.f32 %v5005, %v5937
        %v6035 = vsub.f32 %v5007, %v5937
        %v6036 = vsub.f32 %v5009, %v5937
        %v6037 = vsub.f32 %v5011, %v5937
        %v6038 = vsub.f32 %v5013, %v5941
        %v6039 = vsub.f32 %v5015, %v5941
        %v6040 = vsub.f32 %v5017, %v5941
        %v6041 = vsub.f32 %v5019, %v5941
        %v6042 = vsub.f32 %v5021, %v5941
        %v6043 = vsub.f32 %v5023, %v5941
        %v6044 = vsub.f32 %v5025, %v5941
        %v6045 = vsub.f32 %v5027, %v5941
        %v6046 = vsub.f32 %v5029, %v5941
        %v6047 = vsub.f32 %v5031, %v5941
        %v6048 = vsub.f32 %v5033, %v5941
        %v6049 = vsub.f32 %v5035, %v5941
        %v6050 = vsub.f32 %v5037, %v5941
        %v6051 = vsub.f32 %v5039, %v5941
        %v6052 = vsub.f32 %v5041, %v5941
        %v6053 = vsub.f32 %v5043, %v5941
        %v6054 = vsub.f32 %v5045, %v5945
        %v6055 = vsub.f32 %v5047, %v5945
        %v6056 = vsub.f32 %v5049, %v5945
        %v6057 = vsub.f32 %v5051, %v5945
        %v6058 = vsub.f32 %v5053, %v5945
        %v6059 = vsub.f32 %v5055, %v5945
        %v6060 = vsub.f32 %v5057, %v5945
        %v6061 = vsub.f32 %v5059, %v5945
        %v6062 = vsub.f32 %v5061, %v5945
        %v6063 = vsub.f32 %v5063, %v5945
        %v6064 = vsub.f32 %v5065, %v5945
        %v6065 = vsub.f32 %v5067, %v5945
        %v6066 = vsub.f32 %v5069, %v5945
        %v6067 = vsub.f32 %v5071, %v5945
        %v6068 = vsub.f32 %v5073, %v5945
        %v6069 = vsub.f32 %v5075, %v5945
        %v6070 = vsub.f32 %v5077, %v5949
        %v6071 = vsub.f32 %v5079, %v5949
        %v6072 = vsub.f32 %v5081, %v5949
        %v6073 = vsub.f32 %v5083, %v5949
        %v6074 = vsub.f32 %v5085, %v5949
        %v6075 = vsub.f32 %v5087, %v5949
        %v6076 = vsub.f32 %v5089, %v5949
        %v6077 = vsub.f32 %v5091, %v5949
        %v6078 = vsub.f32 %v5093, %v5949
        %v6079 = vsub.f32 %v5095, %v5949
        %v6080 = vsub.f32 %v5097, %v5949
        %v6081 = vsub.f32 %v5099, %v5949
        %v6082 = vsub.f32 %v5101, %v5949
        %v6083 = vsub.f32 %v5103, %v5949
        %v6084 = vsub.f32 %v5105, %v5949
        %v6085 = vsub.f32 %v5107, %v5949
        %v6086 = vmul.f32 %v5958, 1.442695
        %v6087 = vpow.pop %v6086
        %v6088 = vmul.f32 %v5959, 1.442695
        %v6089 = vpow.pop %v6088
        %v6090 = vmul.f32 %v5960, 1.442695
        %v6091 = vpow.pop %v6090
        %v6092 = vmul.f32 %v5961, 1.442695
        %v6093 = vpow.pop %v6092
        %v6094 = vmul.f32 %v5962, 1.442695
        %v6095 = vpow.pop %v6094
        %v6096 = vmul.f32 %v5963, 1.442695
        %v6097 = vpow.pop %v6096
        %v6098 = vmul.f32 %v5964, 1.442695
        %v6099 = vpow.pop %v6098
        %v6100 = vmul.f32 %v5965, 1.442695
        %v6101 = vpow.pop %v6100
        %v6102 = vmul.f32 %v5966, 1.442695
        %v6103 = vpow.pop %v6102
        %v6104 = vmul.f32 %v5967, 1.442695
        %v6105 = vpow.pop %v6104
        %v6106 = vmul.f32 %v5968, 1.442695
        %v6107 = vpow.pop %v6106
        %v6108 = vmul.f32 %v5969, 1.442695
        %v6109 = vpow.pop %v6108
        %v6110 = vmul.f32 %v5970, 1.442695
        %v6111 = vpow.pop %v6110
        %v6112 = vmul.f32 %v5971, 1.442695
        %v6113 = vpow.pop %v6112
        %v6114 = vmul.f32 %v5972, 1.442695
        %v6115 = vpow.pop %v6114
        %v6116 = vmul.f32 %v5973, 1.442695
        %v6117 = vpow.pop %v6116
        %v6118 = vmul.f32 %v5974, 1.442695
        %v6119 = vpow.pop %v6118
        %v6120 = vmul.f32 %v5975, 1.442695
        %v6121 = vpow.pop %v6120
        %v6122 = vmul.f32 %v5976, 1.442695
        %v6123 = vpow.pop %v6122
        %v6124 = vmul.f32 %v5977, 1.442695
        %v6125 = vpow.pop %v6124
        %v6126 = vmul.f32 %v5978, 1.442695
        %v6127 = vpow.pop %v6126
        %v6128 = vmul.f32 %v5979, 1.442695
        %v6129 = vpow.pop %v6128
        %v6130 = vmul.f32 %v5980, 1.442695
        %v6131 = vpow.pop %v6130
        %v6132 = vmul.f32 %v5981, 1.442695
        %v6133 = vpow.pop %v6132
        %v6134 = vmul.f32 %v5982, 1.442695
        %v6135 = vpow.pop %v6134
        %v6136 = vmul.f32 %v5983, 1.442695
        %v6137 = vpow.pop %v6136
        %v6138 = vmul.f32 %v5984, 1.442695
        %v6139 = vpow.pop %v6138
        %v6140 = vmul.f32 %v5985, 1.442695
        %v6141 = vpow.pop %v6140
        %v6142 = vmul.f32 %v5986, 1.442695
        %v6143 = vpow.pop %v6142
        %v6144 = vmul.f32 %v5987, 1.442695
        %v6145 = vpow.pop %v6144
        %v6146 = vmul.f32 %v5988, 1.442695
        %v6147 = vpow.pop %v6146
        %v6148 = vmul.f32 %v5989, 1.442695
        %v6149 = vpow.pop %v6148
        %v6150 = vmul.f32 %v5990, 1.442695
        %v6151 = vpow.pop %v6150
        %v6152 = vmul.f32 %v5991, 1.442695
        %v6153 = vpow.pop %v6152
        %v6154 = vmul.f32 %v5992, 1.442695
        %v6155 = vpow.pop %v6154
        %v6156 = vmul.f32 %v5993, 1.442695
        %v6157 = vpow.pop %v6156
        %v6158 = vmul.f32 %v5994, 1.442695
        %v6159 = vpow.pop %v6158
        %v6160 = vmul.f32 %v5995, 1.442695
        %v6161 = vpow.pop %v6160
        %v6162 = vmul.f32 %v5996, 1.442695
        %v6163 = vpow.pop %v6162
        %v6164 = vmul.f32 %v5997, 1.442695
        %v6165 = vpow.pop %v6164
        %v6166 = vmul.f32 %v5998, 1.442695
        %v6167 = vpow.pop %v6166
        %v6168 = vmul.f32 %v5999, 1.442695
        %v6169 = vpow.pop %v6168
        %v6170 = vmul.f32 %v6000, 1.442695
        %v6171 = vpow.pop %v6170
        %v6172 = vmul.f32 %v6001, 1.442695
        %v6173 = vpow.pop %v6172
        %v6174 = vmul.f32 %v6002, 1.442695
        %v6175 = vpow.pop %v6174
        %v6176 = vmul.f32 %v6003, 1.442695
        %v6177 = vpow.pop %v6176
        %v6178 = vmul.f32 %v6004, 1.442695
        %v6179 = vpow.pop %v6178
        %v6180 = vmul.f32 %v6005, 1.442695
        %v6181 = vpow.pop %v6180
        %v6182 = vmul.f32 %v6006, 1.442695
        %v6183 = vpow.pop %v6182
        %v6184 = vmul.f32 %v6007, 1.442695
        %v6185 = vpow.pop %v6184
        %v6186 = vmul.f32 %v6008, 1.442695
        %v6187 = vpow.pop %v6186
        %v6188 = vmul.f32 %v6009, 1.442695
        %v6189 = vpow.pop %v6188
        %v6190 = vmul.f32 %v6010, 1.442695
        %v6191 = vpow.pop %v6190
        %v6192 = vmul.f32 %v6011, 1.442695
        %v6193 = vpow.pop %v6192
        %v6194 = vmul.f32 %v6012, 1.442695
        %v6195 = vpow.pop %v6194
        %v6196 = vmul.f32 %v6013, 1.442695
        %v6197 = vpow.pop %v6196
        %v6198 = vmul.f32 %v6014, 1.442695
        %v6199 = vpow.pop %v6198
        %v6200 = vmul.f32 %v6015, 1.442695
        %v6201 = vpow.pop %v6200
        %v6202 = vmul.f32 %v6016, 1.442695
        %v6203 = vpow.pop %v6202
        %v6204 = vmul.f32 %v6017, 1.442695
        %v6205 = vpow.pop %v6204
        %v6206 = vmul.f32 %v6018, 1.442695
        %v6207 = vpow.pop %v6206
        %v6208 = vmul.f32 %v6019, 1.442695
        %v6209 = vpow.pop %v6208
        %v6210 = vmul.f32 %v6020, 1.442695
        %v6211 = vpow.pop %v6210
        %v6212 = vmul.f32 %v6021, 1.442695
        %v6213 = vpow.pop %v6212
        %v6214 = vmul.f32 %v6022, 1.442695
        %v6215 = vpow.pop %v6214
        %v6216 = vmul.f32 %v6023, 1.442695
        %v6217 = vpow.pop %v6216
        %v6218 = vmul.f32 %v6024, 1.442695
        %v6219 = vpow.pop %v6218
        %v6220 = vmul.f32 %v6025, 1.442695
        %v6221 = vpow.pop %v6220
        %v6222 = vmul.f32 %v6026, 1.442695
        %v6223 = vpow.pop %v6222
        %v6224 = vmul.f32 %v6027, 1.442695
        %v6225 = vpow.pop %v6224
        %v6226 = vmul.f32 %v6028, 1.442695
        %v6227 = vpow.pop %v6226
        %v6228 = vmul.f32 %v6029, 1.442695
        %v6229 = vpow.pop %v6228
        %v6230 = vmul.f32 %v6030, 1.442695
        %v6231 = vpow.pop %v6230
        %v6232 = vmul.f32 %v6031, 1.442695
        %v6233 = vpow.pop %v6232
        %v6234 = vmul.f32 %v6032, 1.442695
        %v6235 = vpow.pop %v6234
        %v6236 = vmul.f32 %v6033, 1.442695
        %v6237 = vpow.pop %v6236
        %v6238 = vmul.f32 %v6034, 1.442695
        %v6239 = vpow.pop %v6238
        %v6240 = vmul.f32 %v6035, 1.442695
        %v6241 = vpow.pop %v6240
        %v6242 = vmul.f32 %v6036, 1.442695
        %v6243 = vpow.pop %v6242
        %v6244 = vmul.f32 %v6037, 1.442695
        %v6245 = vpow.pop %v6244
        %v6246 = vmul.f32 %v6038, 1.442695
        %v6247 = vpow.pop %v6246
        %v6248 = vmul.f32 %v6039, 1.442695
        %v6249 = vpow.pop %v6248
        %v6250 = vmul.f32 %v6040, 1.442695
        %v6251 = vpow.pop %v6250
        %v6252 = vmul.f32 %v6041, 1.442695
        %v6253 = vpow.pop %v6252
        %v6254 = vmul.f32 %v6042, 1.442695
        %v6255 = vpow.pop %v6254
        %v6256 = vmul.f32 %v6043, 1.442695
        %v6257 = vpow.pop %v6256
        %v6258 = vmul.f32 %v6044, 1.442695
        %v6259 = vpow.pop %v6258
        %v6260 = vmul.f32 %v6045, 1.442695
        %v6261 = vpow.pop %v6260
        %v6262 = vmul.f32 %v6046, 1.442695
        %v6263 = vpow.pop %v6262
        %v6264 = vmul.f32 %v6047, 1.442695
        %v6265 = vpow.pop %v6264
        %v6266 = vmul.f32 %v6048, 1.442695
        %v6267 = vpow.pop %v6266
        %v6268 = vmul.f32 %v6049, 1.442695
        %v6269 = vpow.pop %v6268
        %v6270 = vmul.f32 %v6050, 1.442695
        %v6271 = vpow.pop %v6270
        %v6272 = vmul.f32 %v6051, 1.442695
        %v6273 = vpow.pop %v6272
        %v6274 = vmul.f32 %v6052, 1.442695
        %v6275 = vpow.pop %v6274
        %v6276 = vmul.f32 %v6053, 1.442695
        %v6277 = vpow.pop %v6276
        %v6278 = vmul.f32 %v6054, 1.442695
        %v6279 = vpow.pop %v6278
        %v6280 = vmul.f32 %v6055, 1.442695
        %v6281 = vpow.pop %v6280
        %v6282 = vmul.f32 %v6056, 1.442695
        %v6283 = vpow.pop %v6282
        %v6284 = vmul.f32 %v6057, 1.442695
        %v6285 = vpow.pop %v6284
        %v6286 = vmul.f32 %v6058, 1.442695
        %v6287 = vpow.pop %v6286
        %v6288 = vmul.f32 %v6059, 1.442695
        %v6289 = vpow.pop %v6288
        %v6290 = vmul.f32 %v6060, 1.442695
        %v6291 = vpow.pop %v6290
        %v6292 = vmul.f32 %v6061, 1.442695
        %v6293 = vpow.pop %v6292
        %v6294 = vmul.f32 %v6062, 1.442695
        %v6295 = vpow.pop %v6294
        %v6296 = vmul.f32 %v6063, 1.442695
        %v6297 = vpow.pop %v6296
        %v6298 = vmul.f32 %v6064, 1.442695
        %v6299 = vpow.pop %v6298
        %v6300 = vmul.f32 %v6065, 1.442695
        %v6301 = vpow.pop %v6300
        %v6302 = vmul.f32 %v6066, 1.442695
        %v6303 = vpow.pop %v6302
        %v6304 = vmul.f32 %v6067, 1.442695
        %v6305 = vpow.pop %v6304
        %v6306 = vmul.f32 %v6068, 1.442695
        %v6307 = vpow.pop %v6306
        %v6308 = vmul.f32 %v6069, 1.442695
        %v6309 = vpow.pop %v6308
        %v6310 = vmul.f32 %v6070, 1.442695
        %v6311 = vpow.pop %v6310
        %v6312 = vmul.f32 %v6071, 1.442695
        %v6313 = vpow.pop %v6312
        %v6314 = vmul.f32 %v6072, 1.442695
        %v6315 = vpow.pop %v6314
        %v6316 = vmul.f32 %v6073, 1.442695
        %v6317 = vpow.pop %v6316
        %v6318 = vmul.f32 %v6074, 1.442695
        %v6319 = vpow.pop %v6318
        %v6320 = vmul.f32 %v6075, 1.442695
        %v6321 = vpow.pop %v6320
        %v6322 = vmul.f32 %v6076, 1.442695
        %v6323 = vpow.pop %v6322
        %v6324 = vmul.f32 %v6077, 1.442695
        %v6325 = vpow.pop %v6324
        %v6326 = vmul.f32 %v6078, 1.442695
        %v6327 = vpow.pop %v6326
        %v6328 = vmul.f32 %v6079, 1.442695
        %v6329 = vpow.pop %v6328
        %v6330 = vmul.f32 %v6080, 1.442695
        %v6331 = vpow.pop %v6330
        %v6332 = vmul.f32 %v6081, 1.442695
        %v6333 = vpow.pop %v6332
        %v6334 = vmul.f32 %v6082, 1.442695
        %v6335 = vpow.pop %v6334
        %v6336 = vmul.f32 %v6083, 1.442695
        %v6337 = vpow.pop %v6336
        %v6338 = vmul.f32 %v6084, 1.442695
        %v6339 = vpow.pop %v6338
        %v6340 = vmul.f32 %v6085, 1.442695
        %v6341 = vpow.pop %v6340
        %6470 = vset.pattern.permute.xlu0 0
        %6471 = vperm.xlu0 %6470, %v6087
        %v6472 = vpop.permute.xlu0 %6471
        %6473 = vset.pattern.permute.xlu0 0
        %6474 = vperm.xlu0 %6473, %v6089
        %v6475 = vpop.permute.xlu0 %6474
        %6476 = vset.pattern.permute.xlu0 0
        %6477 = vperm.xlu0 %6476, %v6091
        %v6478 = vpop.permute.xlu0 %6477
        %6479 = vset.pattern.permute.xlu0 0
        %6480 = vperm.xlu0 %6479, %v6093
        %v6481 = vpop.permute.xlu0 %6480
        %6482 = vset.pattern.permute.xlu0 0
        %6483 = vperm.xlu0 %6482, %v6095
        %v6484 = vpop.permute.xlu0 %6483
        %6485 = vset.pattern.permute.xlu0 0
        %6486 = vperm.xlu0 %6485, %v6097
        %v6487 = vpop.permute.xlu0 %6486
        %6488 = vset.pattern.permute.xlu0 0
        %6489 = vperm.xlu0 %6488, %v6099
        %v6490 = vpop.permute.xlu0 %6489
        %6491 = vset.pattern.permute.xlu0 0
        %6492 = vperm.xlu0 %6491, %v6101
        %v6493 = vpop.permute.xlu0 %6492
        %6494 = vset.pattern.permute.xlu0 0
        %6495 = vperm.xlu0 %6494, %v6103
        %v6496 = vpop.permute.xlu0 %6495
        %6497 = vset.pattern.permute.xlu0 0
        %6498 = vperm.xlu0 %6497, %v6105
        %v6499 = vpop.permute.xlu0 %6498
        %6500 = vset.pattern.permute.xlu0 0
        %6501 = vperm.xlu0 %6500, %v6107
        %v6502 = vpop.permute.xlu0 %6501
        %6503 = vset.pattern.permute.xlu0 0
        %6504 = vperm.xlu0 %6503, %v6109
        %v6505 = vpop.permute.xlu0 %6504
        %6506 = vset.pattern.permute.xlu0 0
        %6507 = vperm.xlu0 %6506, %v6111
        %v6508 = vpop.permute.xlu0 %6507
        %6509 = vset.pattern.permute.xlu0 0
        %6510 = vperm.xlu0 %6509, %v6113
        %v6511 = vpop.permute.xlu0 %6510
        %6512 = vset.pattern.permute.xlu0 0
        %6513 = vperm.xlu0 %6512, %v6115
        %v6514 = vpop.permute.xlu0 %6513
        %6515 = vset.pattern.permute.xlu0 0
        %6516 = vperm.xlu0 %6515, %v6117
        %v6517 = vpop.permute.xlu0 %6516
        %6518 = vset.pattern.permute.xlu0 0
        %6519 = vperm.xlu0 %6518, %v6119
        %v6520 = vpop.permute.xlu0 %6519
        %6521 = vset.pattern.permute.xlu0 0
        %6522 = vperm.xlu0 %6521, %v6121
        %v6523 = vpop.permute.xlu0 %6522
        %6524 = vset.pattern.permute.xlu0 0
        %6525 = vperm.xlu0 %6524, %v6123
        %v6526 = vpop.permute.xlu0 %6525
        %6527 = vset.pattern.permute.xlu0 0
        %6528 = vperm.xlu0 %6527, %v6125
        %v6529 = vpop.permute.xlu0 %6528
        %6530 = vset.pattern.permute.xlu0 0
        %6531 = vperm.xlu0 %6530, %v6127
        %v6532 = vpop.permute.xlu0 %6531
        %6533 = vset.pattern.permute.xlu0 0
        %6534 = vperm.xlu0 %6533, %v6129
        %v6535 = vpop.permute.xlu0 %6534
        %6536 = vset.pattern.permute.xlu0 0
        %6537 = vperm.xlu0 %6536, %v6131
        %v6538 = vpop.permute.xlu0 %6537
        %6539 = vset.pattern.permute.xlu0 0
        %6540 = vperm.xlu0 %6539, %v6133
        %v6541 = vpop.permute.xlu0 %6540
        %6542 = vset.pattern.permute.xlu0 0
        %6543 = vperm.xlu0 %6542, %v6135
        %v6544 = vpop.permute.xlu0 %6543
        %6545 = vset.pattern.permute.xlu0 0
        %6546 = vperm.xlu0 %6545, %v6137
        %v6547 = vpop.permute.xlu0 %6546
        %6548 = vset.pattern.permute.xlu0 0
        %6549 = vperm.xlu0 %6548, %v6139
        %v6550 = vpop.permute.xlu0 %6549
        %6551 = vset.pattern.permute.xlu0 0
        %6552 = vperm.xlu0 %6551, %v6141
        %v6553 = vpop.permute.xlu0 %6552
        %6554 = vset.pattern.permute.xlu0 0
        %6555 = vperm.xlu0 %6554, %v6143
        %v6556 = vpop.permute.xlu0 %6555
        %6557 = vset.pattern.permute.xlu0 0
        %6558 = vperm.xlu0 %6557, %v6145
        %v6559 = vpop.permute.xlu0 %6558
        %6560 = vset.pattern.permute.xlu0 0
        %6561 = vperm.xlu0 %6560, %v6147
        %v6562 = vpop.permute.xlu0 %6561
        %6563 = vset.pattern.permute.xlu0 0
        %6564 = vperm.xlu0 %6563, %v6149
        %v6565 = vpop.permute.xlu0 %6564
        %6566 = vset.pattern.permute.xlu0 0
        %6567 = vperm.xlu0 %6566, %v6151
        %v6568 = vpop.permute.xlu0 %6567
        %6569 = vset.pattern.permute.xlu0 0
        %6570 = vperm.xlu0 %6569, %v6153
        %v6571 = vpop.permute.xlu0 %6570
        %6572 = vset.pattern.permute.xlu0 0
        %6573 = vperm.xlu0 %6572, %v6155
        %v6574 = vpop.permute.xlu0 %6573
        %6575 = vset.pattern.permute.xlu0 0
        %6576 = vperm.xlu0 %6575, %v6157
        %v6577 = vpop.permute.xlu0 %6576
        %6578 = vset.pattern.permute.xlu0 0
        %6579 = vperm.xlu0 %6578, %v6159
        %v6580 = vpop.permute.xlu0 %6579
        %6581 = vset.pattern.permute.xlu0 0
        %6582 = vperm.xlu0 %6581, %v6161
        %v6583 = vpop.permute.xlu0 %6582
        %6584 = vset.pattern.permute.xlu0 0
        %6585 = vperm.xlu0 %6584, %v6163
        %v6586 = vpop.permute.xlu0 %6585
        %6587 = vset.pattern.permute.xlu0 0
        %6588 = vperm.xlu0 %6587, %v6165
        %v6589 = vpop.permute.xlu0 %6588
        %6590 = vset.pattern.permute.xlu0 0
        %6591 = vperm.xlu0 %6590, %v6167
        %v6592 = vpop.permute.xlu0 %6591
        %6593 = vset.pattern.permute.xlu0 0
        %6594 = vperm.xlu0 %6593, %v6169
        %v6595 = vpop.permute.xlu0 %6594
        %6596 = vset.pattern.permute.xlu0 0
        %6597 = vperm.xlu0 %6596, %v6171
        %v6598 = vpop.permute.xlu0 %6597
        %6599 = vset.pattern.permute.xlu0 0
        %6600 = vperm.xlu0 %6599, %v6173
        %v6601 = vpop.permute.xlu0 %6600
        %6602 = vset.pattern.permute.xlu0 0
        %6603 = vperm.xlu0 %6602, %v6175
        %v6604 = vpop.permute.xlu0 %6603
        %6605 = vset.pattern.permute.xlu0 0
        %6606 = vperm.xlu0 %6605, %v6177
        %v6607 = vpop.permute.xlu0 %6606
        %6608 = vset.pattern.permute.xlu0 0
        %6609 = vperm.xlu0 %6608, %v6179
        %v6610 = vpop.permute.xlu0 %6609
        %6611 = vset.pattern.permute.xlu0 0
        %6612 = vperm.xlu0 %6611, %v6181
        %v6613 = vpop.permute.xlu0 %6612
        %6614 = vset.pattern.permute.xlu0 0
        %6615 = vperm.xlu0 %6614, %v6183
        %v6616 = vpop.permute.xlu0 %6615
        %6617 = vset.pattern.permute.xlu0 0
        %6618 = vperm.xlu0 %6617, %v6185
        %v6619 = vpop.permute.xlu0 %6618
        %6620 = vset.pattern.permute.xlu0 0
        %6621 = vperm.xlu0 %6620, %v6187
        %v6622 = vpop.permute.xlu0 %6621
        %6623 = vset.pattern.permute.xlu0 0
        %6624 = vperm.xlu0 %6623, %v6189
        %v6625 = vpop.permute.xlu0 %6624
        %6626 = vset.pattern.permute.xlu0 0
        %6627 = vperm.xlu0 %6626, %v6191
        %v6628 = vpop.permute.xlu0 %6627
        %6629 = vset.pattern.permute.xlu0 0
        %6630 = vperm.xlu0 %6629, %v6193
        %v6631 = vpop.permute.xlu0 %6630
        %6632 = vset.pattern.permute.xlu0 0
        %6633 = vperm.xlu0 %6632, %v6195
        %v6634 = vpop.permute.xlu0 %6633
        %6635 = vset.pattern.permute.xlu0 0
        %6636 = vperm.xlu0 %6635, %v6197
        %v6637 = vpop.permute.xlu0 %6636
        %6638 = vset.pattern.permute.xlu0 0
        %6639 = vperm.xlu0 %6638, %v6199
        %v6640 = vpop.permute.xlu0 %6639
        %6641 = vset.pattern.permute.xlu0 0
        %6642 = vperm.xlu0 %6641, %v6201
        %v6643 = vpop.permute.xlu0 %6642
        %6644 = vset.pattern.permute.xlu0 0
        %6645 = vperm.xlu0 %6644, %v6203
        %v6646 = vpop.permute.xlu0 %6645
        %6647 = vset.pattern.permute.xlu0 0
        %6648 = vperm.xlu0 %6647, %v6205
        %v6649 = vpop.permute.xlu0 %6648
        %6650 = vset.pattern.permute.xlu0 0
        %6651 = vperm.xlu0 %6650, %v6207
        %v6652 = vpop.permute.xlu0 %6651
        %6653 = vset.pattern.permute.xlu0 0
        %6654 = vperm.xlu0 %6653, %v6209
        %v6655 = vpop.permute.xlu0 %6654
        %6656 = vset.pattern.permute.xlu0 0
        %6657 = vperm.xlu0 %6656, %v6211
        %v6658 = vpop.permute.xlu0 %6657
        %6659 = vset.pattern.permute.xlu0 0
        %6660 = vperm.xlu0 %6659, %v6213
        %v6661 = vpop.permute.xlu0 %6660
        %6662 = vset.pattern.permute.xlu0 0
        %6663 = vperm.xlu0 %6662, %v6215
        %v6664 = vpop.permute.xlu0 %6663
        %6665 = vset.pattern.permute.xlu0 0
        %6666 = vperm.xlu0 %6665, %v6217
        %v6667 = vpop.permute.xlu0 %6666
        %6668 = vset.pattern.permute.xlu0 0
        %6669 = vperm.xlu0 %6668, %v6219
        %v6670 = vpop.permute.xlu0 %6669
        %6671 = vset.pattern.permute.xlu0 0
        %6672 = vperm.xlu0 %6671, %v6221
        %v6673 = vpop.permute.xlu0 %6672
        %6674 = vset.pattern.permute.xlu0 0
        %6675 = vperm.xlu0 %6674, %v6223
        %v6676 = vpop.permute.xlu0 %6675
        %6677 = vset.pattern.permute.xlu0 0
        %6678 = vperm.xlu0 %6677, %v6225
        %v6679 = vpop.permute.xlu0 %6678
        %6680 = vset.pattern.permute.xlu0 0
        %6681 = vperm.xlu0 %6680, %v6227
        %v6682 = vpop.permute.xlu0 %6681
        %6683 = vset.pattern.permute.xlu0 0
        %6684 = vperm.xlu0 %6683, %v6229
        %v6685 = vpop.permute.xlu0 %6684
        %6686 = vset.pattern.permute.xlu0 0
        %6687 = vperm.xlu0 %6686, %v6231
        %v6688 = vpop.permute.xlu0 %6687
        %6689 = vset.pattern.permute.xlu0 0
        %6690 = vperm.xlu0 %6689, %v6233
        %v6691 = vpop.permute.xlu0 %6690
        %6692 = vset.pattern.permute.xlu0 0
        %6693 = vperm.xlu0 %6692, %v6235
        %v6694 = vpop.permute.xlu0 %6693
        %6695 = vset.pattern.permute.xlu0 0
        %6696 = vperm.xlu0 %6695, %v6237
        %v6697 = vpop.permute.xlu0 %6696
        %6698 = vset.pattern.permute.xlu0 0
        %6699 = vperm.xlu0 %6698, %v6239
        %v6700 = vpop.permute.xlu0 %6699
        %6701 = vset.pattern.permute.xlu0 0
        %6702 = vperm.xlu0 %6701, %v6241
        %v6703 = vpop.permute.xlu0 %6702
        %6704 = vset.pattern.permute.xlu0 0
        %6705 = vperm.xlu0 %6704, %v6243
        %v6706 = vpop.permute.xlu0 %6705
        %6707 = vset.pattern.permute.xlu0 0
        %6708 = vperm.xlu0 %6707, %v6245
        %v6709 = vpop.permute.xlu0 %6708
        %6710 = vset.pattern.permute.xlu0 0
        %6711 = vperm.xlu0 %6710, %v6247
        %v6712 = vpop.permute.xlu0 %6711
        %6713 = vset.pattern.permute.xlu0 0
        %6714 = vperm.xlu0 %6713, %v6249
        %v6715 = vpop.permute.xlu0 %6714
        %6716 = vset.pattern.permute.xlu0 0
        %6717 = vperm.xlu0 %6716, %v6251
        %v6718 = vpop.permute.xlu0 %6717
        %6719 = vset.pattern.permute.xlu0 0
        %6720 = vperm.xlu0 %6719, %v6253
        %v6721 = vpop.permute.xlu0 %6720
        %6722 = vset.pattern.permute.xlu0 0
        %6723 = vperm.xlu0 %6722, %v6255
        %v6724 = vpop.permute.xlu0 %6723
        %6725 = vset.pattern.permute.xlu0 0
        %6726 = vperm.xlu0 %6725, %v6257
        %v6727 = vpop.permute.xlu0 %6726
        %6728 = vset.pattern.permute.xlu0 0
        %6729 = vperm.xlu0 %6728, %v6259
        %v6730 = vpop.permute.xlu0 %6729
        %6731 = vset.pattern.permute.xlu0 0
        %6732 = vperm.xlu0 %6731, %v6261
        %v6733 = vpop.permute.xlu0 %6732
        %6734 = vset.pattern.permute.xlu0 0
        %6735 = vperm.xlu0 %6734, %v6263
        %v6736 = vpop.permute.xlu0 %6735
        %6737 = vset.pattern.permute.xlu0 0
        %6738 = vperm.xlu0 %6737, %v6265
        %v6739 = vpop.permute.xlu0 %6738
        %6740 = vset.pattern.permute.xlu0 0
        %6741 = vperm.xlu0 %6740, %v6267
        %v6742 = vpop.permute.xlu0 %6741
        %6743 = vset.pattern.permute.xlu0 0
        %6744 = vperm.xlu0 %6743, %v6269
        %v6745 = vpop.permute.xlu0 %6744
        %6746 = vset.pattern.permute.xlu0 0
        %6747 = vperm.xlu0 %6746, %v6271
        %v6748 = vpop.permute.xlu0 %6747
        %6749 = vset.pattern.permute.xlu0 0
        %6750 = vperm.xlu0 %6749, %v6273
        %v6751 = vpop.permute.xlu0 %6750
        %6752 = vset.pattern.permute.xlu0 0
        %6753 = vperm.xlu0 %6752, %v6275
        %v6754 = vpop.permute.xlu0 %6753
        %6755 = vset.pattern.permute.xlu0 0
        %6756 = vperm.xlu0 %6755, %v6277
        %v6757 = vpop.permute.xlu0 %6756
        %6758 = vset.pattern.permute.xlu0 0
        %6759 = vperm.xlu0 %6758, %v6279
        %v6760 = vpop.permute.xlu0 %6759
        %6761 = vset.pattern.permute.xlu0 0
        %6762 = vperm.xlu0 %6761, %v6281
        %v6763 = vpop.permute.xlu0 %6762
        %6764 = vset.pattern.permute.xlu0 0
        %6765 = vperm.xlu0 %6764, %v6283
        %v6766 = vpop.permute.xlu0 %6765
        %6767 = vset.pattern.permute.xlu0 0
        %6768 = vperm.xlu0 %6767, %v6285
        %v6769 = vpop.permute.xlu0 %6768
        %6770 = vset.pattern.permute.xlu0 0
        %6771 = vperm.xlu0 %6770, %v6287
        %v6772 = vpop.permute.xlu0 %6771
        %6773 = vset.pattern.permute.xlu0 0
        %6774 = vperm.xlu0 %6773, %v6289
        %v6775 = vpop.permute.xlu0 %6774
        %6776 = vset.pattern.permute.xlu0 0
        %6777 = vperm.xlu0 %6776, %v6291
        %v6778 = vpop.permute.xlu0 %6777
        %6779 = vset.pattern.permute.xlu0 0
        %6780 = vperm.xlu0 %6779, %v6293
        %v6781 = vpop.permute.xlu0 %6780
        %6782 = vset.pattern.permute.xlu0 0
        %6783 = vperm.xlu0 %6782, %v6295
        %v6784 = vpop.permute.xlu0 %6783
        %6785 = vset.pattern.permute.xlu0 0
        %6786 = vperm.xlu0 %6785, %v6297
        %v6787 = vpop.permute.xlu0 %6786
        %6788 = vset.pattern.permute.xlu0 0
        %6789 = vperm.xlu0 %6788, %v6299
        %v6790 = vpop.permute.xlu0 %6789
        %6791 = vset.pattern.permute.xlu0 0
        %6792 = vperm.xlu0 %6791, %v6301
        %v6793 = vpop.permute.xlu0 %6792
        %6794 = vset.pattern.permute.xlu0 0
        %6795 = vperm.xlu0 %6794, %v6303
        %v6796 = vpop.permute.xlu0 %6795
        %6797 = vset.pattern.permute.xlu0 0
        %6798 = vperm.xlu0 %6797, %v6305
        %v6799 = vpop.permute.xlu0 %6798
        %6800 = vset.pattern.permute.xlu0 0
        %6801 = vperm.xlu0 %6800, %v6307
        %v6802 = vpop.permute.xlu0 %6801
        %6803 = vset.pattern.permute.xlu0 0
        %6804 = vperm.xlu0 %6803, %v6309
        %v6805 = vpop.permute.xlu0 %6804
        %6806 = vset.pattern.permute.xlu0 0
        %6807 = vperm.xlu0 %6806, %v6311
        %v6808 = vpop.permute.xlu0 %6807
        %6809 = vset.pattern.permute.xlu0 0
        %6810 = vperm.xlu0 %6809, %v6313
        %v6811 = vpop.permute.xlu0 %6810
        %6812 = vset.pattern.permute.xlu0 0
        %6813 = vperm.xlu0 %6812, %v6315
        %v6814 = vpop.permute.xlu0 %6813
        %6815 = vset.pattern.permute.xlu0 0
        %6816 = vperm.xlu0 %6815, %v6317
        %v6817 = vpop.permute.xlu0 %6816
        %6818 = vset.pattern.permute.xlu0 0
        %6819 = vperm.xlu0 %6818, %v6319
        %v6820 = vpop.permute.xlu0 %6819
        %6821 = vset.pattern.permute.xlu0 0
        %6822 = vperm.xlu0 %6821, %v6321
        %v6823 = vpop.permute.xlu0 %6822
        %6824 = vset.pattern.permute.xlu0 0
        %6825 = vperm.xlu0 %6824, %v6323
        %v6826 = vpop.permute.xlu0 %6825
        %6827 = vset.pattern.permute.xlu0 0
        %6828 = vperm.xlu0 %6827, %v6325
        %v6829 = vpop.permute.xlu0 %6828
        %6830 = vset.pattern.permute.xlu0 0
        %6831 = vperm.xlu0 %6830, %v6327
        %v6832 = vpop.permute.xlu0 %6831
        %6833 = vset.pattern.permute.xlu0 0
        %6834 = vperm.xlu0 %6833, %v6329
        %v6835 = vpop.permute.xlu0 %6834
        %6836 = vset.pattern.permute.xlu0 0
        %6837 = vperm.xlu0 %6836, %v6331
        %v6838 = vpop.permute.xlu0 %6837
        %6839 = vset.pattern.permute.xlu0 0
        %6840 = vperm.xlu0 %6839, %v6333
        %v6841 = vpop.permute.xlu0 %6840
        %6842 = vset.pattern.permute.xlu0 0
        %6843 = vperm.xlu0 %6842, %v6335
        %v6844 = vpop.permute.xlu0 %6843
        %6845 = vset.pattern.permute.xlu0 0
        %6846 = vperm.xlu0 %6845, %v6337
        %v6847 = vpop.permute.xlu0 %6846
        %6848 = vset.pattern.permute.xlu0 0
        %6849 = vperm.xlu0 %6848, %v6339
        %v6850 = vpop.permute.xlu0 %6849
        %6851 = vset.pattern.permute.xlu0 0
        %6852 = vperm.xlu0 %6851, %v6341
        %v6853 = vpop.permute.xlu0 %6852
        %v6854 = vlaneseq
        %v6855 = vshrl.u32 %v6854, 7
        %v6856 = vsub.s32 %v5237, %v6855
        %v6857 = vrot.slane %v6472, %v6856
        %v6858 = vlaneseq
        %v6859 = vshrl.u32 %v6858, 7
        %v6860 = vsub.s32 %v5242, %v6859
        %v6861 = vrot.slane %v6475, %v6860
        %v6862 = vsel %vm5247, %v6861, %v6857
        %v6863 = vlaneseq
        %v6864 = vshrl.u32 %v6863, 7
        %v6865 = vsub.s32 %v5249, %v6864
        %v6866 = vrot.slane %v6478, %v6865
        %v6867 = vsel %vm5254, %v6866, %v6862
        %v6868 = vlaneseq
        %v6869 = vshrl.u32 %v6868, 7
        %v6870 = vsub.s32 %v5256, %v6869
        %v6871 = vrot.slane %v6481, %v6870
        %v6872 = vsel %vm5261, %v6871, %v6867
        %v6873 = vlaneseq
        %v6874 = vshrl.u32 %v6873, 7
        %v6875 = vsub.s32 %v5263, %v6874
        %v6876 = vrot.slane %v6484, %v6875
        %v6877 = vsel %vm5268, %v6876, %v6872
        %v6878 = vlaneseq
        %v6879 = vshrl.u32 %v6878, 7
        %v6880 = vsub.s32 %v5270, %v6879
        %v6881 = vrot.slane %v6487, %v6880
        %v6882 = vsel %vm5275, %v6881, %v6877
        %v6883 = vlaneseq
        %v6884 = vshrl.u32 %v6883, 7
        %v6885 = vsub.s32 %v5277, %v6884
        %v6886 = vrot.slane %v6490, %v6885
        %v6887 = vsel %vm5282, %v6886, %v6882
        %v6888 = vlaneseq
        %v6889 = vshrl.u32 %v6888, 7
        %v6890 = vsub.s32 %v5284, %v6889
        %v6891 = vrot.slane %v6493, %v6890
        %v6892 = vsel %vm5289, %v6891, %v6887
        %v6893 = vlaneseq
        %v6894 = vshrl.u32 %v6893, 7
        %v6895 = vsub.s32 %v5291, %v6894
        %v6896 = vrot.slane %v6496, %v6895
        %v6897 = vsel %vm5296, %v6896, %v6892
        %v6898 = vlaneseq
        %v6899 = vshrl.u32 %v6898, 7
        %v6900 = vsub.s32 %v5298, %v6899
        %v6901 = vrot.slane %v6499, %v6900
        %v6902 = vsel %vm5303, %v6901, %v6897
        %v6903 = vlaneseq
        %v6904 = vshrl.u32 %v6903, 7
        %v6905 = vsub.s32 %v5305, %v6904
        %v6906 = vrot.slane %v6502, %v6905
        %v6907 = vsel %vm5310, %v6906, %v6902
        %v6908 = vlaneseq
        %v6909 = vshrl.u32 %v6908, 7
        %v6910 = vsub.s32 %v5312, %v6909
        %v6911 = vrot.slane %v6505, %v6910
        %v6912 = vsel %vm5317, %v6911, %v6907
        %v6913 = vlaneseq
        %v6914 = vshrl.u32 %v6913, 7
        %v6915 = vsub.s32 %v5319, %v6914
        %v6916 = vrot.slane %v6508, %v6915
        %v6917 = vsel %vm5324, %v6916, %v6912
        %v6918 = vlaneseq
        %v6919 = vshrl.u32 %v6918, 7
        %v6920 = vsub.s32 %v5326, %v6919
        %v6921 = vrot.slane %v6511, %v6920
        %v6922 = vsel %vm5331, %v6921, %v6917
        %v6923 = vlaneseq
        %v6924 = vshrl.u32 %v6923, 7
        %v6925 = vsub.s32 %v5333, %v6924
        %v6926 = vrot.slane %v6514, %v6925
        %v6927 = vsel %vm5338, %v6926, %v6922
        %v6928 = vlaneseq
        %v6929 = vshrl.u32 %v6928, 7
        %v6930 = vsub.s32 %v5340, %v6929
        %v6931 = vrot.slane %v6517, %v6930
        %v6932 = vsel %vm5345, %v6931, %v6927
        %v6933 = vlaneseq
        %v6934 = vshrl.u32 %v6933, 7
        %v6935 = vsub.s32 %v5237, %v6934
        %v6936 = vrot.slane %v6520, %v6935
        %v6937 = vlaneseq
        %v6938 = vshrl.u32 %v6937, 7
        %v6939 = vsub.s32 %v5242, %v6938
        %v6940 = vrot.slane %v6523, %v6939
        %v6941 = vsel %vm5247, %v6940, %v6936
        %v6942 = vlaneseq
        %v6943 = vshrl.u32 %v6942, 7
        %v6944 = vsub.s32 %v5249, %v6943
        %v6945 = vrot.slane %v6526, %v6944
        %v6946 = vsel %vm5254, %v6945, %v6941
        %v6947 = vlaneseq
        %v6948 = vshrl.u32 %v6947, 7
        %v6949 = vsub.s32 %v5256, %v6948
        %v6950 = vrot.slane %v6529, %v6949
        %v6951 = vsel %vm5261, %v6950, %v6946
        %v6952 = vlaneseq
        %v6953 = vshrl.u32 %v6952, 7
        %v6954 = vsub.s32 %v5263, %v6953
        %v6955 = vrot.slane %v6532, %v6954
        %v6956 = vsel %vm5268, %v6955, %v6951
        %v6957 = vlaneseq
        %v6958 = vshrl.u32 %v6957, 7
        %v6959 = vsub.s32 %v5270, %v6958
        %v6960 = vrot.slane %v6535, %v6959
        %v6961 = vsel %vm5275, %v6960, %v6956
        %v6962 = vlaneseq
        %v6963 = vshrl.u32 %v6962, 7
        %v6964 = vsub.s32 %v5277, %v6963
        %v6965 = vrot.slane %v6538, %v6964
        %v6966 = vsel %vm5282, %v6965, %v6961
        %v6967 = vlaneseq
        %v6968 = vshrl.u32 %v6967, 7
        %v6969 = vsub.s32 %v5284, %v6968
        %v6970 = vrot.slane %v6541, %v6969
        %v6971 = vsel %vm5289, %v6970, %v6966
        %v6972 = vlaneseq
        %v6973 = vshrl.u32 %v6972, 7
        %v6974 = vsub.s32 %v5291, %v6973
        %v6975 = vrot.slane %v6544, %v6974
        %v6976 = vsel %vm5296, %v6975, %v6971
        %v6977 = vlaneseq
        %v6978 = vshrl.u32 %v6977, 7
        %v6979 = vsub.s32 %v5298, %v6978
        %v6980 = vrot.slane %v6547, %v6979
        %v6981 = vsel %vm5303, %v6980, %v6976
        %v6982 = vlaneseq
        %v6983 = vshrl.u32 %v6982, 7
        %v6984 = vsub.s32 %v5305, %v6983
        %v6985 = vrot.slane %v6550, %v6984
        %v6986 = vsel %vm5310, %v6985, %v6981
        %v6987 = vlaneseq
        %v6988 = vshrl.u32 %v6987, 7
        %v6989 = vsub.s32 %v5312, %v6988
        %v6990 = vrot.slane %v6553, %v6989
        %v6991 = vsel %vm5317, %v6990, %v6986
        %v6992 = vlaneseq
        %v6993 = vshrl.u32 %v6992, 7
        %v6994 = vsub.s32 %v5319, %v6993
        %v6995 = vrot.slane %v6556, %v6994
        %v6996 = vsel %vm5324, %v6995, %v6991
        %v6997 = vlaneseq
        %v6998 = vshrl.u32 %v6997, 7
        %v6999 = vsub.s32 %v5326, %v6998
        %v7000 = vrot.slane %v6559, %v6999
        %v7001 = vsel %vm5331, %v7000, %v6996
        %v7002 = vlaneseq
        %v7003 = vshrl.u32 %v7002, 7
        %v7004 = vsub.s32 %v5333, %v7003
        %v7005 = vrot.slane %v6562, %v7004
        %v7006 = vsel %vm5338, %v7005, %v7001
        %v7007 = vlaneseq
        %v7008 = vshrl.u32 %v7007, 7
        %v7009 = vsub.s32 %v5340, %v7008
        %v7010 = vrot.slane %v6565, %v7009
        %v7011 = vsel %vm5345, %v7010, %v7006
        %v7012 = vlaneseq
        %v7013 = vshrl.u32 %v7012, 7
        %v7014 = vsub.s32 %v5237, %v7013
        %v7015 = vrot.slane %v6568, %v7014
        %v7016 = vlaneseq
        %v7017 = vshrl.u32 %v7016, 7
        %v7018 = vsub.s32 %v5242, %v7017
        %v7019 = vrot.slane %v6571, %v7018
        %v7020 = vsel %vm5247, %v7019, %v7015
        %v7021 = vlaneseq
        %v7022 = vshrl.u32 %v7021, 7
        %v7023 = vsub.s32 %v5249, %v7022
        %v7024 = vrot.slane %v6574, %v7023
        %v7025 = vsel %vm5254, %v7024, %v7020
        %v7026 = vlaneseq
        %v7027 = vshrl.u32 %v7026, 7
        %v7028 = vsub.s32 %v5256, %v7027
        %v7029 = vrot.slane %v6577, %v7028
        %v7030 = vsel %vm5261, %v7029, %v7025
        %v7031 = vlaneseq
        %v7032 = vshrl.u32 %v7031, 7
        %v7033 = vsub.s32 %v5263, %v7032
        %v7034 = vrot.slane %v6580, %v7033
        %v7035 = vsel %vm5268, %v7034, %v7030
        %v7036 = vlaneseq
        %v7037 = vshrl.u32 %v7036, 7
        %v7038 = vsub.s32 %v5270, %v7037
        %v7039 = vrot.slane %v6583, %v7038
        %v7040 = vsel %vm5275, %v7039, %v7035
        %v7041 = vlaneseq
        %v7042 = vshrl.u32 %v7041, 7
        %v7043 = vsub.s32 %v5277, %v7042
        %v7044 = vrot.slane %v6586, %v7043
        %v7045 = vsel %vm5282, %v7044, %v7040
        %v7046 = vlaneseq
        %v7047 = vshrl.u32 %v7046, 7
        %v7048 = vsub.s32 %v5284, %v7047
        %v7049 = vrot.slane %v6589, %v7048
        %v7050 = vsel %vm5289, %v7049, %v7045
        %v7051 = vlaneseq
        %v7052 = vshrl.u32 %v7051, 7
        %v7053 = vsub.s32 %v5291, %v7052
        %v7054 = vrot.slane %v6592, %v7053
        %v7055 = vsel %vm5296, %v7054, %v7050
        %v7056 = vlaneseq
        %v7057 = vshrl.u32 %v7056, 7
        %v7058 = vsub.s32 %v5298, %v7057
        %v7059 = vrot.slane %v6595, %v7058
        %v7060 = vsel %vm5303, %v7059, %v7055
        %v7061 = vlaneseq
        %v7062 = vshrl.u32 %v7061, 7
        %v7063 = vsub.s32 %v5305, %v7062
        %v7064 = vrot.slane %v6598, %v7063
        %v7065 = vsel %vm5310, %v7064, %v7060
        %v7066 = vlaneseq
        %v7067 = vshrl.u32 %v7066, 7
        %v7068 = vsub.s32 %v5312, %v7067
        %v7069 = vrot.slane %v6601, %v7068
        %v7070 = vsel %vm5317, %v7069, %v7065
        %v7071 = vlaneseq
        %v7072 = vshrl.u32 %v7071, 7
        %v7073 = vsub.s32 %v5319, %v7072
        %v7074 = vrot.slane %v6604, %v7073
        %v7075 = vsel %vm5324, %v7074, %v7070
        %v7076 = vlaneseq
        %v7077 = vshrl.u32 %v7076, 7
        %v7078 = vsub.s32 %v5326, %v7077
        %v7079 = vrot.slane %v6607, %v7078
        %v7080 = vsel %vm5331, %v7079, %v7075
        %v7081 = vlaneseq
        %v7082 = vshrl.u32 %v7081, 7
        %v7083 = vsub.s32 %v5333, %v7082
        %v7084 = vrot.slane %v6610, %v7083
        %v7085 = vsel %vm5338, %v7084, %v7080
        %v7086 = vlaneseq
        %v7087 = vshrl.u32 %v7086, 7
        %v7088 = vsub.s32 %v5340, %v7087
        %v7089 = vrot.slane %v6613, %v7088
        %v7090 = vsel %vm5345, %v7089, %v7085
        %v7091 = vlaneseq
        %v7092 = vshrl.u32 %v7091, 7
        %v7093 = vsub.s32 %v5237, %v7092
        %v7094 = vrot.slane %v6616, %v7093
        %v7095 = vlaneseq
        %v7096 = vshrl.u32 %v7095, 7
        %v7097 = vsub.s32 %v5242, %v7096
        %v7098 = vrot.slane %v6619, %v7097
        %v7099 = vsel %vm5247, %v7098, %v7094
        %v7100 = vlaneseq
        %v7101 = vshrl.u32 %v7100, 7
        %v7102 = vsub.s32 %v5249, %v7101
        %v7103 = vrot.slane %v6622, %v7102
        %v7104 = vsel %vm5254, %v7103, %v7099
        %v7105 = vlaneseq
        %v7106 = vshrl.u32 %v7105, 7
        %v7107 = vsub.s32 %v5256, %v7106
        %v7108 = vrot.slane %v6625, %v7107
        %v7109 = vsel %vm5261, %v7108, %v7104
        %v7110 = vlaneseq
        %v7111 = vshrl.u32 %v7110, 7
        %v7112 = vsub.s32 %v5263, %v7111
        %v7113 = vrot.slane %v6628, %v7112
        %v7114 = vsel %vm5268, %v7113, %v7109
        %v7115 = vlaneseq
        %v7116 = vshrl.u32 %v7115, 7
        %v7117 = vsub.s32 %v5270, %v7116
        %v7118 = vrot.slane %v6631, %v7117
        %v7119 = vsel %vm5275, %v7118, %v7114
        %v7120 = vlaneseq
        %v7121 = vshrl.u32 %v7120, 7
        %v7122 = vsub.s32 %v5277, %v7121
        %v7123 = vrot.slane %v6634, %v7122
        %v7124 = vsel %vm5282, %v7123, %v7119
        %v7125 = vlaneseq
        %v7126 = vshrl.u32 %v7125, 7
        %v7127 = vsub.s32 %v5284, %v7126
        %v7128 = vrot.slane %v6637, %v7127
        %v7129 = vsel %vm5289, %v7128, %v7124
        %v7130 = vlaneseq
        %v7131 = vshrl.u32 %v7130, 7
        %v7132 = vsub.s32 %v5291, %v7131
        %v7133 = vrot.slane %v6640, %v7132
        %v7134 = vsel %vm5296, %v7133, %v7129
        %v7135 = vlaneseq
        %v7136 = vshrl.u32 %v7135, 7
        %v7137 = vsub.s32 %v5298, %v7136
        %v7138 = vrot.slane %v6643, %v7137
        %v7139 = vsel %vm5303, %v7138, %v7134
        %v7140 = vlaneseq
        %v7141 = vshrl.u32 %v7140, 7
        %v7142 = vsub.s32 %v5305, %v7141
        %v7143 = vrot.slane %v6646, %v7142
        %v7144 = vsel %vm5310, %v7143, %v7139
        %v7145 = vlaneseq
        %v7146 = vshrl.u32 %v7145, 7
        %v7147 = vsub.s32 %v5312, %v7146
        %v7148 = vrot.slane %v6649, %v7147
        %v7149 = vsel %vm5317, %v7148, %v7144
        %v7150 = vlaneseq
        %v7151 = vshrl.u32 %v7150, 7
        %v7152 = vsub.s32 %v5319, %v7151
        %v7153 = vrot.slane %v6652, %v7152
        %v7154 = vsel %vm5324, %v7153, %v7149
        %v7155 = vlaneseq
        %v7156 = vshrl.u32 %v7155, 7
        %v7157 = vsub.s32 %v5326, %v7156
        %v7158 = vrot.slane %v6655, %v7157
        %v7159 = vsel %vm5331, %v7158, %v7154
        %v7160 = vlaneseq
        %v7161 = vshrl.u32 %v7160, 7
        %v7162 = vsub.s32 %v5333, %v7161
        %v7163 = vrot.slane %v6658, %v7162
        %v7164 = vsel %vm5338, %v7163, %v7159
        %v7165 = vlaneseq
        %v7166 = vshrl.u32 %v7165, 7
        %v7167 = vsub.s32 %v5340, %v7166
        %v7168 = vrot.slane %v6661, %v7167
        %v7169 = vsel %vm5345, %v7168, %v7164
        %v7170 = vlaneseq
        %v7171 = vshrl.u32 %v7170, 7
        %v7172 = vsub.s32 %v5237, %v7171
        %v7173 = vrot.slane %v6664, %v7172
        %v7174 = vlaneseq
        %v7175 = vshrl.u32 %v7174, 7
        %v7176 = vsub.s32 %v5242, %v7175
        %v7177 = vrot.slane %v6667, %v7176
        %v7178 = vsel %vm5247, %v7177, %v7173
        %v7179 = vlaneseq
        %v7180 = vshrl.u32 %v7179, 7
        %v7181 = vsub.s32 %v5249, %v7180
        %v7182 = vrot.slane %v6670, %v7181
        %v7183 = vsel %vm5254, %v7182, %v7178
        %v7184 = vlaneseq
        %v7185 = vshrl.u32 %v7184, 7
        %v7186 = vsub.s32 %v5256, %v7185
        %v7187 = vrot.slane %v6673, %v7186
        %v7188 = vsel %vm5261, %v7187, %v7183
        %v7189 = vlaneseq
        %v7190 = vshrl.u32 %v7189, 7
        %v7191 = vsub.s32 %v5263, %v7190
        %v7192 = vrot.slane %v6676, %v7191
        %v7193 = vsel %vm5268, %v7192, %v7188
        %v7194 = vlaneseq
        %v7195 = vshrl.u32 %v7194, 7
        %v7196 = vsub.s32 %v5270, %v7195
        %v7197 = vrot.slane %v6679, %v7196
        %v7198 = vsel %vm5275, %v7197, %v7193
        %v7199 = vlaneseq
        %v7200 = vshrl.u32 %v7199, 7
        %v7201 = vsub.s32 %v5277, %v7200
        %v7202 = vrot.slane %v6682, %v7201
        %v7203 = vsel %vm5282, %v7202, %v7198
        %v7204 = vlaneseq
        %v7205 = vshrl.u32 %v7204, 7
        %v7206 = vsub.s32 %v5284, %v7205
        %v7207 = vrot.slane %v6685, %v7206
        %v7208 = vsel %vm5289, %v7207, %v7203
        %v7209 = vlaneseq
        %v7210 = vshrl.u32 %v7209, 7
        %v7211 = vsub.s32 %v5291, %v7210
        %v7212 = vrot.slane %v6688, %v7211
        %v7213 = vsel %vm5296, %v7212, %v7208
        %v7214 = vlaneseq
        %v7215 = vshrl.u32 %v7214, 7
        %v7216 = vsub.s32 %v5298, %v7215
        %v7217 = vrot.slane %v6691, %v7216
        %v7218 = vsel %vm5303, %v7217, %v7213
        %v7219 = vlaneseq
        %v7220 = vshrl.u32 %v7219, 7
        %v7221 = vsub.s32 %v5305, %v7220
        %v7222 = vrot.slane %v6694, %v7221
        %v7223 = vsel %vm5310, %v7222, %v7218
        %v7224 = vlaneseq
        %v7225 = vshrl.u32 %v7224, 7
        %v7226 = vsub.s32 %v5312, %v7225
        %v7227 = vrot.slane %v6697, %v7226
        %v7228 = vsel %vm5317, %v7227, %v7223
        %v7229 = vlaneseq
        %v7230 = vshrl.u32 %v7229, 7
        %v7231 = vsub.s32 %v5319, %v7230
        %v7232 = vrot.slane %v6700, %v7231
        %v7233 = vsel %vm5324, %v7232, %v7228
        %v7234 = vlaneseq
        %v7235 = vshrl.u32 %v7234, 7
        %v7236 = vsub.s32 %v5326, %v7235
        %v7237 = vrot.slane %v6703, %v7236
        %v7238 = vsel %vm5331, %v7237, %v7233
        %v7239 = vlaneseq
        %v7240 = vshrl.u32 %v7239, 7
        %v7241 = vsub.s32 %v5333, %v7240
        %v7242 = vrot.slane %v6706, %v7241
        %v7243 = vsel %vm5338, %v7242, %v7238
        %v7244 = vlaneseq
        %v7245 = vshrl.u32 %v7244, 7
        %v7246 = vsub.s32 %v5340, %v7245
        %v7247 = vrot.slane %v6709, %v7246
        %v7248 = vsel %vm5345, %v7247, %v7243
        %v7249 = vlaneseq
        %v7250 = vshrl.u32 %v7249, 7
        %v7251 = vsub.s32 %v5237, %v7250
        %v7252 = vrot.slane %v6712, %v7251
        %v7253 = vlaneseq
        %v7254 = vshrl.u32 %v7253, 7
        %v7255 = vsub.s32 %v5242, %v7254
        %v7256 = vrot.slane %v6715, %v7255
        %v7257 = vsel %vm5247, %v7256, %v7252
        %v7258 = vlaneseq
        %v7259 = vshrl.u32 %v7258, 7
        %v7260 = vsub.s32 %v5249, %v7259
        %v7261 = vrot.slane %v6718, %v7260
        %v7262 = vsel %vm5254, %v7261, %v7257
        %v7263 = vlaneseq
        %v7264 = vshrl.u32 %v7263, 7
        %v7265 = vsub.s32 %v5256, %v7264
        %v7266 = vrot.slane %v6721, %v7265
        %v7267 = vsel %vm5261, %v7266, %v7262
        %v7268 = vlaneseq
        %v7269 = vshrl.u32 %v7268, 7
        %v7270 = vsub.s32 %v5263, %v7269
        %v7271 = vrot.slane %v6724, %v7270
        %v7272 = vsel %vm5268, %v7271, %v7267
        %v7273 = vlaneseq
        %v7274 = vshrl.u32 %v7273, 7
        %v7275 = vsub.s32 %v5270, %v7274
        %v7276 = vrot.slane %v6727, %v7275
        %v7277 = vsel %vm5275, %v7276, %v7272
        %v7278 = vlaneseq
        %v7279 = vshrl.u32 %v7278, 7
        %v7280 = vsub.s32 %v5277, %v7279
        %v7281 = vrot.slane %v6730, %v7280
        %v7282 = vsel %vm5282, %v7281, %v7277
        %v7283 = vlaneseq
        %v7284 = vshrl.u32 %v7283, 7
        %v7285 = vsub.s32 %v5284, %v7284
        %v7286 = vrot.slane %v6733, %v7285
        %v7287 = vsel %vm5289, %v7286, %v7282
        %v7288 = vlaneseq
        %v7289 = vshrl.u32 %v7288, 7
        %v7290 = vsub.s32 %v5291, %v7289
        %v7291 = vrot.slane %v6736, %v7290
        %v7292 = vsel %vm5296, %v7291, %v7287
        %v7293 = vlaneseq
        %v7294 = vshrl.u32 %v7293, 7
        %v7295 = vsub.s32 %v5298, %v7294
        %v7296 = vrot.slane %v6739, %v7295
        %v7297 = vsel %vm5303, %v7296, %v7292
        %v7298 = vlaneseq
        %v7299 = vshrl.u32 %v7298, 7
        %v7300 = vsub.s32 %v5305, %v7299
        %v7301 = vrot.slane %v6742, %v7300
        %v7302 = vsel %vm5310, %v7301, %v7297
        %v7303 = vlaneseq
        %v7304 = vshrl.u32 %v7303, 7
        %v7305 = vsub.s32 %v5312, %v7304
        %v7306 = vrot.slane %v6745, %v7305
        %v7307 = vsel %vm5317, %v7306, %v7302
        %v7308 = vlaneseq
        %v7309 = vshrl.u32 %v7308, 7
        %v7310 = vsub.s32 %v5319, %v7309
        %v7311 = vrot.slane %v6748, %v7310
        %v7312 = vsel %vm5324, %v7311, %v7307
        %v7313 = vlaneseq
        %v7314 = vshrl.u32 %v7313, 7
        %v7315 = vsub.s32 %v5326, %v7314
        %v7316 = vrot.slane %v6751, %v7315
        %v7317 = vsel %vm5331, %v7316, %v7312
        %v7318 = vlaneseq
        %v7319 = vshrl.u32 %v7318, 7
        %v7320 = vsub.s32 %v5333, %v7319
        %v7321 = vrot.slane %v6754, %v7320
        %v7322 = vsel %vm5338, %v7321, %v7317
        %v7323 = vlaneseq
        %v7324 = vshrl.u32 %v7323, 7
        %v7325 = vsub.s32 %v5340, %v7324
        %v7326 = vrot.slane %v6757, %v7325
        %v7327 = vsel %vm5345, %v7326, %v7322
        %v7328 = vlaneseq
        %v7329 = vshrl.u32 %v7328, 7
        %v7330 = vsub.s32 %v5237, %v7329
        %v7331 = vrot.slane %v6760, %v7330
        %v7332 = vlaneseq
        %v7333 = vshrl.u32 %v7332, 7
        %v7334 = vsub.s32 %v5242, %v7333
        %v7335 = vrot.slane %v6763, %v7334
        %v7336 = vsel %vm5247, %v7335, %v7331
        %v7337 = vlaneseq
        %v7338 = vshrl.u32 %v7337, 7
        %v7339 = vsub.s32 %v5249, %v7338
        %v7340 = vrot.slane %v6766, %v7339
        %v7341 = vsel %vm5254, %v7340, %v7336
        %v7342 = vlaneseq
        %v7343 = vshrl.u32 %v7342, 7
        %v7344 = vsub.s32 %v5256, %v7343
        %v7345 = vrot.slane %v6769, %v7344
        %v7346 = vsel %vm5261, %v7345, %v7341
        %v7347 = vlaneseq
        %v7348 = vshrl.u32 %v7347, 7
        %v7349 = vsub.s32 %v5263, %v7348
        %v7350 = vrot.slane %v6772, %v7349
        %v7351 = vsel %vm5268, %v7350, %v7346
        %v7352 = vlaneseq
        %v7353 = vshrl.u32 %v7352, 7
        %v7354 = vsub.s32 %v5270, %v7353
        %v7355 = vrot.slane %v6775, %v7354
        %v7356 = vsel %vm5275, %v7355, %v7351
        %v7357 = vlaneseq
        %v7358 = vshrl.u32 %v7357, 7
        %v7359 = vsub.s32 %v5277, %v7358
        %v7360 = vrot.slane %v6778, %v7359
        %v7361 = vsel %vm5282, %v7360, %v7356
        %v7362 = vlaneseq
        %v7363 = vshrl.u32 %v7362, 7
        %v7364 = vsub.s32 %v5284, %v7363
        %v7365 = vrot.slane %v6781, %v7364
        %v7366 = vsel %vm5289, %v7365, %v7361
        %v7367 = vlaneseq
        %v7368 = vshrl.u32 %v7367, 7
        %v7369 = vsub.s32 %v5291, %v7368
        %v7370 = vrot.slane %v6784, %v7369
        %v7371 = vsel %vm5296, %v7370, %v7366
        %v7372 = vlaneseq
        %v7373 = vshrl.u32 %v7372, 7
        %v7374 = vsub.s32 %v5298, %v7373
        %v7375 = vrot.slane %v6787, %v7374
        %v7376 = vsel %vm5303, %v7375, %v7371
        %v7377 = vlaneseq
        %v7378 = vshrl.u32 %v7377, 7
        %v7379 = vsub.s32 %v5305, %v7378
        %v7380 = vrot.slane %v6790, %v7379
        %v7381 = vsel %vm5310, %v7380, %v7376
        %v7382 = vlaneseq
        %v7383 = vshrl.u32 %v7382, 7
        %v7384 = vsub.s32 %v5312, %v7383
        %v7385 = vrot.slane %v6793, %v7384
        %v7386 = vsel %vm5317, %v7385, %v7381
        %v7387 = vlaneseq
        %v7388 = vshrl.u32 %v7387, 7
        %v7389 = vsub.s32 %v5319, %v7388
        %v7390 = vrot.slane %v6796, %v7389
        %v7391 = vsel %vm5324, %v7390, %v7386
        %v7392 = vlaneseq
        %v7393 = vshrl.u32 %v7392, 7
        %v7394 = vsub.s32 %v5326, %v7393
        %v7395 = vrot.slane %v6799, %v7394
        %v7396 = vsel %vm5331, %v7395, %v7391
        %v7397 = vlaneseq
        %v7398 = vshrl.u32 %v7397, 7
        %v7399 = vsub.s32 %v5333, %v7398
        %v7400 = vrot.slane %v6802, %v7399
        %v7401 = vsel %vm5338, %v7400, %v7396
        %v7402 = vlaneseq
        %v7403 = vshrl.u32 %v7402, 7
        %v7404 = vsub.s32 %v5340, %v7403
        %v7405 = vrot.slane %v6805, %v7404
        %v7406 = vsel %vm5345, %v7405, %v7401
        %v7407 = vlaneseq
        %v7408 = vshrl.u32 %v7407, 7
        %v7409 = vsub.s32 %v5237, %v7408
        %v7410 = vrot.slane %v6808, %v7409
        %v7411 = vlaneseq
        %v7412 = vshrl.u32 %v7411, 7
        %v7413 = vsub.s32 %v5242, %v7412
        %v7414 = vrot.slane %v6811, %v7413
        %v7415 = vsel %vm5247, %v7414, %v7410
        %v7416 = vlaneseq
        %v7417 = vshrl.u32 %v7416, 7
        %v7418 = vsub.s32 %v5249, %v7417
        %v7419 = vrot.slane %v6814, %v7418
        %v7420 = vsel %vm5254, %v7419, %v7415
        %v7421 = vlaneseq
        %v7422 = vshrl.u32 %v7421, 7
        %v7423 = vsub.s32 %v5256, %v7422
        %v7424 = vrot.slane %v6817, %v7423
        %v7425 = vsel %vm5261, %v7424, %v7420
        %v7426 = vlaneseq
        %v7427 = vshrl.u32 %v7426, 7
        %v7428 = vsub.s32 %v5263, %v7427
        %v7429 = vrot.slane %v6820, %v7428
        %v7430 = vsel %vm5268, %v7429, %v7425
        %v7431 = vlaneseq
        %v7432 = vshrl.u32 %v7431, 7
        %v7433 = vsub.s32 %v5270, %v7432
        %v7434 = vrot.slane %v6823, %v7433
        %v7435 = vsel %vm5275, %v7434, %v7430
        %v7436 = vlaneseq
        %v7437 = vshrl.u32 %v7436, 7
        %v7438 = vsub.s32 %v5277, %v7437
        %v7439 = vrot.slane %v6826, %v7438
        %v7440 = vsel %vm5282, %v7439, %v7435
        %v7441 = vlaneseq
        %v7442 = vshrl.u32 %v7441, 7
        %v7443 = vsub.s32 %v5284, %v7442
        %v7444 = vrot.slane %v6829, %v7443
        %v7445 = vsel %vm5289, %v7444, %v7440
        %v7446 = vlaneseq
        %v7447 = vshrl.u32 %v7446, 7
        %v7448 = vsub.s32 %v5291, %v7447
        %v7449 = vrot.slane %v6832, %v7448
        %v7450 = vsel %vm5296, %v7449, %v7445
        %v7451 = vlaneseq
        %v7452 = vshrl.u32 %v7451, 7
        %v7453 = vsub.s32 %v5298, %v7452
        %v7454 = vrot.slane %v6835, %v7453
        %v7455 = vsel %vm5303, %v7454, %v7450
        %v7456 = vlaneseq
        %v7457 = vshrl.u32 %v7456, 7
        %v7458 = vsub.s32 %v5305, %v7457
        %v7459 = vrot.slane %v6838, %v7458
        %v7460 = vsel %vm5310, %v7459, %v7455
        %v7461 = vlaneseq
        %v7462 = vshrl.u32 %v7461, 7
        %v7463 = vsub.s32 %v5312, %v7462
        %v7464 = vrot.slane %v6841, %v7463
        %v7465 = vsel %vm5317, %v7464, %v7460
        %v7466 = vlaneseq
        %v7467 = vshrl.u32 %v7466, 7
        %v7468 = vsub.s32 %v5319, %v7467
        %v7469 = vrot.slane %v6844, %v7468
        %v7470 = vsel %vm5324, %v7469, %v7465
        %v7471 = vlaneseq
        %v7472 = vshrl.u32 %v7471, 7
        %v7473 = vsub.s32 %v5326, %v7472
        %v7474 = vrot.slane %v6847, %v7473
        %v7475 = vsel %vm5331, %v7474, %v7470
        %v7476 = vlaneseq
        %v7477 = vshrl.u32 %v7476, 7
        %v7478 = vsub.s32 %v5333, %v7477
        %v7479 = vrot.slane %v6850, %v7478
        %v7480 = vsel %vm5338, %v7479, %v7475
        %v7481 = vlaneseq
        %v7482 = vshrl.u32 %v7481, 7
        %v7483 = vsub.s32 %v5340, %v7482
        %v7484 = vrot.slane %v6853, %v7483
        %v7485 = vsel %vm5345, %v7484, %v7480
        %v7486 = vsel %vm5900, %v7011, %v6932
        %v7487 = vsel %vm5902, %v7090, %v7486
        %v7488 = vsel %vm5904, %v7169, %v7487
        %v7489 = vsel %vm5906, %v7248, %v7488
        %v7490 = vsel %vm5908, %v7327, %v7489
        %v7491 = vsel %vm5910, %v7406, %v7490
        %v7492 = vsel %vm5912, %v7485, %v7491
        %7494 = vadd.xlane.f32.xlu0 %v7492
        %v7495 = vpop.xlane.xlu0 %7494
        %v7496 = vrcp.pop %v7495
        %v7498 = vlaneseq
        %v7499 = vshrl.u32 %v7498, 7
        %v7500 = vsub.s32 0, %v7499
        %v7501 = vrot.slane %v7496, %v7500
        %v7502 = vlaneseq
        %v7503 = vshrl.u32 %v7502, 7
        %v7504 = vsub.s32 1, %v7503
        %v7505 = vrot.slane %v7496, %v7504
        %v7506 = vlaneseq
        %v7507 = vshrl.u32 %v7506, 7
        %v7508 = vsub.s32 2, %v7507
        %v7509 = vrot.slane %v7496, %v7508
        %v7510 = vlaneseq
        %v7511 = vshrl.u32 %v7510, 7
        %v7512 = vsub.s32 3, %v7511
        %v7513 = vrot.slane %v7496, %v7512
        %v7514 = vlaneseq
        %v7515 = vshrl.u32 %v7514, 7
        %v7516 = vsub.s32 4, %v7515
        %v7517 = vrot.slane %v7496, %v7516
        %v7518 = vlaneseq
        %v7519 = vshrl.u32 %v7518, 7
        %v7520 = vsub.s32 5, %v7519
        %v7521 = vrot.slane %v7496, %v7520
        %v7522 = vlaneseq
        %v7523 = vshrl.u32 %v7522, 7
        %v7524 = vsub.s32 6, %v7523
        %v7525 = vrot.slane %v7496, %v7524
        %v7526 = vlaneseq
        %v7527 = vshrl.u32 %v7526, 7
        %v7528 = vsub.s32 7, %v7527
        %v7529 = vrot.slane %v7496, %v7528
        %v7538 = vmul.f32 %v6087, %v7501
        %v7539 = vmul.f32 %v6089, %v7501
        %v7540 = vmul.f32 %v6091, %v7501
        %v7541 = vmul.f32 %v6093, %v7501
        %v7542 = vmul.f32 %v6095, %v7501
        %v7543 = vmul.f32 %v6097, %v7501
        %v7544 = vmul.f32 %v6099, %v7501
        %v7545 = vmul.f32 %v6101, %v7501
        %v7546 = vmul.f32 %v6103, %v7501
        %v7547 = vmul.f32 %v6105, %v7501
        %v7548 = vmul.f32 %v6107, %v7501
        %v7549 = vmul.f32 %v6109, %v7501
        %v7550 = vmul.f32 %v6111, %v7501
        %v7551 = vmul.f32 %v6113, %v7501
        %v7552 = vmul.f32 %v6115, %v7501
        %v7553 = vmul.f32 %v6117, %v7501
        %v7554 = vmul.f32 %v6119, %v7505
        %v7555 = vmul.f32 %v6121, %v7505
        %v7556 = vmul.f32 %v6123, %v7505
        %v7557 = vmul.f32 %v6125, %v7505
        %v7558 = vmul.f32 %v6127, %v7505
        %v7559 = vmul.f32 %v6129, %v7505
        %v7560 = vmul.f32 %v6131, %v7505
        %v7561 = vmul.f32 %v6133, %v7505
        %v7562 = vmul.f32 %v6135, %v7505
        %v7563 = vmul.f32 %v6137, %v7505
        %v7564 = vmul.f32 %v6139, %v7505
        %v7565 = vmul.f32 %v6141, %v7505
        %v7566 = vmul.f32 %v6143, %v7505
        %v7567 = vmul.f32 %v6145, %v7505
        %v7568 = vmul.f32 %v6147, %v7505
        %v7569 = vmul.f32 %v6149, %v7505
        %v7570 = vmul.f32 %v6151, %v7509
        %v7571 = vmul.f32 %v6153, %v7509
        %v7572 = vmul.f32 %v6155, %v7509
        %v7573 = vmul.f32 %v6157, %v7509
        %v7574 = vmul.f32 %v6159, %v7509
        %v7575 = vmul.f32 %v6161, %v7509
        %v7576 = vmul.f32 %v6163, %v7509
        %v7577 = vmul.f32 %v6165, %v7509
        %v7578 = vmul.f32 %v6167, %v7509
        %v7579 = vmul.f32 %v6169, %v7509
        %v7580 = vmul.f32 %v6171, %v7509
        %v7581 = vmul.f32 %v6173, %v7509
        %v7582 = vmul.f32 %v6175, %v7509
        %v7583 = vmul.f32 %v6177, %v7509
        %v7584 = vmul.f32 %v6179, %v7509
        %v7585 = vmul.f32 %v6181, %v7509
        %v7586 = vmul.f32 %v6183, %v7513
        %v7587 = vmul.f32 %v6185, %v7513
        %v7588 = vmul.f32 %v6187, %v7513
        %v7589 = vmul.f32 %v6189, %v7513
        %v7590 = vmul.f32 %v6191, %v7513
        %v7591 = vmul.f32 %v6193, %v7513
        %v7592 = vmul.f32 %v6195, %v7513
        %v7593 = vmul.f32 %v6197, %v7513
        %v7594 = vmul.f32 %v6199, %v7513
        %v7595 = vmul.f32 %v6201, %v7513
        %v7596 = vmul.f32 %v6203, %v7513
        %v7597 = vmul.f32 %v6205, %v7513
        %v7598 = vmul.f32 %v6207, %v7513
        %v7599 = vmul.f32 %v6209, %v7513
        %v7600 = vmul.f32 %v6211, %v7513
        %v7601 = vmul.f32 %v6213, %v7513
        %v7602 = vmul.f32 %v6215, %v7517
        %v7603 = vmul.f32 %v6217, %v7517
        %v7604 = vmul.f32 %v6219, %v7517
        %v7605 = vmul.f32 %v6221, %v7517
        %v7606 = vmul.f32 %v6223, %v7517
        %v7607 = vmul.f32 %v6225, %v7517
        %v7608 = vmul.f32 %v6227, %v7517
        %v7609 = vmul.f32 %v6229, %v7517
        %v7610 = vmul.f32 %v6231, %v7517
        %v7611 = vmul.f32 %v6233, %v7517
        %v7612 = vmul.f32 %v6235, %v7517
        %v7613 = vmul.f32 %v6237, %v7517
        %v7614 = vmul.f32 %v6239, %v7517
        %v7615 = vmul.f32 %v6241, %v7517
        %v7616 = vmul.f32 %v6243, %v7517
        %v7617 = vmul.f32 %v6245, %v7517
        %v7618 = vmul.f32 %v6247, %v7521
        %v7619 = vmul.f32 %v6249, %v7521
        %v7620 = vmul.f32 %v6251, %v7521
        %v7621 = vmul.f32 %v6253, %v7521
        %v7622 = vmul.f32 %v6255, %v7521
        %v7623 = vmul.f32 %v6257, %v7521
        %v7624 = vmul.f32 %v6259, %v7521
        %v7625 = vmul.f32 %v6261, %v7521
        %v7626 = vmul.f32 %v6263, %v7521
        %v7627 = vmul.f32 %v6265, %v7521
        %v7628 = vmul.f32 %v6267, %v7521
        %v7629 = vmul.f32 %v6269, %v7521
        %v7630 = vmul.f32 %v6271, %v7521
        %v7631 = vmul.f32 %v6273, %v7521
        %v7632 = vmul.f32 %v6275, %v7521
        %v7633 = vmul.f32 %v6277, %v7521
        %v7634 = vmul.f32 %v6279, %v7525
        %v7635 = vmul.f32 %v6281, %v7525
        %v7636 = vmul.f32 %v6283, %v7525
        %v7637 = vmul.f32 %v6285, %v7525
        %v7638 = vmul.f32 %v6287, %v7525
        %v7639 = vmul.f32 %v6289, %v7525
        %v7640 = vmul.f32 %v6291, %v7525
        %v7641 = vmul.f32 %v6293, %v7525
        %v7642 = vmul.f32 %v6295, %v7525
        %v7643 = vmul.f32 %v6297, %v7525
        %v7644 = vmul.f32 %v6299, %v7525
        %v7645 = vmul.f32 %v6301, %v7525
        %v7646 = vmul.f32 %v6303, %v7525
        %v7647 = vmul.f32 %v6305, %v7525
        %v7648 = vmul.f32 %v6307, %v7525
        %v7649 = vmul.f32 %v6309, %v7525
        %v7650 = vmul.f32 %v6311, %v7529
        %v7651 = vmul.f32 %v6313, %v7529
        %v7652 = vmul.f32 %v6315, %v7529
        %v7653 = vmul.f32 %v6317, %v7529
        %v7654 = vmul.f32 %v6319, %v7529
        %v7655 = vmul.f32 %v6321, %v7529
        %v7656 = vmul.f32 %v6323, %v7529
        %v7657 = vmul.f32 %v6325, %v7529
        %v7658 = vmul.f32 %v6327, %v7529
        %v7659 = vmul.f32 %v6329, %v7529
        %v7660 = vmul.f32 %v6331, %v7529
        %v7661 = vmul.f32 %v6333, %v7529
        %v7662 = vmul.f32 %v6335, %v7529
        %v7663 = vmul.f32 %v6337, %v7529
        %v7664 = vmul.f32 %v6339, %v7529
        %v7665 = vmul.f32 %v6341, %v7529
        %7794 = vset.pattern.permute.xlu0 0
        %7795 = vperm.xlu0 %7794, %v7538
        %v7796 = vpop.permute.xlu0 %7795
        %7797 = vset.pattern.permute.xlu0 0
        %7798 = vperm.xlu0 %7797, %v7539
        %v7799 = vpop.permute.xlu0 %7798
        %7800 = vset.pattern.permute.xlu0 0
        %7801 = vperm.xlu0 %7800, %v7540
        %v7802 = vpop.permute.xlu0 %7801
        %7803 = vset.pattern.permute.xlu0 0
        %7804 = vperm.xlu0 %7803, %v7541
        %v7805 = vpop.permute.xlu0 %7804
        %7806 = vset.pattern.permute.xlu0 0
        %7807 = vperm.xlu0 %7806, %v7542
        %v7808 = vpop.permute.xlu0 %7807
        %7809 = vset.pattern.permute.xlu0 0
        %7810 = vperm.xlu0 %7809, %v7543
        %v7811 = vpop.permute.xlu0 %7810
        %7812 = vset.pattern.permute.xlu0 0
        %7813 = vperm.xlu0 %7812, %v7544
        %v7814 = vpop.permute.xlu0 %7813
        %7815 = vset.pattern.permute.xlu0 0
        %7816 = vperm.xlu0 %7815, %v7545
        %v7817 = vpop.permute.xlu0 %7816
        %7818 = vset.pattern.permute.xlu0 0
        %7819 = vperm.xlu0 %7818, %v7546
        %v7820 = vpop.permute.xlu0 %7819
        %7821 = vset.pattern.permute.xlu0 0
        %7822 = vperm.xlu0 %7821, %v7547
        %v7823 = vpop.permute.xlu0 %7822
        %7824 = vset.pattern.permute.xlu0 0
        %7825 = vperm.xlu0 %7824, %v7548
        %v7826 = vpop.permute.xlu0 %7825
        %7827 = vset.pattern.permute.xlu0 0
        %7828 = vperm.xlu0 %7827, %v7549
        %v7829 = vpop.permute.xlu0 %7828
        %7830 = vset.pattern.permute.xlu0 0
        %7831 = vperm.xlu0 %7830, %v7550
        %v7832 = vpop.permute.xlu0 %7831
        %7833 = vset.pattern.permute.xlu0 0
        %7834 = vperm.xlu0 %7833, %v7551
        %v7835 = vpop.permute.xlu0 %7834
        %7836 = vset.pattern.permute.xlu0 0
        %7837 = vperm.xlu0 %7836, %v7552
        %v7838 = vpop.permute.xlu0 %7837
        %7839 = vset.pattern.permute.xlu0 0
        %7840 = vperm.xlu0 %7839, %v7553
        %v7841 = vpop.permute.xlu0 %7840
        %7842 = vset.pattern.permute.xlu0 0
        %7843 = vperm.xlu0 %7842, %v7554
        %v7844 = vpop.permute.xlu0 %7843
        %7845 = vset.pattern.permute.xlu0 0
        %7846 = vperm.xlu0 %7845, %v7555
        %v7847 = vpop.permute.xlu0 %7846
        %7848 = vset.pattern.permute.xlu0 0
        %7849 = vperm.xlu0 %7848, %v7556
        %v7850 = vpop.permute.xlu0 %7849
        %7851 = vset.pattern.permute.xlu0 0
        %7852 = vperm.xlu0 %7851, %v7557
        %v7853 = vpop.permute.xlu0 %7852
        %7854 = vset.pattern.permute.xlu0 0
        %7855 = vperm.xlu0 %7854, %v7558
        %v7856 = vpop.permute.xlu0 %7855
        %7857 = vset.pattern.permute.xlu0 0
        %7858 = vperm.xlu0 %7857, %v7559
        %v7859 = vpop.permute.xlu0 %7858
        %7860 = vset.pattern.permute.xlu0 0
        %7861 = vperm.xlu0 %7860, %v7560
        %v7862 = vpop.permute.xlu0 %7861
        %7863 = vset.pattern.permute.xlu0 0
        %7864 = vperm.xlu0 %7863, %v7561
        %v7865 = vpop.permute.xlu0 %7864
        %7866 = vset.pattern.permute.xlu0 0
        %7867 = vperm.xlu0 %7866, %v7562
        %v7868 = vpop.permute.xlu0 %7867
        %7869 = vset.pattern.permute.xlu0 0
        %7870 = vperm.xlu0 %7869, %v7563
        %v7871 = vpop.permute.xlu0 %7870
        %7872 = vset.pattern.permute.xlu0 0
        %7873 = vperm.xlu0 %7872, %v7564
        %v7874 = vpop.permute.xlu0 %7873
        %7875 = vset.pattern.permute.xlu0 0
        %7876 = vperm.xlu0 %7875, %v7565
        %v7877 = vpop.permute.xlu0 %7876
        %7878 = vset.pattern.permute.xlu0 0
        %7879 = vperm.xlu0 %7878, %v7566
        %v7880 = vpop.permute.xlu0 %7879
        %7881 = vset.pattern.permute.xlu0 0
        %7882 = vperm.xlu0 %7881, %v7567
        %v7883 = vpop.permute.xlu0 %7882
        %7884 = vset.pattern.permute.xlu0 0
        %7885 = vperm.xlu0 %7884, %v7568
        %v7886 = vpop.permute.xlu0 %7885
        %7887 = vset.pattern.permute.xlu0 0
        %7888 = vperm.xlu0 %7887, %v7569
        %v7889 = vpop.permute.xlu0 %7888
        %7890 = vset.pattern.permute.xlu0 0
        %7891 = vperm.xlu0 %7890, %v7570
        %v7892 = vpop.permute.xlu0 %7891
        %7893 = vset.pattern.permute.xlu0 0
        %7894 = vperm.xlu0 %7893, %v7571
        %v7895 = vpop.permute.xlu0 %7894
        %7896 = vset.pattern.permute.xlu0 0
        %7897 = vperm.xlu0 %7896, %v7572
        %v7898 = vpop.permute.xlu0 %7897
        %7899 = vset.pattern.permute.xlu0 0
        %7900 = vperm.xlu0 %7899, %v7573
        %v7901 = vpop.permute.xlu0 %7900
        %7902 = vset.pattern.permute.xlu0 0
        %7903 = vperm.xlu0 %7902, %v7574
        %v7904 = vpop.permute.xlu0 %7903
        %7905 = vset.pattern.permute.xlu0 0
        %7906 = vperm.xlu0 %7905, %v7575
        %v7907 = vpop.permute.xlu0 %7906
        %7908 = vset.pattern.permute.xlu0 0
        %7909 = vperm.xlu0 %7908, %v7576
        %v7910 = vpop.permute.xlu0 %7909
        %7911 = vset.pattern.permute.xlu0 0
        %7912 = vperm.xlu0 %7911, %v7577
        %v7913 = vpop.permute.xlu0 %7912
        %7914 = vset.pattern.permute.xlu0 0
        %7915 = vperm.xlu0 %7914, %v7578
        %v7916 = vpop.permute.xlu0 %7915
        %7917 = vset.pattern.permute.xlu0 0
        %7918 = vperm.xlu0 %7917, %v7579
        %v7919 = vpop.permute.xlu0 %7918
        %7920 = vset.pattern.permute.xlu0 0
        %7921 = vperm.xlu0 %7920, %v7580
        %v7922 = vpop.permute.xlu0 %7921
        %7923 = vset.pattern.permute.xlu0 0
        %7924 = vperm.xlu0 %7923, %v7581
        %v7925 = vpop.permute.xlu0 %7924
        %7926 = vset.pattern.permute.xlu0 0
        %7927 = vperm.xlu0 %7926, %v7582
        %v7928 = vpop.permute.xlu0 %7927
        %7929 = vset.pattern.permute.xlu0 0
        %7930 = vperm.xlu0 %7929, %v7583
        %v7931 = vpop.permute.xlu0 %7930
        %7932 = vset.pattern.permute.xlu0 0
        %7933 = vperm.xlu0 %7932, %v7584
        %v7934 = vpop.permute.xlu0 %7933
        %7935 = vset.pattern.permute.xlu0 0
        %7936 = vperm.xlu0 %7935, %v7585
        %v7937 = vpop.permute.xlu0 %7936
        %7938 = vset.pattern.permute.xlu0 0
        %7939 = vperm.xlu0 %7938, %v7586
        %v7940 = vpop.permute.xlu0 %7939
        %7941 = vset.pattern.permute.xlu0 0
        %7942 = vperm.xlu0 %7941, %v7587
        %v7943 = vpop.permute.xlu0 %7942
        %7944 = vset.pattern.permute.xlu0 0
        %7945 = vperm.xlu0 %7944, %v7588
        %v7946 = vpop.permute.xlu0 %7945
        %7947 = vset.pattern.permute.xlu0 0
        %7948 = vperm.xlu0 %7947, %v7589
        %v7949 = vpop.permute.xlu0 %7948
        %7950 = vset.pattern.permute.xlu0 0
        %7951 = vperm.xlu0 %7950, %v7590
        %v7952 = vpop.permute.xlu0 %7951
        %7953 = vset.pattern.permute.xlu0 0
        %7954 = vperm.xlu0 %7953, %v7591
        %v7955 = vpop.permute.xlu0 %7954
        %7956 = vset.pattern.permute.xlu0 0
        %7957 = vperm.xlu0 %7956, %v7592
        %v7958 = vpop.permute.xlu0 %7957
        %7959 = vset.pattern.permute.xlu0 0
        %7960 = vperm.xlu0 %7959, %v7593
        %v7961 = vpop.permute.xlu0 %7960
        %7962 = vset.pattern.permute.xlu0 0
        %7963 = vperm.xlu0 %7962, %v7594
        %v7964 = vpop.permute.xlu0 %7963
        %7965 = vset.pattern.permute.xlu0 0
        %7966 = vperm.xlu0 %7965, %v7595
        %v7967 = vpop.permute.xlu0 %7966
        %7968 = vset.pattern.permute.xlu0 0
        %7969 = vperm.xlu0 %7968, %v7596
        %v7970 = vpop.permute.xlu0 %7969
        %7971 = vset.pattern.permute.xlu0 0
        %7972 = vperm.xlu0 %7971, %v7597
        %v7973 = vpop.permute.xlu0 %7972
        %7974 = vset.pattern.permute.xlu0 0
        %7975 = vperm.xlu0 %7974, %v7598
        %v7976 = vpop.permute.xlu0 %7975
        %7977 = vset.pattern.permute.xlu0 0
        %7978 = vperm.xlu0 %7977, %v7599
        %v7979 = vpop.permute.xlu0 %7978
        %7980 = vset.pattern.permute.xlu0 0
        %7981 = vperm.xlu0 %7980, %v7600
        %v7982 = vpop.permute.xlu0 %7981
        %7983 = vset.pattern.permute.xlu0 0
        %7984 = vperm.xlu0 %7983, %v7601
        %v7985 = vpop.permute.xlu0 %7984
        %7986 = vset.pattern.permute.xlu0 0
        %7987 = vperm.xlu0 %7986, %v7602
        %v7988 = vpop.permute.xlu0 %7987
        %7989 = vset.pattern.permute.xlu0 0
        %7990 = vperm.xlu0 %7989, %v7603
        %v7991 = vpop.permute.xlu0 %7990
        %7992 = vset.pattern.permute.xlu0 0
        %7993 = vperm.xlu0 %7992, %v7604
        %v7994 = vpop.permute.xlu0 %7993
        %7995 = vset.pattern.permute.xlu0 0
        %7996 = vperm.xlu0 %7995, %v7605
        %v7997 = vpop.permute.xlu0 %7996
        %7998 = vset.pattern.permute.xlu0 0
        %7999 = vperm.xlu0 %7998, %v7606
        %v8000 = vpop.permute.xlu0 %7999
        %8001 = vset.pattern.permute.xlu0 0
        %8002 = vperm.xlu0 %8001, %v7607
        %v8003 = vpop.permute.xlu0 %8002
        %8004 = vset.pattern.permute.xlu0 0
        %8005 = vperm.xlu0 %8004, %v7608
        %v8006 = vpop.permute.xlu0 %8005
        %8007 = vset.pattern.permute.xlu0 0
        %8008 = vperm.xlu0 %8007, %v7609
        %v8009 = vpop.permute.xlu0 %8008
        %8010 = vset.pattern.permute.xlu0 0
        %8011 = vperm.xlu0 %8010, %v7610
        %v8012 = vpop.permute.xlu0 %8011
        %8013 = vset.pattern.permute.xlu0 0
        %8014 = vperm.xlu0 %8013, %v7611
        %v8015 = vpop.permute.xlu0 %8014
        %8016 = vset.pattern.permute.xlu0 0
        %8017 = vperm.xlu0 %8016, %v7612
        %v8018 = vpop.permute.xlu0 %8017
        %8019 = vset.pattern.permute.xlu0 0
        %8020 = vperm.xlu0 %8019, %v7613
        %v8021 = vpop.permute.xlu0 %8020
        %8022 = vset.pattern.permute.xlu0 0
        %8023 = vperm.xlu0 %8022, %v7614
        %v8024 = vpop.permute.xlu0 %8023
        %8025 = vset.pattern.permute.xlu0 0
        %8026 = vperm.xlu0 %8025, %v7615
        %v8027 = vpop.permute.xlu0 %8026
        %8028 = vset.pattern.permute.xlu0 0
        %8029 = vperm.xlu0 %8028, %v7616
        %v8030 = vpop.permute.xlu0 %8029
        %8031 = vset.pattern.permute.xlu0 0
        %8032 = vperm.xlu0 %8031, %v7617
        %v8033 = vpop.permute.xlu0 %8032
        %8034 = vset.pattern.permute.xlu0 0
        %8035 = vperm.xlu0 %8034, %v7618
        %v8036 = vpop.permute.xlu0 %8035
        %8037 = vset.pattern.permute.xlu0 0
        %8038 = vperm.xlu0 %8037, %v7619
        %v8039 = vpop.permute.xlu0 %8038
        %8040 = vset.pattern.permute.xlu0 0
        %8041 = vperm.xlu0 %8040, %v7620
        %v8042 = vpop.permute.xlu0 %8041
        %8043 = vset.pattern.permute.xlu0 0
        %8044 = vperm.xlu0 %8043, %v7621
        %v8045 = vpop.permute.xlu0 %8044
        %8046 = vset.pattern.permute.xlu0 0
        %8047 = vperm.xlu0 %8046, %v7622
        %v8048 = vpop.permute.xlu0 %8047
        %8049 = vset.pattern.permute.xlu0 0
        %8050 = vperm.xlu0 %8049, %v7623
        %v8051 = vpop.permute.xlu0 %8050
        %8052 = vset.pattern.permute.xlu0 0
        %8053 = vperm.xlu0 %8052, %v7624
        %v8054 = vpop.permute.xlu0 %8053
        %8055 = vset.pattern.permute.xlu0 0
        %8056 = vperm.xlu0 %8055, %v7625
        %v8057 = vpop.permute.xlu0 %8056
        %8058 = vset.pattern.permute.xlu0 0
        %8059 = vperm.xlu0 %8058, %v7626
        %v8060 = vpop.permute.xlu0 %8059
        %8061 = vset.pattern.permute.xlu0 0
        %8062 = vperm.xlu0 %8061, %v7627
        %v8063 = vpop.permute.xlu0 %8062
        %8064 = vset.pattern.permute.xlu0 0
        %8065 = vperm.xlu0 %8064, %v7628
        %v8066 = vpop.permute.xlu0 %8065
        %8067 = vset.pattern.permute.xlu0 0
        %8068 = vperm.xlu0 %8067, %v7629
        %v8069 = vpop.permute.xlu0 %8068
        %8070 = vset.pattern.permute.xlu0 0
        %8071 = vperm.xlu0 %8070, %v7630
        %v8072 = vpop.permute.xlu0 %8071
        %8073 = vset.pattern.permute.xlu0 0
        %8074 = vperm.xlu0 %8073, %v7631
        %v8075 = vpop.permute.xlu0 %8074
        %8076 = vset.pattern.permute.xlu0 0
        %8077 = vperm.xlu0 %8076, %v7632
        %v8078 = vpop.permute.xlu0 %8077
        %8079 = vset.pattern.permute.xlu0 0
        %8080 = vperm.xlu0 %8079, %v7633
        %v8081 = vpop.permute.xlu0 %8080
        %8082 = vset.pattern.permute.xlu0 0
        %8083 = vperm.xlu0 %8082, %v7634
        %v8084 = vpop.permute.xlu0 %8083
        %8085 = vset.pattern.permute.xlu0 0
        %8086 = vperm.xlu0 %8085, %v7635
        %v8087 = vpop.permute.xlu0 %8086
        %8088 = vset.pattern.permute.xlu0 0
        %8089 = vperm.xlu0 %8088, %v7636
        %v8090 = vpop.permute.xlu0 %8089
        %8091 = vset.pattern.permute.xlu0 0
        %8092 = vperm.xlu0 %8091, %v7637
        %v8093 = vpop.permute.xlu0 %8092
        %8094 = vset.pattern.permute.xlu0 0
        %8095 = vperm.xlu0 %8094, %v7638
        %v8096 = vpop.permute.xlu0 %8095
        %8097 = vset.pattern.permute.xlu0 0
        %8098 = vperm.xlu0 %8097, %v7639
        %v8099 = vpop.permute.xlu0 %8098
        %8100 = vset.pattern.permute.xlu0 0
        %8101 = vperm.xlu0 %8100, %v7640
        %v8102 = vpop.permute.xlu0 %8101
        %8103 = vset.pattern.permute.xlu0 0
        %8104 = vperm.xlu0 %8103, %v7641
        %v8105 = vpop.permute.xlu0 %8104
        %8106 = vset.pattern.permute.xlu0 0
        %8107 = vperm.xlu0 %8106, %v7642
        %v8108 = vpop.permute.xlu0 %8107
        %8109 = vset.pattern.permute.xlu0 0
        %8110 = vperm.xlu0 %8109, %v7643
        %v8111 = vpop.permute.xlu0 %8110
        %8112 = vset.pattern.permute.xlu0 0
        %8113 = vperm.xlu0 %8112, %v7644
        %v8114 = vpop.permute.xlu0 %8113
        %8115 = vset.pattern.permute.xlu0 0
        %8116 = vperm.xlu0 %8115, %v7645
        %v8117 = vpop.permute.xlu0 %8116
        %8118 = vset.pattern.permute.xlu0 0
        %8119 = vperm.xlu0 %8118, %v7646
        %v8120 = vpop.permute.xlu0 %8119
        %8121 = vset.pattern.permute.xlu0 0
        %8122 = vperm.xlu0 %8121, %v7647
        %v8123 = vpop.permute.xlu0 %8122
        %8124 = vset.pattern.permute.xlu0 0
        %8125 = vperm.xlu0 %8124, %v7648
        %v8126 = vpop.permute.xlu0 %8125
        %8127 = vset.pattern.permute.xlu0 0
        %8128 = vperm.xlu0 %8127, %v7649
        %v8129 = vpop.permute.xlu0 %8128
        %8130 = vset.pattern.permute.xlu0 0
        %8131 = vperm.xlu0 %8130, %v7650
        %v8132 = vpop.permute.xlu0 %8131
        %8133 = vset.pattern.permute.xlu0 0
        %8134 = vperm.xlu0 %8133, %v7651
        %v8135 = vpop.permute.xlu0 %8134
        %8136 = vset.pattern.permute.xlu0 0
        %8137 = vperm.xlu0 %8136, %v7652
        %v8138 = vpop.permute.xlu0 %8137
        %8139 = vset.pattern.permute.xlu0 0
        %8140 = vperm.xlu0 %8139, %v7653
        %v8141 = vpop.permute.xlu0 %8140
        %8142 = vset.pattern.permute.xlu0 0
        %8143 = vperm.xlu0 %8142, %v7654
        %v8144 = vpop.permute.xlu0 %8143
        %8145 = vset.pattern.permute.xlu0 0
        %8146 = vperm.xlu0 %8145, %v7655
        %v8147 = vpop.permute.xlu0 %8146
        %8148 = vset.pattern.permute.xlu0 0
        %8149 = vperm.xlu0 %8148, %v7656
        %v8150 = vpop.permute.xlu0 %8149
        %8151 = vset.pattern.permute.xlu0 0
        %8152 = vperm.xlu0 %8151, %v7657
        %v8153 = vpop.permute.xlu0 %8152
        %8154 = vset.pattern.permute.xlu0 0
        %8155 = vperm.xlu0 %8154, %v7658
        %v8156 = vpop.permute.xlu0 %8155
        %8157 = vset.pattern.permute.xlu0 0
        %8158 = vperm.xlu0 %8157, %v7659
        %v8159 = vpop.permute.xlu0 %8158
        %8160 = vset.pattern.permute.xlu0 0
        %8161 = vperm.xlu0 %8160, %v7660
        %v8162 = vpop.permute.xlu0 %8161
        %8163 = vset.pattern.permute.xlu0 0
        %8164 = vperm.xlu0 %8163, %v7661
        %v8165 = vpop.permute.xlu0 %8164
        %8166 = vset.pattern.permute.xlu0 0
        %8167 = vperm.xlu0 %8166, %v7662
        %v8168 = vpop.permute.xlu0 %8167
        %8169 = vset.pattern.permute.xlu0 0
        %8170 = vperm.xlu0 %8169, %v7663
        %v8171 = vpop.permute.xlu0 %8170
        %8172 = vset.pattern.permute.xlu0 0
        %8173 = vperm.xlu0 %8172, %v7664
        %v8174 = vpop.permute.xlu0 %8173
        %8175 = vset.pattern.permute.xlu0 0
        %8176 = vperm.xlu0 %8175, %v7665
        %v8177 = vpop.permute.xlu0 %8176
        %v8178 = vlaneseq
        %v8179 = vshrl.u32 %v8178, 7
        %v8180 = vsub.s32 %v5237, %v8179
        %v8181 = vrot.slane %v7796, %v8180
        %v8182 = vlaneseq
        %v8183 = vshrl.u32 %v8182, 7
        %v8184 = vsub.s32 %v5242, %v8183
        %v8185 = vrot.slane %v7799, %v8184
        %v8186 = vsel %vm5247, %v8185, %v8181
        %v8187 = vlaneseq
        %v8188 = vshrl.u32 %v8187, 7
        %v8189 = vsub.s32 %v5249, %v8188
        %v8190 = vrot.slane %v7802, %v8189
        %v8191 = vsel %vm5254, %v8190, %v8186
        %v8192 = vlaneseq
        %v8193 = vshrl.u32 %v8192, 7
        %v8194 = vsub.s32 %v5256, %v8193
        %v8195 = vrot.slane %v7805, %v8194
        %v8196 = vsel %vm5261, %v8195, %v8191
        %v8197 = vlaneseq
        %v8198 = vshrl.u32 %v8197, 7
        %v8199 = vsub.s32 %v5263, %v8198
        %v8200 = vrot.slane %v7808, %v8199
        %v8201 = vsel %vm5268, %v8200, %v8196
        %v8202 = vlaneseq
        %v8203 = vshrl.u32 %v8202, 7
        %v8204 = vsub.s32 %v5270, %v8203
        %v8205 = vrot.slane %v7811, %v8204
        %v8206 = vsel %vm5275, %v8205, %v8201
        %v8207 = vlaneseq
        %v8208 = vshrl.u32 %v8207, 7
        %v8209 = vsub.s32 %v5277, %v8208
        %v8210 = vrot.slane %v7814, %v8209
        %v8211 = vsel %vm5282, %v8210, %v8206
        %v8212 = vlaneseq
        %v8213 = vshrl.u32 %v8212, 7
        %v8214 = vsub.s32 %v5284, %v8213
        %v8215 = vrot.slane %v7817, %v8214
        %v8216 = vsel %vm5289, %v8215, %v8211
        %v8217 = vlaneseq
        %v8218 = vshrl.u32 %v8217, 7
        %v8219 = vsub.s32 %v5291, %v8218
        %v8220 = vrot.slane %v7820, %v8219
        %v8221 = vsel %vm5296, %v8220, %v8216
        %v8222 = vlaneseq
        %v8223 = vshrl.u32 %v8222, 7
        %v8224 = vsub.s32 %v5298, %v8223
        %v8225 = vrot.slane %v7823, %v8224
        %v8226 = vsel %vm5303, %v8225, %v8221
        %v8227 = vlaneseq
        %v8228 = vshrl.u32 %v8227, 7
        %v8229 = vsub.s32 %v5305, %v8228
        %v8230 = vrot.slane %v7826, %v8229
        %v8231 = vsel %vm5310, %v8230, %v8226
        %v8232 = vlaneseq
        %v8233 = vshrl.u32 %v8232, 7
        %v8234 = vsub.s32 %v5312, %v8233
        %v8235 = vrot.slane %v7829, %v8234
        %v8236 = vsel %vm5317, %v8235, %v8231
        %v8237 = vlaneseq
        %v8238 = vshrl.u32 %v8237, 7
        %v8239 = vsub.s32 %v5319, %v8238
        %v8240 = vrot.slane %v7832, %v8239
        %v8241 = vsel %vm5324, %v8240, %v8236
        %v8242 = vlaneseq
        %v8243 = vshrl.u32 %v8242, 7
        %v8244 = vsub.s32 %v5326, %v8243
        %v8245 = vrot.slane %v7835, %v8244
        %v8246 = vsel %vm5331, %v8245, %v8241
        %v8247 = vlaneseq
        %v8248 = vshrl.u32 %v8247, 7
        %v8249 = vsub.s32 %v5333, %v8248
        %v8250 = vrot.slane %v7838, %v8249
        %v8251 = vsel %vm5338, %v8250, %v8246
        %v8252 = vlaneseq
        %v8253 = vshrl.u32 %v8252, 7
        %v8254 = vsub.s32 %v5340, %v8253
        %v8255 = vrot.slane %v7841, %v8254
        %v8256 = vsel %vm5345, %v8255, %v8251
        %v8257 = vlaneseq
        %v8258 = vshrl.u32 %v8257, 7
        %v8259 = vsub.s32 %v5237, %v8258
        %v8260 = vrot.slane %v7844, %v8259
        %v8261 = vlaneseq
        %v8262 = vshrl.u32 %v8261, 7
        %v8263 = vsub.s32 %v5242, %v8262
        %v8264 = vrot.slane %v7847, %v8263
        %v8265 = vsel %vm5247, %v8264, %v8260
        %v8266 = vlaneseq
        %v8267 = vshrl.u32 %v8266, 7
        %v8268 = vsub.s32 %v5249, %v8267
        %v8269 = vrot.slane %v7850, %v8268
        %v8270 = vsel %vm5254, %v8269, %v8265
        %v8271 = vlaneseq
        %v8272 = vshrl.u32 %v8271, 7
        %v8273 = vsub.s32 %v5256, %v8272
        %v8274 = vrot.slane %v7853, %v8273
        %v8275 = vsel %vm5261, %v8274, %v8270
        %v8276 = vlaneseq
        %v8277 = vshrl.u32 %v8276, 7
        %v8278 = vsub.s32 %v5263, %v8277
        %v8279 = vrot.slane %v7856, %v8278
        %v8280 = vsel %vm5268, %v8279, %v8275
        %v8281 = vlaneseq
        %v8282 = vshrl.u32 %v8281, 7
        %v8283 = vsub.s32 %v5270, %v8282
        %v8284 = vrot.slane %v7859, %v8283
        %v8285 = vsel %vm5275, %v8284, %v8280
        %v8286 = vlaneseq
        %v8287 = vshrl.u32 %v8286, 7
        %v8288 = vsub.s32 %v5277, %v8287
        %v8289 = vrot.slane %v7862, %v8288
        %v8290 = vsel %vm5282, %v8289, %v8285
        %v8291 = vlaneseq
        %v8292 = vshrl.u32 %v8291, 7
        %v8293 = vsub.s32 %v5284, %v8292
        %v8294 = vrot.slane %v7865, %v8293
        %v8295 = vsel %vm5289, %v8294, %v8290
        %v8296 = vlaneseq
        %v8297 = vshrl.u32 %v8296, 7
        %v8298 = vsub.s32 %v5291, %v8297
        %v8299 = vrot.slane %v7868, %v8298
        %v8300 = vsel %vm5296, %v8299, %v8295
        %v8301 = vlaneseq
        %v8302 = vshrl.u32 %v8301, 7
        %v8303 = vsub.s32 %v5298, %v8302
        %v8304 = vrot.slane %v7871, %v8303
        %v8305 = vsel %vm5303, %v8304, %v8300
        %v8306 = vlaneseq
        %v8307 = vshrl.u32 %v8306, 7
        %v8308 = vsub.s32 %v5305, %v8307
        %v8309 = vrot.slane %v7874, %v8308
        %v8310 = vsel %vm5310, %v8309, %v8305
        %v8311 = vlaneseq
        %v8312 = vshrl.u32 %v8311, 7
        %v8313 = vsub.s32 %v5312, %v8312
        %v8314 = vrot.slane %v7877, %v8313
        %v8315 = vsel %vm5317, %v8314, %v8310
        %v8316 = vlaneseq
        %v8317 = vshrl.u32 %v8316, 7
        %v8318 = vsub.s32 %v5319, %v8317
        %v8319 = vrot.slane %v7880, %v8318
        %v8320 = vsel %vm5324, %v8319, %v8315
        %v8321 = vlaneseq
        %v8322 = vshrl.u32 %v8321, 7
        %v8323 = vsub.s32 %v5326, %v8322
        %v8324 = vrot.slane %v7883, %v8323
        %v8325 = vsel %vm5331, %v8324, %v8320
        %v8326 = vlaneseq
        %v8327 = vshrl.u32 %v8326, 7
        %v8328 = vsub.s32 %v5333, %v8327
        %v8329 = vrot.slane %v7886, %v8328
        %v8330 = vsel %vm5338, %v8329, %v8325
        %v8331 = vlaneseq
        %v8332 = vshrl.u32 %v8331, 7
        %v8333 = vsub.s32 %v5340, %v8332
        %v8334 = vrot.slane %v7889, %v8333
        %v8335 = vsel %vm5345, %v8334, %v8330
        %v8336 = vlaneseq
        %v8337 = vshrl.u32 %v8336, 7
        %v8338 = vsub.s32 %v5237, %v8337
        %v8339 = vrot.slane %v7892, %v8338
        %v8340 = vlaneseq
        %v8341 = vshrl.u32 %v8340, 7
        %v8342 = vsub.s32 %v5242, %v8341
        %v8343 = vrot.slane %v7895, %v8342
        %v8344 = vsel %vm5247, %v8343, %v8339
        %v8345 = vlaneseq
        %v8346 = vshrl.u32 %v8345, 7
        %v8347 = vsub.s32 %v5249, %v8346
        %v8348 = vrot.slane %v7898, %v8347
        %v8349 = vsel %vm5254, %v8348, %v8344
        %v8350 = vlaneseq
        %v8351 = vshrl.u32 %v8350, 7
        %v8352 = vsub.s32 %v5256, %v8351
        %v8353 = vrot.slane %v7901, %v8352
        %v8354 = vsel %vm5261, %v8353, %v8349
        %v8355 = vlaneseq
        %v8356 = vshrl.u32 %v8355, 7
        %v8357 = vsub.s32 %v5263, %v8356
        %v8358 = vrot.slane %v7904, %v8357
        %v8359 = vsel %vm5268, %v8358, %v8354
        %v8360 = vlaneseq
        %v8361 = vshrl.u32 %v8360, 7
        %v8362 = vsub.s32 %v5270, %v8361
        %v8363 = vrot.slane %v7907, %v8362
        %v8364 = vsel %vm5275, %v8363, %v8359
        %v8365 = vlaneseq
        %v8366 = vshrl.u32 %v8365, 7
        %v8367 = vsub.s32 %v5277, %v8366
        %v8368 = vrot.slane %v7910, %v8367
        %v8369 = vsel %vm5282, %v8368, %v8364
        %v8370 = vlaneseq
        %v8371 = vshrl.u32 %v8370, 7
        %v8372 = vsub.s32 %v5284, %v8371
        %v8373 = vrot.slane %v7913, %v8372
        %v8374 = vsel %vm5289, %v8373, %v8369
        %v8375 = vlaneseq
        %v8376 = vshrl.u32 %v8375, 7
        %v8377 = vsub.s32 %v5291, %v8376
        %v8378 = vrot.slane %v7916, %v8377
        %v8379 = vsel %vm5296, %v8378, %v8374
        %v8380 = vlaneseq
        %v8381 = vshrl.u32 %v8380, 7
        %v8382 = vsub.s32 %v5298, %v8381
        %v8383 = vrot.slane %v7919, %v8382
        %v8384 = vsel %vm5303, %v8383, %v8379
        %v8385 = vlaneseq
        %v8386 = vshrl.u32 %v8385, 7
        %v8387 = vsub.s32 %v5305, %v8386
        %v8388 = vrot.slane %v7922, %v8387
        %v8389 = vsel %vm5310, %v8388, %v8384
        %v8390 = vlaneseq
        %v8391 = vshrl.u32 %v8390, 7
        %v8392 = vsub.s32 %v5312, %v8391
        %v8393 = vrot.slane %v7925, %v8392
        %v8394 = vsel %vm5317, %v8393, %v8389
        %v8395 = vlaneseq
        %v8396 = vshrl.u32 %v8395, 7
        %v8397 = vsub.s32 %v5319, %v8396
        %v8398 = vrot.slane %v7928, %v8397
        %v8399 = vsel %vm5324, %v8398, %v8394
        %v8400 = vlaneseq
        %v8401 = vshrl.u32 %v8400, 7
        %v8402 = vsub.s32 %v5326, %v8401
        %v8403 = vrot.slane %v7931, %v8402
        %v8404 = vsel %vm5331, %v8403, %v8399
        %v8405 = vlaneseq
        %v8406 = vshrl.u32 %v8405, 7
        %v8407 = vsub.s32 %v5333, %v8406
        %v8408 = vrot.slane %v7934, %v8407
        %v8409 = vsel %vm5338, %v8408, %v8404
        %v8410 = vlaneseq
        %v8411 = vshrl.u32 %v8410, 7
        %v8412 = vsub.s32 %v5340, %v8411
        %v8413 = vrot.slane %v7937, %v8412
        %v8414 = vsel %vm5345, %v8413, %v8409
        %v8415 = vlaneseq
        %v8416 = vshrl.u32 %v8415, 7
        %v8417 = vsub.s32 %v5237, %v8416
        %v8418 = vrot.slane %v7940, %v8417
        %v8419 = vlaneseq
        %v8420 = vshrl.u32 %v8419, 7
        %v8421 = vsub.s32 %v5242, %v8420
        %v8422 = vrot.slane %v7943, %v8421
        %v8423 = vsel %vm5247, %v8422, %v8418
        %v8424 = vlaneseq
        %v8425 = vshrl.u32 %v8424, 7
        %v8426 = vsub.s32 %v5249, %v8425
        %v8427 = vrot.slane %v7946, %v8426
        %v8428 = vsel %vm5254, %v8427, %v8423
        %v8429 = vlaneseq
        %v8430 = vshrl.u32 %v8429, 7
        %v8431 = vsub.s32 %v5256, %v8430
        %v8432 = vrot.slane %v7949, %v8431
        %v8433 = vsel %vm5261, %v8432, %v8428
        %v8434 = vlaneseq
        %v8435 = vshrl.u32 %v8434, 7
        %v8436 = vsub.s32 %v5263, %v8435
        %v8437 = vrot.slane %v7952, %v8436
        %v8438 = vsel %vm5268, %v8437, %v8433
        %v8439 = vlaneseq
        %v8440 = vshrl.u32 %v8439, 7
        %v8441 = vsub.s32 %v5270, %v8440
        %v8442 = vrot.slane %v7955, %v8441
        %v8443 = vsel %vm5275, %v8442, %v8438
        %v8444 = vlaneseq
        %v8445 = vshrl.u32 %v8444, 7
        %v8446 = vsub.s32 %v5277, %v8445
        %v8447 = vrot.slane %v7958, %v8446
        %v8448 = vsel %vm5282, %v8447, %v8443
        %v8449 = vlaneseq
        %v8450 = vshrl.u32 %v8449, 7
        %v8451 = vsub.s32 %v5284, %v8450
        %v8452 = vrot.slane %v7961, %v8451
        %v8453 = vsel %vm5289, %v8452, %v8448
        %v8454 = vlaneseq
        %v8455 = vshrl.u32 %v8454, 7
        %v8456 = vsub.s32 %v5291, %v8455
        %v8457 = vrot.slane %v7964, %v8456
        %v8458 = vsel %vm5296, %v8457, %v8453
        %v8459 = vlaneseq
        %v8460 = vshrl.u32 %v8459, 7
        %v8461 = vsub.s32 %v5298, %v8460
        %v8462 = vrot.slane %v7967, %v8461
        %v8463 = vsel %vm5303, %v8462, %v8458
        %v8464 = vlaneseq
        %v8465 = vshrl.u32 %v8464, 7
        %v8466 = vsub.s32 %v5305, %v8465
        %v8467 = vrot.slane %v7970, %v8466
        %v8468 = vsel %vm5310, %v8467, %v8463
        %v8469 = vlaneseq
        %v8470 = vshrl.u32 %v8469, 7
        %v8471 = vsub.s32 %v5312, %v8470
        %v8472 = vrot.slane %v7973, %v8471
        %v8473 = vsel %vm5317, %v8472, %v8468
        %v8474 = vlaneseq
        %v8475 = vshrl.u32 %v8474, 7
        %v8476 = vsub.s32 %v5319, %v8475
        %v8477 = vrot.slane %v7976, %v8476
        %v8478 = vsel %vm5324, %v8477, %v8473
        %v8479 = vlaneseq
        %v8480 = vshrl.u32 %v8479, 7
        %v8481 = vsub.s32 %v5326, %v8480
        %v8482 = vrot.slane %v7979, %v8481
        %v8483 = vsel %vm5331, %v8482, %v8478
        %v8484 = vlaneseq
        %v8485 = vshrl.u32 %v8484, 7
        %v8486 = vsub.s32 %v5333, %v8485
        %v8487 = vrot.slane %v7982, %v8486
        %v8488 = vsel %vm5338, %v8487, %v8483
        %v8489 = vlaneseq
        %v8490 = vshrl.u32 %v8489, 7
        %v8491 = vsub.s32 %v5340, %v8490
        %v8492 = vrot.slane %v7985, %v8491
        %v8493 = vsel %vm5345, %v8492, %v8488
        %v8494 = vlaneseq
        %v8495 = vshrl.u32 %v8494, 7
        %v8496 = vsub.s32 %v5237, %v8495
        %v8497 = vrot.slane %v7988, %v8496
        %v8498 = vlaneseq
        %v8499 = vshrl.u32 %v8498, 7
        %v8500 = vsub.s32 %v5242, %v8499
        %v8501 = vrot.slane %v7991, %v8500
        %v8502 = vsel %vm5247, %v8501, %v8497
        %v8503 = vlaneseq
        %v8504 = vshrl.u32 %v8503, 7
        %v8505 = vsub.s32 %v5249, %v8504
        %v8506 = vrot.slane %v7994, %v8505
        %v8507 = vsel %vm5254, %v8506, %v8502
        %v8508 = vlaneseq
        %v8509 = vshrl.u32 %v8508, 7
        %v8510 = vsub.s32 %v5256, %v8509
        %v8511 = vrot.slane %v7997, %v8510
        %v8512 = vsel %vm5261, %v8511, %v8507
        %v8513 = vlaneseq
        %v8514 = vshrl.u32 %v8513, 7
        %v8515 = vsub.s32 %v5263, %v8514
        %v8516 = vrot.slane %v8000, %v8515
        %v8517 = vsel %vm5268, %v8516, %v8512
        %v8518 = vlaneseq
        %v8519 = vshrl.u32 %v8518, 7
        %v8520 = vsub.s32 %v5270, %v8519
        %v8521 = vrot.slane %v8003, %v8520
        %v8522 = vsel %vm5275, %v8521, %v8517
        %v8523 = vlaneseq
        %v8524 = vshrl.u32 %v8523, 7
        %v8525 = vsub.s32 %v5277, %v8524
        %v8526 = vrot.slane %v8006, %v8525
        %v8527 = vsel %vm5282, %v8526, %v8522
        %v8528 = vlaneseq
        %v8529 = vshrl.u32 %v8528, 7
        %v8530 = vsub.s32 %v5284, %v8529
        %v8531 = vrot.slane %v8009, %v8530
        %v8532 = vsel %vm5289, %v8531, %v8527
        %v8533 = vlaneseq
        %v8534 = vshrl.u32 %v8533, 7
        %v8535 = vsub.s32 %v5291, %v8534
        %v8536 = vrot.slane %v8012, %v8535
        %v8537 = vsel %vm5296, %v8536, %v8532
        %v8538 = vlaneseq
        %v8539 = vshrl.u32 %v8538, 7
        %v8540 = vsub.s32 %v5298, %v8539
        %v8541 = vrot.slane %v8015, %v8540
        %v8542 = vsel %vm5303, %v8541, %v8537
        %v8543 = vlaneseq
        %v8544 = vshrl.u32 %v8543, 7
        %v8545 = vsub.s32 %v5305, %v8544
        %v8546 = vrot.slane %v8018, %v8545
        %v8547 = vsel %vm5310, %v8546, %v8542
        %v8548 = vlaneseq
        %v8549 = vshrl.u32 %v8548, 7
        %v8550 = vsub.s32 %v5312, %v8549
        %v8551 = vrot.slane %v8021, %v8550
        %v8552 = vsel %vm5317, %v8551, %v8547
        %v8553 = vlaneseq
        %v8554 = vshrl.u32 %v8553, 7
        %v8555 = vsub.s32 %v5319, %v8554
        %v8556 = vrot.slane %v8024, %v8555
        %v8557 = vsel %vm5324, %v8556, %v8552
        %v8558 = vlaneseq
        %v8559 = vshrl.u32 %v8558, 7
        %v8560 = vsub.s32 %v5326, %v8559
        %v8561 = vrot.slane %v8027, %v8560
        %v8562 = vsel %vm5331, %v8561, %v8557
        %v8563 = vlaneseq
        %v8564 = vshrl.u32 %v8563, 7
        %v8565 = vsub.s32 %v5333, %v8564
        %v8566 = vrot.slane %v8030, %v8565
        %v8567 = vsel %vm5338, %v8566, %v8562
        %v8568 = vlaneseq
        %v8569 = vshrl.u32 %v8568, 7
        %v8570 = vsub.s32 %v5340, %v8569
        %v8571 = vrot.slane %v8033, %v8570
        %v8572 = vsel %vm5345, %v8571, %v8567
        %v8573 = vlaneseq
        %v8574 = vshrl.u32 %v8573, 7
        %v8575 = vsub.s32 %v5237, %v8574
        %v8576 = vrot.slane %v8036, %v8575
        %v8577 = vlaneseq
        %v8578 = vshrl.u32 %v8577, 7
        %v8579 = vsub.s32 %v5242, %v8578
        %v8580 = vrot.slane %v8039, %v8579
        %v8581 = vsel %vm5247, %v8580, %v8576
        %v8582 = vlaneseq
        %v8583 = vshrl.u32 %v8582, 7
        %v8584 = vsub.s32 %v5249, %v8583
        %v8585 = vrot.slane %v8042, %v8584
        %v8586 = vsel %vm5254, %v8585, %v8581
        %v8587 = vlaneseq
        %v8588 = vshrl.u32 %v8587, 7
        %v8589 = vsub.s32 %v5256, %v8588
        %v8590 = vrot.slane %v8045, %v8589
        %v8591 = vsel %vm5261, %v8590, %v8586
        %v8592 = vlaneseq
        %v8593 = vshrl.u32 %v8592, 7
        %v8594 = vsub.s32 %v5263, %v8593
        %v8595 = vrot.slane %v8048, %v8594
        %v8596 = vsel %vm5268, %v8595, %v8591
        %v8597 = vlaneseq
        %v8598 = vshrl.u32 %v8597, 7
        %v8599 = vsub.s32 %v5270, %v8598
        %v8600 = vrot.slane %v8051, %v8599
        %v8601 = vsel %vm5275, %v8600, %v8596
        %v8602 = vlaneseq
        %v8603 = vshrl.u32 %v8602, 7
        %v8604 = vsub.s32 %v5277, %v8603
        %v8605 = vrot.slane %v8054, %v8604
        %v8606 = vsel %vm5282, %v8605, %v8601
        %v8607 = vlaneseq
        %v8608 = vshrl.u32 %v8607, 7
        %v8609 = vsub.s32 %v5284, %v8608
        %v8610 = vrot.slane %v8057, %v8609
        %v8611 = vsel %vm5289, %v8610, %v8606
        %v8612 = vlaneseq
        %v8613 = vshrl.u32 %v8612, 7
        %v8614 = vsub.s32 %v5291, %v8613
        %v8615 = vrot.slane %v8060, %v8614
        %v8616 = vsel %vm5296, %v8615, %v8611
        %v8617 = vlaneseq
        %v8618 = vshrl.u32 %v8617, 7
        %v8619 = vsub.s32 %v5298, %v8618
        %v8620 = vrot.slane %v8063, %v8619
        %v8621 = vsel %vm5303, %v8620, %v8616
        %v8622 = vlaneseq
        %v8623 = vshrl.u32 %v8622, 7
        %v8624 = vsub.s32 %v5305, %v8623
        %v8625 = vrot.slane %v8066, %v8624
        %v8626 = vsel %vm5310, %v8625, %v8621
        %v8627 = vlaneseq
        %v8628 = vshrl.u32 %v8627, 7
        %v8629 = vsub.s32 %v5312, %v8628
        %v8630 = vrot.slane %v8069, %v8629
        %v8631 = vsel %vm5317, %v8630, %v8626
        %v8632 = vlaneseq
        %v8633 = vshrl.u32 %v8632, 7
        %v8634 = vsub.s32 %v5319, %v8633
        %v8635 = vrot.slane %v8072, %v8634
        %v8636 = vsel %vm5324, %v8635, %v8631
        %v8637 = vlaneseq
        %v8638 = vshrl.u32 %v8637, 7
        %v8639 = vsub.s32 %v5326, %v8638
        %v8640 = vrot.slane %v8075, %v8639
        %v8641 = vsel %vm5331, %v8640, %v8636
        %v8642 = vlaneseq
        %v8643 = vshrl.u32 %v8642, 7
        %v8644 = vsub.s32 %v5333, %v8643
        %v8645 = vrot.slane %v8078, %v8644
        %v8646 = vsel %vm5338, %v8645, %v8641
        %v8647 = vlaneseq
        %v8648 = vshrl.u32 %v8647, 7
        %v8649 = vsub.s32 %v5340, %v8648
        %v8650 = vrot.slane %v8081, %v8649
        %v8651 = vsel %vm5345, %v8650, %v8646
        %v8652 = vlaneseq
        %v8653 = vshrl.u32 %v8652, 7
        %v8654 = vsub.s32 %v5237, %v8653
        %v8655 = vrot.slane %v8084, %v8654
        %v8656 = vlaneseq
        %v8657 = vshrl.u32 %v8656, 7
        %v8658 = vsub.s32 %v5242, %v8657
        %v8659 = vrot.slane %v8087, %v8658
        %v8660 = vsel %vm5247, %v8659, %v8655
        %v8661 = vlaneseq
        %v8662 = vshrl.u32 %v8661, 7
        %v8663 = vsub.s32 %v5249, %v8662
        %v8664 = vrot.slane %v8090, %v8663
        %v8665 = vsel %vm5254, %v8664, %v8660
        %v8666 = vlaneseq
        %v8667 = vshrl.u32 %v8666, 7
        %v8668 = vsub.s32 %v5256, %v8667
        %v8669 = vrot.slane %v8093, %v8668
        %v8670 = vsel %vm5261, %v8669, %v8665
        %v8671 = vlaneseq
        %v8672 = vshrl.u32 %v8671, 7
        %v8673 = vsub.s32 %v5263, %v8672
        %v8674 = vrot.slane %v8096, %v8673
        %v8675 = vsel %vm5268, %v8674, %v8670
        %v8676 = vlaneseq
        %v8677 = vshrl.u32 %v8676, 7
        %v8678 = vsub.s32 %v5270, %v8677
        %v8679 = vrot.slane %v8099, %v8678
        %v8680 = vsel %vm5275, %v8679, %v8675
        %v8681 = vlaneseq
        %v8682 = vshrl.u32 %v8681, 7
        %v8683 = vsub.s32 %v5277, %v8682
        %v8684 = vrot.slane %v8102, %v8683
        %v8685 = vsel %vm5282, %v8684, %v8680
        %v8686 = vlaneseq
        %v8687 = vshrl.u32 %v8686, 7
        %v8688 = vsub.s32 %v5284, %v8687
        %v8689 = vrot.slane %v8105, %v8688
        %v8690 = vsel %vm5289, %v8689, %v8685
        %v8691 = vlaneseq
        %v8692 = vshrl.u32 %v8691, 7
        %v8693 = vsub.s32 %v5291, %v8692
        %v8694 = vrot.slane %v8108, %v8693
        %v8695 = vsel %vm5296, %v8694, %v8690
        %v8696 = vlaneseq
        %v8697 = vshrl.u32 %v8696, 7
        %v8698 = vsub.s32 %v5298, %v8697
        %v8699 = vrot.slane %v8111, %v8698
        %v8700 = vsel %vm5303, %v8699, %v8695
        %v8701 = vlaneseq
        %v8702 = vshrl.u32 %v8701, 7
        %v8703 = vsub.s32 %v5305, %v8702
        %v8704 = vrot.slane %v8114, %v8703
        %v8705 = vsel %vm5310, %v8704, %v8700
        %v8706 = vlaneseq
        %v8707 = vshrl.u32 %v8706, 7
        %v8708 = vsub.s32 %v5312, %v8707
        %v8709 = vrot.slane %v8117, %v8708
        %v8710 = vsel %vm5317, %v8709, %v8705
        %v8711 = vlaneseq
        %v8712 = vshrl.u32 %v8711, 7
        %v8713 = vsub.s32 %v5319, %v8712
        %v8714 = vrot.slane %v8120, %v8713
        %v8715 = vsel %vm5324, %v8714, %v8710
        %v8716 = vlaneseq
        %v8717 = vshrl.u32 %v8716, 7
        %v8718 = vsub.s32 %v5326, %v8717
        %v8719 = vrot.slane %v8123, %v8718
        %v8720 = vsel %vm5331, %v8719, %v8715
        %v8721 = vlaneseq
        %v8722 = vshrl.u32 %v8721, 7
        %v8723 = vsub.s32 %v5333, %v8722
        %v8724 = vrot.slane %v8126, %v8723
        %v8725 = vsel %vm5338, %v8724, %v8720
        %v8726 = vlaneseq
        %v8727 = vshrl.u32 %v8726, 7
        %v8728 = vsub.s32 %v5340, %v8727
        %v8729 = vrot.slane %v8129, %v8728
        %v8730 = vsel %vm5345, %v8729, %v8725
        %v8731 = vlaneseq
        %v8732 = vshrl.u32 %v8731, 7
        %v8733 = vsub.s32 %v5237, %v8732
        %v8734 = vrot.slane %v8132, %v8733
        %v8735 = vlaneseq
        %v8736 = vshrl.u32 %v8735, 7
        %v8737 = vsub.s32 %v5242, %v8736
        %v8738 = vrot.slane %v8135, %v8737
        %v8739 = vsel %vm5247, %v8738, %v8734
        %v8740 = vlaneseq
        %v8741 = vshrl.u32 %v8740, 7
        %v8742 = vsub.s32 %v5249, %v8741
        %v8743 = vrot.slane %v8138, %v8742
        %v8744 = vsel %vm5254, %v8743, %v8739
        %v8745 = vlaneseq
        %v8746 = vshrl.u32 %v8745, 7
        %v8747 = vsub.s32 %v5256, %v8746
        %v8748 = vrot.slane %v8141, %v8747
        %v8749 = vsel %vm5261, %v8748, %v8744
        %v8750 = vlaneseq
        %v8751 = vshrl.u32 %v8750, 7
        %v8752 = vsub.s32 %v5263, %v8751
        %v8753 = vrot.slane %v8144, %v8752
        %v8754 = vsel %vm5268, %v8753, %v8749
        %v8755 = vlaneseq
        %v8756 = vshrl.u32 %v8755, 7
        %v8757 = vsub.s32 %v5270, %v8756
        %v8758 = vrot.slane %v8147, %v8757
        %v8759 = vsel %vm5275, %v8758, %v8754
        %v8760 = vlaneseq
        %v8761 = vshrl.u32 %v8760, 7
        %v8762 = vsub.s32 %v5277, %v8761
        %v8763 = vrot.slane %v8150, %v8762
        %v8764 = vsel %vm5282, %v8763, %v8759
        %v8765 = vlaneseq
        %v8766 = vshrl.u32 %v8765, 7
        %v8767 = vsub.s32 %v5284, %v8766
        %v8768 = vrot.slane %v8153, %v8767
        %v8769 = vsel %vm5289, %v8768, %v8764
        %v8770 = vlaneseq
        %v8771 = vshrl.u32 %v8770, 7
        %v8772 = vsub.s32 %v5291, %v8771
        %v8773 = vrot.slane %v8156, %v8772
        %v8774 = vsel %vm5296, %v8773, %v8769
        %v8775 = vlaneseq
        %v8776 = vshrl.u32 %v8775, 7
        %v8777 = vsub.s32 %v5298, %v8776
        %v8778 = vrot.slane %v8159, %v8777
        %v8779 = vsel %vm5303, %v8778, %v8774
        %v8780 = vlaneseq
        %v8781 = vshrl.u32 %v8780, 7
        %v8782 = vsub.s32 %v5305, %v8781
        %v8783 = vrot.slane %v8162, %v8782
        %v8784 = vsel %vm5310, %v8783, %v8779
        %v8785 = vlaneseq
        %v8786 = vshrl.u32 %v8785, 7
        %v8787 = vsub.s32 %v5312, %v8786
        %v8788 = vrot.slane %v8165, %v8787
        %v8789 = vsel %vm5317, %v8788, %v8784
        %v8790 = vlaneseq
        %v8791 = vshrl.u32 %v8790, 7
        %v8792 = vsub.s32 %v5319, %v8791
        %v8793 = vrot.slane %v8168, %v8792
        %v8794 = vsel %vm5324, %v8793, %v8789
        %v8795 = vlaneseq
        %v8796 = vshrl.u32 %v8795, 7
        %v8797 = vsub.s32 %v5326, %v8796
        %v8798 = vrot.slane %v8171, %v8797
        %v8799 = vsel %vm5331, %v8798, %v8794
        %v8800 = vlaneseq
        %v8801 = vshrl.u32 %v8800, 7
        %v8802 = vsub.s32 %v5333, %v8801
        %v8803 = vrot.slane %v8174, %v8802
        %v8804 = vsel %vm5338, %v8803, %v8799
        %v8805 = vlaneseq
        %v8806 = vshrl.u32 %v8805, 7
        %v8807 = vsub.s32 %v5340, %v8806
        %v8808 = vrot.slane %v8177, %v8807
        %v8809 = vsel %vm5345, %v8808, %v8804
        %v8810 = vsel %vm5900, %v8335, %v8256
        %v8811 = vsel %vm5902, %v8414, %v8810
        %v8812 = vsel %vm5904, %v8493, %v8811
        %v8813 = vsel %vm5906, %v8572, %v8812
        %v8814 = vsel %vm5908, %v8651, %v8813
        %v8815 = vsel %vm5910, %v8730, %v8814
        %v8816 = vsel %vm5912, %v8809, %v8815
        %8818 = vst [vmem:[%s256] sm:$0xff] %v8816
        %s8819 = sand.u32 %s120, 1
        %s8820 = scalar_lea.sflag [#allocation4], %s8819
        %s8821 = sand.u32 %s120, 1
        %s8822 = smul.addr %s8821, 8
        %s8823 = scalar_lea.vmem [#allocation10], %s8822
        // Predicated region
        $region53: #{tpu_custom_call.1} parent=35 // pred_check
          %p8824 = pneg %p130
        $region54: #{tpu_custom_call.1} parent=35 // pred_check_branch
          %8826 = sbr.rel (%p8824) target = $region56
        $region55: #{tpu_custom_call.1} parent=35 // pred_region
          %s8828 = ssub.s32 128, 128
          %8829 = vsyncadd %s8820, %s8828
          %s8830 = smul.addr %s23, 128
          %s8831 = scalar_lea.hbm %s4, %s8830
          %s8833 = sshll.u32 %s8823, 4
          %s8834 = int_to_ptr.vmem [resolvable:$true] %s8833
          %8836 = dma.vmem_to_hbm [thread:$0]  %s8834, 128, %s8831, %s8820
        $region56: #{tpu_custom_call.1} parent=35 // pred_fallthru
          _
      $region36: #{tpu_custom_call.1} parent=5 // pred_fallthru
        _
      %p8837 = scmp.le.s32.totalorder 2, %s18
      // Predicated region
      $region57: #{tpu_custom_call.1} parent=5 // pred_check
        %p8838 = pneg %p8837
      $region58: #{tpu_custom_call.1} parent=5 // pred_check_branch
        %8840 = sbr.rel (%p8838) target = $region60
      $region59: #{tpu_custom_call.1} parent=5 // pred_region
        %s8841 = ssub.s32 %s18, 2
        // Predicated region
        $region61: #{tpu_custom_call.1} parent=59 // pred_check
          %p8842 = pneg %p136
        $region62: #{tpu_custom_call.1} parent=59 // pred_check_branch
          %8844 = sbr.rel (%p8842) target = $region64
        $region63: #{tpu_custom_call.1} parent=59 // pred_region
          %s8845 = sand.u32 %s121, 1
          %s8846 = scalar_lea.sflag [#allocation4], %s8845
          %s8847 = sand.u32 %s121, 1
          %s8848 = smul.addr %s8847, 8
          %s8849 = scalar_lea.vmem [#allocation10], %s8848
          %8850 = dma.done %s8846, 128
        $region64: #{tpu_custom_call.1} parent=59 // pred_fallthru
          _
      $region60: #{tpu_custom_call.1} parent=5 // pred_fallthru
        _
    $region6: #{tpu_custom_call.1} parent=1 // loop_footer
      %s22 = sadd.s32 1, %s18
    $region7: #{tpu_custom_call.1} parent=1 // loop_footer_branch
      %17 = sbr.rel target = $region3
    $region8: #{tpu_custom_call.1} parent=1 // loop_exit
      _
    %8851 = vsyncpa [#allocation3], 1
    %s8852 = scalar_lea.sflag [#allocation3], 1
    %8853 = vsyncpa %s8852, 1
    %8854 = vsyncpa [#allocation6], 1
    %8855 = vsyncpa [#allocation9], 1
    %8856 = vsyncpa [#allocation4], 1
    %s8857 = scalar_lea.sflag [#allocation4], 1
    %8858 = vsyncpa %s8857, 1

</llo_original>
